<compile_context>
chip_gen: v6e
topology: v6e:2x2x1
jax: 0.10.0
libtpu: 0.0.40
codegen_flags: <defaults>
</compile_context>

<pallas_src>
import functools

import jax
import jax.numpy as jnp
from jax.experimental import pallas as pl
from jax.experimental.pallas import tpu as pltpu

NUM_HIDDEN = 32
BN_EPS = 1e-5
CIN_ALIGN = 16   # bf16 packs 16 sublanes/vreg -> keep bf16 scratch stores aligned


def _round_up(x, m):
    return (x + m - 1) // m * m


def _fused_fcn_kernel(x_ref, w0_ref, w_hid_ref, shift_hid_ref, w_out_ref,
                      shift_out_ref, o_ref, patch_ref, *, H, W, B, c0):
    """Whole-network forward for one slab of B images (channel-major layout).

    x_ref:         (c0, B*H*W)       f32   [x1; x2] channels, images along lanes
    w0_ref:        (32, 9*c0)        bf16  conv0 weights (BN scale folded), im2col layout
    w_hid_ref:     (6, 32, 288)      bf16  conv1..conv6 weights (BN scale folded)
    shift_hid_ref: (32, 7)           f32   column i = bias/BN shift of hidden layer i
    w_out_ref:     (c_out, 288)      bf16  final conv weights (rows padded past n_class)
    shift_out_ref: (c_out, 1)        f32   final conv bias (rows padded)
    o_ref:         (c_out, B*H*W)    f32   output slab (channel-major, lane-dense)
    patch_ref:     (9*max(c0,32), B*H*W) bf16 scratch: reusable im2col matrix
    """
    P = H * W
    TILE = B * P

    # ---- border masks for the 9 taps of a 3x3 "same" conv (built once) ------
    # ppos = position within *its own* image: images are concatenated along the
    # lane axis and every tap that would cross an image boundary is exactly a
    # masked border position, so the lane roll below may wrap freely.
    pidx = jax.lax.broadcasted_iota(jnp.int32, (1, TILE), 1)
    ppos = (jnp.bitwise_and(pidx, P - 1) if (P & (P - 1)) == 0
            else jax.lax.rem(pidx, jnp.int32(P)))
    col = (jnp.bitwise_and(ppos, W - 1) if (W & (W - 1)) == 0
           else jax.lax.rem(ppos, jnp.int32(W)))

    taps = []   # (lane shift s, f32 zero-pad mask or None)
    for dy in range(3):
        for dx in range(3):
            oy, ox = dy - 1, dx - 1
            conds = []
            if oy == -1:
                conds.append(ppos >= W)              # row - 1 >= 0
            if oy == 1:
                conds.append(ppos < (H - 1) * W)     # row + 1 <= H - 1
            if ox == -1:
                conds.append(col >= 1)               # col - 1 >= 0
            if ox == 1:
                conds.append(col <= W - 2)           # col + 1 <= W - 1
            mask = None
            if conds:
                m = conds[0]
                for c in conds[1:]:
                    m = jnp.logical_and(m, c)
                mask = m.astype(jnp.float32)
            taps.append((oy * W + ox, mask))

    def im2col_to_scratch(a, cin):
        """Write the (9*cin, TILE) im2col matrix of activation `a` into patch_ref."""
        for t, (s, mask) in enumerate(taps):
            # Want shifted[p] = a[p + s]  ->  roll lanes by (-s) mod TILE (XLU op,
            # wrapped values only land on masked border positions).
            shifted = a if s == 0 else pltpu.roll(a, (-s) % TILE, axis=1)
            if mask is not None:
                shifted = shifted * mask            # f32 mask mul (v5e-safe)
            # Static, 16-row-aligned bf16 store into the persistent scratch.
            patch_ref[t * cin:(t + 1) * cin, :] = shifted.astype(patch_ref.dtype)

    def conv(a, cin, w_mat, shift_col, relu):
        # One im2col MXU matmul per layer: bf16 x bf16 -> f32 accumulation;
        # epilogue (bias/BN shift add + optional ReLU) stays in f32.
        im2col_to_scratch(a, cin)
        y = jnp.dot(w_mat, patch_ref[0:9 * cin, :],
                    preferred_element_type=jnp.float32)
        y = y + shift_col
        return jnp.maximum(y, 0.0) if relu else y

    a = x_ref[...]                                                    # (c0, TILE) f32
    a = conv(a, c0, w0_ref[...], shift_hid_ref[:, 0:1], relu=False)   # conv0 + bn0
    for i in range(1, 7):                                             # conv1..6 + bn + relu
        a = conv(a, NUM_HIDDEN, w_hid_ref[i - 1], shift_hid_ref[:, i:i + 1],
                 relu=True)
    out = conv(a, NUM_HIDDEN, w_out_ref[...], shift_out_ref[...], relu=False)
    o_ref[...] = out.astype(o_ref.dtype)


def _pick_block_images(n):
    """Images per grid step: amortize per-step overhead, keep >=2 steps (v7x)."""
    for b in (16, 8, 4, 2):
        if n % b == 0 and n // b >= 2:
            return b
    return 1


@functools.partial(jax.jit, static_argnames=("n_class",))
def fully_conv_net_forward(packed, x1_nchw, x2_nchw, *, n_class):
    """x1, x2: (N, im_channel, H, W) -> motion: (N, n_class, H, W) float32."""
    N, Cim, H, W = x1_nchw.shape
    P = H * W
    c0 = _round_up(2 * Cim, CIN_ALIGN)
    c_out = _round_up(n_class, 8)
    B = _pick_block_images(N)
    TILE = B * P
    k_max = 9 * max(c0, NUM_HIDDEN)

    # torch.cat((x1, x2), dim=1), channel-major with ALL images along the lane
    # axis: (c0, N*H*W).  Channels are zero-padded to a multiple of 16 so every
    # bf16 im2col scratch store in the kernel is packed-sublane aligned.
    x = jnp.concatenate([x1_nchw.reshape(N, Cim, P),
                         x2_nchw.reshape(N, Cim, P)], axis=1).astype(jnp.float32)
    if c0 > 2 * Cim:
        x = jnp.pad(x, ((0, 0), (0, c0 - 2 * Cim), (0, 0)))
    x = jnp.transpose(x, (1, 0, 2)).reshape(c0, N * P)

    kernel = functools.partial(_fused_fcn_kernel, H=H, W=W, B=B, c0=c0)
    out = pl.pallas_call(
        kernel,
        out_shape=jax.ShapeDtypeStruct((c_out, N * P), jnp.float32),
        grid_spec=pltpu.PrefetchScalarGridSpec(
            num_scalar_prefetch=0,
            grid=(N // B,),
            in_specs=[
                pl.BlockSpec((c0, TILE), lambda g: (0, g)),
                # Constant-index weight/shift blocks: fetched once, stay resident.
                pl.BlockSpec((NUM_HIDDEN, 9 * c0), lambda g: (0, 0)),
                pl.BlockSpec((6, NUM_HIDDEN, 9 * NUM_HIDDEN), lambda g: (0, 0, 0)),
                pl.BlockSpec((NUM_HIDDEN, 7), lambda g: (0, 0)),
                pl.BlockSpec((c_out, 9 * NUM_HIDDEN), lambda g: (0, 0)),
                pl.BlockSpec((c_out, 1), lambda g: (0, 0)),
            ],
            out_specs=pl.BlockSpec((c_out, TILE), lambda g: (0, g)),
            scratch_shapes=[pltpu.VMEM((k_max, TILE), jnp.bfloat16)],
        ),
        compiler_params=pltpu.CompilerParams(
            dimension_semantics=("parallel",)),
    )(x, packed["w0_t"], packed["w_hid_t"], packed["shift_hid"],
      packed["w_out_t"], packed["shift_out"])

    # (c_out, N*P) -> (N, n_class, H, W); drop the n_class padding rows.
    out = jnp.transpose(out.reshape(c_out, N, P), (1, 0, 2))[:, :n_class, :]
    return out.reshape(N, n_class, H, W)


# --------------------------- parameter preparation ---------------------------

def _init_conv(key, cin, cout):
    """PyTorch-default Conv2d init: U(-1/sqrt(fan_in), 1/sqrt(fan_in))."""
    kw, kb = jax.random.split(key)
    bound = 1.0 / float(cin * 9) ** 0.5
    w = jax.random.uniform(kw, (3, 3, cin, cout), jnp.float32, -bound, bound)
    b = jax.random.uniform(kb, (cout,), jnp.float32, -bound, bound)
    return w, b


def _im2col_weight(w, scale, cin_pad, cout_pad=None):
    """(3,3,cin,cout) -> (cout[_pad], 9*cin_pad) bf16, BN scale folded, zero-padded."""
    w = w * scale[None, None, None, :]
    cin, cout = w.shape[2], w.shape[3]
    if cin < cin_pad:
        w = jnp.pad(w, ((0, 0), (0, 0), (0, cin_pad - cin), (0, 0)))
    wm = jnp.transpose(w, (3, 0, 1, 2)).reshape(cout, 9 * cin_pad)
    if cout_pad is not None and cout < cout_pad:
        wm = jnp.pad(wm, ((0, cout_pad - cout), (0, 0)))
    return wm.astype(jnp.bfloat16)


def init_params(key, im_channel, n_class):
    """Returns (layers, packed): raw per-layer params (for the pure-JAX reference)
    and the packed kernel-side arrays (bf16 im2col weights with folded BN scale,
    f32 shifts, n_class padded to 8)."""
    cins = [2 * im_channel] + [NUM_HIDDEN] * 7
    couts = [NUM_HIDDEN] * 7 + [n_class]
    has_bn = [True] * 7 + [False]
    relu = [False] + [True] * 6 + [False]
    keys = jax.random.split(key, 8)

    layers = []
    for k, cin, cout, bn, r in zip(keys, cins, couts, has_bn, relu):
        w, b = _init_conv(k, cin, cout)
        if bn:
            # Eval-mode BatchNorm fold: running mean=0, var=1, gamma=1, beta=0.
            scale = jnp.full((cout,), 1.0 / (1.0 + BN_EPS) ** 0.5, jnp.float32)
            shift = b * scale
        else:
            scale = jnp.ones((cout,), jnp.float32)
            shift = b
        layers.append(dict(w=w, scale=scale, shift=shift, relu=r))

    c0 = _round_up(2 * im_channel, CIN_ALIGN)
    c_out = _round_up(n_class, 8)
    packed = dict(
        w0_t=_im2col_weight(layers[0]["w"], layers[0]["scale"], c0),
        w_hid_t=jnp.stack([
            _im2col_weight(layers[i]["w"], layers[i]["scale"], NUM_HIDDEN)
            for i in range(1, 7)]),
        shift_hid=jnp.stack([layers[i]["shift"] for i in range(7)], axis=1),
        w_out_t=_im2col_weight(layers[7]["w"], layers[7]["scale"], NUM_HIDDEN,
                               cout_pad=c_out),
        shift_out=jnp.pad(layers[7]["shift"],
                          (0, c_out - n_class)).reshape(c_out, 1),
    )
    return layers, packed


# ------------------------------- verification --------------------------------

def _reference_forward(layers, x1, x2, matmul_dtype=jnp.float32):
    """Pure-JAX reference (lax conv).  matmul_dtype=bfloat16 reproduces the
    kernel's numerics exactly (bf16 MXU inputs, f32 accumulation/epilogue)."""
    prec = jax.lax.Precision.HIGHEST if matmul_dtype == jnp.float32 else None
    x = jnp.concatenate([x1, x2], axis=1).astype(jnp.float32)
    for p in layers:
        w = (p["w"] * p["scale"][None, None, None, :]).astype(matmul_dtype)
        w_oihw = jnp.transpose(w, (3, 2, 0, 1))        # (3,3,Cin,Cout) -> (O,I,kH,kW)
        y = jax.lax.conv_general_dilated(
            x.astype(matmul_dtype), w_oihw, window_strides=(1, 1),
            padding="SAME", dimension_numbers=("NCHW", "OIHW", "NCHW"),
            preferred_element_type=jnp.float32, precision=prec)
        y = y + p["shift"][None, :, None, None]
        if p["relu"]:
            y = jnp.maximum(y, 0.0)
        x = y
    return x


if __name__ == "__main__":
    N, im_channel, im_size, n_class = 2, 4, 16, 3
    key = jax.random.PRNGKey(0)
    k_params, k_x1, k_x2 = jax.random.split(key, 3)

    layers, packed = init_params(k_params, im_channel, n_class)
    x1 = jax.random.normal(k_x1, (N, im_channel, im_size, im_size), jnp.float32)
    x2 = jax.random.normal(k_x2, (N, im_channel, im_size, im_size), jnp.float32)

    motion = jax.block_until_ready(
        fully_conv_net_forward(packed, x1, x2, n_class=n_class))
    assert motion.shape == (N, n_class, im_size, im_size), motion.shape

    # Strict check: reference with the kernel's exact numerics
    # (bf16 matmul inputs, f32 accumulation and epilogue).
    ref_bf16 = jax.block_until_ready(
        _reference_forward(layers, x1, x2, matmul_dtype=jnp.bfloat16))
    err_bf16 = float(jnp.max(jnp.abs(motion - ref_bf16)))
    assert jnp.allclose(motion, ref_bf16, atol=1e-3, rtol=1e-3), (
        f"mismatch vs bf16-semantics reference, max err {err_bf16}")

    # Fidelity check vs the full-f32 reference (bf16 MXU inputs introduce a tiny
    # deviation, hence the slightly looser tolerance).
    ref_f32 = jax.block_until_ready(_reference_forward(layers, x1, x2))
    err_f32 = float(jnp.max(jnp.abs(motion - ref_f32)))
    assert jnp.allclose(motion, ref_f32, atol=5e-3, rtol=5e-3), (
        f"mismatch vs f32 reference, max err {err_f32}")

    print("KERNEL_OK")
</pallas_src>

<mosaic_0001>
module attributes {stable_mosaic.version = 11 : i64} {
  func.func @_fused_fcn_kernel(%arg0: i32, %arg1: memref<16x256xf32, #tpu.memory_space<vmem>>, %arg2: memref<32x144xbf16, #tpu.memory_space<vmem>>, %arg3: memref<6x32x288xbf16, #tpu.memory_space<vmem>>, %arg4: memref<32x7xf32, #tpu.memory_space<vmem>>, %arg5: memref<8x288xbf16, #tpu.memory_space<vmem>>, %arg6: memref<8x1xf32, #tpu.memory_space<vmem>>, %arg7: memref<8x256xf32, #tpu.memory_space<vmem>>, %arg8: memref<288x256xbf16, #tpu.memory_space<vmem>>) attributes {dimension_semantics = [#tpu.dimension_semantics<parallel>], iteration_bounds = array<i64: 2>, scalar_prefetch = 0 : i64, scratch_operands = 1 : i64, tpu.core_type = #tpu.core_type<tc>, window_params = [{transform_indices = @transform_0, window_bounds = array<i64: 16, 256>}, {pipeline_mode = #tpu.pipeline_mode<synchronous>, transform_indices = @transform_1, window_bounds = array<i64: 32, 144>}, {pipeline_mode = #tpu.pipeline_mode<synchronous>, transform_indices = @transform_2, window_bounds = array<i64: 6, 32, 288>}, {pipeline_mode = #tpu.pipeline_mode<synchronous>, transform_indices = @transform_3, window_bounds = array<i64: 32, 7>}, {pipeline_mode = #tpu.pipeline_mode<synchronous>, transform_indices = @transform_4, window_bounds = array<i64: 8, 288>}, {pipeline_mode = #tpu.pipeline_mode<synchronous>, transform_indices = @transform_5, window_bounds = array<i64: 8, 1>}, {transform_indices = @transform_6, window_bounds = array<i64: 8, 256>}]} {
    %0 = tpu.iota {dimensions = array<i32: 1>} : vector<1x256xi32>
    %c255_i32 = arith.constant 255 : i32
    %1 = vector.broadcast %c255_i32 : i32 to vector<1x256xi32>
    %2 = arith.andi %0, %1 : vector<1x256xi32>
    %c15_i32 = arith.constant 15 : i32
    %3 = vector.broadcast %c15_i32 : i32 to vector<1x256xi32>
    %4 = arith.andi %2, %3 : vector<1x256xi32>
    %c16_i32 = arith.constant 16 : i32
    %5 = vector.broadcast %c16_i32 : i32 to vector<1x256xi32>
    %6 = arith.cmpi sge, %2, %5 : vector<1x256xi32>
    %c1_i32 = arith.constant 1 : i32
    %7 = vector.broadcast %c1_i32 : i32 to vector<1x256xi32>
    %8 = arith.cmpi sge, %4, %7 : vector<1x256xi32>
    %9 = arith.andi %6, %8 : vector<1x256xi1>
    %10 = arith.extui %9 : vector<1x256xi1> to vector<1x256xi32>
    %11 = arith.sitofp %10 : vector<1x256xi32> to vector<1x256xf32>
    %c16_i32_0 = arith.constant 16 : i32
    %12 = vector.broadcast %c16_i32_0 : i32 to vector<1x256xi32>
    %13 = arith.cmpi sge, %2, %12 : vector<1x256xi32>
    %14 = arith.extui %13 : vector<1x256xi1> to vector<1x256xi32>
    %15 = arith.sitofp %14 : vector<1x256xi32> to vector<1x256xf32>
    %c16_i32_1 = arith.constant 16 : i32
    %16 = vector.broadcast %c16_i32_1 : i32 to vector<1x256xi32>
    %17 = arith.cmpi sge, %2, %16 : vector<1x256xi32>
    %c14_i32 = arith.constant 14 : i32
    %18 = vector.broadcast %c14_i32 : i32 to vector<1x256xi32>
    %19 = arith.cmpi sle, %4, %18 : vector<1x256xi32>
    %20 = arith.andi %17, %19 : vector<1x256xi1>
    %21 = arith.extui %20 : vector<1x256xi1> to vector<1x256xi32>
    %22 = arith.sitofp %21 : vector<1x256xi32> to vector<1x256xf32>
    %c1_i32_2 = arith.constant 1 : i32
    %23 = vector.broadcast %c1_i32_2 : i32 to vector<1x256xi32>
    %24 = arith.cmpi sge, %4, %23 : vector<1x256xi32>
    %25 = arith.extui %24 : vector<1x256xi1> to vector<1x256xi32>
    %26 = arith.sitofp %25 : vector<1x256xi32> to vector<1x256xf32>
    %c14_i32_3 = arith.constant 14 : i32
    %27 = vector.broadcast %c14_i32_3 : i32 to vector<1x256xi32>
    %28 = arith.cmpi sle, %4, %27 : vector<1x256xi32>
    %29 = arith.extui %28 : vector<1x256xi1> to vector<1x256xi32>
    %30 = arith.sitofp %29 : vector<1x256xi32> to vector<1x256xf32>
    %c240_i32 = arith.constant 240 : i32
    %31 = vector.broadcast %c240_i32 : i32 to vector<1x256xi32>
    %32 = arith.cmpi slt, %2, %31 : vector<1x256xi32>
    %c1_i32_4 = arith.constant 1 : i32
    %33 = vector.broadcast %c1_i32_4 : i32 to vector<1x256xi32>
    %34 = arith.cmpi sge, %4, %33 : vector<1x256xi32>
    %35 = arith.andi %32, %34 : vector<1x256xi1>
    %36 = arith.extui %35 : vector<1x256xi1> to vector<1x256xi32>
    %37 = arith.sitofp %36 : vector<1x256xi32> to vector<1x256xf32>
    %c240_i32_5 = arith.constant 240 : i32
    %38 = vector.broadcast %c240_i32_5 : i32 to vector<1x256xi32>
    %39 = arith.cmpi slt, %2, %38 : vector<1x256xi32>
    %40 = arith.extui %39 : vector<1x256xi1> to vector<1x256xi32>
    %41 = arith.sitofp %40 : vector<1x256xi32> to vector<1x256xf32>
    %c240_i32_6 = arith.constant 240 : i32
    %42 = vector.broadcast %c240_i32_6 : i32 to vector<1x256xi32>
    %43 = arith.cmpi slt, %2, %42 : vector<1x256xi32>
    %c14_i32_7 = arith.constant 14 : i32
    %44 = vector.broadcast %c14_i32_7 : i32 to vector<1x256xi32>
    %45 = arith.cmpi sle, %4, %44 : vector<1x256xi32>
    %46 = arith.andi %43, %45 : vector<1x256xi1>
    %47 = arith.extui %46 : vector<1x256xi1> to vector<1x256xi32>
    %48 = arith.sitofp %47 : vector<1x256xi32> to vector<1x256xf32>
    %c0 = arith.constant 0 : index
    %c0_8 = arith.constant 0 : index
    %49 = vector.load %arg1[%c0, %c0_8] : memref<16x256xf32, #tpu.memory_space<vmem>>, vector<16x256xf32>
    %c0_9 = arith.constant 0 : index
    %c0_10 = arith.constant 0 : index
    %50 = vector.load %arg2[%c0_9, %c0_10] : memref<32x144xbf16, #tpu.memory_space<vmem>>, vector<32x144xbf16>
    %c0_11 = arith.constant 0 : index
    %c0_12 = arith.constant 0 : index
    %51 = vector.load %arg4[%c0_11, %c0_12] : memref<32x7xf32, #tpu.memory_space<vmem>>, vector<32x1xf32>
    %c17_i32 = arith.constant 17 : i32
    %52 = tpu.dynamic_rotate %49 by %c17_i32 dim 1 : vector<16x256xf32>, i32 -> vector<16x256xf32>
    %53 = vector.broadcast %11 : vector<1x256xf32> to vector<16x256xf32>
    %54 = arith.mulf %52, %53 : vector<16x256xf32>
    %55 = arith.truncf %54 : vector<16x256xf32> to vector<16x256xbf16>
    %c0_13 = arith.constant 0 : index
    %c0_14 = arith.constant 0 : index
    %56 = vector.load %arg8[%c0_13, %c0_14] : memref<288x256xbf16, #tpu.memory_space<vmem>>, vector<16x256xbf16>
    tpu.vector_store %arg8[%c0_13, %c0_14], %55 {strides = array<i32>} : memref<288x256xbf16, #tpu.memory_space<vmem>>, vector<16x256xbf16>,
    %c16_i32_15 = arith.constant 16 : i32
    %57 = tpu.dynamic_rotate %49 by %c16_i32_15 dim 1 : vector<16x256xf32>, i32 -> vector<16x256xf32>
    %58 = vector.broadcast %15 : vector<1x256xf32> to vector<16x256xf32>
    %59 = arith.mulf %57, %58 : vector<16x256xf32>
    %60 = arith.truncf %59 : vector<16x256xf32> to vector<16x256xbf16>
    %c16 = arith.constant 16 : index
    %c0_16 = arith.constant 0 : index
    %61 = vector.load %arg8[%c16, %c0_16] : memref<288x256xbf16, #tpu.memory_space<vmem>>, vector<16x256xbf16>
    tpu.vector_store %arg8[%c16, %c0_16], %60 {strides = array<i32>} : memref<288x256xbf16, #tpu.memory_space<vmem>>, vector<16x256xbf16>,
    %c15_i32_17 = arith.constant 15 : i32
    %62 = tpu.dynamic_rotate %49 by %c15_i32_17 dim 1 : vector<16x256xf32>, i32 -> vector<16x256xf32>
    %63 = vector.broadcast %22 : vector<1x256xf32> to vector<16x256xf32>
    %64 = arith.mulf %62, %63 : vector<16x256xf32>
    %65 = arith.truncf %64 : vector<16x256xf32> to vector<16x256xbf16>
    %c32 = arith.constant 32 : index
    %c0_18 = arith.constant 0 : index
    %66 = vector.load %arg8[%c32, %c0_18] : memref<288x256xbf16, #tpu.memory_space<vmem>>, vector<16x256xbf16>
    tpu.vector_store %arg8[%c32, %c0_18], %65 {strides = array<i32>} : memref<288x256xbf16, #tpu.memory_space<vmem>>, vector<16x256xbf16>,
    %c1_i32_19 = arith.constant 1 : i32
    %67 = tpu.dynamic_rotate %49 by %c1_i32_19 dim 1 : vector<16x256xf32>, i32 -> vector<16x256xf32>
    %68 = vector.broadcast %26 : vector<1x256xf32> to vector<16x256xf32>
    %69 = arith.mulf %67, %68 : vector<16x256xf32>
    %70 = arith.truncf %69 : vector<16x256xf32> to vector<16x256xbf16>
    %c48 = arith.constant 48 : index
    %c0_20 = arith.constant 0 : index
    %71 = vector.load %arg8[%c48, %c0_20] : memref<288x256xbf16, #tpu.memory_space<vmem>>, vector<16x256xbf16>
    tpu.vector_store %arg8[%c48, %c0_20], %70 {strides = array<i32>} : memref<288x256xbf16, #tpu.memory_space<vmem>>, vector<16x256xbf16>,
    %72 = arith.truncf %49 : vector<16x256xf32> to vector<16x256xbf16>
    %c64 = arith.constant 64 : index
    %c0_21 = arith.constant 0 : index
    %73 = vector.load %arg8[%c64, %c0_21] : memref<288x256xbf16, #tpu.memory_space<vmem>>, vector<16x256xbf16>
    tpu.vector_store %arg8[%c64, %c0_21], %72 {strides = array<i32>} : memref<288x256xbf16, #tpu.memory_space<vmem>>, vector<16x256xbf16>,
    %c255_i32_22 = arith.constant 255 : i32
    %74 = tpu.dynamic_rotate %49 by %c255_i32_22 dim 1 : vector<16x256xf32>, i32 -> vector<16x256xf32>
    %75 = vector.broadcast %30 : vector<1x256xf32> to vector<16x256xf32>
    %76 = arith.mulf %74, %75 : vector<16x256xf32>
    %77 = arith.truncf %76 : vector<16x256xf32> to vector<16x256xbf16>
    %c80 = arith.constant 80 : index
    %c0_23 = arith.constant 0 : index
    %78 = vector.load %arg8[%c80, %c0_23] : memref<288x256xbf16, #tpu.memory_space<vmem>>, vector<16x256xbf16>
    tpu.vector_store %arg8[%c80, %c0_23], %77 {strides = array<i32>} : memref<288x256xbf16, #tpu.memory_space<vmem>>, vector<16x256xbf16>,
    %c241_i32 = arith.constant 241 : i32
    %79 = tpu.dynamic_rotate %49 by %c241_i32 dim 1 : vector<16x256xf32>, i32 -> vector<16x256xf32>
    %80 = vector.broadcast %37 : vector<1x256xf32> to vector<16x256xf32>
    %81 = arith.mulf %79, %80 : vector<16x256xf32>
    %82 = arith.truncf %81 : vector<16x256xf32> to vector<16x256xbf16>
    %c96 = arith.constant 96 : index
    %c0_24 = arith.constant 0 : index
    %83 = vector.load %arg8[%c96, %c0_24] : memref<288x256xbf16, #tpu.memory_space<vmem>>, vector<16x256xbf16>
    tpu.vector_store %arg8[%c96, %c0_24], %82 {strides = array<i32>} : memref<288x256xbf16, #tpu.memory_space<vmem>>, vector<16x256xbf16>,
    %c240_i32_25 = arith.constant 240 : i32
    %84 = tpu.dynamic_rotate %49 by %c240_i32_25 dim 1 : vector<16x256xf32>, i32 -> vector<16x256xf32>
    %85 = vector.broadcast %41 : vector<1x256xf32> to vector<16x256xf32>
    %86 = arith.mulf %84, %85 : vector<16x256xf32>
    %87 = arith.truncf %86 : vector<16x256xf32> to vector<16x256xbf16>
    %c112 = arith.constant 112 : index
    %c0_26 = arith.constant 0 : index
    %88 = vector.load %arg8[%c112, %c0_26] : memref<288x256xbf16, #tpu.memory_space<vmem>>, vector<16x256xbf16>
    tpu.vector_store %arg8[%c112, %c0_26], %87 {strides = array<i32>} : memref<288x256xbf16, #tpu.memory_space<vmem>>, vector<16x256xbf16>,
    %c239_i32 = arith.constant 239 : i32
    %89 = tpu.dynamic_rotate %49 by %c239_i32 dim 1 : vector<16x256xf32>, i32 -> vector<16x256xf32>
    %90 = vector.broadcast %48 : vector<1x256xf32> to vector<16x256xf32>
    %91 = arith.mulf %89, %90 : vector<16x256xf32>
    %92 = arith.truncf %91 : vector<16x256xf32> to vector<16x256xbf16>
    %c128 = arith.constant 128 : index
    %c0_27 = arith.constant 0 : index
    %93 = vector.load %arg8[%c128, %c0_27] : memref<288x256xbf16, #tpu.memory_space<vmem>>, vector<16x256xbf16>
    tpu.vector_store %arg8[%c128, %c0_27], %92 {strides = array<i32>} : memref<288x256xbf16, #tpu.memory_space<vmem>>, vector<16x256xbf16>,
    %c0_28 = arith.constant 0 : index
    %c0_29 = arith.constant 0 : index
    %94 = vector.load %arg8[%c0_28, %c0_29] : memref<288x256xbf16, #tpu.memory_space<vmem>>, vector<144x256xbf16>
    %cst = arith.constant dense<0.000000e+00> : vector<32x256xf32>
    %95 = tpu.matmul %50, %94, %cst {dimension_numbers = #tpu.dot_dimension_numbers<[1], [0], [0], [1], [0, 0, 1, 1], [], []>} : vector<32x144xbf16>, vector<144x256xbf16>, vector<32x256xf32> -> vector<32x256xf32>
    %96 = vector.broadcast %51 : vector<32x1xf32> to vector<32x256xf32>
    %97 = arith.addf %95, %96 : vector<32x256xf32>
    %c0_30 = arith.constant 0 : index
    %c0_31 = arith.constant 0 : index
    %c0_32 = arith.constant 0 : index
    %98 = vector.load %arg3[%c0_30, %c0_31, %c0_32] : memref<6x32x288xbf16, #tpu.memory_space<vmem>>, vector<1x32x288xbf16>
    %99 = vector.shape_cast %98 : vector<1x32x288xbf16> to vector<32x288xbf16>
    %c0_33 = arith.constant 0 : index
    %c1 = arith.constant 1 : index
    %100 = vector.load %arg4[%c0_33, %c1] : memref<32x7xf32, #tpu.memory_space<vmem>>, vector<32x1xf32>
    %c17_i32_34 = arith.constant 17 : i32
    %101 = tpu.dynamic_rotate %97 by %c17_i32_34 dim 1 : vector<32x256xf32>, i32 -> vector<32x256xf32>
    %102 = vector.broadcast %11 : vector<1x256xf32> to vector<32x256xf32>
    %103 = arith.mulf %101, %102 : vector<32x256xf32>
    %104 = arith.truncf %103 : vector<32x256xf32> to vector<32x256xbf16>
    %c0_35 = arith.constant 0 : index
    %c0_36 = arith.constant 0 : index
    %105 = vector.load %arg8[%c0_35, %c0_36] : memref<288x256xbf16, #tpu.memory_space<vmem>>, vector<32x256xbf16>
    tpu.vector_store %arg8[%c0_35, %c0_36], %104 {strides = array<i32>} : memref<288x256xbf16, #tpu.memory_space<vmem>>, vector<32x256xbf16>,
    %c16_i32_37 = arith.constant 16 : i32
    %106 = tpu.dynamic_rotate %97 by %c16_i32_37 dim 1 : vector<32x256xf32>, i32 -> vector<32x256xf32>
    %107 = vector.broadcast %15 : vector<1x256xf32> to vector<32x256xf32>
    %108 = arith.mulf %106, %107 : vector<32x256xf32>
    %109 = arith.truncf %108 : vector<32x256xf32> to vector<32x256xbf16>
    %c32_38 = arith.constant 32 : index
    %c0_39 = arith.constant 0 : index
    %110 = vector.load %arg8[%c32_38, %c0_39] : memref<288x256xbf16, #tpu.memory_space<vmem>>, vector<32x256xbf16>
    tpu.vector_store %arg8[%c32_38, %c0_39], %109 {strides = array<i32>} : memref<288x256xbf16, #tpu.memory_space<vmem>>, vector<32x256xbf16>,
    %c15_i32_40 = arith.constant 15 : i32
    %111 = tpu.dynamic_rotate %97 by %c15_i32_40 dim 1 : vector<32x256xf32>, i32 -> vector<32x256xf32>
    %112 = vector.broadcast %22 : vector<1x256xf32> to vector<32x256xf32>
    %113 = arith.mulf %111, %112 : vector<32x256xf32>
    %114 = arith.truncf %113 : vector<32x256xf32> to vector<32x256xbf16>
    %c64_41 = arith.constant 64 : index
    %c0_42 = arith.constant 0 : index
    %115 = vector.load %arg8[%c64_41, %c0_42] : memref<288x256xbf16, #tpu.memory_space<vmem>>, vector<32x256xbf16>
    tpu.vector_store %arg8[%c64_41, %c0_42], %114 {strides = array<i32>} : memref<288x256xbf16, #tpu.memory_space<vmem>>, vector<32x256xbf16>,
    %c1_i32_43 = arith.constant 1 : i32
    %116 = tpu.dynamic_rotate %97 by %c1_i32_43 dim 1 : vector<32x256xf32>, i32 -> vector<32x256xf32>
    %117 = vector.broadcast %26 : vector<1x256xf32> to vector<32x256xf32>
    %118 = arith.mulf %116, %117 : vector<32x256xf32>
    %119 = arith.truncf %118 : vector<32x256xf32> to vector<32x256xbf16>
    %c96_44 = arith.constant 96 : index
    %c0_45 = arith.constant 0 : index
    %120 = vector.load %arg8[%c96_44, %c0_45] : memref<288x256xbf16, #tpu.memory_space<vmem>>, vector<32x256xbf16>
    tpu.vector_store %arg8[%c96_44, %c0_45], %119 {strides = array<i32>} : memref<288x256xbf16, #tpu.memory_space<vmem>>, vector<32x256xbf16>,
    %121 = arith.truncf %97 : vector<32x256xf32> to vector<32x256xbf16>
    %c128_46 = arith.constant 128 : index
    %c0_47 = arith.constant 0 : index
    %122 = vector.load %arg8[%c128_46, %c0_47] : memref<288x256xbf16, #tpu.memory_space<vmem>>, vector<32x256xbf16>
    tpu.vector_store %arg8[%c128_46, %c0_47], %121 {strides = array<i32>} : memref<288x256xbf16, #tpu.memory_space<vmem>>, vector<32x256xbf16>,
    %c255_i32_48 = arith.constant 255 : i32
    %123 = tpu.dynamic_rotate %97 by %c255_i32_48 dim 1 : vector<32x256xf32>, i32 -> vector<32x256xf32>
    %124 = vector.broadcast %30 : vector<1x256xf32> to vector<32x256xf32>
    %125 = arith.mulf %123, %124 : vector<32x256xf32>
    %126 = arith.truncf %125 : vector<32x256xf32> to vector<32x256xbf16>
    %c160 = arith.constant 160 : index
    %c0_49 = arith.constant 0 : index
    %127 = vector.load %arg8[%c160, %c0_49] : memref<288x256xbf16, #tpu.memory_space<vmem>>, vector<32x256xbf16>
    tpu.vector_store %arg8[%c160, %c0_49], %126 {strides = array<i32>} : memref<288x256xbf16, #tpu.memory_space<vmem>>, vector<32x256xbf16>,
    %c241_i32_50 = arith.constant 241 : i32
    %128 = tpu.dynamic_rotate %97 by %c241_i32_50 dim 1 : vector<32x256xf32>, i32 -> vector<32x256xf32>
    %129 = vector.broadcast %37 : vector<1x256xf32> to vector<32x256xf32>
    %130 = arith.mulf %128, %129 : vector<32x256xf32>
    %131 = arith.truncf %130 : vector<32x256xf32> to vector<32x256xbf16>
    %c192 = arith.constant 192 : index
    %c0_51 = arith.constant 0 : index
    %132 = vector.load %arg8[%c192, %c0_51] : memref<288x256xbf16, #tpu.memory_space<vmem>>, vector<32x256xbf16>
    tpu.vector_store %arg8[%c192, %c0_51], %131 {strides = array<i32>} : memref<288x256xbf16, #tpu.memory_space<vmem>>, vector<32x256xbf16>,
    %c240_i32_52 = arith.constant 240 : i32
    %133 = tpu.dynamic_rotate %97 by %c240_i32_52 dim 1 : vector<32x256xf32>, i32 -> vector<32x256xf32>
    %134 = vector.broadcast %41 : vector<1x256xf32> to vector<32x256xf32>
    %135 = arith.mulf %133, %134 : vector<32x256xf32>
    %136 = arith.truncf %135 : vector<32x256xf32> to vector<32x256xbf16>
    %c224 = arith.constant 224 : index
    %c0_53 = arith.constant 0 : index
    %137 = vector.load %arg8[%c224, %c0_53] : memref<288x256xbf16, #tpu.memory_space<vmem>>, vector<32x256xbf16>
    tpu.vector_store %arg8[%c224, %c0_53], %136 {strides = array<i32>} : memref<288x256xbf16, #tpu.memory_space<vmem>>, vector<32x256xbf16>,
    %c239_i32_54 = arith.constant 239 : i32
    %138 = tpu.dynamic_rotate %97 by %c239_i32_54 dim 1 : vector<32x256xf32>, i32 -> vector<32x256xf32>
    %139 = vector.broadcast %48 : vector<1x256xf32> to vector<32x256xf32>
    %140 = arith.mulf %138, %139 : vector<32x256xf32>
    %141 = arith.truncf %140 : vector<32x256xf32> to vector<32x256xbf16>
    %c256 = arith.constant 256 : index
    %c0_55 = arith.constant 0 : index
    %142 = vector.load %arg8[%c256, %c0_55] : memref<288x256xbf16, #tpu.memory_space<vmem>>, vector<32x256xbf16>
    tpu.vector_store %arg8[%c256, %c0_55], %141 {strides = array<i32>} : memref<288x256xbf16, #tpu.memory_space<vmem>>, vector<32x256xbf16>,
    %c0_56 = arith.constant 0 : index
    %c0_57 = arith.constant 0 : index
    %143 = vector.load %arg8[%c0_56, %c0_57] : memref<288x256xbf16, #tpu.memory_space<vmem>>, vector<288x256xbf16>
    %cst_58 = arith.constant dense<0.000000e+00> : vector<32x256xf32>
    %144 = tpu.matmul %99, %143, %cst_58 {dimension_numbers = #tpu.dot_dimension_numbers<[1], [0], [0], [1], [0, 0, 1, 1], [], []>} : vector<32x288xbf16>, vector<288x256xbf16>, vector<32x256xf32> -> vector<32x256xf32>
    %145 = vector.broadcast %100 : vector<32x1xf32> to vector<32x256xf32>
    %146 = arith.addf %144, %145 : vector<32x256xf32>
    %cst_59 = arith.constant 0.000000e+00 : f32
    %147 = vector.broadcast %cst_59 : f32 to vector<32x256xf32>
    %148 = arith.maximumf %146, %147 : vector<32x256xf32>
    %c1_60 = arith.constant 1 : index
    %c0_61 = arith.constant 0 : index
    %c0_62 = arith.constant 0 : index
    %149 = vector.load %arg3[%c1_60, %c0_61, %c0_62] : memref<6x32x288xbf16, #tpu.memory_space<vmem>>, vector<1x32x288xbf16>
    %150 = vector.shape_cast %149 : vector<1x32x288xbf16> to vector<32x288xbf16>
    %c0_63 = arith.constant 0 : index
    %c2 = arith.constant 2 : index
    %151 = vector.load %arg4[%c0_63, %c2] : memref<32x7xf32, #tpu.memory_space<vmem>>, vector<32x1xf32>
    %c17_i32_64 = arith.constant 17 : i32
    %152 = tpu.dynamic_rotate %148 by %c17_i32_64 dim 1 : vector<32x256xf32>, i32 -> vector<32x256xf32>
    %153 = vector.broadcast %11 : vector<1x256xf32> to vector<32x256xf32>
    %154 = arith.mulf %152, %153 : vector<32x256xf32>
    %155 = arith.truncf %154 : vector<32x256xf32> to vector<32x256xbf16>
    %c0_65 = arith.constant 0 : index
    %c0_66 = arith.constant 0 : index
    %156 = vector.load %arg8[%c0_65, %c0_66] : memref<288x256xbf16, #tpu.memory_space<vmem>>, vector<32x256xbf16>
    tpu.vector_store %arg8[%c0_65, %c0_66], %155 {strides = array<i32>} : memref<288x256xbf16, #tpu.memory_space<vmem>>, vector<32x256xbf16>,
    %c16_i32_67 = arith.constant 16 : i32
    %157 = tpu.dynamic_rotate %148 by %c16_i32_67 dim 1 : vector<32x256xf32>, i32 -> vector<32x256xf32>
    %158 = vector.broadcast %15 : vector<1x256xf32> to vector<32x256xf32>
    %159 = arith.mulf %157, %158 : vector<32x256xf32>
    %160 = arith.truncf %159 : vector<32x256xf32> to vector<32x256xbf16>
    %c32_68 = arith.constant 32 : index
    %c0_69 = arith.constant 0 : index
    %161 = vector.load %arg8[%c32_68, %c0_69] : memref<288x256xbf16, #tpu.memory_space<vmem>>, vector<32x256xbf16>
    tpu.vector_store %arg8[%c32_68, %c0_69], %160 {strides = array<i32>} : memref<288x256xbf16, #tpu.memory_space<vmem>>, vector<32x256xbf16>,
    %c15_i32_70 = arith.constant 15 : i32
    %162 = tpu.dynamic_rotate %148 by %c15_i32_70 dim 1 : vector<32x256xf32>, i32 -> vector<32x256xf32>
    %163 = vector.broadcast %22 : vector<1x256xf32> to vector<32x256xf32>
    %164 = arith.mulf %162, %163 : vector<32x256xf32>
    %165 = arith.truncf %164 : vector<32x256xf32> to vector<32x256xbf16>
    %c64_71 = arith.constant 64 : index
    %c0_72 = arith.constant 0 : index
    %166 = vector.load %arg8[%c64_71, %c0_72] : memref<288x256xbf16, #tpu.memory_space<vmem>>, vector<32x256xbf16>
    tpu.vector_store %arg8[%c64_71, %c0_72], %165 {strides = array<i32>} : memref<288x256xbf16, #tpu.memory_space<vmem>>, vector<32x256xbf16>,
    %c1_i32_73 = arith.constant 1 : i32
    %167 = tpu.dynamic_rotate %148 by %c1_i32_73 dim 1 : vector<32x256xf32>, i32 -> vector<32x256xf32>
    %168 = vector.broadcast %26 : vector<1x256xf32> to vector<32x256xf32>
    %169 = arith.mulf %167, %168 : vector<32x256xf32>
    %170 = arith.truncf %169 : vector<32x256xf32> to vector<32x256xbf16>
    %c96_74 = arith.constant 96 : index
    %c0_75 = arith.constant 0 : index
    %171 = vector.load %arg8[%c96_74, %c0_75] : memref<288x256xbf16, #tpu.memory_space<vmem>>, vector<32x256xbf16>
    tpu.vector_store %arg8[%c96_74, %c0_75], %170 {strides = array<i32>} : memref<288x256xbf16, #tpu.memory_space<vmem>>, vector<32x256xbf16>,
    %172 = arith.truncf %148 : vector<32x256xf32> to vector<32x256xbf16>
    %c128_76 = arith.constant 128 : index
    %c0_77 = arith.constant 0 : index
    %173 = vector.load %arg8[%c128_76, %c0_77] : memref<288x256xbf16, #tpu.memory_space<vmem>>, vector<32x256xbf16>
    tpu.vector_store %arg8[%c128_76, %c0_77], %172 {strides = array<i32>} : memref<288x256xbf16, #tpu.memory_space<vmem>>, vector<32x256xbf16>,
    %c255_i32_78 = arith.constant 255 : i32
    %174 = tpu.dynamic_rotate %148 by %c255_i32_78 dim 1 : vector<32x256xf32>, i32 -> vector<32x256xf32>
    %175 = vector.broadcast %30 : vector<1x256xf32> to vector<32x256xf32>
    %176 = arith.mulf %174, %175 : vector<32x256xf32>
    %177 = arith.truncf %176 : vector<32x256xf32> to vector<32x256xbf16>
    %c160_79 = arith.constant 160 : index
    %c0_80 = arith.constant 0 : index
    %178 = vector.load %arg8[%c160_79, %c0_80] : memref<288x256xbf16, #tpu.memory_space<vmem>>, vector<32x256xbf16>
    tpu.vector_store %arg8[%c160_79, %c0_80], %177 {strides = array<i32>} : memref<288x256xbf16, #tpu.memory_space<vmem>>, vector<32x256xbf16>,
    %c241_i32_81 = arith.constant 241 : i32
    %179 = tpu.dynamic_rotate %148 by %c241_i32_81 dim 1 : vector<32x256xf32>, i32 -> vector<32x256xf32>
    %180 = vector.broadcast %37 : vector<1x256xf32> to vector<32x256xf32>
    %181 = arith.mulf %179, %180 : vector<32x256xf32>
    %182 = arith.truncf %181 : vector<32x256xf32> to vector<32x256xbf16>
    %c192_82 = arith.constant 192 : index
    %c0_83 = arith.constant 0 : index
    %183 = vector.load %arg8[%c192_82, %c0_83] : memref<288x256xbf16, #tpu.memory_space<vmem>>, vector<32x256xbf16>
    tpu.vector_store %arg8[%c192_82, %c0_83], %182 {strides = array<i32>} : memref<288x256xbf16, #tpu.memory_space<vmem>>, vector<32x256xbf16>,
    %c240_i32_84 = arith.constant 240 : i32
    %184 = tpu.dynamic_rotate %148 by %c240_i32_84 dim 1 : vector<32x256xf32>, i32 -> vector<32x256xf32>
    %185 = vector.broadcast %41 : vector<1x256xf32> to vector<32x256xf32>
    %186 = arith.mulf %184, %185 : vector<32x256xf32>
    %187 = arith.truncf %186 : vector<32x256xf32> to vector<32x256xbf16>
    %c224_85 = arith.constant 224 : index
    %c0_86 = arith.constant 0 : index
    %188 = vector.load %arg8[%c224_85, %c0_86] : memref<288x256xbf16, #tpu.memory_space<vmem>>, vector<32x256xbf16>
    tpu.vector_store %arg8[%c224_85, %c0_86], %187 {strides = array<i32>} : memref<288x256xbf16, #tpu.memory_space<vmem>>, vector<32x256xbf16>,
    %c239_i32_87 = arith.constant 239 : i32
    %189 = tpu.dynamic_rotate %148 by %c239_i32_87 dim 1 : vector<32x256xf32>, i32 -> vector<32x256xf32>
    %190 = vector.broadcast %48 : vector<1x256xf32> to vector<32x256xf32>
    %191 = arith.mulf %189, %190 : vector<32x256xf32>
    %192 = arith.truncf %191 : vector<32x256xf32> to vector<32x256xbf16>
    %c256_88 = arith.constant 256 : index
    %c0_89 = arith.constant 0 : index
    %193 = vector.load %arg8[%c256_88, %c0_89] : memref<288x256xbf16, #tpu.memory_space<vmem>>, vector<32x256xbf16>
    tpu.vector_store %arg8[%c256_88, %c0_89], %192 {strides = array<i32>} : memref<288x256xbf16, #tpu.memory_space<vmem>>, vector<32x256xbf16>,
    %c0_90 = arith.constant 0 : index
    %c0_91 = arith.constant 0 : index
    %194 = vector.load %arg8[%c0_90, %c0_91] : memref<288x256xbf16, #tpu.memory_space<vmem>>, vector<288x256xbf16>
    %cst_92 = arith.constant dense<0.000000e+00> : vector<32x256xf32>
    %195 = tpu.matmul %150, %194, %cst_92 {dimension_numbers = #tpu.dot_dimension_numbers<[1], [0], [0], [1], [0, 0, 1, 1], [], []>} : vector<32x288xbf16>, vector<288x256xbf16>, vector<32x256xf32> -> vector<32x256xf32>
    %196 = vector.broadcast %151 : vector<32x1xf32> to vector<32x256xf32>
    %197 = arith.addf %195, %196 : vector<32x256xf32>
    %cst_93 = arith.constant 0.000000e+00 : f32
    %198 = vector.broadcast %cst_93 : f32 to vector<32x256xf32>
    %199 = arith.maximumf %197, %198 : vector<32x256xf32>
    %c2_94 = arith.constant 2 : index
    %c0_95 = arith.constant 0 : index
    %c0_96 = arith.constant 0 : index
    %200 = vector.load %arg3[%c2_94, %c0_95, %c0_96] : memref<6x32x288xbf16, #tpu.memory_space<vmem>>, vector<1x32x288xbf16>
    %201 = vector.shape_cast %200 : vector<1x32x288xbf16> to vector<32x288xbf16>
    %c0_97 = arith.constant 0 : index
    %c3 = arith.constant 3 : index
    %202 = vector.load %arg4[%c0_97, %c3] : memref<32x7xf32, #tpu.memory_space<vmem>>, vector<32x1xf32>
    %c17_i32_98 = arith.constant 17 : i32
    %203 = tpu.dynamic_rotate %199 by %c17_i32_98 dim 1 : vector<32x256xf32>, i32 -> vector<32x256xf32>
    %204 = vector.broadcast %11 : vector<1x256xf32> to vector<32x256xf32>
    %205 = arith.mulf %203, %204 : vector<32x256xf32>
    %206 = arith.truncf %205 : vector<32x256xf32> to vector<32x256xbf16>
    %c0_99 = arith.constant 0 : index
    %c0_100 = arith.constant 0 : index
    %207 = vector.load %arg8[%c0_99, %c0_100] : memref<288x256xbf16, #tpu.memory_space<vmem>>, vector<32x256xbf16>
    tpu.vector_store %arg8[%c0_99, %c0_100], %206 {strides = array<i32>} : memref<288x256xbf16, #tpu.memory_space<vmem>>, vector<32x256xbf16>,
    %c16_i32_101 = arith.constant 16 : i32
    %208 = tpu.dynamic_rotate %199 by %c16_i32_101 dim 1 : vector<32x256xf32>, i32 -> vector<32x256xf32>
    %209 = vector.broadcast %15 : vector<1x256xf32> to vector<32x256xf32>
    %210 = arith.mulf %208, %209 : vector<32x256xf32>
    %211 = arith.truncf %210 : vector<32x256xf32> to vector<32x256xbf16>
    %c32_102 = arith.constant 32 : index
    %c0_103 = arith.constant 0 : index
    %212 = vector.load %arg8[%c32_102, %c0_103] : memref<288x256xbf16, #tpu.memory_space<vmem>>, vector<32x256xbf16>
    tpu.vector_store %arg8[%c32_102, %c0_103], %211 {strides = array<i32>} : memref<288x256xbf16, #tpu.memory_space<vmem>>, vector<32x256xbf16>,
    %c15_i32_104 = arith.constant 15 : i32
    %213 = tpu.dynamic_rotate %199 by %c15_i32_104 dim 1 : vector<32x256xf32>, i32 -> vector<32x256xf32>
    %214 = vector.broadcast %22 : vector<1x256xf32> to vector<32x256xf32>
    %215 = arith.mulf %213, %214 : vector<32x256xf32>
    %216 = arith.truncf %215 : vector<32x256xf32> to vector<32x256xbf16>
    %c64_105 = arith.constant 64 : index
    %c0_106 = arith.constant 0 : index
    %217 = vector.load %arg8[%c64_105, %c0_106] : memref<288x256xbf16, #tpu.memory_space<vmem>>, vector<32x256xbf16>
    tpu.vector_store %arg8[%c64_105, %c0_106], %216 {strides = array<i32>} : memref<288x256xbf16, #tpu.memory_space<vmem>>, vector<32x256xbf16>,
    %c1_i32_107 = arith.constant 1 : i32
    %218 = tpu.dynamic_rotate %199 by %c1_i32_107 dim 1 : vector<32x256xf32>, i32 -> vector<32x256xf32>
    %219 = vector.broadcast %26 : vector<1x256xf32> to vector<32x256xf32>
    %220 = arith.mulf %218, %219 : vector<32x256xf32>
    %221 = arith.truncf %220 : vector<32x256xf32> to vector<32x256xbf16>
    %c96_108 = arith.constant 96 : index
    %c0_109 = arith.constant 0 : index
    %222 = vector.load %arg8[%c96_108, %c0_109] : memref<288x256xbf16, #tpu.memory_space<vmem>>, vector<32x256xbf16>
    tpu.vector_store %arg8[%c96_108, %c0_109], %221 {strides = array<i32>} : memref<288x256xbf16, #tpu.memory_space<vmem>>, vector<32x256xbf16>,
    %223 = arith.truncf %199 : vector<32x256xf32> to vector<32x256xbf16>
    %c128_110 = arith.constant 128 : index
    %c0_111 = arith.constant 0 : index
    %224 = vector.load %arg8[%c128_110, %c0_111] : memref<288x256xbf16, #tpu.memory_space<vmem>>, vector<32x256xbf16>
    tpu.vector_store %arg8[%c128_110, %c0_111], %223 {strides = array<i32>} : memref<288x256xbf16, #tpu.memory_space<vmem>>, vector<32x256xbf16>,
    %c255_i32_112 = arith.constant 255 : i32
    %225 = tpu.dynamic_rotate %199 by %c255_i32_112 dim 1 : vector<32x256xf32>, i32 -> vector<32x256xf32>
    %226 = vector.broadcast %30 : vector<1x256xf32> to vector<32x256xf32>
    %227 = arith.mulf %225, %226 : vector<32x256xf32>
    %228 = arith.truncf %227 : vector<32x256xf32> to vector<32x256xbf16>
    %c160_113 = arith.constant 160 : index
    %c0_114 = arith.constant 0 : index
    %229 = vector.load %arg8[%c160_113, %c0_114] : memref<288x256xbf16, #tpu.memory_space<vmem>>, vector<32x256xbf16>
    tpu.vector_store %arg8[%c160_113, %c0_114], %228 {strides = array<i32>} : memref<288x256xbf16, #tpu.memory_space<vmem>>, vector<32x256xbf16>,
    %c241_i32_115 = arith.constant 241 : i32
    %230 = tpu.dynamic_rotate %199 by %c241_i32_115 dim 1 : vector<32x256xf32>, i32 -> vector<32x256xf32>
    %231 = vector.broadcast %37 : vector<1x256xf32> to vector<32x256xf32>
    %232 = arith.mulf %230, %231 : vector<32x256xf32>
    %233 = arith.truncf %232 : vector<32x256xf32> to vector<32x256xbf16>
    %c192_116 = arith.constant 192 : index
    %c0_117 = arith.constant 0 : index
    %234 = vector.load %arg8[%c192_116, %c0_117] : memref<288x256xbf16, #tpu.memory_space<vmem>>, vector<32x256xbf16>
    tpu.vector_store %arg8[%c192_116, %c0_117], %233 {strides = array<i32>} : memref<288x256xbf16, #tpu.memory_space<vmem>>, vector<32x256xbf16>,
    %c240_i32_118 = arith.constant 240 : i32
    %235 = tpu.dynamic_rotate %199 by %c240_i32_118 dim 1 : vector<32x256xf32>, i32 -> vector<32x256xf32>
    %236 = vector.broadcast %41 : vector<1x256xf32> to vector<32x256xf32>
    %237 = arith.mulf %235, %236 : vector<32x256xf32>
    %238 = arith.truncf %237 : vector<32x256xf32> to vector<32x256xbf16>
    %c224_119 = arith.constant 224 : index
    %c0_120 = arith.constant 0 : index
    %239 = vector.load %arg8[%c224_119, %c0_120] : memref<288x256xbf16, #tpu.memory_space<vmem>>, vector<32x256xbf16>
    tpu.vector_store %arg8[%c224_119, %c0_120], %238 {strides = array<i32>} : memref<288x256xbf16, #tpu.memory_space<vmem>>, vector<32x256xbf16>,
    %c239_i32_121 = arith.constant 239 : i32
    %240 = tpu.dynamic_rotate %199 by %c239_i32_121 dim 1 : vector<32x256xf32>, i32 -> vector<32x256xf32>
    %241 = vector.broadcast %48 : vector<1x256xf32> to vector<32x256xf32>
    %242 = arith.mulf %240, %241 : vector<32x256xf32>
    %243 = arith.truncf %242 : vector<32x256xf32> to vector<32x256xbf16>
    %c256_122 = arith.constant 256 : index
    %c0_123 = arith.constant 0 : index
    %244 = vector.load %arg8[%c256_122, %c0_123] : memref<288x256xbf16, #tpu.memory_space<vmem>>, vector<32x256xbf16>
    tpu.vector_store %arg8[%c256_122, %c0_123], %243 {strides = array<i32>} : memref<288x256xbf16, #tpu.memory_space<vmem>>, vector<32x256xbf16>,
    %c0_124 = arith.constant 0 : index
    %c0_125 = arith.constant 0 : index
    %245 = vector.load %arg8[%c0_124, %c0_125] : memref<288x256xbf16, #tpu.memory_space<vmem>>, vector<288x256xbf16>
    %cst_126 = arith.constant dense<0.000000e+00> : vector<32x256xf32>
    %246 = tpu.matmul %201, %245, %cst_126 {dimension_numbers = #tpu.dot_dimension_numbers<[1], [0], [0], [1], [0, 0, 1, 1], [], []>} : vector<32x288xbf16>, vector<288x256xbf16>, vector<32x256xf32> -> vector<32x256xf32>
    %247 = vector.broadcast %202 : vector<32x1xf32> to vector<32x256xf32>
    %248 = arith.addf %246, %247 : vector<32x256xf32>
    %cst_127 = arith.constant 0.000000e+00 : f32
    %249 = vector.broadcast %cst_127 : f32 to vector<32x256xf32>
    %250 = arith.maximumf %248, %249 : vector<32x256xf32>
    %c3_128 = arith.constant 3 : index
    %c0_129 = arith.constant 0 : index
    %c0_130 = arith.constant 0 : index
    %251 = vector.load %arg3[%c3_128, %c0_129, %c0_130] : memref<6x32x288xbf16, #tpu.memory_space<vmem>>, vector<1x32x288xbf16>
    %252 = vector.shape_cast %251 : vector<1x32x288xbf16> to vector<32x288xbf16>
    %c0_131 = arith.constant 0 : index
    %c4 = arith.constant 4 : index
    %253 = vector.load %arg4[%c0_131, %c4] : memref<32x7xf32, #tpu.memory_space<vmem>>, vector<32x1xf32>
    %c17_i32_132 = arith.constant 17 : i32
    %254 = tpu.dynamic_rotate %250 by %c17_i32_132 dim 1 : vector<32x256xf32>, i32 -> vector<32x256xf32>
    %255 = vector.broadcast %11 : vector<1x256xf32> to vector<32x256xf32>
    %256 = arith.mulf %254, %255 : vector<32x256xf32>
    %257 = arith.truncf %256 : vector<32x256xf32> to vector<32x256xbf16>
    %c0_133 = arith.constant 0 : index
    %c0_134 = arith.constant 0 : index
    %258 = vector.load %arg8[%c0_133, %c0_134] : memref<288x256xbf16, #tpu.memory_space<vmem>>, vector<32x256xbf16>
    tpu.vector_store %arg8[%c0_133, %c0_134], %257 {strides = array<i32>} : memref<288x256xbf16, #tpu.memory_space<vmem>>, vector<32x256xbf16>,
    %c16_i32_135 = arith.constant 16 : i32
    %259 = tpu.dynamic_rotate %250 by %c16_i32_135 dim 1 : vector<32x256xf32>, i32 -> vector<32x256xf32>
    %260 = vector.broadcast %15 : vector<1x256xf32> to vector<32x256xf32>
    %261 = arith.mulf %259, %260 : vector<32x256xf32>
    %262 = arith.truncf %261 : vector<32x256xf32> to vector<32x256xbf16>
    %c32_136 = arith.constant 32 : index
    %c0_137 = arith.constant 0 : index
    %263 = vector.load %arg8[%c32_136, %c0_137] : memref<288x256xbf16, #tpu.memory_space<vmem>>, vector<32x256xbf16>
    tpu.vector_store %arg8[%c32_136, %c0_137], %262 {strides = array<i32>} : memref<288x256xbf16, #tpu.memory_space<vmem>>, vector<32x256xbf16>,
    %c15_i32_138 = arith.constant 15 : i32
    %264 = tpu.dynamic_rotate %250 by %c15_i32_138 dim 1 : vector<32x256xf32>, i32 -> vector<32x256xf32>
    %265 = vector.broadcast %22 : vector<1x256xf32> to vector<32x256xf32>
    %266 = arith.mulf %264, %265 : vector<32x256xf32>
    %267 = arith.truncf %266 : vector<32x256xf32> to vector<32x256xbf16>
    %c64_139 = arith.constant 64 : index
    %c0_140 = arith.constant 0 : index
    %268 = vector.load %arg8[%c64_139, %c0_140] : memref<288x256xbf16, #tpu.memory_space<vmem>>, vector<32x256xbf16>
    tpu.vector_store %arg8[%c64_139, %c0_140], %267 {strides = array<i32>} : memref<288x256xbf16, #tpu.memory_space<vmem>>, vector<32x256xbf16>,
    %c1_i32_141 = arith.constant 1 : i32
    %269 = tpu.dynamic_rotate %250 by %c1_i32_141 dim 1 : vector<32x256xf32>, i32 -> vector<32x256xf32>
    %270 = vector.broadcast %26 : vector<1x256xf32> to vector<32x256xf32>
    %271 = arith.mulf %269, %270 : vector<32x256xf32>
    %272 = arith.truncf %271 : vector<32x256xf32> to vector<32x256xbf16>
    %c96_142 = arith.constant 96 : index
    %c0_143 = arith.constant 0 : index
    %273 = vector.load %arg8[%c96_142, %c0_143] : memref<288x256xbf16, #tpu.memory_space<vmem>>, vector<32x256xbf16>
    tpu.vector_store %arg8[%c96_142, %c0_143], %272 {strides = array<i32>} : memref<288x256xbf16, #tpu.memory_space<vmem>>, vector<32x256xbf16>,
    %274 = arith.truncf %250 : vector<32x256xf32> to vector<32x256xbf16>
    %c128_144 = arith.constant 128 : index
    %c0_145 = arith.constant 0 : index
    %275 = vector.load %arg8[%c128_144, %c0_145] : memref<288x256xbf16, #tpu.memory_space<vmem>>, vector<32x256xbf16>
    tpu.vector_store %arg8[%c128_144, %c0_145], %274 {strides = array<i32>} : memref<288x256xbf16, #tpu.memory_space<vmem>>, vector<32x256xbf16>,
    %c255_i32_146 = arith.constant 255 : i32
    %276 = tpu.dynamic_rotate %250 by %c255_i32_146 dim 1 : vector<32x256xf32>, i32 -> vector<32x256xf32>
    %277 = vector.broadcast %30 : vector<1x256xf32> to vector<32x256xf32>
    %278 = arith.mulf %276, %277 : vector<32x256xf32>
    %279 = arith.truncf %278 : vector<32x256xf32> to vector<32x256xbf16>
    %c160_147 = arith.constant 160 : index
    %c0_148 = arith.constant 0 : index
    %280 = vector.load %arg8[%c160_147, %c0_148] : memref<288x256xbf16, #tpu.memory_space<vmem>>, vector<32x256xbf16>
    tpu.vector_store %arg8[%c160_147, %c0_148], %279 {strides = array<i32>} : memref<288x256xbf16, #tpu.memory_space<vmem>>, vector<32x256xbf16>,
    %c241_i32_149 = arith.constant 241 : i32
    %281 = tpu.dynamic_rotate %250 by %c241_i32_149 dim 1 : vector<32x256xf32>, i32 -> vector<32x256xf32>
    %282 = vector.broadcast %37 : vector<1x256xf32> to vector<32x256xf32>
    %283 = arith.mulf %281, %282 : vector<32x256xf32>
    %284 = arith.truncf %283 : vector<32x256xf32> to vector<32x256xbf16>
    %c192_150 = arith.constant 192 : index
    %c0_151 = arith.constant 0 : index
    %285 = vector.load %arg8[%c192_150, %c0_151] : memref<288x256xbf16, #tpu.memory_space<vmem>>, vector<32x256xbf16>
    tpu.vector_store %arg8[%c192_150, %c0_151], %284 {strides = array<i32>} : memref<288x256xbf16, #tpu.memory_space<vmem>>, vector<32x256xbf16>,
    %c240_i32_152 = arith.constant 240 : i32
    %286 = tpu.dynamic_rotate %250 by %c240_i32_152 dim 1 : vector<32x256xf32>, i32 -> vector<32x256xf32>
    %287 = vector.broadcast %41 : vector<1x256xf32> to vector<32x256xf32>
    %288 = arith.mulf %286, %287 : vector<32x256xf32>
    %289 = arith.truncf %288 : vector<32x256xf32> to vector<32x256xbf16>
    %c224_153 = arith.constant 224 : index
    %c0_154 = arith.constant 0 : index
    %290 = vector.load %arg8[%c224_153, %c0_154] : memref<288x256xbf16, #tpu.memory_space<vmem>>, vector<32x256xbf16>
    tpu.vector_store %arg8[%c224_153, %c0_154], %289 {strides = array<i32>} : memref<288x256xbf16, #tpu.memory_space<vmem>>, vector<32x256xbf16>,
    %c239_i32_155 = arith.constant 239 : i32
    %291 = tpu.dynamic_rotate %250 by %c239_i32_155 dim 1 : vector<32x256xf32>, i32 -> vector<32x256xf32>
    %292 = vector.broadcast %48 : vector<1x256xf32> to vector<32x256xf32>
    %293 = arith.mulf %291, %292 : vector<32x256xf32>
    %294 = arith.truncf %293 : vector<32x256xf32> to vector<32x256xbf16>
    %c256_156 = arith.constant 256 : index
    %c0_157 = arith.constant 0 : index
    %295 = vector.load %arg8[%c256_156, %c0_157] : memref<288x256xbf16, #tpu.memory_space<vmem>>, vector<32x256xbf16>
    tpu.vector_store %arg8[%c256_156, %c0_157], %294 {strides = array<i32>} : memref<288x256xbf16, #tpu.memory_space<vmem>>, vector<32x256xbf16>,
    %c0_158 = arith.constant 0 : index
    %c0_159 = arith.constant 0 : index
    %296 = vector.load %arg8[%c0_158, %c0_159] : memref<288x256xbf16, #tpu.memory_space<vmem>>, vector<288x256xbf16>
    %cst_160 = arith.constant dense<0.000000e+00> : vector<32x256xf32>
    %297 = tpu.matmul %252, %296, %cst_160 {dimension_numbers = #tpu.dot_dimension_numbers<[1], [0], [0], [1], [0, 0, 1, 1], [], []>} : vector<32x288xbf16>, vector<288x256xbf16>, vector<32x256xf32> -> vector<32x256xf32>
    %298 = vector.broadcast %253 : vector<32x1xf32> to vector<32x256xf32>
    %299 = arith.addf %297, %298 : vector<32x256xf32>
    %cst_161 = arith.constant 0.000000e+00 : f32
    %300 = vector.broadcast %cst_161 : f32 to vector<32x256xf32>
    %301 = arith.maximumf %299, %300 : vector<32x256xf32>
    %c4_162 = arith.constant 4 : index
    %c0_163 = arith.constant 0 : index
    %c0_164 = arith.constant 0 : index
    %302 = vector.load %arg3[%c4_162, %c0_163, %c0_164] : memref<6x32x288xbf16, #tpu.memory_space<vmem>>, vector<1x32x288xbf16>
    %303 = vector.shape_cast %302 : vector<1x32x288xbf16> to vector<32x288xbf16>
    %c0_165 = arith.constant 0 : index
    %c5 = arith.constant 5 : index
    %304 = vector.load %arg4[%c0_165, %c5] : memref<32x7xf32, #tpu.memory_space<vmem>>, vector<32x1xf32>
    %c17_i32_166 = arith.constant 17 : i32
    %305 = tpu.dynamic_rotate %301 by %c17_i32_166 dim 1 : vector<32x256xf32>, i32 -> vector<32x256xf32>
    %306 = vector.broadcast %11 : vector<1x256xf32> to vector<32x256xf32>
    %307 = arith.mulf %305, %306 : vector<32x256xf32>
    %308 = arith.truncf %307 : vector<32x256xf32> to vector<32x256xbf16>
    %c0_167 = arith.constant 0 : index
    %c0_168 = arith.constant 0 : index
    %309 = vector.load %arg8[%c0_167, %c0_168] : memref<288x256xbf16, #tpu.memory_space<vmem>>, vector<32x256xbf16>
    tpu.vector_store %arg8[%c0_167, %c0_168], %308 {strides = array<i32>} : memref<288x256xbf16, #tpu.memory_space<vmem>>, vector<32x256xbf16>,
    %c16_i32_169 = arith.constant 16 : i32
    %310 = tpu.dynamic_rotate %301 by %c16_i32_169 dim 1 : vector<32x256xf32>, i32 -> vector<32x256xf32>
    %311 = vector.broadcast %15 : vector<1x256xf32> to vector<32x256xf32>
    %312 = arith.mulf %310, %311 : vector<32x256xf32>
    %313 = arith.truncf %312 : vector<32x256xf32> to vector<32x256xbf16>
    %c32_170 = arith.constant 32 : index
    %c0_171 = arith.constant 0 : index
    %314 = vector.load %arg8[%c32_170, %c0_171] : memref<288x256xbf16, #tpu.memory_space<vmem>>, vector<32x256xbf16>
    tpu.vector_store %arg8[%c32_170, %c0_171], %313 {strides = array<i32>} : memref<288x256xbf16, #tpu.memory_space<vmem>>, vector<32x256xbf16>,
    %c15_i32_172 = arith.constant 15 : i32
    %315 = tpu.dynamic_rotate %301 by %c15_i32_172 dim 1 : vector<32x256xf32>, i32 -> vector<32x256xf32>
    %316 = vector.broadcast %22 : vector<1x256xf32> to vector<32x256xf32>
    %317 = arith.mulf %315, %316 : vector<32x256xf32>
    %318 = arith.truncf %317 : vector<32x256xf32> to vector<32x256xbf16>
    %c64_173 = arith.constant 64 : index
    %c0_174 = arith.constant 0 : index
    %319 = vector.load %arg8[%c64_173, %c0_174] : memref<288x256xbf16, #tpu.memory_space<vmem>>, vector<32x256xbf16>
    tpu.vector_store %arg8[%c64_173, %c0_174], %318 {strides = array<i32>} : memref<288x256xbf16, #tpu.memory_space<vmem>>, vector<32x256xbf16>,
    %c1_i32_175 = arith.constant 1 : i32
    %320 = tpu.dynamic_rotate %301 by %c1_i32_175 dim 1 : vector<32x256xf32>, i32 -> vector<32x256xf32>
    %321 = vector.broadcast %26 : vector<1x256xf32> to vector<32x256xf32>
    %322 = arith.mulf %320, %321 : vector<32x256xf32>
    %323 = arith.truncf %322 : vector<32x256xf32> to vector<32x256xbf16>
    %c96_176 = arith.constant 96 : index
    %c0_177 = arith.constant 0 : index
    %324 = vector.load %arg8[%c96_176, %c0_177] : memref<288x256xbf16, #tpu.memory_space<vmem>>, vector<32x256xbf16>
    tpu.vector_store %arg8[%c96_176, %c0_177], %323 {strides = array<i32>} : memref<288x256xbf16, #tpu.memory_space<vmem>>, vector<32x256xbf16>,
    %325 = arith.truncf %301 : vector<32x256xf32> to vector<32x256xbf16>
    %c128_178 = arith.constant 128 : index
    %c0_179 = arith.constant 0 : index
    %326 = vector.load %arg8[%c128_178, %c0_179] : memref<288x256xbf16, #tpu.memory_space<vmem>>, vector<32x256xbf16>
    tpu.vector_store %arg8[%c128_178, %c0_179], %325 {strides = array<i32>} : memref<288x256xbf16, #tpu.memory_space<vmem>>, vector<32x256xbf16>,
    %c255_i32_180 = arith.constant 255 : i32
    %327 = tpu.dynamic_rotate %301 by %c255_i32_180 dim 1 : vector<32x256xf32>, i32 -> vector<32x256xf32>
    %328 = vector.broadcast %30 : vector<1x256xf32> to vector<32x256xf32>
    %329 = arith.mulf %327, %328 : vector<32x256xf32>
    %330 = arith.truncf %329 : vector<32x256xf32> to vector<32x256xbf16>
    %c160_181 = arith.constant 160 : index
    %c0_182 = arith.constant 0 : index
    %331 = vector.load %arg8[%c160_181, %c0_182] : memref<288x256xbf16, #tpu.memory_space<vmem>>, vector<32x256xbf16>
    tpu.vector_store %arg8[%c160_181, %c0_182], %330 {strides = array<i32>} : memref<288x256xbf16, #tpu.memory_space<vmem>>, vector<32x256xbf16>,
    %c241_i32_183 = arith.constant 241 : i32
    %332 = tpu.dynamic_rotate %301 by %c241_i32_183 dim 1 : vector<32x256xf32>, i32 -> vector<32x256xf32>
    %333 = vector.broadcast %37 : vector<1x256xf32> to vector<32x256xf32>
    %334 = arith.mulf %332, %333 : vector<32x256xf32>
    %335 = arith.truncf %334 : vector<32x256xf32> to vector<32x256xbf16>
    %c192_184 = arith.constant 192 : index
    %c0_185 = arith.constant 0 : index
    %336 = vector.load %arg8[%c192_184, %c0_185] : memref<288x256xbf16, #tpu.memory_space<vmem>>, vector<32x256xbf16>
    tpu.vector_store %arg8[%c192_184, %c0_185], %335 {strides = array<i32>} : memref<288x256xbf16, #tpu.memory_space<vmem>>, vector<32x256xbf16>,
    %c240_i32_186 = arith.constant 240 : i32
    %337 = tpu.dynamic_rotate %301 by %c240_i32_186 dim 1 : vector<32x256xf32>, i32 -> vector<32x256xf32>
    %338 = vector.broadcast %41 : vector<1x256xf32> to vector<32x256xf32>
    %339 = arith.mulf %337, %338 : vector<32x256xf32>
    %340 = arith.truncf %339 : vector<32x256xf32> to vector<32x256xbf16>
    %c224_187 = arith.constant 224 : index
    %c0_188 = arith.constant 0 : index
    %341 = vector.load %arg8[%c224_187, %c0_188] : memref<288x256xbf16, #tpu.memory_space<vmem>>, vector<32x256xbf16>
    tpu.vector_store %arg8[%c224_187, %c0_188], %340 {strides = array<i32>} : memref<288x256xbf16, #tpu.memory_space<vmem>>, vector<32x256xbf16>,
    %c239_i32_189 = arith.constant 239 : i32
    %342 = tpu.dynamic_rotate %301 by %c239_i32_189 dim 1 : vector<32x256xf32>, i32 -> vector<32x256xf32>
    %343 = vector.broadcast %48 : vector<1x256xf32> to vector<32x256xf32>
    %344 = arith.mulf %342, %343 : vector<32x256xf32>
    %345 = arith.truncf %344 : vector<32x256xf32> to vector<32x256xbf16>
    %c256_190 = arith.constant 256 : index
    %c0_191 = arith.constant 0 : index
    %346 = vector.load %arg8[%c256_190, %c0_191] : memref<288x256xbf16, #tpu.memory_space<vmem>>, vector<32x256xbf16>
    tpu.vector_store %arg8[%c256_190, %c0_191], %345 {strides = array<i32>} : memref<288x256xbf16, #tpu.memory_space<vmem>>, vector<32x256xbf16>,
    %c0_192 = arith.constant 0 : index
    %c0_193 = arith.constant 0 : index
    %347 = vector.load %arg8[%c0_192, %c0_193] : memref<288x256xbf16, #tpu.memory_space<vmem>>, vector<288x256xbf16>
    %cst_194 = arith.constant dense<0.000000e+00> : vector<32x256xf32>
    %348 = tpu.matmul %303, %347, %cst_194 {dimension_numbers = #tpu.dot_dimension_numbers<[1], [0], [0], [1], [0, 0, 1, 1], [], []>} : vector<32x288xbf16>, vector<288x256xbf16>, vector<32x256xf32> -> vector<32x256xf32>
    %349 = vector.broadcast %304 : vector<32x1xf32> to vector<32x256xf32>
    %350 = arith.addf %348, %349 : vector<32x256xf32>
    %cst_195 = arith.constant 0.000000e+00 : f32
    %351 = vector.broadcast %cst_195 : f32 to vector<32x256xf32>
    %352 = arith.maximumf %350, %351 : vector<32x256xf32>
    %c5_196 = arith.constant 5 : index
    %c0_197 = arith.constant 0 : index
    %c0_198 = arith.constant 0 : index
    %353 = vector.load %arg3[%c5_196, %c0_197, %c0_198] : memref<6x32x288xbf16, #tpu.memory_space<vmem>>, vector<1x32x288xbf16>
    %354 = vector.shape_cast %353 : vector<1x32x288xbf16> to vector<32x288xbf16>
    %c0_199 = arith.constant 0 : index
    %c6 = arith.constant 6 : index
    %355 = vector.load %arg4[%c0_199, %c6] : memref<32x7xf32, #tpu.memory_space<vmem>>, vector<32x1xf32>
    %c17_i32_200 = arith.constant 17 : i32
    %356 = tpu.dynamic_rotate %352 by %c17_i32_200 dim 1 : vector<32x256xf32>, i32 -> vector<32x256xf32>
    %357 = vector.broadcast %11 : vector<1x256xf32> to vector<32x256xf32>
    %358 = arith.mulf %356, %357 : vector<32x256xf32>
    %359 = arith.truncf %358 : vector<32x256xf32> to vector<32x256xbf16>
    %c0_201 = arith.constant 0 : index
    %c0_202 = arith.constant 0 : index
    %360 = vector.load %arg8[%c0_201, %c0_202] : memref<288x256xbf16, #tpu.memory_space<vmem>>, vector<32x256xbf16>
    tpu.vector_store %arg8[%c0_201, %c0_202], %359 {strides = array<i32>} : memref<288x256xbf16, #tpu.memory_space<vmem>>, vector<32x256xbf16>,
    %c16_i32_203 = arith.constant 16 : i32
    %361 = tpu.dynamic_rotate %352 by %c16_i32_203 dim 1 : vector<32x256xf32>, i32 -> vector<32x256xf32>
    %362 = vector.broadcast %15 : vector<1x256xf32> to vector<32x256xf32>
    %363 = arith.mulf %361, %362 : vector<32x256xf32>
    %364 = arith.truncf %363 : vector<32x256xf32> to vector<32x256xbf16>
    %c32_204 = arith.constant 32 : index
    %c0_205 = arith.constant 0 : index
    %365 = vector.load %arg8[%c32_204, %c0_205] : memref<288x256xbf16, #tpu.memory_space<vmem>>, vector<32x256xbf16>
    tpu.vector_store %arg8[%c32_204, %c0_205], %364 {strides = array<i32>} : memref<288x256xbf16, #tpu.memory_space<vmem>>, vector<32x256xbf16>,
    %c15_i32_206 = arith.constant 15 : i32
    %366 = tpu.dynamic_rotate %352 by %c15_i32_206 dim 1 : vector<32x256xf32>, i32 -> vector<32x256xf32>
    %367 = vector.broadcast %22 : vector<1x256xf32> to vector<32x256xf32>
    %368 = arith.mulf %366, %367 : vector<32x256xf32>
    %369 = arith.truncf %368 : vector<32x256xf32> to vector<32x256xbf16>
    %c64_207 = arith.constant 64 : index
    %c0_208 = arith.constant 0 : index
    %370 = vector.load %arg8[%c64_207, %c0_208] : memref<288x256xbf16, #tpu.memory_space<vmem>>, vector<32x256xbf16>
    tpu.vector_store %arg8[%c64_207, %c0_208], %369 {strides = array<i32>} : memref<288x256xbf16, #tpu.memory_space<vmem>>, vector<32x256xbf16>,
    %c1_i32_209 = arith.constant 1 : i32
    %371 = tpu.dynamic_rotate %352 by %c1_i32_209 dim 1 : vector<32x256xf32>, i32 -> vector<32x256xf32>
    %372 = vector.broadcast %26 : vector<1x256xf32> to vector<32x256xf32>
    %373 = arith.mulf %371, %372 : vector<32x256xf32>
    %374 = arith.truncf %373 : vector<32x256xf32> to vector<32x256xbf16>
    %c96_210 = arith.constant 96 : index
    %c0_211 = arith.constant 0 : index
    %375 = vector.load %arg8[%c96_210, %c0_211] : memref<288x256xbf16, #tpu.memory_space<vmem>>, vector<32x256xbf16>
    tpu.vector_store %arg8[%c96_210, %c0_211], %374 {strides = array<i32>} : memref<288x256xbf16, #tpu.memory_space<vmem>>, vector<32x256xbf16>,
    %376 = arith.truncf %352 : vector<32x256xf32> to vector<32x256xbf16>
    %c128_212 = arith.constant 128 : index
    %c0_213 = arith.constant 0 : index
    %377 = vector.load %arg8[%c128_212, %c0_213] : memref<288x256xbf16, #tpu.memory_space<vmem>>, vector<32x256xbf16>
    tpu.vector_store %arg8[%c128_212, %c0_213], %376 {strides = array<i32>} : memref<288x256xbf16, #tpu.memory_space<vmem>>, vector<32x256xbf16>,
    %c255_i32_214 = arith.constant 255 : i32
    %378 = tpu.dynamic_rotate %352 by %c255_i32_214 dim 1 : vector<32x256xf32>, i32 -> vector<32x256xf32>
    %379 = vector.broadcast %30 : vector<1x256xf32> to vector<32x256xf32>
    %380 = arith.mulf %378, %379 : vector<32x256xf32>
    %381 = arith.truncf %380 : vector<32x256xf32> to vector<32x256xbf16>
    %c160_215 = arith.constant 160 : index
    %c0_216 = arith.constant 0 : index
    %382 = vector.load %arg8[%c160_215, %c0_216] : memref<288x256xbf16, #tpu.memory_space<vmem>>, vector<32x256xbf16>
    tpu.vector_store %arg8[%c160_215, %c0_216], %381 {strides = array<i32>} : memref<288x256xbf16, #tpu.memory_space<vmem>>, vector<32x256xbf16>,
    %c241_i32_217 = arith.constant 241 : i32
    %383 = tpu.dynamic_rotate %352 by %c241_i32_217 dim 1 : vector<32x256xf32>, i32 -> vector<32x256xf32>
    %384 = vector.broadcast %37 : vector<1x256xf32> to vector<32x256xf32>
    %385 = arith.mulf %383, %384 : vector<32x256xf32>
    %386 = arith.truncf %385 : vector<32x256xf32> to vector<32x256xbf16>
    %c192_218 = arith.constant 192 : index
    %c0_219 = arith.constant 0 : index
    %387 = vector.load %arg8[%c192_218, %c0_219] : memref<288x256xbf16, #tpu.memory_space<vmem>>, vector<32x256xbf16>
    tpu.vector_store %arg8[%c192_218, %c0_219], %386 {strides = array<i32>} : memref<288x256xbf16, #tpu.memory_space<vmem>>, vector<32x256xbf16>,
    %c240_i32_220 = arith.constant 240 : i32
    %388 = tpu.dynamic_rotate %352 by %c240_i32_220 dim 1 : vector<32x256xf32>, i32 -> vector<32x256xf32>
    %389 = vector.broadcast %41 : vector<1x256xf32> to vector<32x256xf32>
    %390 = arith.mulf %388, %389 : vector<32x256xf32>
    %391 = arith.truncf %390 : vector<32x256xf32> to vector<32x256xbf16>
    %c224_221 = arith.constant 224 : index
    %c0_222 = arith.constant 0 : index
    %392 = vector.load %arg8[%c224_221, %c0_222] : memref<288x256xbf16, #tpu.memory_space<vmem>>, vector<32x256xbf16>
    tpu.vector_store %arg8[%c224_221, %c0_222], %391 {strides = array<i32>} : memref<288x256xbf16, #tpu.memory_space<vmem>>, vector<32x256xbf16>,
    %c239_i32_223 = arith.constant 239 : i32
    %393 = tpu.dynamic_rotate %352 by %c239_i32_223 dim 1 : vector<32x256xf32>, i32 -> vector<32x256xf32>
    %394 = vector.broadcast %48 : vector<1x256xf32> to vector<32x256xf32>
    %395 = arith.mulf %393, %394 : vector<32x256xf32>
    %396 = arith.truncf %395 : vector<32x256xf32> to vector<32x256xbf16>
    %c256_224 = arith.constant 256 : index
    %c0_225 = arith.constant 0 : index
    %397 = vector.load %arg8[%c256_224, %c0_225] : memref<288x256xbf16, #tpu.memory_space<vmem>>, vector<32x256xbf16>
    tpu.vector_store %arg8[%c256_224, %c0_225], %396 {strides = array<i32>} : memref<288x256xbf16, #tpu.memory_space<vmem>>, vector<32x256xbf16>,
    %c0_226 = arith.constant 0 : index
    %c0_227 = arith.constant 0 : index
    %398 = vector.load %arg8[%c0_226, %c0_227] : memref<288x256xbf16, #tpu.memory_space<vmem>>, vector<288x256xbf16>
    %cst_228 = arith.constant dense<0.000000e+00> : vector<32x256xf32>
    %399 = tpu.matmul %354, %398, %cst_228 {dimension_numbers = #tpu.dot_dimension_numbers<[1], [0], [0], [1], [0, 0, 1, 1], [], []>} : vector<32x288xbf16>, vector<288x256xbf16>, vector<32x256xf32> -> vector<32x256xf32>
    %400 = vector.broadcast %355 : vector<32x1xf32> to vector<32x256xf32>
    %401 = arith.addf %399, %400 : vector<32x256xf32>
    %cst_229 = arith.constant 0.000000e+00 : f32
    %402 = vector.broadcast %cst_229 : f32 to vector<32x256xf32>
    %403 = arith.maximumf %401, %402 : vector<32x256xf32>
    %c0_230 = arith.constant 0 : index
    %c0_231 = arith.constant 0 : index
    %404 = vector.load %arg5[%c0_230, %c0_231] : memref<8x288xbf16, #tpu.memory_space<vmem>>, vector<8x288xbf16>
    %c0_232 = arith.constant 0 : index
    %c0_233 = arith.constant 0 : index
    %405 = vector.load %arg6[%c0_232, %c0_233] : memref<8x1xf32, #tpu.memory_space<vmem>>, vector<8x1xf32>
    %c17_i32_234 = arith.constant 17 : i32
    %406 = tpu.dynamic_rotate %403 by %c17_i32_234 dim 1 : vector<32x256xf32>, i32 -> vector<32x256xf32>
    %407 = vector.broadcast %11 : vector<1x256xf32> to vector<32x256xf32>
    %408 = arith.mulf %406, %407 : vector<32x256xf32>
    %409 = arith.truncf %408 : vector<32x256xf32> to vector<32x256xbf16>
    %c0_235 = arith.constant 0 : index
    %c0_236 = arith.constant 0 : index
    %410 = vector.load %arg8[%c0_235, %c0_236] : memref<288x256xbf16, #tpu.memory_space<vmem>>, vector<32x256xbf16>
    tpu.vector_store %arg8[%c0_235, %c0_236], %409 {strides = array<i32>} : memref<288x256xbf16, #tpu.memory_space<vmem>>, vector<32x256xbf16>,
    %c16_i32_237 = arith.constant 16 : i32
    %411 = tpu.dynamic_rotate %403 by %c16_i32_237 dim 1 : vector<32x256xf32>, i32 -> vector<32x256xf32>
    %412 = vector.broadcast %15 : vector<1x256xf32> to vector<32x256xf32>
    %413 = arith.mulf %411, %412 : vector<32x256xf32>
    %414 = arith.truncf %413 : vector<32x256xf32> to vector<32x256xbf16>
    %c32_238 = arith.constant 32 : index
    %c0_239 = arith.constant 0 : index
    %415 = vector.load %arg8[%c32_238, %c0_239] : memref<288x256xbf16, #tpu.memory_space<vmem>>, vector<32x256xbf16>
    tpu.vector_store %arg8[%c32_238, %c0_239], %414 {strides = array<i32>} : memref<288x256xbf16, #tpu.memory_space<vmem>>, vector<32x256xbf16>,
    %c15_i32_240 = arith.constant 15 : i32
    %416 = tpu.dynamic_rotate %403 by %c15_i32_240 dim 1 : vector<32x256xf32>, i32 -> vector<32x256xf32>
    %417 = vector.broadcast %22 : vector<1x256xf32> to vector<32x256xf32>
    %418 = arith.mulf %416, %417 : vector<32x256xf32>
    %419 = arith.truncf %418 : vector<32x256xf32> to vector<32x256xbf16>
    %c64_241 = arith.constant 64 : index
    %c0_242 = arith.constant 0 : index
    %420 = vector.load %arg8[%c64_241, %c0_242] : memref<288x256xbf16, #tpu.memory_space<vmem>>, vector<32x256xbf16>
    tpu.vector_store %arg8[%c64_241, %c0_242], %419 {strides = array<i32>} : memref<288x256xbf16, #tpu.memory_space<vmem>>, vector<32x256xbf16>,
    %c1_i32_243 = arith.constant 1 : i32
    %421 = tpu.dynamic_rotate %403 by %c1_i32_243 dim 1 : vector<32x256xf32>, i32 -> vector<32x256xf32>
    %422 = vector.broadcast %26 : vector<1x256xf32> to vector<32x256xf32>
    %423 = arith.mulf %421, %422 : vector<32x256xf32>
    %424 = arith.truncf %423 : vector<32x256xf32> to vector<32x256xbf16>
    %c96_244 = arith.constant 96 : index
    %c0_245 = arith.constant 0 : index
    %425 = vector.load %arg8[%c96_244, %c0_245] : memref<288x256xbf16, #tpu.memory_space<vmem>>, vector<32x256xbf16>
    tpu.vector_store %arg8[%c96_244, %c0_245], %424 {strides = array<i32>} : memref<288x256xbf16, #tpu.memory_space<vmem>>, vector<32x256xbf16>,
    %426 = arith.truncf %403 : vector<32x256xf32> to vector<32x256xbf16>
    %c128_246 = arith.constant 128 : index
    %c0_247 = arith.constant 0 : index
    %427 = vector.load %arg8[%c128_246, %c0_247] : memref<288x256xbf16, #tpu.memory_space<vmem>>, vector<32x256xbf16>
    tpu.vector_store %arg8[%c128_246, %c0_247], %426 {strides = array<i32>} : memref<288x256xbf16, #tpu.memory_space<vmem>>, vector<32x256xbf16>,
    %c255_i32_248 = arith.constant 255 : i32
    %428 = tpu.dynamic_rotate %403 by %c255_i32_248 dim 1 : vector<32x256xf32>, i32 -> vector<32x256xf32>
    %429 = vector.broadcast %30 : vector<1x256xf32> to vector<32x256xf32>
    %430 = arith.mulf %428, %429 : vector<32x256xf32>
    %431 = arith.truncf %430 : vector<32x256xf32> to vector<32x256xbf16>
    %c160_249 = arith.constant 160 : index
    %c0_250 = arith.constant 0 : index
    %432 = vector.load %arg8[%c160_249, %c0_250] : memref<288x256xbf16, #tpu.memory_space<vmem>>, vector<32x256xbf16>
    tpu.vector_store %arg8[%c160_249, %c0_250], %431 {strides = array<i32>} : memref<288x256xbf16, #tpu.memory_space<vmem>>, vector<32x256xbf16>,
    %c241_i32_251 = arith.constant 241 : i32
    %433 = tpu.dynamic_rotate %403 by %c241_i32_251 dim 1 : vector<32x256xf32>, i32 -> vector<32x256xf32>
    %434 = vector.broadcast %37 : vector<1x256xf32> to vector<32x256xf32>
    %435 = arith.mulf %433, %434 : vector<32x256xf32>
    %436 = arith.truncf %435 : vector<32x256xf32> to vector<32x256xbf16>
    %c192_252 = arith.constant 192 : index
    %c0_253 = arith.constant 0 : index
    %437 = vector.load %arg8[%c192_252, %c0_253] : memref<288x256xbf16, #tpu.memory_space<vmem>>, vector<32x256xbf16>
    tpu.vector_store %arg8[%c192_252, %c0_253], %436 {strides = array<i32>} : memref<288x256xbf16, #tpu.memory_space<vmem>>, vector<32x256xbf16>,
    %c240_i32_254 = arith.constant 240 : i32
    %438 = tpu.dynamic_rotate %403 by %c240_i32_254 dim 1 : vector<32x256xf32>, i32 -> vector<32x256xf32>
    %439 = vector.broadcast %41 : vector<1x256xf32> to vector<32x256xf32>
    %440 = arith.mulf %438, %439 : vector<32x256xf32>
    %441 = arith.truncf %440 : vector<32x256xf32> to vector<32x256xbf16>
    %c224_255 = arith.constant 224 : index
    %c0_256 = arith.constant 0 : index
    %442 = vector.load %arg8[%c224_255, %c0_256] : memref<288x256xbf16, #tpu.memory_space<vmem>>, vector<32x256xbf16>
    tpu.vector_store %arg8[%c224_255, %c0_256], %441 {strides = array<i32>} : memref<288x256xbf16, #tpu.memory_space<vmem>>, vector<32x256xbf16>,
    %c239_i32_257 = arith.constant 239 : i32
    %443 = tpu.dynamic_rotate %403 by %c239_i32_257 dim 1 : vector<32x256xf32>, i32 -> vector<32x256xf32>
    %444 = vector.broadcast %48 : vector<1x256xf32> to vector<32x256xf32>
    %445 = arith.mulf %443, %444 : vector<32x256xf32>
    %446 = arith.truncf %445 : vector<32x256xf32> to vector<32x256xbf16>
    %c256_258 = arith.constant 256 : index
    %c0_259 = arith.constant 0 : index
    %447 = vector.load %arg8[%c256_258, %c0_259] : memref<288x256xbf16, #tpu.memory_space<vmem>>, vector<32x256xbf16>
    tpu.vector_store %arg8[%c256_258, %c0_259], %446 {strides = array<i32>} : memref<288x256xbf16, #tpu.memory_space<vmem>>, vector<32x256xbf16>,
    %c0_260 = arith.constant 0 : index
    %c0_261 = arith.constant 0 : index
    %448 = vector.load %arg8[%c0_260, %c0_261] : memref<288x256xbf16, #tpu.memory_space<vmem>>, vector<288x256xbf16>
    %cst_262 = arith.constant dense<0.000000e+00> : vector<8x256xf32>
    %449 = tpu.matmul %404, %448, %cst_262 {dimension_numbers = #tpu.dot_dimension_numbers<[1], [0], [0], [1], [0, 0, 1, 1], [], []>} : vector<8x288xbf16>, vector<288x256xbf16>, vector<8x256xf32> -> vector<8x256xf32>
    %450 = vector.broadcast %405 : vector<8x1xf32> to vector<8x256xf32>
    %451 = arith.addf %449, %450 : vector<8x256xf32>
    %c0_263 = arith.constant 0 : index
    %c0_264 = arith.constant 0 : index
    %452 = vector.load %arg7[%c0_263, %c0_264] : memref<8x256xf32, #tpu.memory_space<vmem>>, vector<8x256xf32>
    tpu.vector_store %arg7[%c0_263, %c0_264], %451 {strides = array<i32>} : memref<8x256xf32, #tpu.memory_space<vmem>>, vector<8x256xf32>,
    return
  }
  func.func @transform_0(%arg0: i32) -> (i32, i32) {
    %c0_i32 = arith.constant 0 : i32
    %c0_i32_0 = arith.constant 0 : i32
    return %c0_i32, %arg0 : i32, i32
  }
  func.func @transform_1(%arg0: i32) -> (i32, i32) {
    %c0_i32 = arith.constant 0 : i32
    %c0_i32_0 = arith.constant 0 : i32
    %c0_i32_1 = arith.constant 0 : i32
    return %c0_i32, %c0_i32_0 : i32, i32
  }
  func.func @transform_2(%arg0: i32) -> (i32, i32, i32) {
    %c0_i32 = arith.constant 0 : i32
    %c0_i32_0 = arith.constant 0 : i32
    %c0_i32_1 = arith.constant 0 : i32
    %c0_i32_2 = arith.constant 0 : i32
    return %c0_i32, %c0_i32_0, %c0_i32_1 : i32, i32, i32
  }
  func.func @transform_3(%arg0: i32) -> (i32, i32) {
    %c0_i32 = arith.constant 0 : i32
    %c0_i32_0 = arith.constant 0 : i32
    %c0_i32_1 = arith.constant 0 : i32
    return %c0_i32, %c0_i32_0 : i32, i32
  }
  func.func @transform_4(%arg0: i32) -> (i32, i32) {
    %c0_i32 = arith.constant 0 : i32
    %c0_i32_0 = arith.constant 0 : i32
    %c0_i32_1 = arith.constant 0 : i32
    return %c0_i32, %c0_i32_0 : i32, i32
  }
  func.func @transform_5(%arg0: i32) -> (i32, i32) {
    %c0_i32 = arith.constant 0 : i32
    %c0_i32_0 = arith.constant 0 : i32
    %c0_i32_1 = arith.constant 0 : i32
    return %c0_i32, %c0_i32_0 : i32, i32
  }
  func.func @transform_6(%arg0: i32) -> (i32, i32) {
    %c0_i32 = arith.constant 0 : i32
    %c0_i32_0 = arith.constant 0 : i32
    return %c0_i32, %arg0 : i32, i32
  }
}

</mosaic_0001>

<llo_original>
// kernel: fully_conv_net_forward.1
$region0: #{fully_conv_net_forward.1}
  #allocation0 [shape = 'u32[]', space=smem, size = 0x4, offset = 0x4, fixed_abs, tag = 'smem constant byte address 0x4 - core index']
  #allocation1 [shape = 'u32[144,128]{1,0:T(1,128)}', space=vmem, size = 0x12000, scoped, tag = 'internal scratch']
  #allocation2 [shape = 'bf16[288,256]{1,0:T(8,128)(2,1)}', space=vmem, size = 0x24000, scoped, tag = 'scratch operand']
  %s0 = inlined_call_operand.vmem [shape: f32[16,512], index: 0, kind: input, shape index: {}]
  %s1 = inlined_call_operand.vmem [shape: bf16[32,144], index: 1, kind: input, shape index: {}]
  %s2 = inlined_call_operand.vmem [shape: bf16[6,32,288], index: 2, kind: input, shape index: {}]
  %s3 = inlined_call_operand.vmem [shape: f32[32,7], index: 3, kind: input, shape index: {}]
  %s4 = inlined_call_operand.vmem [shape: bf16[8,288], index: 4, kind: input, shape index: {}]
  %s5 = inlined_call_operand.vmem [shape: f32[8,1], index: 5, kind: input, shape index: {}]
  %s6 = inlined_call_operand.vmem [shape: f32[8,512], index: 6, kind: output, shape index: {}]
  %s7 = sld [smem:[#allocation0]]
  $region80: #{fully_conv_net_forward.1} parent=0
    _
  %s9 = ssub.s32 1, %s7
  %s10 = scalar_select 0, %s9, %s7
  $region1: #{fully_conv_net_forward.1} parent=0
    #allocation3 [shape = 'u8[32768]{0}', space=vmem, size = 0x8000, scoped, tag = 'input window, operand 0']
    loop: start=0, step=1, limit=4
    $region2: #{fully_conv_net_forward.1} parent=1 // loop_pre_header
      _
    $region3: #{fully_conv_net_forward.1} parent=1 // loop_header
      %s12 = sphi 0, %s16
      %p13 = scmp.ge.s32.totalorder %s12, 4
      %s22 = sphi 0, %s24
      %s25 = sphi 0, %s22
      %s26 = sphi 0, %s25
      %s42 = sphi 0, %s26
      %s46 = sphi 0, %s46
      %s48 = sphi 0, %s46
      %s49 = sphi 0, %s48
      %s63 = sphi 0, %s49
      %s67 = sphi 0, %s67
      %s69 = sphi 0, %s67
      %s70 = sphi 0, %s69
      %s84 = sphi 0, %s70
      %s88 = sphi 0, %s88
      %s90 = sphi 0, %s88
      %s91 = sphi 0, %s90
      %s105 = sphi 0, %s91
      %s109 = sphi 0, %s109
      %s111 = sphi 0, %s109
      %s112 = sphi 0, %s111
      %s126 = sphi 0, %s112
      %s130 = sphi 0, %s130
      %s132 = sphi 0, %s130
      %s133 = sphi 0, %s132
      %s147 = sphi 0, %s133
      %s153 = sphi 0, %s155
      %s156 = sphi 0, %s153
      %s157 = sphi 0, %s156
      %s173 = sphi 0, %s157
    $region4: #{fully_conv_net_forward.1} parent=1 // loop_header_branch
      %15 = sbr.rel (%p13) target = $region8
    $region5: #{fully_conv_net_forward.1} parent=1 // loop_body
      %s17 = ssub.s32 %s12, 1
      %s18 = ssub.s32 %s12, 2
      %s19 = sadd.s32 %s12, 1
      %s20 = ssub.s32 %s12, %s19
      %p21 = scmp.eq.s32.totalorder %s20, 0
      %s23 = sadd.s32 %s22, 1
      %s24 = scalar_select %p21, %s22, %s23
      %p27 = pneg %p21
      %p28 = scmp.eq.s32.totalorder %s12, 1
      %p29 = por %p27, %p28
      %p30 = scmp.ne.s32.totalorder %s22, %s25
      %p31 = scmp.eq.s32.totalorder %s12, 0
      %p32 = por %p30, %p31
      %p33 = scmp.ne.s32.totalorder %s22, %s25
      %p34 = scmp.eq.s32.totalorder %s17, 1
      %p35 = por %p33, %p34
      %p36 = scmp.ne.s32.totalorder %s25, %s26
      %p37 = scmp.eq.s32.totalorder %s17, 0
      %p38 = por %p36, %p37
      %p39 = scmp.ne.s32.totalorder %s25, %s26
      %p40 = scmp.eq.s32.totalorder %s18, 1
      %p41 = por %p39, %p40
      %p43 = scmp.ne.s32.totalorder %s26, %s42
      %p44 = scmp.eq.s32.totalorder %s18, 0
      %p45 = por %p43, %p44
      %s47 = sadd.s32 %s46, 1
      %p50 = scmp.eq.s32.totalorder %s12, 1
      %p51 = scmp.ne.s32.totalorder %s46, %s48
      %p52 = scmp.eq.s32.totalorder %s12, 0
      %p53 = por %p51, %p52
      %p54 = scmp.ne.s32.totalorder %s46, %s48
      %p55 = scmp.eq.s32.totalorder %s17, 1
      %p56 = por %p54, %p55
      %p57 = scmp.ne.s32.totalorder %s48, %s49
      %p58 = scmp.eq.s32.totalorder %s17, 0
      %p59 = por %p57, %p58
      %p60 = scmp.ne.s32.totalorder %s48, %s49
      %p61 = scmp.eq.s32.totalorder %s18, 1
      %p62 = por %p60, %p61
      %p64 = scmp.ne.s32.totalorder %s49, %s63
      %p65 = scmp.eq.s32.totalorder %s18, 0
      %p66 = por %p64, %p65
      %s68 = sadd.s32 %s67, 1
      %p71 = scmp.eq.s32.totalorder %s12, 1
      %p72 = scmp.ne.s32.totalorder %s67, %s69
      %p73 = scmp.eq.s32.totalorder %s12, 0
      %p74 = por %p72, %p73
      %p75 = scmp.ne.s32.totalorder %s67, %s69
      %p76 = scmp.eq.s32.totalorder %s17, 1
      %p77 = por %p75, %p76
      %p78 = scmp.ne.s32.totalorder %s69, %s70
      %p79 = scmp.eq.s32.totalorder %s17, 0
      %p80 = por %p78, %p79
      %p81 = scmp.ne.s32.totalorder %s69, %s70
      %p82 = scmp.eq.s32.totalorder %s18, 1
      %p83 = por %p81, %p82
      %p85 = scmp.ne.s32.totalorder %s70, %s84
      %p86 = scmp.eq.s32.totalorder %s18, 0
      %p87 = por %p85, %p86
      %s89 = sadd.s32 %s88, 1
      %p92 = scmp.eq.s32.totalorder %s12, 1
      %p93 = scmp.ne.s32.totalorder %s88, %s90
      %p94 = scmp.eq.s32.totalorder %s12, 0
      %p95 = por %p93, %p94
      %p96 = scmp.ne.s32.totalorder %s88, %s90
      %p97 = scmp.eq.s32.totalorder %s17, 1
      %p98 = por %p96, %p97
      %p99 = scmp.ne.s32.totalorder %s90, %s91
      %p100 = scmp.eq.s32.totalorder %s17, 0
      %p101 = por %p99, %p100
      %p102 = scmp.ne.s32.totalorder %s90, %s91
      %p103 = scmp.eq.s32.totalorder %s18, 1
      %p104 = por %p102, %p103
      %p106 = scmp.ne.s32.totalorder %s91, %s105
      %p107 = scmp.eq.s32.totalorder %s18, 0
      %p108 = por %p106, %p107
      %s110 = sadd.s32 %s109, 1
      %p113 = scmp.eq.s32.totalorder %s12, 1
      %p114 = scmp.ne.s32.totalorder %s109, %s111
      %p115 = scmp.eq.s32.totalorder %s12, 0
      %p116 = por %p114, %p115
      %p117 = scmp.ne.s32.totalorder %s109, %s111
      %p118 = scmp.eq.s32.totalorder %s17, 1
      %p119 = por %p117, %p118
      %p120 = scmp.ne.s32.totalorder %s111, %s112
      %p121 = scmp.eq.s32.totalorder %s17, 0
      %p122 = por %p120, %p121
      %p123 = scmp.ne.s32.totalorder %s111, %s112
      %p124 = scmp.eq.s32.totalorder %s18, 1
      %p125 = por %p123, %p124
      %p127 = scmp.ne.s32.totalorder %s112, %s126
      %p128 = scmp.eq.s32.totalorder %s18, 0
      %p129 = por %p127, %p128
      %s131 = sadd.s32 %s130, 1
      %p134 = scmp.eq.s32.totalorder %s12, 1
      %p135 = scmp.ne.s32.totalorder %s130, %s132
      %p136 = scmp.eq.s32.totalorder %s12, 0
      %p137 = por %p135, %p136
      %p138 = scmp.ne.s32.totalorder %s130, %s132
      %p139 = scmp.eq.s32.totalorder %s17, 1
      %p140 = por %p138, %p139
      %p141 = scmp.ne.s32.totalorder %s132, %s133
      %p142 = scmp.eq.s32.totalorder %s17, 0
      %p143 = por %p141, %p142
      %p144 = scmp.ne.s32.totalorder %s132, %s133
      %p145 = scmp.eq.s32.totalorder %s18, 1
      %p146 = por %p144, %p145
      %p148 = scmp.ne.s32.totalorder %s133, %s147
      %p149 = scmp.eq.s32.totalorder %s18, 0
      %p150 = por %p148, %p149
      %s151 = ssub.s32 %s12, %s19
      %p152 = scmp.eq.s32.totalorder %s151, 0
      %s154 = sadd.s32 %s153, 1
      %s155 = scalar_select %p152, %s153, %s154
      %p158 = pneg %p152
      %p159 = scmp.eq.s32.totalorder %s12, 1
      %p160 = por %p158, %p159
      %p161 = scmp.ne.s32.totalorder %s153, %s156
      %p162 = scmp.eq.s32.totalorder %s12, 0
      %p163 = por %p161, %p162
      %p164 = scmp.ne.s32.totalorder %s153, %s156
      %p165 = scmp.eq.s32.totalorder %s17, 1
      %p166 = por %p164, %p165
      %p167 = scmp.ne.s32.totalorder %s156, %s157
      %p168 = scmp.eq.s32.totalorder %s17, 0
      %p169 = por %p167, %p168
      %p170 = scmp.ne.s32.totalorder %s156, %s157
      %p171 = scmp.eq.s32.totalorder %s18, 1
      %p172 = por %p170, %p171
      %p174 = scmp.ne.s32.totalorder %s157, %s173
      %p175 = scmp.eq.s32.totalorder %s18, 0
      %p176 = por %p174, %p175
      %p177 = scmp.le.s32.totalorder 1, %s12
      %p178 = scmp.lt.s32.totalorder %s12, 3
      %p179 = pnand %p177, %p178
      %p180 = pneg %p179
      // Predicated region
      $region9: #{fully_conv_net_forward.1} parent=5 // pred_check
        _
      $region10: #{fully_conv_net_forward.1} parent=5 // pred_check_branch
        %182 = sbr.rel (%p179) target = $region12
      $region11: #{fully_conv_net_forward.1} parent=5 // pred_region
        %s183 = ssub.s32 %s12, 1
        // Predicated region
        $region13: #{fully_conv_net_forward.1} parent=11 // pred_check
          %p184 = pneg %p59
        $region14: #{fully_conv_net_forward.1} parent=11 // pred_check_branch
          %186 = sbr.rel (%p184) target = $region16
        $region15: #{fully_conv_net_forward.1} parent=11 // pred_region
          _
        $region16: #{fully_conv_net_forward.1} parent=11 // pred_fallthru
          _
        // Predicated region
        $region17: #{fully_conv_net_forward.1} parent=11 // pred_check
          %p187 = pneg %p80
        $region18: #{fully_conv_net_forward.1} parent=11 // pred_check_branch
          %189 = sbr.rel (%p187) target = $region20
        $region19: #{fully_conv_net_forward.1} parent=11 // pred_region
          _
        $region20: #{fully_conv_net_forward.1} parent=11 // pred_fallthru
          _
        // Predicated region
        $region21: #{fully_conv_net_forward.1} parent=11 // pred_check
          %p190 = pneg %p101
        $region22: #{fully_conv_net_forward.1} parent=11 // pred_check_branch
          %192 = sbr.rel (%p190) target = $region24
        $region23: #{fully_conv_net_forward.1} parent=11 // pred_region
          _
        $region24: #{fully_conv_net_forward.1} parent=11 // pred_fallthru
          _
        // Predicated region
        $region25: #{fully_conv_net_forward.1} parent=11 // pred_check
          %p193 = pneg %p122
        $region26: #{fully_conv_net_forward.1} parent=11 // pred_check_branch
          %195 = sbr.rel (%p193) target = $region28
        $region27: #{fully_conv_net_forward.1} parent=11 // pred_region
          _
        $region28: #{fully_conv_net_forward.1} parent=11 // pred_fallthru
          _
        // Predicated region
        $region29: #{fully_conv_net_forward.1} parent=11 // pred_check
          %p196 = pneg %p143
        $region30: #{fully_conv_net_forward.1} parent=11 // pred_check_branch
          %198 = sbr.rel (%p196) target = $region32
        $region31: #{fully_conv_net_forward.1} parent=11 // pred_region
          _
        $region32: #{fully_conv_net_forward.1} parent=11 // pred_fallthru
          _
      $region12: #{fully_conv_net_forward.1} parent=5 // pred_fallthru
        _
      %p199 = scmp.lt.s32.totalorder %s12, 2
      // Predicated region
      $region33: #{fully_conv_net_forward.1} parent=5 // pred_check
        %p200 = pneg %p199
      $region34: #{fully_conv_net_forward.1} parent=5 // pred_check_branch
        %202 = sbr.rel (%p200) target = $region36
      $region35: #{fully_conv_net_forward.1} parent=5 // pred_region
        // Predicated region
        $region37: #{fully_conv_net_forward.1} parent=35 // pred_check
          %p203 = pneg %p32
        $region38: #{fully_conv_net_forward.1} parent=35 // pred_check_branch
          %205 = sbr.rel (%p203) target = $region40
        $region39: #{fully_conv_net_forward.1} parent=35 // pred_region
          %s206 = sand.u32 %s22, 1
          %s207 = sand.u32 %s22, 1
          %s208 = smul.addr %s207, 32
          %s209 = scalar_lea.vmem [#allocation3], %s208
          %s210 = smul.u32 2, %s12
          %s211 = smul.addr %s210, 8
          %s212 = scalar_lea.vmem %s0, %s211
          // Predicated region
          $region41: #{fully_conv_net_forward.1} parent=39 // pred_check
            _
          $region42: #{fully_conv_net_forward.1} parent=39 // pred_check_branch
            %214 = sbr.rel (0) target = $region44
          $region43: #{fully_conv_net_forward.1} parent=39 // pred_region
            // Predicated region
            $region45: #{fully_conv_net_forward.1} parent=43 // pred_check
              _
            $region46: #{fully_conv_net_forward.1} parent=43 // pred_check_branch
              %216 = sbr.rel (0) target = $region48
            $region47: #{fully_conv_net_forward.1} parent=43 // pred_region
              loop: start=0, step=1, limit=1
              $region49: #{fully_conv_net_forward.1} parent=47 // loop_pre_header
                _
              $region50: #{fully_conv_net_forward.1} parent=47 // loop_header
                %s218 = sphi 0, %s222
                %p219 = scmp.ge.s32.totalorder %s218, 1
                %s223 = sphi %s212, %s212
                %s224 = sphi %s209, %s209
              $region51: #{fully_conv_net_forward.1} parent=47 // loop_header_branch
                %221 = sbr.rel (%p219) target = $region55
              $region52: #{fully_conv_net_forward.1} parent=47 // loop_body
                %v225 = vld [vmem:[%s223] sm:$0xff]
                %226 = vst [vmem:[%s224] sm:$0xff] %v225
                %v227 = vld [vmem:[%s223 + $0x8] sm:$0xff]
                %228 = vst [vmem:[%s224 + $0x8] sm:$0xff] %v227
                %v229 = vld [vmem:[%s223 + $0x20] sm:$0xff]
                %230 = vst [vmem:[%s224 + $0x10] sm:$0xff] %v229
                %v231 = vld [vmem:[%s223 + $0x28] sm:$0xff]
                %232 = vst [vmem:[%s224 + $0x18] sm:$0xff] %v231
              $region53: #{fully_conv_net_forward.1} parent=47 // loop_footer
                %s222 = sadd.s32 1, %s218
              $region54: #{fully_conv_net_forward.1} parent=47 // loop_footer_branch
                %217 = sbr.rel target = $region50
              $region55: #{fully_conv_net_forward.1} parent=47 // loop_exit
                _
            $region48: #{fully_conv_net_forward.1} parent=43 // pred_fallthru
              _
            // Predicated region
            $region56: #{fully_conv_net_forward.1} parent=43 // pred_check
              _
            $region57: #{fully_conv_net_forward.1} parent=43 // pred_check_branch
              %234 = sbr.rel target = $region59
            $region58: #{fully_conv_net_forward.1} parent=43 // pred_region
              _
            $region59: #{fully_conv_net_forward.1} parent=43 // pred_fallthru
              _
          $region44: #{fully_conv_net_forward.1} parent=39 // pred_fallthru
            _
          %235 = vnop
        $region40: #{fully_conv_net_forward.1} parent=35 // pred_fallthru
          _
      $region36: #{fully_conv_net_forward.1} parent=5 // pred_fallthru
        _
      %p236 = scmp.le.s32.totalorder 1, %s12
      %p237 = scmp.lt.s32.totalorder %s12, 3
      %p238 = pnand %p236, %p237
      %p239 = pneg %p238
      // Predicated region
      $region60: #{fully_conv_net_forward.1} parent=5 // pred_check
        _
      $region61: #{fully_conv_net_forward.1} parent=5 // pred_check_branch
        %241 = sbr.rel (%p238) target = $region63
      $region62: #{fully_conv_net_forward.1} parent=5 // pred_region
        %s242 = ssub.s32 %s12, 1
        %s243 = sand.u32 %s25, 1
        %s244 = sand.u32 %s25, 1
        %s245 = smul.addr %s244, 32
        %s246 = scalar_lea.vmem [#allocation3], %s245
        // Predicated region
        $region64: #{fully_conv_net_forward.1} parent=62 // pred_check
          %p247 = pneg %p38
        $region65: #{fully_conv_net_forward.1} parent=62 // pred_check_branch
          %249 = sbr.rel (%p247) target = $region67
        $region66: #{fully_conv_net_forward.1} parent=62 // pred_region
          _
        $region67: #{fully_conv_net_forward.1} parent=62 // pred_fallthru
          _
        %s250 = sand.u32 %s25, 1
        %s251 = sand.u32 %s25, 1
        %s252 = smul.addr %s251, 32
        %s253 = scalar_lea.vmem [#allocation3], %s252
        %p254 = pneg %p38
        %p255 = pneg %p35
        %p256 = pneg %p59
        %p257 = pneg %p56
        %p258 = pneg %p80
        %p259 = pneg %p77
        %p260 = pneg %p101
        %p261 = pneg %p98
        %p262 = pneg %p122
        %p263 = pneg %p119
        %p264 = pneg %p143
        %p265 = pneg %p140
        %p266 = pneg %p169
        %p267 = pneg %p166
        %s268 = smul.u32 2, %s17
        %p269 = scmp.lt.s32.totalorder %s268, 3
        %s270 = scalar_select %p269, %s268, 3
        %s271 = smul.addr %s270, 8
        %s272 = scalar_lea.vmem %s6, %s271
        %s273 = smul.u32 2, %s17
        %s274 = smul.u32 2, %s17
        %p275 = scmp.lt.s32.totalorder %s274, 3
        %s276 = scalar_select %p275, %s274, 3
        %s277 = smul.addr %s276, 8
        %s278 = scalar_lea.vmem %s6, %s277
        %s279 = smul.u32 2, %s17
        %v281 = vlaneseq
        %v282 = vand.u32 %v281, 127
        %v283 = vadd.s32 %v282, 128
        %v284 = vand.u32 %v282, 255
        %v285 = vand.u32 %v283, 255
        %v286 = vand.u32 %v284, 15
        %v287 = vand.u32 %v285, 15
        %vm288 = vcmp.ge.s32.totalorder %v284, 16
        %vm289 = vcmp.ge.s32.totalorder %v285, 16
        %vm290 = vcmp.ge.s32.totalorder %v286, 1
        %vm291 = vcmp.ge.s32.totalorder %v287, 1
        %vm292 = vmand %vm288, %vm290
        %vm293 = vmand %vm289, %vm291
        %v294 = vsel %vm292, 1, 0
        %v295 = vsel %vm293, 1, 0
        %v296 = vcvt.s32.f32 %v294
        %v297 = vcvt.s32.f32 %v295
        %v298 = vsel %vm288, 1, 0
        %v299 = vsel %vm289, 1, 0
        %v300 = vcvt.s32.f32 %v298
        %v301 = vcvt.s32.f32 %v299
        %vm302 = vcmp.le.s32.totalorder %v286, 14
        %vm303 = vcmp.le.s32.totalorder %v287, 14
        %vm304 = vmand %vm288, %vm302
        %vm305 = vmand %vm289, %vm303
        %v306 = vsel %vm304, 1, 0
        %v307 = vsel %vm305, 1, 0
        %v308 = vcvt.s32.f32 %v306
        %v309 = vcvt.s32.f32 %v307
        %v310 = vsel %vm290, 1, 0
        %v311 = vsel %vm291, 1, 0
        %v312 = vcvt.s32.f32 %v310
        %v313 = vcvt.s32.f32 %v311
        %v314 = vsel %vm302, 1, 0
        %v315 = vsel %vm303, 1, 0
        %v316 = vcvt.s32.f32 %v314
        %v317 = vcvt.s32.f32 %v315
        %vm318 = vcmp.lt.s32.totalorder %v284, 240
        %vm319 = vcmp.lt.s32.totalorder %v285, 240
        %vm320 = vmand %vm318, %vm290
        %vm321 = vmand %vm319, %vm291
        %v322 = vsel %vm320, 1, 0
        %v323 = vsel %vm321, 1, 0
        %v324 = vcvt.s32.f32 %v322
        %v325 = vcvt.s32.f32 %v323
        %v326 = vsel %vm318, 1, 0
        %v327 = vsel %vm319, 1, 0
        %v328 = vcvt.s32.f32 %v326
        %v329 = vcvt.s32.f32 %v327
        %vm330 = vmand %vm318, %vm302
        %vm331 = vmand %vm319, %vm303
        %v332 = vsel %vm330, 1, 0
        %v333 = vsel %vm331, 1, 0
        %v334 = vcvt.s32.f32 %v332
        %v335 = vcvt.s32.f32 %v333
        %v336 = vld [vmem:[%s246] sm:$0xff]
        %v337 = vld [vmem:[%s246 + $0x8] sm:$0xff]
        %v338 = vld [vmem:[%s246 + $0x10] sm:$0xff]
        %v339 = vld [vmem:[%s246 + $0x18] sm:$0xff]
        %v340 = vld [vmem:[%s1] sm:$0xff]
        %v341 = vld [vmem:[%s1 + $0x8] sm:$0xff]
        %v342 = vld [vmem:[%s1 + $0x10] sm:$0xff]
        %v343 = vld [vmem:[%s1 + $0x18] sm:$0xff]
        %v344 = vld [vmem:[%s3] sm:$0xff]
        %v345 = vld [vmem:[%s3 + $0x8] sm:$0xff]
        %v346 = vld [vmem:[%s3 + $0x10] sm:$0xff]
        %v347 = vld [vmem:[%s3 + $0x18] sm:$0xff]
        %348 = vrot.lane.b32.xlu0 %v336, 17
        %v349 = vpop.permute.xlu0 %348
        %350 = vrot.lane.b32.xlu0 %v338, 17
        %v351 = vpop.permute.xlu0 %350
        %352 = vrot.lane.b32.xlu0 %v337, 17
        %v353 = vpop.permute.xlu0 %352
        %354 = vrot.lane.b32.xlu0 %v339, 17
        %v355 = vpop.permute.xlu0 %354
        %vm356 = vcmp.lt.s32.totalorder %v282, 17
        %v357 = vsel %vm356, %v349, %v353
        %v358 = vsel %vm356, %v351, %v355
        %v359 = vsel %vm356, %v353, %v349
        %v360 = vsel %vm356, %v355, %v351
        %v361 = vmul.f32 %v359, %v296
        %v362 = vmul.f32 %v357, %v297
        %v363 = vmul.f32 %v360, %v296
        %v364 = vmul.f32 %v358, %v297
        %v365 = vpack.c.bf16 %v363, %v361
        %v366 = vpack.c.bf16 %v364, %v362
        %v369 = vunpack.c.l.b16 %v365
        %v370 = vunpack.c.l.b16 %v366
        %v371 = vunpack.c.h.b16 %v365
        %v372 = vunpack.c.h.b16 %v366
        %v373 = vpack.c.b16 %v370, %v369
        %v374 = vpack.c.b16 %v372, %v371
        %377 = vst [vmem:[#allocation2] sm:$0xff] %v373
        %378 = vst [vmem:[#allocation2 + $0x8] sm:$0xff] %v374
        %379 = vrot.lane.b32.xlu0 %v336, 16
        %v380 = vpop.permute.xlu0 %379
        %381 = vrot.lane.b32.xlu0 %v338, 16
        %v382 = vpop.permute.xlu0 %381
        %383 = vrot.lane.b32.xlu0 %v337, 16
        %v384 = vpop.permute.xlu0 %383
        %385 = vrot.lane.b32.xlu0 %v339, 16
        %v386 = vpop.permute.xlu0 %385
        %vm387 = vcmp.lt.s32.totalorder %v282, 16
        %v388 = vsel %vm387, %v380, %v384
        %v389 = vsel %vm387, %v382, %v386
        %v390 = vsel %vm387, %v384, %v380
        %v391 = vsel %vm387, %v386, %v382
        %v392 = vmul.f32 %v390, %v300
        %v393 = vmul.f32 %v388, %v301
        %v394 = vmul.f32 %v391, %v300
        %v395 = vmul.f32 %v389, %v301
        %v396 = vpack.c.bf16 %v394, %v392
        %v397 = vpack.c.bf16 %v395, %v393
        %v400 = vunpack.c.l.b16 %v396
        %v401 = vunpack.c.l.b16 %v397
        %v402 = vunpack.c.h.b16 %v396
        %v403 = vunpack.c.h.b16 %v397
        %v404 = vpack.c.b16 %v401, %v400
        %v405 = vpack.c.b16 %v403, %v402
        %408 = vst [vmem:[#allocation2 + $0x10] sm:$0xff] %v404
        %409 = vst [vmem:[#allocation2 + $0x18] sm:$0xff] %v405
        %410 = vrot.lane.b32.xlu0 %v336, 15
        %v411 = vpop.permute.xlu0 %410
        %412 = vrot.lane.b32.xlu0 %v338, 15
        %v413 = vpop.permute.xlu0 %412
        %414 = vrot.lane.b32.xlu0 %v337, 15
        %v415 = vpop.permute.xlu0 %414
        %416 = vrot.lane.b32.xlu0 %v339, 15
        %v417 = vpop.permute.xlu0 %416
        %vm418 = vcmp.lt.s32.totalorder %v282, 15
        %v419 = vsel %vm418, %v411, %v415
        %v420 = vsel %vm418, %v413, %v417
        %v421 = vsel %vm418, %v415, %v411
        %v422 = vsel %vm418, %v417, %v413
        %v423 = vmul.f32 %v421, %v308
        %v424 = vmul.f32 %v419, %v309
        %v425 = vmul.f32 %v422, %v308
        %v426 = vmul.f32 %v420, %v309
        %v427 = vpack.c.bf16 %v425, %v423
        %v428 = vpack.c.bf16 %v426, %v424
        %v431 = vunpack.c.l.b16 %v427
        %v432 = vunpack.c.l.b16 %v428
        %v433 = vunpack.c.h.b16 %v427
        %v434 = vunpack.c.h.b16 %v428
        %v435 = vpack.c.b16 %v432, %v431
        %v436 = vpack.c.b16 %v434, %v433
        %439 = vst [vmem:[#allocation2 + $0x20] sm:$0xff] %v435
        %440 = vst [vmem:[#allocation2 + $0x28] sm:$0xff] %v436
        %441 = vrot.lane.b32.xlu0 %v336, 1
        %v442 = vpop.permute.xlu0 %441
        %443 = vrot.lane.b32.xlu0 %v338, 1
        %v444 = vpop.permute.xlu0 %443
        %445 = vrot.lane.b32.xlu0 %v337, 1
        %v446 = vpop.permute.xlu0 %445
        %447 = vrot.lane.b32.xlu0 %v339, 1
        %v448 = vpop.permute.xlu0 %447
        %vm449 = vcmp.lt.s32.totalorder %v282, 1
        %v450 = vsel %vm449, %v442, %v446
        %v451 = vsel %vm449, %v444, %v448
        %v452 = vsel %vm449, %v446, %v442
        %v453 = vsel %vm449, %v448, %v444
        %v454 = vmul.f32 %v452, %v312
        %v455 = vmul.f32 %v450, %v313
        %v456 = vmul.f32 %v453, %v312
        %v457 = vmul.f32 %v451, %v313
        %v458 = vpack.c.bf16 %v456, %v454
        %v459 = vpack.c.bf16 %v457, %v455
        %v462 = vunpack.c.l.b16 %v458
        %v463 = vunpack.c.l.b16 %v459
        %v464 = vunpack.c.h.b16 %v458
        %v465 = vunpack.c.h.b16 %v459
        %v466 = vpack.c.b16 %v463, %v462
        %v467 = vpack.c.b16 %v465, %v464
        %470 = vst [vmem:[#allocation2 + $0x30] sm:$0xff] %v466
        %471 = vst [vmem:[#allocation2 + $0x38] sm:$0xff] %v467
        %v472 = vpack.c.bf16 %v338, %v336
        %v473 = vpack.c.bf16 %v339, %v337
        %v476 = vunpack.c.l.b16 %v472
        %v477 = vunpack.c.l.b16 %v473
        %v478 = vunpack.c.h.b16 %v472
        %v479 = vunpack.c.h.b16 %v473
        %v480 = vpack.c.b16 %v477, %v476
        %v481 = vpack.c.b16 %v479, %v478
        %484 = vst [vmem:[#allocation2 + $0x40] sm:$0xff] %v480
        %485 = vst [vmem:[#allocation2 + $0x48] sm:$0xff] %v481
        %486 = vrot.lane.b32.xlu0 %v336, 127
        %v487 = vpop.permute.xlu0 %486
        %488 = vrot.lane.b32.xlu0 %v338, 127
        %v489 = vpop.permute.xlu0 %488
        %490 = vrot.lane.b32.xlu0 %v337, 127
        %v491 = vpop.permute.xlu0 %490
        %492 = vrot.lane.b32.xlu0 %v339, 127
        %v493 = vpop.permute.xlu0 %492
        %vm494 = vcmp.lt.s32.totalorder %v282, 127
        %v495 = vsel %vm494, %v487, %v491
        %v496 = vsel %vm494, %v489, %v493
        %v497 = vsel %vm494, %v491, %v487
        %v498 = vsel %vm494, %v493, %v489
        %v499 = vmul.f32 %v495, %v316
        %v500 = vmul.f32 %v497, %v317
        %v501 = vmul.f32 %v496, %v316
        %v502 = vmul.f32 %v498, %v317
        %v503 = vpack.c.bf16 %v501, %v499
        %v504 = vpack.c.bf16 %v502, %v500
        %v507 = vunpack.c.l.b16 %v503
        %v508 = vunpack.c.l.b16 %v504
        %v509 = vunpack.c.h.b16 %v503
        %v510 = vunpack.c.h.b16 %v504
        %v511 = vpack.c.b16 %v508, %v507
        %v512 = vpack.c.b16 %v510, %v509
        %515 = vst [vmem:[#allocation2 + $0x50] sm:$0xff] %v511
        %516 = vst [vmem:[#allocation2 + $0x58] sm:$0xff] %v512
        %517 = vrot.lane.b32.xlu0 %v336, 113
        %v518 = vpop.permute.xlu0 %517
        %519 = vrot.lane.b32.xlu0 %v338, 113
        %v520 = vpop.permute.xlu0 %519
        %521 = vrot.lane.b32.xlu0 %v337, 113
        %v522 = vpop.permute.xlu0 %521
        %523 = vrot.lane.b32.xlu0 %v339, 113
        %v524 = vpop.permute.xlu0 %523
        %vm525 = vcmp.lt.s32.totalorder %v282, 113
        %v526 = vsel %vm525, %v518, %v522
        %v527 = vsel %vm525, %v520, %v524
        %v528 = vsel %vm525, %v522, %v518
        %v529 = vsel %vm525, %v524, %v520
        %v530 = vmul.f32 %v526, %v324
        %v531 = vmul.f32 %v528, %v325
        %v532 = vmul.f32 %v527, %v324
        %v533 = vmul.f32 %v529, %v325
        %v534 = vpack.c.bf16 %v532, %v530
        %v535 = vpack.c.bf16 %v533, %v531
        %v538 = vunpack.c.l.b16 %v534
        %v539 = vunpack.c.l.b16 %v535
        %v540 = vunpack.c.h.b16 %v534
        %v541 = vunpack.c.h.b16 %v535
        %v542 = vpack.c.b16 %v539, %v538
        %v543 = vpack.c.b16 %v541, %v540
        %546 = vst [vmem:[#allocation2 + $0x60] sm:$0xff] %v542
        %547 = vst [vmem:[#allocation2 + $0x68] sm:$0xff] %v543
        %548 = vrot.lane.b32.xlu0 %v336, 112
        %v549 = vpop.permute.xlu0 %548
        %550 = vrot.lane.b32.xlu0 %v338, 112
        %v551 = vpop.permute.xlu0 %550
        %552 = vrot.lane.b32.xlu0 %v337, 112
        %v553 = vpop.permute.xlu0 %552
        %554 = vrot.lane.b32.xlu0 %v339, 112
        %v555 = vpop.permute.xlu0 %554
        %vm556 = vcmp.lt.s32.totalorder %v282, 112
        %v557 = vsel %vm556, %v549, %v553
        %v558 = vsel %vm556, %v551, %v555
        %v559 = vsel %vm556, %v553, %v549
        %v560 = vsel %vm556, %v555, %v551
        %v561 = vmul.f32 %v557, %v328
        %v562 = vmul.f32 %v559, %v329
        %v563 = vmul.f32 %v558, %v328
        %v564 = vmul.f32 %v560, %v329
        %v565 = vpack.c.bf16 %v563, %v561
        %v566 = vpack.c.bf16 %v564, %v562
        %v569 = vunpack.c.l.b16 %v565
        %v570 = vunpack.c.l.b16 %v566
        %v571 = vunpack.c.h.b16 %v565
        %v572 = vunpack.c.h.b16 %v566
        %v573 = vpack.c.b16 %v570, %v569
        %v574 = vpack.c.b16 %v572, %v571
        %577 = vst [vmem:[#allocation2 + $0x70] sm:$0xff] %v573
        %578 = vst [vmem:[#allocation2 + $0x78] sm:$0xff] %v574
        %579 = vrot.lane.b32.xlu0 %v336, 111
        %v580 = vpop.permute.xlu0 %579
        %581 = vrot.lane.b32.xlu0 %v338, 111
        %v582 = vpop.permute.xlu0 %581
        %583 = vrot.lane.b32.xlu0 %v337, 111
        %v584 = vpop.permute.xlu0 %583
        %585 = vrot.lane.b32.xlu0 %v339, 111
        %v586 = vpop.permute.xlu0 %585
        %vm587 = vcmp.lt.s32.totalorder %v282, 111
        %v588 = vsel %vm587, %v580, %v584
        %v589 = vsel %vm587, %v582, %v586
        %v590 = vsel %vm587, %v584, %v580
        %v591 = vsel %vm587, %v586, %v582
        %v592 = vmul.f32 %v588, %v334
        %v593 = vmul.f32 %v590, %v335
        %v594 = vmul.f32 %v589, %v334
        %v595 = vmul.f32 %v591, %v335
        %v596 = vpack.c.bf16 %v594, %v592
        %v597 = vpack.c.bf16 %v595, %v593
        %v600 = vunpack.c.l.b16 %v596
        %v601 = vunpack.c.l.b16 %v597
        %v602 = vunpack.c.h.b16 %v596
        %v603 = vunpack.c.h.b16 %v597
        %v604 = vpack.c.b16 %v601, %v600
        %v605 = vpack.c.b16 %v603, %v602
        %608 = vst [vmem:[#allocation2 + $0x80] sm:$0xff] %v604
        %609 = vst [vmem:[#allocation2 + $0x88] sm:$0xff] %v605
        %v610 = vld [vmem:[#allocation2] sm:$0xff]
        %v611 = vld [vmem:[#allocation2 + $0x8] sm:$0xff]
        %v612 = vld [vmem:[#allocation2 + $0x10] sm:$0xff]
        %v613 = vld [vmem:[#allocation2 + $0x18] sm:$0xff]
        %v614 = vld [vmem:[#allocation2 + $0x20] sm:$0xff]
        %v615 = vld [vmem:[#allocation2 + $0x28] sm:$0xff]
        %v616 = vld [vmem:[#allocation2 + $0x30] sm:$0xff]
        %v617 = vld [vmem:[#allocation2 + $0x38] sm:$0xff]
        %v618 = vld [vmem:[#allocation2 + $0x40] sm:$0xff]
        %v619 = vld [vmem:[#allocation2 + $0x48] sm:$0xff]
        %v620 = vld [vmem:[#allocation2 + $0x50] sm:$0xff]
        %v621 = vld [vmem:[#allocation2 + $0x58] sm:$0xff]
        %v622 = vld [vmem:[#allocation2 + $0x60] sm:$0xff]
        %v623 = vld [vmem:[#allocation2 + $0x68] sm:$0xff]
        %v624 = vld [vmem:[#allocation2 + $0x70] sm:$0xff]
        %v625 = vld [vmem:[#allocation2 + $0x78] sm:$0xff]
        %v626 = vld [vmem:[#allocation2 + $0x80] sm:$0xff]
        %v627 = vld [vmem:[#allocation2 + $0x88] sm:$0xff]
        %629 = vset.pattern.permute.xlu0 0
        %630 = vperm.xlu0 %629, %v344
        %v631 = vpop.permute.xlu0 %630
        %634 = vset.pattern.permute.xlu0 0
        %635 = vperm.xlu0 %634, %v345
        %v636 = vpop.permute.xlu0 %635
        %639 = vset.pattern.permute.xlu0 0
        %640 = vperm.xlu0 %639, %v346
        %v641 = vpop.permute.xlu0 %640
        %644 = vset.pattern.permute.xlu0 0
        %645 = vperm.xlu0 %644, %v347
        %v646 = vpop.permute.xlu0 %645
        %v652 = vunpack.c.l.b16 %v340
        %v653 = vunpack.c.h.b16 %v340
        %v654 = vunpack.c.l.b16 %v341
        %v655 = vunpack.c.h.b16 %v341
        %v656 = vunpack.c.l.b16 %v342
        %v657 = vunpack.c.h.b16 %v342
        %v658 = vunpack.c.l.b16 %v343
        %v659 = vunpack.c.h.b16 %v343
        %v660 = vpack.c.b16 %v654, %v652
        %v661 = vpack.c.b16 %v655, %v653
        %v662 = vpack.c.b16 %v658, %v656
        %v663 = vpack.c.b16 %v659, %v657
        %v684 = vunpack.c.l.b16 %v610
        %v685 = vunpack.c.h.b16 %v610
        %v686 = vunpack.c.l.b16 %v611
        %v687 = vunpack.c.h.b16 %v611
        %v688 = vunpack.c.l.b16 %v612
        %v689 = vunpack.c.h.b16 %v612
        %v690 = vunpack.c.l.b16 %v613
        %v691 = vunpack.c.h.b16 %v613
        %v692 = vunpack.c.l.b16 %v614
        %v693 = vunpack.c.h.b16 %v614
        %v694 = vunpack.c.l.b16 %v615
        %v695 = vunpack.c.h.b16 %v615
        %v696 = vunpack.c.l.b16 %v616
        %v697 = vunpack.c.h.b16 %v616
        %v698 = vunpack.c.l.b16 %v617
        %v699 = vunpack.c.h.b16 %v617
        %v700 = vunpack.c.l.b16 %v618
        %v701 = vunpack.c.h.b16 %v618
        %v702 = vunpack.c.l.b16 %v619
        %v703 = vunpack.c.h.b16 %v619
        %v704 = vunpack.c.l.b16 %v620
        %v705 = vunpack.c.h.b16 %v620
        %v706 = vunpack.c.l.b16 %v621
        %v707 = vunpack.c.h.b16 %v621
        %v708 = vunpack.c.l.b16 %v622
        %v709 = vunpack.c.h.b16 %v622
        %v710 = vunpack.c.l.b16 %v623
        %v711 = vunpack.c.h.b16 %v623
        %v712 = vunpack.c.l.b16 %v624
        %v713 = vunpack.c.h.b16 %v624
        %v714 = vunpack.c.l.b16 %v625
        %v715 = vunpack.c.h.b16 %v625
        %v716 = vunpack.c.l.b16 %v626
        %v717 = vunpack.c.h.b16 %v626
        %v718 = vunpack.c.l.b16 %v627
        %v719 = vunpack.c.h.b16 %v627
        %v720 = vpack.c.b16 %v686, %v684
        %v721 = vpack.c.b16 %v687, %v685
        %v722 = vpack.c.b16 %v690, %v688
        %v723 = vpack.c.b16 %v691, %v689
        %v724 = vpack.c.b16 %v694, %v692
        %v725 = vpack.c.b16 %v695, %v693
        %v726 = vpack.c.b16 %v698, %v696
        %v727 = vpack.c.b16 %v699, %v697
        %v728 = vpack.c.b16 %v702, %v700
        %v729 = vpack.c.b16 %v703, %v701
        %v730 = vpack.c.b16 %v706, %v704
        %v731 = vpack.c.b16 %v707, %v705
        %v732 = vpack.c.b16 %v710, %v708
        %v733 = vpack.c.b16 %v711, %v709
        %v734 = vpack.c.b16 %v714, %v712
        %v735 = vpack.c.b16 %v715, %v713
        %v736 = vpack.c.b16 %v718, %v716
        %v737 = vpack.c.b16 %v719, %v717
        %vm756 = vcmask 130048
        %v758 = vsel %vm756, %v661, 0
        %v761 = vsel %vm756, %v663, 0
        %763 = vmatprep.subr.bf16.mxu0 %v735
        %764 = vmatpush1.bf16.msra.mxu0 %v734
        %765 = vmatprep.subr.bf16.mxu0 %v733
        %766 = vmatpush1.bf16.msra.mxu0 %v732
        %767 = vmatprep.subr.bf16.mxu0 %v731
        %768 = vmatpush1.bf16.msra.mxu0 %v730
        %769 = vmatprep.subr.bf16.mxu0 %v729
        %770 = vmatpush1.bf16.msra.mxu0 %v728
        %771 = vmatprep.subr.bf16.mxu0 %v727
        %772 = vmatpush1.bf16.msra.mxu0 %v726
        %773 = vmatprep.subr.bf16.mxu0 %v725
        %774 = vmatpush1.bf16.msra.mxu0 %v724
        %775 = vmatprep.subr.bf16.mxu0 %v723
        %776 = vmatpush1.bf16.msra.mxu0 %v722
        %777 = vmatprep.subr.bf16.mxu0 %v721
        %778 = vmatpush1.bf16.msra.mxu0 %v720
        %779 = vmatprep.subr.bf16.mxu0 0
        %780 = vmatpush2.bf16.msra.mxu0 0
        %781 = vmatprep.subr.bf16.mxu0 0
        %782 = vmatpush2.bf16.msra.mxu0 0
        %783 = vmatprep.subr.bf16.mxu0 0
        %784 = vmatpush2.bf16.msra.mxu0 0
        %785 = vmatprep.subr.bf16.mxu0 0
        %786 = vmatpush2.bf16.msra.mxu0 0
        %787 = vmatprep.subr.bf16.mxu0 0
        %788 = vmatpush2.bf16.msra.mxu0 0
        %789 = vmatprep.subr.bf16.mxu0 0
        %790 = vmatpush2.bf16.msra.mxu0 0
        %791 = vmatprep.subr.bf16.mxu0 0
        %792 = vmatpush2.bf16.msra.mxu0 0
        %793 = vmatprep.subr.bf16.mxu0 %v737
        %794 = vmatpush2.bf16.msra.mxu0 %v736
        %795 = vmatprep.mubr.bf16.mxu0 %v758
        %796 = vmatmul.mubr.bf16.gmra.mxu0 %v660
        %v797 = vpop.f32.mrf.mxu0
        %v798 = vadd.f32 %v631, %v797
        %v799 = vpop.f32.mrf.mxu0
        %v800 = vadd.f32 %v631, %v799
        %v801 = vpop.f32.mrf.mxu0
        %v802 = vadd.f32 %v636, %v801
        %v803 = vpop.f32.mrf.mxu0
        %v804 = vadd.f32 %v636, %v803
        %805 = vmatprep.mubr.bf16.mxu0 %v761
        %806 = vmatmul.mubr.bf16.gmra.mxu0 %v662
        %v807 = vpop.f32.mrf.mxu0
        %v808 = vadd.f32 %v641, %v807
        %v809 = vpop.f32.mrf.mxu0
        %v810 = vadd.f32 %v641, %v809
        %v811 = vpop.f32.mrf.mxu0
        %v812 = vadd.f32 %v646, %v811
        %v813 = vpop.f32.mrf.mxu0
        %v814 = vadd.f32 %v646, %v813
        %815 = vdwg.mxu0
        %v816 = vld [vmem:[%s2] sm:$0xff]
        %v817 = vld [vmem:[%s2 + $0x8] sm:$0xf]
        %v818 = vld [vmem:[%s2 + $0xc] sm:$0xff]
        %v819 = vld [vmem:[%s2 + $0x14] sm:$0xf]
        %v820 = vld [vmem:[%s2 + $0x18] sm:$0xff]
        %v821 = vld [vmem:[%s2 + $0x20] sm:$0xf]
        %v822 = vld [vmem:[%s2 + $0x24] sm:$0xff]
        %v823 = vld [vmem:[%s2 + $0x2c] sm:$0xf]
        %v824 = vld [vmem:[%s3] sm:$0xff]
        %v825 = vld [vmem:[%s3 + $0x8] sm:$0xff]
        %v826 = vld [vmem:[%s3 + $0x10] sm:$0xff]
        %v827 = vld [vmem:[%s3 + $0x18] sm:$0xff]
        %828 = vrot.lane.b32.xlu0 %v798, 17
        %v829 = vpop.permute.xlu0 %828
        %830 = vrot.lane.b32.xlu0 %v802, 17
        %v831 = vpop.permute.xlu0 %830
        %832 = vrot.lane.b32.xlu0 %v808, 17
        %v833 = vpop.permute.xlu0 %832
        %834 = vrot.lane.b32.xlu0 %v812, 17
        %v835 = vpop.permute.xlu0 %834
        %836 = vrot.lane.b32.xlu0 %v800, 17
        %v837 = vpop.permute.xlu0 %836
        %838 = vrot.lane.b32.xlu0 %v804, 17
        %v839 = vpop.permute.xlu0 %838
        %840 = vrot.lane.b32.xlu0 %v810, 17
        %v841 = vpop.permute.xlu0 %840
        %842 = vrot.lane.b32.xlu0 %v814, 17
        %v843 = vpop.permute.xlu0 %842
        %v844 = vsel %vm356, %v829, %v837
        %v845 = vsel %vm356, %v831, %v839
        %v846 = vsel %vm356, %v833, %v841
        %v847 = vsel %vm356, %v835, %v843
        %v848 = vsel %vm356, %v837, %v829
        %v849 = vsel %vm356, %v839, %v831
        %v850 = vsel %vm356, %v841, %v833
        %v851 = vsel %vm356, %v843, %v835
        %v852 = vmul.f32 %v848, %v296
        %v853 = vmul.f32 %v844, %v297
        %v854 = vmul.f32 %v849, %v296
        %v855 = vmul.f32 %v845, %v297
        %v856 = vmul.f32 %v850, %v296
        %v857 = vmul.f32 %v846, %v297
        %v858 = vmul.f32 %v851, %v296
        %v859 = vmul.f32 %v847, %v297
        %v860 = vpack.c.bf16 %v854, %v852
        %v861 = vpack.c.bf16 %v855, %v853
        %v862 = vpack.c.bf16 %v858, %v856
        %v863 = vpack.c.bf16 %v859, %v857
        %v868 = vunpack.c.l.b16 %v860
        %v869 = vunpack.c.l.b16 %v861
        %v870 = vunpack.c.h.b16 %v860
        %v871 = vunpack.c.h.b16 %v861
        %v872 = vunpack.c.l.b16 %v862
        %v873 = vunpack.c.l.b16 %v863
        %v874 = vunpack.c.h.b16 %v862
        %v875 = vunpack.c.h.b16 %v863
        %v876 = vpack.c.b16 %v869, %v868
        %v877 = vpack.c.b16 %v871, %v870
        %v878 = vpack.c.b16 %v873, %v872
        %v879 = vpack.c.b16 %v875, %v874
        %884 = vst [vmem:[#allocation2] sm:$0xff] %v876
        %885 = vst [vmem:[#allocation2 + $0x8] sm:$0xff] %v877
        %886 = vst [vmem:[#allocation2 + $0x10] sm:$0xff] %v878
        %887 = vst [vmem:[#allocation2 + $0x18] sm:$0xff] %v879
        %888 = vrot.lane.b32.xlu0 %v798, 16
        %v889 = vpop.permute.xlu0 %888
        %890 = vrot.lane.b32.xlu0 %v802, 16
        %v891 = vpop.permute.xlu0 %890
        %892 = vrot.lane.b32.xlu0 %v808, 16
        %v893 = vpop.permute.xlu0 %892
        %894 = vrot.lane.b32.xlu0 %v812, 16
        %v895 = vpop.permute.xlu0 %894
        %896 = vrot.lane.b32.xlu0 %v800, 16
        %v897 = vpop.permute.xlu0 %896
        %898 = vrot.lane.b32.xlu0 %v804, 16
        %v899 = vpop.permute.xlu0 %898
        %900 = vrot.lane.b32.xlu0 %v810, 16
        %v901 = vpop.permute.xlu0 %900
        %902 = vrot.lane.b32.xlu0 %v814, 16
        %v903 = vpop.permute.xlu0 %902
        %v904 = vsel %vm387, %v889, %v897
        %v905 = vsel %vm387, %v891, %v899
        %v906 = vsel %vm387, %v893, %v901
        %v907 = vsel %vm387, %v895, %v903
        %v908 = vsel %vm387, %v897, %v889
        %v909 = vsel %vm387, %v899, %v891
        %v910 = vsel %vm387, %v901, %v893
        %v911 = vsel %vm387, %v903, %v895
        %v912 = vmul.f32 %v908, %v300
        %v913 = vmul.f32 %v904, %v301
        %v914 = vmul.f32 %v909, %v300
        %v915 = vmul.f32 %v905, %v301
        %v916 = vmul.f32 %v910, %v300
        %v917 = vmul.f32 %v906, %v301
        %v918 = vmul.f32 %v911, %v300
        %v919 = vmul.f32 %v907, %v301
        %v920 = vpack.c.bf16 %v914, %v912
        %v921 = vpack.c.bf16 %v915, %v913
        %v922 = vpack.c.bf16 %v918, %v916
        %v923 = vpack.c.bf16 %v919, %v917
        %v928 = vunpack.c.l.b16 %v920
        %v929 = vunpack.c.l.b16 %v921
        %v930 = vunpack.c.h.b16 %v920
        %v931 = vunpack.c.h.b16 %v921
        %v932 = vunpack.c.l.b16 %v922
        %v933 = vunpack.c.l.b16 %v923
        %v934 = vunpack.c.h.b16 %v922
        %v935 = vunpack.c.h.b16 %v923
        %v936 = vpack.c.b16 %v929, %v928
        %v937 = vpack.c.b16 %v931, %v930
        %v938 = vpack.c.b16 %v933, %v932
        %v939 = vpack.c.b16 %v935, %v934
        %944 = vst [vmem:[#allocation2 + $0x20] sm:$0xff] %v936
        %945 = vst [vmem:[#allocation2 + $0x28] sm:$0xff] %v937
        %946 = vst [vmem:[#allocation2 + $0x30] sm:$0xff] %v938
        %947 = vst [vmem:[#allocation2 + $0x38] sm:$0xff] %v939
        %948 = vrot.lane.b32.xlu0 %v798, 15
        %v949 = vpop.permute.xlu0 %948
        %950 = vrot.lane.b32.xlu0 %v802, 15
        %v951 = vpop.permute.xlu0 %950
        %952 = vrot.lane.b32.xlu0 %v808, 15
        %v953 = vpop.permute.xlu0 %952
        %954 = vrot.lane.b32.xlu0 %v812, 15
        %v955 = vpop.permute.xlu0 %954
        %956 = vrot.lane.b32.xlu0 %v800, 15
        %v957 = vpop.permute.xlu0 %956
        %958 = vrot.lane.b32.xlu0 %v804, 15
        %v959 = vpop.permute.xlu0 %958
        %960 = vrot.lane.b32.xlu0 %v810, 15
        %v961 = vpop.permute.xlu0 %960
        %962 = vrot.lane.b32.xlu0 %v814, 15
        %v963 = vpop.permute.xlu0 %962
        %v964 = vsel %vm418, %v949, %v957
        %v965 = vsel %vm418, %v951, %v959
        %v966 = vsel %vm418, %v953, %v961
        %v967 = vsel %vm418, %v955, %v963
        %v968 = vsel %vm418, %v957, %v949
        %v969 = vsel %vm418, %v959, %v951
        %v970 = vsel %vm418, %v961, %v953
        %v971 = vsel %vm418, %v963, %v955
        %v972 = vmul.f32 %v968, %v308
        %v973 = vmul.f32 %v964, %v309
        %v974 = vmul.f32 %v969, %v308
        %v975 = vmul.f32 %v965, %v309
        %v976 = vmul.f32 %v970, %v308
        %v977 = vmul.f32 %v966, %v309
        %v978 = vmul.f32 %v971, %v308
        %v979 = vmul.f32 %v967, %v309
        %v980 = vpack.c.bf16 %v974, %v972
        %v981 = vpack.c.bf16 %v975, %v973
        %v982 = vpack.c.bf16 %v978, %v976
        %v983 = vpack.c.bf16 %v979, %v977
        %v988 = vunpack.c.l.b16 %v980
        %v989 = vunpack.c.l.b16 %v981
        %v990 = vunpack.c.h.b16 %v980
        %v991 = vunpack.c.h.b16 %v981
        %v992 = vunpack.c.l.b16 %v982
        %v993 = vunpack.c.l.b16 %v983
        %v994 = vunpack.c.h.b16 %v982
        %v995 = vunpack.c.h.b16 %v983
        %v996 = vpack.c.b16 %v989, %v988
        %v997 = vpack.c.b16 %v991, %v990
        %v998 = vpack.c.b16 %v993, %v992
        %v999 = vpack.c.b16 %v995, %v994
        %1004 = vst [vmem:[#allocation2 + $0x40] sm:$0xff] %v996
        %1005 = vst [vmem:[#allocation2 + $0x48] sm:$0xff] %v997
        %1006 = vst [vmem:[#allocation2 + $0x50] sm:$0xff] %v998
        %1007 = vst [vmem:[#allocation2 + $0x58] sm:$0xff] %v999
        %1008 = vrot.lane.b32.xlu0 %v798, 1
        %v1009 = vpop.permute.xlu0 %1008
        %1010 = vrot.lane.b32.xlu0 %v802, 1
        %v1011 = vpop.permute.xlu0 %1010
        %1012 = vrot.lane.b32.xlu0 %v808, 1
        %v1013 = vpop.permute.xlu0 %1012
        %1014 = vrot.lane.b32.xlu0 %v812, 1
        %v1015 = vpop.permute.xlu0 %1014
        %1016 = vrot.lane.b32.xlu0 %v800, 1
        %v1017 = vpop.permute.xlu0 %1016
        %1018 = vrot.lane.b32.xlu0 %v804, 1
        %v1019 = vpop.permute.xlu0 %1018
        %1020 = vrot.lane.b32.xlu0 %v810, 1
        %v1021 = vpop.permute.xlu0 %1020
        %1022 = vrot.lane.b32.xlu0 %v814, 1
        %v1023 = vpop.permute.xlu0 %1022
        %v1024 = vsel %vm449, %v1009, %v1017
        %v1025 = vsel %vm449, %v1011, %v1019
        %v1026 = vsel %vm449, %v1013, %v1021
        %v1027 = vsel %vm449, %v1015, %v1023
        %v1028 = vsel %vm449, %v1017, %v1009
        %v1029 = vsel %vm449, %v1019, %v1011
        %v1030 = vsel %vm449, %v1021, %v1013
        %v1031 = vsel %vm449, %v1023, %v1015
        %v1032 = vmul.f32 %v1028, %v312
        %v1033 = vmul.f32 %v1024, %v313
        %v1034 = vmul.f32 %v1029, %v312
        %v1035 = vmul.f32 %v1025, %v313
        %v1036 = vmul.f32 %v1030, %v312
        %v1037 = vmul.f32 %v1026, %v313
        %v1038 = vmul.f32 %v1031, %v312
        %v1039 = vmul.f32 %v1027, %v313
        %v1040 = vpack.c.bf16 %v1034, %v1032
        %v1041 = vpack.c.bf16 %v1035, %v1033
        %v1042 = vpack.c.bf16 %v1038, %v1036
        %v1043 = vpack.c.bf16 %v1039, %v1037
        %v1048 = vunpack.c.l.b16 %v1040
        %v1049 = vunpack.c.l.b16 %v1041
        %v1050 = vunpack.c.h.b16 %v1040
        %v1051 = vunpack.c.h.b16 %v1041
        %v1052 = vunpack.c.l.b16 %v1042
        %v1053 = vunpack.c.l.b16 %v1043
        %v1054 = vunpack.c.h.b16 %v1042
        %v1055 = vunpack.c.h.b16 %v1043
        %v1056 = vpack.c.b16 %v1049, %v1048
        %v1057 = vpack.c.b16 %v1051, %v1050
        %v1058 = vpack.c.b16 %v1053, %v1052
        %v1059 = vpack.c.b16 %v1055, %v1054
        %1064 = vst [vmem:[#allocation2 + $0x60] sm:$0xff] %v1056
        %1065 = vst [vmem:[#allocation2 + $0x68] sm:$0xff] %v1057
        %1066 = vst [vmem:[#allocation2 + $0x70] sm:$0xff] %v1058
        %1067 = vst [vmem:[#allocation2 + $0x78] sm:$0xff] %v1059
        %v1068 = vpack.c.bf16 %v802, %v798
        %v1069 = vpack.c.bf16 %v804, %v800
        %v1070 = vpack.c.bf16 %v812, %v808
        %v1071 = vpack.c.bf16 %v814, %v810
        %v1076 = vunpack.c.l.b16 %v1068
        %v1077 = vunpack.c.l.b16 %v1069
        %v1078 = vunpack.c.h.b16 %v1068
        %v1079 = vunpack.c.h.b16 %v1069
        %v1080 = vunpack.c.l.b16 %v1070
        %v1081 = vunpack.c.l.b16 %v1071
        %v1082 = vunpack.c.h.b16 %v1070
        %v1083 = vunpack.c.h.b16 %v1071
        %v1084 = vpack.c.b16 %v1077, %v1076
        %v1085 = vpack.c.b16 %v1079, %v1078
        %v1086 = vpack.c.b16 %v1081, %v1080
        %v1087 = vpack.c.b16 %v1083, %v1082
        %1092 = vst [vmem:[#allocation2 + $0x80] sm:$0xff] %v1084
        %1093 = vst [vmem:[#allocation2 + $0x88] sm:$0xff] %v1085
        %1094 = vst [vmem:[#allocation2 + $0x90] sm:$0xff] %v1086
        %1095 = vst [vmem:[#allocation2 + $0x98] sm:$0xff] %v1087
        %1096 = vrot.lane.b32.xlu0 %v798, 127
        %v1097 = vpop.permute.xlu0 %1096
        %1098 = vrot.lane.b32.xlu0 %v802, 127
        %v1099 = vpop.permute.xlu0 %1098
        %1100 = vrot.lane.b32.xlu0 %v808, 127
        %v1101 = vpop.permute.xlu0 %1100
        %1102 = vrot.lane.b32.xlu0 %v812, 127
        %v1103 = vpop.permute.xlu0 %1102
        %1104 = vrot.lane.b32.xlu0 %v800, 127
        %v1105 = vpop.permute.xlu0 %1104
        %1106 = vrot.lane.b32.xlu0 %v804, 127
        %v1107 = vpop.permute.xlu0 %1106
        %1108 = vrot.lane.b32.xlu0 %v810, 127
        %v1109 = vpop.permute.xlu0 %1108
        %1110 = vrot.lane.b32.xlu0 %v814, 127
        %v1111 = vpop.permute.xlu0 %1110
        %v1112 = vsel %vm494, %v1097, %v1105
        %v1113 = vsel %vm494, %v1099, %v1107
        %v1114 = vsel %vm494, %v1101, %v1109
        %v1115 = vsel %vm494, %v1103, %v1111
        %v1116 = vsel %vm494, %v1105, %v1097
        %v1117 = vsel %vm494, %v1107, %v1099
        %v1118 = vsel %vm494, %v1109, %v1101
        %v1119 = vsel %vm494, %v1111, %v1103
        %v1120 = vmul.f32 %v1112, %v316
        %v1121 = vmul.f32 %v1116, %v317
        %v1122 = vmul.f32 %v1113, %v316
        %v1123 = vmul.f32 %v1117, %v317
        %v1124 = vmul.f32 %v1114, %v316
        %v1125 = vmul.f32 %v1118, %v317
        %v1126 = vmul.f32 %v1115, %v316
        %v1127 = vmul.f32 %v1119, %v317
        %v1128 = vpack.c.bf16 %v1122, %v1120
        %v1129 = vpack.c.bf16 %v1123, %v1121
        %v1130 = vpack.c.bf16 %v1126, %v1124
        %v1131 = vpack.c.bf16 %v1127, %v1125
        %v1136 = vunpack.c.l.b16 %v1128
        %v1137 = vunpack.c.l.b16 %v1129
        %v1138 = vunpack.c.h.b16 %v1128
        %v1139 = vunpack.c.h.b16 %v1129
        %v1140 = vunpack.c.l.b16 %v1130
        %v1141 = vunpack.c.l.b16 %v1131
        %v1142 = vunpack.c.h.b16 %v1130
        %v1143 = vunpack.c.h.b16 %v1131
        %v1144 = vpack.c.b16 %v1137, %v1136
        %v1145 = vpack.c.b16 %v1139, %v1138
        %v1146 = vpack.c.b16 %v1141, %v1140
        %v1147 = vpack.c.b16 %v1143, %v1142
        %1152 = vst [vmem:[#allocation2 + $0xa0] sm:$0xff] %v1144
        %1153 = vst [vmem:[#allocation2 + $0xa8] sm:$0xff] %v1145
        %1154 = vst [vmem:[#allocation2 + $0xb0] sm:$0xff] %v1146
        %1155 = vst [vmem:[#allocation2 + $0xb8] sm:$0xff] %v1147
        %1156 = vrot.lane.b32.xlu0 %v798, 113
        %v1157 = vpop.permute.xlu0 %1156
        %1158 = vrot.lane.b32.xlu0 %v802, 113
        %v1159 = vpop.permute.xlu0 %1158
        %1160 = vrot.lane.b32.xlu0 %v808, 113
        %v1161 = vpop.permute.xlu0 %1160
        %1162 = vrot.lane.b32.xlu0 %v812, 113
        %v1163 = vpop.permute.xlu0 %1162
        %1164 = vrot.lane.b32.xlu0 %v800, 113
        %v1165 = vpop.permute.xlu0 %1164
        %1166 = vrot.lane.b32.xlu0 %v804, 113
        %v1167 = vpop.permute.xlu0 %1166
        %1168 = vrot.lane.b32.xlu0 %v810, 113
        %v1169 = vpop.permute.xlu0 %1168
        %1170 = vrot.lane.b32.xlu0 %v814, 113
        %v1171 = vpop.permute.xlu0 %1170
        %v1172 = vsel %vm525, %v1157, %v1165
        %v1173 = vsel %vm525, %v1159, %v1167
        %v1174 = vsel %vm525, %v1161, %v1169
        %v1175 = vsel %vm525, %v1163, %v1171
        %v1176 = vsel %vm525, %v1165, %v1157
        %v1177 = vsel %vm525, %v1167, %v1159
        %v1178 = vsel %vm525, %v1169, %v1161
        %v1179 = vsel %vm525, %v1171, %v1163
        %v1180 = vmul.f32 %v1172, %v324
        %v1181 = vmul.f32 %v1176, %v325
        %v1182 = vmul.f32 %v1173, %v324
        %v1183 = vmul.f32 %v1177, %v325
        %v1184 = vmul.f32 %v1174, %v324
        %v1185 = vmul.f32 %v1178, %v325
        %v1186 = vmul.f32 %v1175, %v324
        %v1187 = vmul.f32 %v1179, %v325
        %v1188 = vpack.c.bf16 %v1182, %v1180
        %v1189 = vpack.c.bf16 %v1183, %v1181
        %v1190 = vpack.c.bf16 %v1186, %v1184
        %v1191 = vpack.c.bf16 %v1187, %v1185
        %v1196 = vunpack.c.l.b16 %v1188
        %v1197 = vunpack.c.l.b16 %v1189
        %v1198 = vunpack.c.h.b16 %v1188
        %v1199 = vunpack.c.h.b16 %v1189
        %v1200 = vunpack.c.l.b16 %v1190
        %v1201 = vunpack.c.l.b16 %v1191
        %v1202 = vunpack.c.h.b16 %v1190
        %v1203 = vunpack.c.h.b16 %v1191
        %v1204 = vpack.c.b16 %v1197, %v1196
        %v1205 = vpack.c.b16 %v1199, %v1198
        %v1206 = vpack.c.b16 %v1201, %v1200
        %v1207 = vpack.c.b16 %v1203, %v1202
        %1212 = vst [vmem:[#allocation2 + $0xc0] sm:$0xff] %v1204
        %1213 = vst [vmem:[#allocation2 + $0xc8] sm:$0xff] %v1205
        %1214 = vst [vmem:[#allocation2 + $0xd0] sm:$0xff] %v1206
        %1215 = vst [vmem:[#allocation2 + $0xd8] sm:$0xff] %v1207
        %1216 = vrot.lane.b32.xlu0 %v798, 112
        %v1217 = vpop.permute.xlu0 %1216
        %1218 = vrot.lane.b32.xlu0 %v802, 112
        %v1219 = vpop.permute.xlu0 %1218
        %1220 = vrot.lane.b32.xlu0 %v808, 112
        %v1221 = vpop.permute.xlu0 %1220
        %1222 = vrot.lane.b32.xlu0 %v812, 112
        %v1223 = vpop.permute.xlu0 %1222
        %1224 = vrot.lane.b32.xlu0 %v800, 112
        %v1225 = vpop.permute.xlu0 %1224
        %1226 = vrot.lane.b32.xlu0 %v804, 112
        %v1227 = vpop.permute.xlu0 %1226
        %1228 = vrot.lane.b32.xlu0 %v810, 112
        %v1229 = vpop.permute.xlu0 %1228
        %1230 = vrot.lane.b32.xlu0 %v814, 112
        %v1231 = vpop.permute.xlu0 %1230
        %v1232 = vsel %vm556, %v1217, %v1225
        %v1233 = vsel %vm556, %v1219, %v1227
        %v1234 = vsel %vm556, %v1221, %v1229
        %v1235 = vsel %vm556, %v1223, %v1231
        %v1236 = vsel %vm556, %v1225, %v1217
        %v1237 = vsel %vm556, %v1227, %v1219
        %v1238 = vsel %vm556, %v1229, %v1221
        %v1239 = vsel %vm556, %v1231, %v1223
        %v1240 = vmul.f32 %v1232, %v328
        %v1241 = vmul.f32 %v1236, %v329
        %v1242 = vmul.f32 %v1233, %v328
        %v1243 = vmul.f32 %v1237, %v329
        %v1244 = vmul.f32 %v1234, %v328
        %v1245 = vmul.f32 %v1238, %v329
        %v1246 = vmul.f32 %v1235, %v328
        %v1247 = vmul.f32 %v1239, %v329
        %v1248 = vpack.c.bf16 %v1242, %v1240
        %v1249 = vpack.c.bf16 %v1243, %v1241
        %v1250 = vpack.c.bf16 %v1246, %v1244
        %v1251 = vpack.c.bf16 %v1247, %v1245
        %v1256 = vunpack.c.l.b16 %v1248
        %v1257 = vunpack.c.l.b16 %v1249
        %v1258 = vunpack.c.h.b16 %v1248
        %v1259 = vunpack.c.h.b16 %v1249
        %v1260 = vunpack.c.l.b16 %v1250
        %v1261 = vunpack.c.l.b16 %v1251
        %v1262 = vunpack.c.h.b16 %v1250
        %v1263 = vunpack.c.h.b16 %v1251
        %v1264 = vpack.c.b16 %v1257, %v1256
        %v1265 = vpack.c.b16 %v1259, %v1258
        %v1266 = vpack.c.b16 %v1261, %v1260
        %v1267 = vpack.c.b16 %v1263, %v1262
        %1272 = vst [vmem:[#allocation2 + $0xe0] sm:$0xff] %v1264
        %1273 = vst [vmem:[#allocation2 + $0xe8] sm:$0xff] %v1265
        %1274 = vst [vmem:[#allocation2 + $0xf0] sm:$0xff] %v1266
        %1275 = vst [vmem:[#allocation2 + $0xf8] sm:$0xff] %v1267
        %1276 = vrot.lane.b32.xlu0 %v798, 111
        %v1277 = vpop.permute.xlu0 %1276
        %1278 = vrot.lane.b32.xlu0 %v802, 111
        %v1279 = vpop.permute.xlu0 %1278
        %1280 = vrot.lane.b32.xlu0 %v808, 111
        %v1281 = vpop.permute.xlu0 %1280
        %1282 = vrot.lane.b32.xlu0 %v812, 111
        %v1283 = vpop.permute.xlu0 %1282
        %1284 = vrot.lane.b32.xlu0 %v800, 111
        %v1285 = vpop.permute.xlu0 %1284
        %1286 = vrot.lane.b32.xlu0 %v804, 111
        %v1287 = vpop.permute.xlu0 %1286
        %1288 = vrot.lane.b32.xlu0 %v810, 111
        %v1289 = vpop.permute.xlu0 %1288
        %1290 = vrot.lane.b32.xlu0 %v814, 111
        %v1291 = vpop.permute.xlu0 %1290
        %v1292 = vsel %vm587, %v1277, %v1285
        %v1293 = vsel %vm587, %v1279, %v1287
        %v1294 = vsel %vm587, %v1281, %v1289
        %v1295 = vsel %vm587, %v1283, %v1291
        %v1296 = vsel %vm587, %v1285, %v1277
        %v1297 = vsel %vm587, %v1287, %v1279
        %v1298 = vsel %vm587, %v1289, %v1281
        %v1299 = vsel %vm587, %v1291, %v1283
        %v1300 = vmul.f32 %v1292, %v334
        %v1301 = vmul.f32 %v1296, %v335
        %v1302 = vmul.f32 %v1293, %v334
        %v1303 = vmul.f32 %v1297, %v335
        %v1304 = vmul.f32 %v1294, %v334
        %v1305 = vmul.f32 %v1298, %v335
        %v1306 = vmul.f32 %v1295, %v334
        %v1307 = vmul.f32 %v1299, %v335
        %v1308 = vpack.c.bf16 %v1302, %v1300
        %v1309 = vpack.c.bf16 %v1303, %v1301
        %v1310 = vpack.c.bf16 %v1306, %v1304
        %v1311 = vpack.c.bf16 %v1307, %v1305
        %v1316 = vunpack.c.l.b16 %v1308
        %v1317 = vunpack.c.l.b16 %v1309
        %v1318 = vunpack.c.h.b16 %v1308
        %v1319 = vunpack.c.h.b16 %v1309
        %v1320 = vunpack.c.l.b16 %v1310
        %v1321 = vunpack.c.l.b16 %v1311
        %v1322 = vunpack.c.h.b16 %v1310
        %v1323 = vunpack.c.h.b16 %v1311
        %v1324 = vpack.c.b16 %v1317, %v1316
        %v1325 = vpack.c.b16 %v1319, %v1318
        %v1326 = vpack.c.b16 %v1321, %v1320
        %v1327 = vpack.c.b16 %v1323, %v1322
        %1332 = vst [vmem:[#allocation2 + $0x100] sm:$0xff] %v1324
        %1333 = vst [vmem:[#allocation2 + $0x108] sm:$0xff] %v1325
        %1334 = vst [vmem:[#allocation2 + $0x110] sm:$0xff] %v1326
        %1335 = vst [vmem:[#allocation2 + $0x118] sm:$0xff] %v1327
        %v1336 = vld [vmem:[#allocation2] sm:$0xff]
        %v1337 = vld [vmem:[#allocation2 + $0x8] sm:$0xff]
        %v1338 = vld [vmem:[#allocation2 + $0x10] sm:$0xff]
        %v1339 = vld [vmem:[#allocation2 + $0x18] sm:$0xff]
        %v1340 = vld [vmem:[#allocation2 + $0x20] sm:$0xff]
        %v1341 = vld [vmem:[#allocation2 + $0x28] sm:$0xff]
        %v1342 = vld [vmem:[#allocation2 + $0x30] sm:$0xff]
        %v1343 = vld [vmem:[#allocation2 + $0x38] sm:$0xff]
        %v1344 = vld [vmem:[#allocation2 + $0x40] sm:$0xff]
        %v1345 = vld [vmem:[#allocation2 + $0x48] sm:$0xff]
        %v1346 = vld [vmem:[#allocation2 + $0x50] sm:$0xff]
        %v1347 = vld [vmem:[#allocation2 + $0x58] sm:$0xff]
        %v1348 = vld [vmem:[#allocation2 + $0x60] sm:$0xff]
        %v1349 = vld [vmem:[#allocation2 + $0x68] sm:$0xff]
        %v1350 = vld [vmem:[#allocation2 + $0x70] sm:$0xff]
        %v1351 = vld [vmem:[#allocation2 + $0x78] sm:$0xff]
        %v1352 = vld [vmem:[#allocation2 + $0x80] sm:$0xff]
        %v1353 = vld [vmem:[#allocation2 + $0x88] sm:$0xff]
        %v1354 = vld [vmem:[#allocation2 + $0x90] sm:$0xff]
        %v1355 = vld [vmem:[#allocation2 + $0x98] sm:$0xff]
        %v1356 = vld [vmem:[#allocation2 + $0xa0] sm:$0xff]
        %v1357 = vld [vmem:[#allocation2 + $0xa8] sm:$0xff]
        %v1358 = vld [vmem:[#allocation2 + $0xb0] sm:$0xff]
        %v1359 = vld [vmem:[#allocation2 + $0xb8] sm:$0xff]
        %v1360 = vld [vmem:[#allocation2 + $0xc0] sm:$0xff]
        %v1361 = vld [vmem:[#allocation2 + $0xc8] sm:$0xff]
        %v1362 = vld [vmem:[#allocation2 + $0xd0] sm:$0xff]
        %v1363 = vld [vmem:[#allocation2 + $0xd8] sm:$0xff]
        %v1364 = vld [vmem:[#allocation2 + $0xe0] sm:$0xff]
        %v1365 = vld [vmem:[#allocation2 + $0xe8] sm:$0xff]
        %v1366 = vld [vmem:[#allocation2 + $0xf0] sm:$0xff]
        %v1367 = vld [vmem:[#allocation2 + $0xf8] sm:$0xff]
        %v1368 = vld [vmem:[#allocation2 + $0x100] sm:$0xff]
        %v1369 = vld [vmem:[#allocation2 + $0x108] sm:$0xff]
        %v1370 = vld [vmem:[#allocation2 + $0x110] sm:$0xff]
        %v1371 = vld [vmem:[#allocation2 + $0x118] sm:$0xff]
        %1373 = vset.pattern.permute.xlu0 1
        %1374 = vperm.xlu0 %1373, %v824
        %v1375 = vpop.permute.xlu0 %1374
        %1378 = vset.pattern.permute.xlu0 1
        %1379 = vperm.xlu0 %1378, %v825
        %v1380 = vpop.permute.xlu0 %1379
        %1383 = vset.pattern.permute.xlu0 1
        %1384 = vperm.xlu0 %1383, %v826
        %v1385 = vpop.permute.xlu0 %1384
        %1388 = vset.pattern.permute.xlu0 1
        %1389 = vperm.xlu0 %1388, %v827
        %v1390 = vpop.permute.xlu0 %1389
        %v1400 = vunpack.c.l.b16 %v816
        %v1401 = vunpack.c.h.b16 %v816
        %v1402 = vunpack.c.l.b16 %v817
        %v1403 = vunpack.c.l.b16 %v818
        %v1404 = vunpack.c.h.b16 %v818
        %v1405 = vunpack.c.l.b16 %v819
        %v1406 = vunpack.c.l.b16 %v820
        %v1407 = vunpack.c.h.b16 %v820
        %v1408 = vunpack.c.l.b16 %v821
        %v1409 = vunpack.c.l.b16 %v822
        %v1410 = vunpack.c.h.b16 %v822
        %v1411 = vunpack.c.l.b16 %v823
        %v1412 = vpack.c.b16 %v1403, %v1400
        %v1413 = vpack.c.b16 %v1404, %v1401
        %v1414 = vpack.c.b16 %v1405, %v1402
        %v1415 = vpack.c.b16 %v1409, %v1406
        %v1416 = vpack.c.b16 %v1410, %v1407
        %v1417 = vpack.c.b16 %v1411, %v1408
        %v1458 = vunpack.c.l.b16 %v1336
        %v1459 = vunpack.c.h.b16 %v1336
        %v1460 = vunpack.c.l.b16 %v1337
        %v1461 = vunpack.c.h.b16 %v1337
        %v1462 = vunpack.c.l.b16 %v1338
        %v1463 = vunpack.c.h.b16 %v1338
        %v1464 = vunpack.c.l.b16 %v1339
        %v1465 = vunpack.c.h.b16 %v1339
        %v1466 = vunpack.c.l.b16 %v1340
        %v1467 = vunpack.c.h.b16 %v1340
        %v1468 = vunpack.c.l.b16 %v1341
        %v1469 = vunpack.c.h.b16 %v1341
        %v1470 = vunpack.c.l.b16 %v1342
        %v1471 = vunpack.c.h.b16 %v1342
        %v1472 = vunpack.c.l.b16 %v1343
        %v1473 = vunpack.c.h.b16 %v1343
        %v1474 = vunpack.c.l.b16 %v1344
        %v1475 = vunpack.c.h.b16 %v1344
        %v1476 = vunpack.c.l.b16 %v1345
        %v1477 = vunpack.c.h.b16 %v1345
        %v1478 = vunpack.c.l.b16 %v1346
        %v1479 = vunpack.c.h.b16 %v1346
        %v1480 = vunpack.c.l.b16 %v1347
        %v1481 = vunpack.c.h.b16 %v1347
        %v1482 = vunpack.c.l.b16 %v1348
        %v1483 = vunpack.c.h.b16 %v1348
        %v1484 = vunpack.c.l.b16 %v1349
        %v1485 = vunpack.c.h.b16 %v1349
        %v1486 = vunpack.c.l.b16 %v1350
        %v1487 = vunpack.c.h.b16 %v1350
        %v1488 = vunpack.c.l.b16 %v1351
        %v1489 = vunpack.c.h.b16 %v1351
        %v1490 = vunpack.c.l.b16 %v1352
        %v1491 = vunpack.c.h.b16 %v1352
        %v1492 = vunpack.c.l.b16 %v1353
        %v1493 = vunpack.c.h.b16 %v1353
        %v1494 = vunpack.c.l.b16 %v1354
        %v1495 = vunpack.c.h.b16 %v1354
        %v1496 = vunpack.c.l.b16 %v1355
        %v1497 = vunpack.c.h.b16 %v1355
        %v1498 = vunpack.c.l.b16 %v1356
        %v1499 = vunpack.c.h.b16 %v1356
        %v1500 = vunpack.c.l.b16 %v1357
        %v1501 = vunpack.c.h.b16 %v1357
        %v1502 = vunpack.c.l.b16 %v1358
        %v1503 = vunpack.c.h.b16 %v1358
        %v1504 = vunpack.c.l.b16 %v1359
        %v1505 = vunpack.c.h.b16 %v1359
        %v1506 = vunpack.c.l.b16 %v1360
        %v1507 = vunpack.c.h.b16 %v1360
        %v1508 = vunpack.c.l.b16 %v1361
        %v1509 = vunpack.c.h.b16 %v1361
        %v1510 = vunpack.c.l.b16 %v1362
        %v1511 = vunpack.c.h.b16 %v1362
        %v1512 = vunpack.c.l.b16 %v1363
        %v1513 = vunpack.c.h.b16 %v1363
        %v1514 = vunpack.c.l.b16 %v1364
        %v1515 = vunpack.c.h.b16 %v1364
        %v1516 = vunpack.c.l.b16 %v1365
        %v1517 = vunpack.c.h.b16 %v1365
        %v1518 = vunpack.c.l.b16 %v1366
        %v1519 = vunpack.c.h.b16 %v1366
        %v1520 = vunpack.c.l.b16 %v1367
        %v1521 = vunpack.c.h.b16 %v1367
        %v1522 = vunpack.c.l.b16 %v1368
        %v1523 = vunpack.c.h.b16 %v1368
        %v1524 = vunpack.c.l.b16 %v1369
        %v1525 = vunpack.c.h.b16 %v1369
        %v1526 = vunpack.c.l.b16 %v1370
        %v1527 = vunpack.c.h.b16 %v1370
        %v1528 = vunpack.c.l.b16 %v1371
        %v1529 = vunpack.c.h.b16 %v1371
        %v1530 = vpack.c.b16 %v1460, %v1458
        %v1531 = vpack.c.b16 %v1461, %v1459
        %v1532 = vpack.c.b16 %v1464, %v1462
        %v1533 = vpack.c.b16 %v1465, %v1463
        %v1534 = vpack.c.b16 %v1468, %v1466
        %v1535 = vpack.c.b16 %v1469, %v1467
        %v1536 = vpack.c.b16 %v1472, %v1470
        %v1537 = vpack.c.b16 %v1473, %v1471
        %v1538 = vpack.c.b16 %v1476, %v1474
        %v1539 = vpack.c.b16 %v1477, %v1475
        %v1540 = vpack.c.b16 %v1480, %v1478
        %v1541 = vpack.c.b16 %v1481, %v1479
        %v1542 = vpack.c.b16 %v1484, %v1482
        %v1543 = vpack.c.b16 %v1485, %v1483
        %v1544 = vpack.c.b16 %v1488, %v1486
        %v1545 = vpack.c.b16 %v1489, %v1487
        %v1546 = vpack.c.b16 %v1492, %v1490
        %v1547 = vpack.c.b16 %v1493, %v1491
        %v1548 = vpack.c.b16 %v1496, %v1494
        %v1549 = vpack.c.b16 %v1497, %v1495
        %v1550 = vpack.c.b16 %v1500, %v1498
        %v1551 = vpack.c.b16 %v1501, %v1499
        %v1552 = vpack.c.b16 %v1504, %v1502
        %v1553 = vpack.c.b16 %v1505, %v1503
        %v1554 = vpack.c.b16 %v1508, %v1506
        %v1555 = vpack.c.b16 %v1509, %v1507
        %v1556 = vpack.c.b16 %v1512, %v1510
        %v1557 = vpack.c.b16 %v1513, %v1511
        %v1558 = vpack.c.b16 %v1516, %v1514
        %v1559 = vpack.c.b16 %v1517, %v1515
        %v1560 = vpack.c.b16 %v1520, %v1518
        %v1561 = vpack.c.b16 %v1521, %v1519
        %v1562 = vpack.c.b16 %v1524, %v1522
        %v1563 = vpack.c.b16 %v1525, %v1523
        %v1564 = vpack.c.b16 %v1528, %v1526
        %v1565 = vpack.c.b16 %v1529, %v1527
        %vm1602 = vcmask 261120
        %v1604 = vsel %vm1602, %v1414, 0
        %v1607 = vsel %vm1602, %v1417, 0
        %1609 = vmatprep.subr.bf16.mxu0 %v1545
        %1610 = vmatpush1.bf16.msra.mxu0 %v1544
        %1611 = vmatprep.subr.bf16.mxu0 %v1543
        %1612 = vmatpush1.bf16.msra.mxu0 %v1542
        %1613 = vmatprep.subr.bf16.mxu0 %v1541
        %1614 = vmatpush1.bf16.msra.mxu0 %v1540
        %1615 = vmatprep.subr.bf16.mxu0 %v1539
        %1616 = vmatpush1.bf16.msra.mxu0 %v1538
        %1617 = vmatprep.subr.bf16.mxu0 %v1537
        %1618 = vmatpush1.bf16.msra.mxu0 %v1536
        %1619 = vmatprep.subr.bf16.mxu0 %v1535
        %1620 = vmatpush1.bf16.msra.mxu0 %v1534
        %1621 = vmatprep.subr.bf16.mxu0 %v1533
        %1622 = vmatpush1.bf16.msra.mxu0 %v1532
        %1623 = vmatprep.subr.bf16.mxu0 %v1531
        %1624 = vmatpush1.bf16.msra.mxu0 %v1530
        %1625 = vmatprep.subr.bf16.mxu0 %v1561
        %1626 = vmatpush2.bf16.msra.mxu0 %v1560
        %1627 = vmatprep.subr.bf16.mxu0 %v1559
        %1628 = vmatpush2.bf16.msra.mxu0 %v1558
        %1629 = vmatprep.subr.bf16.mxu0 %v1557
        %1630 = vmatpush2.bf16.msra.mxu0 %v1556
        %1631 = vmatprep.subr.bf16.mxu0 %v1555
        %1632 = vmatpush2.bf16.msra.mxu0 %v1554
        %1633 = vmatprep.subr.bf16.mxu0 %v1553
        %1634 = vmatpush2.bf16.msra.mxu0 %v1552
        %1635 = vmatprep.subr.bf16.mxu0 %v1551
        %1636 = vmatpush2.bf16.msra.mxu0 %v1550
        %1637 = vmatprep.subr.bf16.mxu0 %v1549
        %1638 = vmatpush2.bf16.msra.mxu0 %v1548
        %1639 = vmatprep.subr.bf16.mxu0 %v1547
        %1640 = vmatpush2.bf16.msra.mxu0 %v1546
        %1641 = vmatprep.mubr.bf16.mxu0 %v1413
        %1642 = vmatmul.mubr.bf16.gmra.mxu0 %v1412
        %v1643 = vpop.f32.mrf.mxu0
        %v1644 = vadd.f32 %v1375, %v1643
        %v1645 = vpop.f32.mrf.mxu0
        %v1646 = vadd.f32 %v1375, %v1645
        %v1647 = vpop.f32.mrf.mxu0
        %v1648 = vadd.f32 %v1380, %v1647
        %v1649 = vpop.f32.mrf.mxu0
        %v1650 = vadd.f32 %v1380, %v1649
        %1651 = vmatprep.mubr.bf16.mxu0 %v1416
        %1652 = vmatmul.mubr.bf16.gmra.mxu0 %v1415
        %v1653 = vpop.f32.mrf.mxu0
        %v1654 = vadd.f32 %v1385, %v1653
        %v1655 = vpop.f32.mrf.mxu0
        %v1656 = vadd.f32 %v1385, %v1655
        %v1657 = vpop.f32.mrf.mxu0
        %v1658 = vadd.f32 %v1390, %v1657
        %v1659 = vpop.f32.mrf.mxu0
        %v1660 = vadd.f32 %v1390, %v1659
        %1661 = vdwg.mxu0
        %1662 = vmatprep.subr.bf16.mxu0 0
        %1663 = vmatpush1.bf16.msra.mxu0 0
        %1664 = vmatprep.subr.bf16.mxu0 0
        %1665 = vmatpush1.bf16.msra.mxu0 0
        %1666 = vmatprep.subr.bf16.mxu0 0
        %1667 = vmatpush1.bf16.msra.mxu0 0
        %1668 = vmatprep.subr.bf16.mxu0 0
        %1669 = vmatpush1.bf16.msra.mxu0 0
        %1670 = vmatprep.subr.bf16.mxu0 0
        %1671 = vmatpush1.bf16.msra.mxu0 0
        %1672 = vmatprep.subr.bf16.mxu0 0
        %1673 = vmatpush1.bf16.msra.mxu0 0
        %1674 = vmatprep.subr.bf16.mxu0 %v1565
        %1675 = vmatpush1.bf16.msra.mxu0 %v1564
        %1676 = vmatprep.subr.bf16.mxu0 %v1563
        %1677 = vmatpush1.bf16.msra.mxu0 %v1562
        %1678 = vmatprep.subr.bf16.mxu0 0
        %1679 = vmatpush2.bf16.msra.mxu0 0
        %1680 = vmatprep.subr.bf16.mxu0 0
        %1681 = vmatpush2.bf16.msra.mxu0 0
        %1682 = vmatprep.subr.bf16.mxu0 0
        %1683 = vmatpush2.bf16.msra.mxu0 0
        %1684 = vmatprep.subr.bf16.mxu0 0
        %1685 = vmatpush2.bf16.msra.mxu0 0
        %1686 = vmatprep.subr.bf16.mxu0 0
        %1687 = vmatpush2.bf16.msra.mxu0 0
        %1688 = vmatprep.subr.bf16.mxu0 0
        %1689 = vmatpush2.bf16.msra.mxu0 0
        %1690 = vmatprep.subr.bf16.mxu0 0
        %1691 = vmatpush2.bf16.msra.mxu0 0
        %1692 = vmatprep.subr.bf16.mxu0 0
        %1693 = vmatpush2.bf16.msra.mxu0 0
        %1694 = vmatprep.mubr.bf16.mxu0 0
        %1695 = vmatmul.mubr.bf16.gmra.mxu0 %v1604
        %v1696 = vpop.f32.mrf.mxu0
        %v1697 = vadd.f32 %v1644, %v1696
        %v1698 = vpop.f32.mrf.mxu0
        %v1699 = vadd.f32 %v1646, %v1698
        %v1700 = vpop.f32.mrf.mxu0
        %v1701 = vadd.f32 %v1648, %v1700
        %v1702 = vpop.f32.mrf.mxu0
        %v1703 = vadd.f32 %v1650, %v1702
        %1704 = vmatprep.mubr.bf16.mxu0 0
        %1705 = vmatmul.mubr.bf16.gmra.mxu0 %v1607
        %v1706 = vpop.f32.mrf.mxu0
        %v1707 = vadd.f32 %v1654, %v1706
        %v1708 = vpop.f32.mrf.mxu0
        %v1709 = vadd.f32 %v1656, %v1708
        %v1710 = vpop.f32.mrf.mxu0
        %v1711 = vadd.f32 %v1658, %v1710
        %v1712 = vpop.f32.mrf.mxu0
        %v1713 = vadd.f32 %v1660, %v1712
        %1714 = vdwg.mxu0
        %v1715 = vmax.f32 %v1697, 0.0
        %v1716 = vmax.f32 %v1699, 0.0
        %v1717 = vmax.f32 %v1701, 0.0
        %v1718 = vmax.f32 %v1703, 0.0
        %v1719 = vmax.f32 %v1707, 0.0
        %v1720 = vmax.f32 %v1709, 0.0
        %v1721 = vmax.f32 %v1711, 0.0
        %v1722 = vmax.f32 %v1713, 0.0
        %s1723 = scalar_lea.vmem %s2, 48
        %v1724 = vld [vmem:[%s1723] sm:$0xff]
        %v1725 = vld [vmem:[%s1723 + $0x8] sm:$0xf]
        %v1726 = vld [vmem:[%s1723 + $0xc] sm:$0xff]
        %v1727 = vld [vmem:[%s1723 + $0x14] sm:$0xf]
        %v1728 = vld [vmem:[%s1723 + $0x18] sm:$0xff]
        %v1729 = vld [vmem:[%s1723 + $0x20] sm:$0xf]
        %v1730 = vld [vmem:[%s1723 + $0x24] sm:$0xff]
        %v1731 = vld [vmem:[%s1723 + $0x2c] sm:$0xf]
        %v1732 = vld [vmem:[%s3] sm:$0xff]
        %v1733 = vld [vmem:[%s3 + $0x8] sm:$0xff]
        %v1734 = vld [vmem:[%s3 + $0x10] sm:$0xff]
        %v1735 = vld [vmem:[%s3 + $0x18] sm:$0xff]
        %1736 = vrot.lane.b32.xlu0 %v1715, 17
        %v1737 = vpop.permute.xlu0 %1736
        %1738 = vrot.lane.b32.xlu0 %v1717, 17
        %v1739 = vpop.permute.xlu0 %1738
        %1740 = vrot.lane.b32.xlu0 %v1719, 17
        %v1741 = vpop.permute.xlu0 %1740
        %1742 = vrot.lane.b32.xlu0 %v1721, 17
        %v1743 = vpop.permute.xlu0 %1742
        %1744 = vrot.lane.b32.xlu0 %v1716, 17
        %v1745 = vpop.permute.xlu0 %1744
        %1746 = vrot.lane.b32.xlu0 %v1718, 17
        %v1747 = vpop.permute.xlu0 %1746
        %1748 = vrot.lane.b32.xlu0 %v1720, 17
        %v1749 = vpop.permute.xlu0 %1748
        %1750 = vrot.lane.b32.xlu0 %v1722, 17
        %v1751 = vpop.permute.xlu0 %1750
        %v1752 = vsel %vm356, %v1737, %v1745
        %v1753 = vsel %vm356, %v1739, %v1747
        %v1754 = vsel %vm356, %v1741, %v1749
        %v1755 = vsel %vm356, %v1743, %v1751
        %v1756 = vsel %vm356, %v1745, %v1737
        %v1757 = vsel %vm356, %v1747, %v1739
        %v1758 = vsel %vm356, %v1749, %v1741
        %v1759 = vsel %vm356, %v1751, %v1743
        %v1760 = vmul.f32 %v1756, %v296
        %v1761 = vmul.f32 %v1752, %v297
        %v1762 = vmul.f32 %v1757, %v296
        %v1763 = vmul.f32 %v1753, %v297
        %v1764 = vmul.f32 %v1758, %v296
        %v1765 = vmul.f32 %v1754, %v297
        %v1766 = vmul.f32 %v1759, %v296
        %v1767 = vmul.f32 %v1755, %v297
        %v1768 = vpack.c.bf16 %v1762, %v1760
        %v1769 = vpack.c.bf16 %v1763, %v1761
        %v1770 = vpack.c.bf16 %v1766, %v1764
        %v1771 = vpack.c.bf16 %v1767, %v1765
        %v1776 = vunpack.c.l.b16 %v1768
        %v1777 = vunpack.c.l.b16 %v1769
        %v1778 = vunpack.c.h.b16 %v1768
        %v1779 = vunpack.c.h.b16 %v1769
        %v1780 = vunpack.c.l.b16 %v1770
        %v1781 = vunpack.c.l.b16 %v1771
        %v1782 = vunpack.c.h.b16 %v1770
        %v1783 = vunpack.c.h.b16 %v1771
        %v1784 = vpack.c.b16 %v1777, %v1776
        %v1785 = vpack.c.b16 %v1779, %v1778
        %v1786 = vpack.c.b16 %v1781, %v1780
        %v1787 = vpack.c.b16 %v1783, %v1782
        %1792 = vst [vmem:[#allocation2] sm:$0xff] %v1784
        %1793 = vst [vmem:[#allocation2 + $0x8] sm:$0xff] %v1785
        %1794 = vst [vmem:[#allocation2 + $0x10] sm:$0xff] %v1786
        %1795 = vst [vmem:[#allocation2 + $0x18] sm:$0xff] %v1787
        %1796 = vrot.lane.b32.xlu0 %v1715, 16
        %v1797 = vpop.permute.xlu0 %1796
        %1798 = vrot.lane.b32.xlu0 %v1717, 16
        %v1799 = vpop.permute.xlu0 %1798
        %1800 = vrot.lane.b32.xlu0 %v1719, 16
        %v1801 = vpop.permute.xlu0 %1800
        %1802 = vrot.lane.b32.xlu0 %v1721, 16
        %v1803 = vpop.permute.xlu0 %1802
        %1804 = vrot.lane.b32.xlu0 %v1716, 16
        %v1805 = vpop.permute.xlu0 %1804
        %1806 = vrot.lane.b32.xlu0 %v1718, 16
        %v1807 = vpop.permute.xlu0 %1806
        %1808 = vrot.lane.b32.xlu0 %v1720, 16
        %v1809 = vpop.permute.xlu0 %1808
        %1810 = vrot.lane.b32.xlu0 %v1722, 16
        %v1811 = vpop.permute.xlu0 %1810
        %v1812 = vsel %vm387, %v1797, %v1805
        %v1813 = vsel %vm387, %v1799, %v1807
        %v1814 = vsel %vm387, %v1801, %v1809
        %v1815 = vsel %vm387, %v1803, %v1811
        %v1816 = vsel %vm387, %v1805, %v1797
        %v1817 = vsel %vm387, %v1807, %v1799
        %v1818 = vsel %vm387, %v1809, %v1801
        %v1819 = vsel %vm387, %v1811, %v1803
        %v1820 = vmul.f32 %v1816, %v300
        %v1821 = vmul.f32 %v1812, %v301
        %v1822 = vmul.f32 %v1817, %v300
        %v1823 = vmul.f32 %v1813, %v301
        %v1824 = vmul.f32 %v1818, %v300
        %v1825 = vmul.f32 %v1814, %v301
        %v1826 = vmul.f32 %v1819, %v300
        %v1827 = vmul.f32 %v1815, %v301
        %v1828 = vpack.c.bf16 %v1822, %v1820
        %v1829 = vpack.c.bf16 %v1823, %v1821
        %v1830 = vpack.c.bf16 %v1826, %v1824
        %v1831 = vpack.c.bf16 %v1827, %v1825
        %v1836 = vunpack.c.l.b16 %v1828
        %v1837 = vunpack.c.l.b16 %v1829
        %v1838 = vunpack.c.h.b16 %v1828
        %v1839 = vunpack.c.h.b16 %v1829
        %v1840 = vunpack.c.l.b16 %v1830
        %v1841 = vunpack.c.l.b16 %v1831
        %v1842 = vunpack.c.h.b16 %v1830
        %v1843 = vunpack.c.h.b16 %v1831
        %v1844 = vpack.c.b16 %v1837, %v1836
        %v1845 = vpack.c.b16 %v1839, %v1838
        %v1846 = vpack.c.b16 %v1841, %v1840
        %v1847 = vpack.c.b16 %v1843, %v1842
        %1852 = vst [vmem:[#allocation2 + $0x20] sm:$0xff] %v1844
        %1853 = vst [vmem:[#allocation2 + $0x28] sm:$0xff] %v1845
        %1854 = vst [vmem:[#allocation2 + $0x30] sm:$0xff] %v1846
        %1855 = vst [vmem:[#allocation2 + $0x38] sm:$0xff] %v1847
        %1856 = vrot.lane.b32.xlu0 %v1715, 15
        %v1857 = vpop.permute.xlu0 %1856
        %1858 = vrot.lane.b32.xlu0 %v1717, 15
        %v1859 = vpop.permute.xlu0 %1858
        %1860 = vrot.lane.b32.xlu0 %v1719, 15
        %v1861 = vpop.permute.xlu0 %1860
        %1862 = vrot.lane.b32.xlu0 %v1721, 15
        %v1863 = vpop.permute.xlu0 %1862
        %1864 = vrot.lane.b32.xlu0 %v1716, 15
        %v1865 = vpop.permute.xlu0 %1864
        %1866 = vrot.lane.b32.xlu0 %v1718, 15
        %v1867 = vpop.permute.xlu0 %1866
        %1868 = vrot.lane.b32.xlu0 %v1720, 15
        %v1869 = vpop.permute.xlu0 %1868
        %1870 = vrot.lane.b32.xlu0 %v1722, 15
        %v1871 = vpop.permute.xlu0 %1870
        %v1872 = vsel %vm418, %v1857, %v1865
        %v1873 = vsel %vm418, %v1859, %v1867
        %v1874 = vsel %vm418, %v1861, %v1869
        %v1875 = vsel %vm418, %v1863, %v1871
        %v1876 = vsel %vm418, %v1865, %v1857
        %v1877 = vsel %vm418, %v1867, %v1859
        %v1878 = vsel %vm418, %v1869, %v1861
        %v1879 = vsel %vm418, %v1871, %v1863
        %v1880 = vmul.f32 %v1876, %v308
        %v1881 = vmul.f32 %v1872, %v309
        %v1882 = vmul.f32 %v1877, %v308
        %v1883 = vmul.f32 %v1873, %v309
        %v1884 = vmul.f32 %v1878, %v308
        %v1885 = vmul.f32 %v1874, %v309
        %v1886 = vmul.f32 %v1879, %v308
        %v1887 = vmul.f32 %v1875, %v309
        %v1888 = vpack.c.bf16 %v1882, %v1880
        %v1889 = vpack.c.bf16 %v1883, %v1881
        %v1890 = vpack.c.bf16 %v1886, %v1884
        %v1891 = vpack.c.bf16 %v1887, %v1885
        %v1896 = vunpack.c.l.b16 %v1888
        %v1897 = vunpack.c.l.b16 %v1889
        %v1898 = vunpack.c.h.b16 %v1888
        %v1899 = vunpack.c.h.b16 %v1889
        %v1900 = vunpack.c.l.b16 %v1890
        %v1901 = vunpack.c.l.b16 %v1891
        %v1902 = vunpack.c.h.b16 %v1890
        %v1903 = vunpack.c.h.b16 %v1891
        %v1904 = vpack.c.b16 %v1897, %v1896
        %v1905 = vpack.c.b16 %v1899, %v1898
        %v1906 = vpack.c.b16 %v1901, %v1900
        %v1907 = vpack.c.b16 %v1903, %v1902
        %1912 = vst [vmem:[#allocation2 + $0x40] sm:$0xff] %v1904
        %1913 = vst [vmem:[#allocation2 + $0x48] sm:$0xff] %v1905
        %1914 = vst [vmem:[#allocation2 + $0x50] sm:$0xff] %v1906
        %1915 = vst [vmem:[#allocation2 + $0x58] sm:$0xff] %v1907
        %1916 = vrot.lane.b32.xlu0 %v1715, 1
        %v1917 = vpop.permute.xlu0 %1916
        %1918 = vrot.lane.b32.xlu0 %v1717, 1
        %v1919 = vpop.permute.xlu0 %1918
        %1920 = vrot.lane.b32.xlu0 %v1719, 1
        %v1921 = vpop.permute.xlu0 %1920
        %1922 = vrot.lane.b32.xlu0 %v1721, 1
        %v1923 = vpop.permute.xlu0 %1922
        %1924 = vrot.lane.b32.xlu0 %v1716, 1
        %v1925 = vpop.permute.xlu0 %1924
        %1926 = vrot.lane.b32.xlu0 %v1718, 1
        %v1927 = vpop.permute.xlu0 %1926
        %1928 = vrot.lane.b32.xlu0 %v1720, 1
        %v1929 = vpop.permute.xlu0 %1928
        %1930 = vrot.lane.b32.xlu0 %v1722, 1
        %v1931 = vpop.permute.xlu0 %1930
        %v1932 = vsel %vm449, %v1917, %v1925
        %v1933 = vsel %vm449, %v1919, %v1927
        %v1934 = vsel %vm449, %v1921, %v1929
        %v1935 = vsel %vm449, %v1923, %v1931
        %v1936 = vsel %vm449, %v1925, %v1917
        %v1937 = vsel %vm449, %v1927, %v1919
        %v1938 = vsel %vm449, %v1929, %v1921
        %v1939 = vsel %vm449, %v1931, %v1923
        %v1940 = vmul.f32 %v1936, %v312
        %v1941 = vmul.f32 %v1932, %v313
        %v1942 = vmul.f32 %v1937, %v312
        %v1943 = vmul.f32 %v1933, %v313
        %v1944 = vmul.f32 %v1938, %v312
        %v1945 = vmul.f32 %v1934, %v313
        %v1946 = vmul.f32 %v1939, %v312
        %v1947 = vmul.f32 %v1935, %v313
        %v1948 = vpack.c.bf16 %v1942, %v1940
        %v1949 = vpack.c.bf16 %v1943, %v1941
        %v1950 = vpack.c.bf16 %v1946, %v1944
        %v1951 = vpack.c.bf16 %v1947, %v1945
        %v1956 = vunpack.c.l.b16 %v1948
        %v1957 = vunpack.c.l.b16 %v1949
        %v1958 = vunpack.c.h.b16 %v1948
        %v1959 = vunpack.c.h.b16 %v1949
        %v1960 = vunpack.c.l.b16 %v1950
        %v1961 = vunpack.c.l.b16 %v1951
        %v1962 = vunpack.c.h.b16 %v1950
        %v1963 = vunpack.c.h.b16 %v1951
        %v1964 = vpack.c.b16 %v1957, %v1956
        %v1965 = vpack.c.b16 %v1959, %v1958
        %v1966 = vpack.c.b16 %v1961, %v1960
        %v1967 = vpack.c.b16 %v1963, %v1962
        %1972 = vst [vmem:[#allocation2 + $0x60] sm:$0xff] %v1964
        %1973 = vst [vmem:[#allocation2 + $0x68] sm:$0xff] %v1965
        %1974 = vst [vmem:[#allocation2 + $0x70] sm:$0xff] %v1966
        %1975 = vst [vmem:[#allocation2 + $0x78] sm:$0xff] %v1967
        %v1976 = vpack.c.bf16 %v1717, %v1715
        %v1977 = vpack.c.bf16 %v1718, %v1716
        %v1978 = vpack.c.bf16 %v1721, %v1719
        %v1979 = vpack.c.bf16 %v1722, %v1720
        %v1984 = vunpack.c.l.b16 %v1976
        %v1985 = vunpack.c.l.b16 %v1977
        %v1986 = vunpack.c.h.b16 %v1976
        %v1987 = vunpack.c.h.b16 %v1977
        %v1988 = vunpack.c.l.b16 %v1978
        %v1989 = vunpack.c.l.b16 %v1979
        %v1990 = vunpack.c.h.b16 %v1978
        %v1991 = vunpack.c.h.b16 %v1979
        %v1992 = vpack.c.b16 %v1985, %v1984
        %v1993 = vpack.c.b16 %v1987, %v1986
        %v1994 = vpack.c.b16 %v1989, %v1988
        %v1995 = vpack.c.b16 %v1991, %v1990
        %2000 = vst [vmem:[#allocation2 + $0x80] sm:$0xff] %v1992
        %2001 = vst [vmem:[#allocation2 + $0x88] sm:$0xff] %v1993
        %2002 = vst [vmem:[#allocation2 + $0x90] sm:$0xff] %v1994
        %2003 = vst [vmem:[#allocation2 + $0x98] sm:$0xff] %v1995
        %2004 = vrot.lane.b32.xlu0 %v1715, 127
        %v2005 = vpop.permute.xlu0 %2004
        %2006 = vrot.lane.b32.xlu0 %v1717, 127
        %v2007 = vpop.permute.xlu0 %2006
        %2008 = vrot.lane.b32.xlu0 %v1719, 127
        %v2009 = vpop.permute.xlu0 %2008
        %2010 = vrot.lane.b32.xlu0 %v1721, 127
        %v2011 = vpop.permute.xlu0 %2010
        %2012 = vrot.lane.b32.xlu0 %v1716, 127
        %v2013 = vpop.permute.xlu0 %2012
        %2014 = vrot.lane.b32.xlu0 %v1718, 127
        %v2015 = vpop.permute.xlu0 %2014
        %2016 = vrot.lane.b32.xlu0 %v1720, 127
        %v2017 = vpop.permute.xlu0 %2016
        %2018 = vrot.lane.b32.xlu0 %v1722, 127
        %v2019 = vpop.permute.xlu0 %2018
        %v2020 = vsel %vm494, %v2005, %v2013
        %v2021 = vsel %vm494, %v2007, %v2015
        %v2022 = vsel %vm494, %v2009, %v2017
        %v2023 = vsel %vm494, %v2011, %v2019
        %v2024 = vsel %vm494, %v2013, %v2005
        %v2025 = vsel %vm494, %v2015, %v2007
        %v2026 = vsel %vm494, %v2017, %v2009
        %v2027 = vsel %vm494, %v2019, %v2011
        %v2028 = vmul.f32 %v2020, %v316
        %v2029 = vmul.f32 %v2024, %v317
        %v2030 = vmul.f32 %v2021, %v316
        %v2031 = vmul.f32 %v2025, %v317
        %v2032 = vmul.f32 %v2022, %v316
        %v2033 = vmul.f32 %v2026, %v317
        %v2034 = vmul.f32 %v2023, %v316
        %v2035 = vmul.f32 %v2027, %v317
        %v2036 = vpack.c.bf16 %v2030, %v2028
        %v2037 = vpack.c.bf16 %v2031, %v2029
        %v2038 = vpack.c.bf16 %v2034, %v2032
        %v2039 = vpack.c.bf16 %v2035, %v2033
        %v2044 = vunpack.c.l.b16 %v2036
        %v2045 = vunpack.c.l.b16 %v2037
        %v2046 = vunpack.c.h.b16 %v2036
        %v2047 = vunpack.c.h.b16 %v2037
        %v2048 = vunpack.c.l.b16 %v2038
        %v2049 = vunpack.c.l.b16 %v2039
        %v2050 = vunpack.c.h.b16 %v2038
        %v2051 = vunpack.c.h.b16 %v2039
        %v2052 = vpack.c.b16 %v2045, %v2044
        %v2053 = vpack.c.b16 %v2047, %v2046
        %v2054 = vpack.c.b16 %v2049, %v2048
        %v2055 = vpack.c.b16 %v2051, %v2050
        %2060 = vst [vmem:[#allocation2 + $0xa0] sm:$0xff] %v2052
        %2061 = vst [vmem:[#allocation2 + $0xa8] sm:$0xff] %v2053
        %2062 = vst [vmem:[#allocation2 + $0xb0] sm:$0xff] %v2054
        %2063 = vst [vmem:[#allocation2 + $0xb8] sm:$0xff] %v2055
        %2064 = vrot.lane.b32.xlu0 %v1715, 113
        %v2065 = vpop.permute.xlu0 %2064
        %2066 = vrot.lane.b32.xlu0 %v1717, 113
        %v2067 = vpop.permute.xlu0 %2066
        %2068 = vrot.lane.b32.xlu0 %v1719, 113
        %v2069 = vpop.permute.xlu0 %2068
        %2070 = vrot.lane.b32.xlu0 %v1721, 113
        %v2071 = vpop.permute.xlu0 %2070
        %2072 = vrot.lane.b32.xlu0 %v1716, 113
        %v2073 = vpop.permute.xlu0 %2072
        %2074 = vrot.lane.b32.xlu0 %v1718, 113
        %v2075 = vpop.permute.xlu0 %2074
        %2076 = vrot.lane.b32.xlu0 %v1720, 113
        %v2077 = vpop.permute.xlu0 %2076
        %2078 = vrot.lane.b32.xlu0 %v1722, 113
        %v2079 = vpop.permute.xlu0 %2078
        %v2080 = vsel %vm525, %v2065, %v2073
        %v2081 = vsel %vm525, %v2067, %v2075
        %v2082 = vsel %vm525, %v2069, %v2077
        %v2083 = vsel %vm525, %v2071, %v2079
        %v2084 = vsel %vm525, %v2073, %v2065
        %v2085 = vsel %vm525, %v2075, %v2067
        %v2086 = vsel %vm525, %v2077, %v2069
        %v2087 = vsel %vm525, %v2079, %v2071
        %v2088 = vmul.f32 %v2080, %v324
        %v2089 = vmul.f32 %v2084, %v325
        %v2090 = vmul.f32 %v2081, %v324
        %v2091 = vmul.f32 %v2085, %v325
        %v2092 = vmul.f32 %v2082, %v324
        %v2093 = vmul.f32 %v2086, %v325
        %v2094 = vmul.f32 %v2083, %v324
        %v2095 = vmul.f32 %v2087, %v325
        %v2096 = vpack.c.bf16 %v2090, %v2088
        %v2097 = vpack.c.bf16 %v2091, %v2089
        %v2098 = vpack.c.bf16 %v2094, %v2092
        %v2099 = vpack.c.bf16 %v2095, %v2093
        %v2104 = vunpack.c.l.b16 %v2096
        %v2105 = vunpack.c.l.b16 %v2097
        %v2106 = vunpack.c.h.b16 %v2096
        %v2107 = vunpack.c.h.b16 %v2097
        %v2108 = vunpack.c.l.b16 %v2098
        %v2109 = vunpack.c.l.b16 %v2099
        %v2110 = vunpack.c.h.b16 %v2098
        %v2111 = vunpack.c.h.b16 %v2099
        %v2112 = vpack.c.b16 %v2105, %v2104
        %v2113 = vpack.c.b16 %v2107, %v2106
        %v2114 = vpack.c.b16 %v2109, %v2108
        %v2115 = vpack.c.b16 %v2111, %v2110
        %2120 = vst [vmem:[#allocation2 + $0xc0] sm:$0xff] %v2112
        %2121 = vst [vmem:[#allocation2 + $0xc8] sm:$0xff] %v2113
        %2122 = vst [vmem:[#allocation2 + $0xd0] sm:$0xff] %v2114
        %2123 = vst [vmem:[#allocation2 + $0xd8] sm:$0xff] %v2115
        %2124 = vrot.lane.b32.xlu0 %v1715, 112
        %v2125 = vpop.permute.xlu0 %2124
        %2126 = vrot.lane.b32.xlu0 %v1717, 112
        %v2127 = vpop.permute.xlu0 %2126
        %2128 = vrot.lane.b32.xlu0 %v1719, 112
        %v2129 = vpop.permute.xlu0 %2128
        %2130 = vrot.lane.b32.xlu0 %v1721, 112
        %v2131 = vpop.permute.xlu0 %2130
        %2132 = vrot.lane.b32.xlu0 %v1716, 112
        %v2133 = vpop.permute.xlu0 %2132
        %2134 = vrot.lane.b32.xlu0 %v1718, 112
        %v2135 = vpop.permute.xlu0 %2134
        %2136 = vrot.lane.b32.xlu0 %v1720, 112
        %v2137 = vpop.permute.xlu0 %2136
        %2138 = vrot.lane.b32.xlu0 %v1722, 112
        %v2139 = vpop.permute.xlu0 %2138
        %v2140 = vsel %vm556, %v2125, %v2133
        %v2141 = vsel %vm556, %v2127, %v2135
        %v2142 = vsel %vm556, %v2129, %v2137
        %v2143 = vsel %vm556, %v2131, %v2139
        %v2144 = vsel %vm556, %v2133, %v2125
        %v2145 = vsel %vm556, %v2135, %v2127
        %v2146 = vsel %vm556, %v2137, %v2129
        %v2147 = vsel %vm556, %v2139, %v2131
        %v2148 = vmul.f32 %v2140, %v328
        %v2149 = vmul.f32 %v2144, %v329
        %v2150 = vmul.f32 %v2141, %v328
        %v2151 = vmul.f32 %v2145, %v329
        %v2152 = vmul.f32 %v2142, %v328
        %v2153 = vmul.f32 %v2146, %v329
        %v2154 = vmul.f32 %v2143, %v328
        %v2155 = vmul.f32 %v2147, %v329
        %v2156 = vpack.c.bf16 %v2150, %v2148
        %v2157 = vpack.c.bf16 %v2151, %v2149
        %v2158 = vpack.c.bf16 %v2154, %v2152
        %v2159 = vpack.c.bf16 %v2155, %v2153
        %v2164 = vunpack.c.l.b16 %v2156
        %v2165 = vunpack.c.l.b16 %v2157
        %v2166 = vunpack.c.h.b16 %v2156
        %v2167 = vunpack.c.h.b16 %v2157
        %v2168 = vunpack.c.l.b16 %v2158
        %v2169 = vunpack.c.l.b16 %v2159
        %v2170 = vunpack.c.h.b16 %v2158
        %v2171 = vunpack.c.h.b16 %v2159
        %v2172 = vpack.c.b16 %v2165, %v2164
        %v2173 = vpack.c.b16 %v2167, %v2166
        %v2174 = vpack.c.b16 %v2169, %v2168
        %v2175 = vpack.c.b16 %v2171, %v2170
        %2180 = vst [vmem:[#allocation2 + $0xe0] sm:$0xff] %v2172
        %2181 = vst [vmem:[#allocation2 + $0xe8] sm:$0xff] %v2173
        %2182 = vst [vmem:[#allocation2 + $0xf0] sm:$0xff] %v2174
        %2183 = vst [vmem:[#allocation2 + $0xf8] sm:$0xff] %v2175
        %2184 = vrot.lane.b32.xlu0 %v1715, 111
        %v2185 = vpop.permute.xlu0 %2184
        %2186 = vrot.lane.b32.xlu0 %v1717, 111
        %v2187 = vpop.permute.xlu0 %2186
        %2188 = vrot.lane.b32.xlu0 %v1719, 111
        %v2189 = vpop.permute.xlu0 %2188
        %2190 = vrot.lane.b32.xlu0 %v1721, 111
        %v2191 = vpop.permute.xlu0 %2190
        %2192 = vrot.lane.b32.xlu0 %v1716, 111
        %v2193 = vpop.permute.xlu0 %2192
        %2194 = vrot.lane.b32.xlu0 %v1718, 111
        %v2195 = vpop.permute.xlu0 %2194
        %2196 = vrot.lane.b32.xlu0 %v1720, 111
        %v2197 = vpop.permute.xlu0 %2196
        %2198 = vrot.lane.b32.xlu0 %v1722, 111
        %v2199 = vpop.permute.xlu0 %2198
        %v2200 = vsel %vm587, %v2185, %v2193
        %v2201 = vsel %vm587, %v2187, %v2195
        %v2202 = vsel %vm587, %v2189, %v2197
        %v2203 = vsel %vm587, %v2191, %v2199
        %v2204 = vsel %vm587, %v2193, %v2185
        %v2205 = vsel %vm587, %v2195, %v2187
        %v2206 = vsel %vm587, %v2197, %v2189
        %v2207 = vsel %vm587, %v2199, %v2191
        %v2208 = vmul.f32 %v2200, %v334
        %v2209 = vmul.f32 %v2204, %v335
        %v2210 = vmul.f32 %v2201, %v334
        %v2211 = vmul.f32 %v2205, %v335
        %v2212 = vmul.f32 %v2202, %v334
        %v2213 = vmul.f32 %v2206, %v335
        %v2214 = vmul.f32 %v2203, %v334
        %v2215 = vmul.f32 %v2207, %v335
        %v2216 = vpack.c.bf16 %v2210, %v2208
        %v2217 = vpack.c.bf16 %v2211, %v2209
        %v2218 = vpack.c.bf16 %v2214, %v2212
        %v2219 = vpack.c.bf16 %v2215, %v2213
        %v2224 = vunpack.c.l.b16 %v2216
        %v2225 = vunpack.c.l.b16 %v2217
        %v2226 = vunpack.c.h.b16 %v2216
        %v2227 = vunpack.c.h.b16 %v2217
        %v2228 = vunpack.c.l.b16 %v2218
        %v2229 = vunpack.c.l.b16 %v2219
        %v2230 = vunpack.c.h.b16 %v2218
        %v2231 = vunpack.c.h.b16 %v2219
        %v2232 = vpack.c.b16 %v2225, %v2224
        %v2233 = vpack.c.b16 %v2227, %v2226
        %v2234 = vpack.c.b16 %v2229, %v2228
        %v2235 = vpack.c.b16 %v2231, %v2230
        %2240 = vst [vmem:[#allocation2 + $0x100] sm:$0xff] %v2232
        %2241 = vst [vmem:[#allocation2 + $0x108] sm:$0xff] %v2233
        %2242 = vst [vmem:[#allocation2 + $0x110] sm:$0xff] %v2234
        %2243 = vst [vmem:[#allocation2 + $0x118] sm:$0xff] %v2235
        %v2244 = vld [vmem:[#allocation2] sm:$0xff]
        %v2245 = vld [vmem:[#allocation2 + $0x8] sm:$0xff]
        %v2246 = vld [vmem:[#allocation2 + $0x10] sm:$0xff]
        %v2247 = vld [vmem:[#allocation2 + $0x18] sm:$0xff]
        %v2248 = vld [vmem:[#allocation2 + $0x20] sm:$0xff]
        %v2249 = vld [vmem:[#allocation2 + $0x28] sm:$0xff]
        %v2250 = vld [vmem:[#allocation2 + $0x30] sm:$0xff]
        %v2251 = vld [vmem:[#allocation2 + $0x38] sm:$0xff]
        %v2252 = vld [vmem:[#allocation2 + $0x40] sm:$0xff]
        %v2253 = vld [vmem:[#allocation2 + $0x48] sm:$0xff]
        %v2254 = vld [vmem:[#allocation2 + $0x50] sm:$0xff]
        %v2255 = vld [vmem:[#allocation2 + $0x58] sm:$0xff]
        %v2256 = vld [vmem:[#allocation2 + $0x60] sm:$0xff]
        %v2257 = vld [vmem:[#allocation2 + $0x68] sm:$0xff]
        %v2258 = vld [vmem:[#allocation2 + $0x70] sm:$0xff]
        %v2259 = vld [vmem:[#allocation2 + $0x78] sm:$0xff]
        %v2260 = vld [vmem:[#allocation2 + $0x80] sm:$0xff]
        %v2261 = vld [vmem:[#allocation2 + $0x88] sm:$0xff]
        %v2262 = vld [vmem:[#allocation2 + $0x90] sm:$0xff]
        %v2263 = vld [vmem:[#allocation2 + $0x98] sm:$0xff]
        %v2264 = vld [vmem:[#allocation2 + $0xa0] sm:$0xff]
        %v2265 = vld [vmem:[#allocation2 + $0xa8] sm:$0xff]
        %v2266 = vld [vmem:[#allocation2 + $0xb0] sm:$0xff]
        %v2267 = vld [vmem:[#allocation2 + $0xb8] sm:$0xff]
        %v2268 = vld [vmem:[#allocation2 + $0xc0] sm:$0xff]
        %v2269 = vld [vmem:[#allocation2 + $0xc8] sm:$0xff]
        %v2270 = vld [vmem:[#allocation2 + $0xd0] sm:$0xff]
        %v2271 = vld [vmem:[#allocation2 + $0xd8] sm:$0xff]
        %v2272 = vld [vmem:[#allocation2 + $0xe0] sm:$0xff]
        %v2273 = vld [vmem:[#allocation2 + $0xe8] sm:$0xff]
        %v2274 = vld [vmem:[#allocation2 + $0xf0] sm:$0xff]
        %v2275 = vld [vmem:[#allocation2 + $0xf8] sm:$0xff]
        %v2276 = vld [vmem:[#allocation2 + $0x100] sm:$0xff]
        %v2277 = vld [vmem:[#allocation2 + $0x108] sm:$0xff]
        %v2278 = vld [vmem:[#allocation2 + $0x110] sm:$0xff]
        %v2279 = vld [vmem:[#allocation2 + $0x118] sm:$0xff]
        %2281 = vset.pattern.permute.xlu0 2
        %2282 = vperm.xlu0 %2281, %v1732
        %v2283 = vpop.permute.xlu0 %2282
        %2286 = vset.pattern.permute.xlu0 2
        %2287 = vperm.xlu0 %2286, %v1733
        %v2288 = vpop.permute.xlu0 %2287
        %2291 = vset.pattern.permute.xlu0 2
        %2292 = vperm.xlu0 %2291, %v1734
        %v2293 = vpop.permute.xlu0 %2292
        %2296 = vset.pattern.permute.xlu0 2
        %2297 = vperm.xlu0 %2296, %v1735
        %v2298 = vpop.permute.xlu0 %2297
        %v2308 = vunpack.c.l.b16 %v1724
        %v2309 = vunpack.c.h.b16 %v1724
        %v2310 = vunpack.c.l.b16 %v1725
        %v2311 = vunpack.c.l.b16 %v1726
        %v2312 = vunpack.c.h.b16 %v1726
        %v2313 = vunpack.c.l.b16 %v1727
        %v2314 = vunpack.c.l.b16 %v1728
        %v2315 = vunpack.c.h.b16 %v1728
        %v2316 = vunpack.c.l.b16 %v1729
        %v2317 = vunpack.c.l.b16 %v1730
        %v2318 = vunpack.c.h.b16 %v1730
        %v2319 = vunpack.c.l.b16 %v1731
        %v2320 = vpack.c.b16 %v2311, %v2308
        %v2321 = vpack.c.b16 %v2312, %v2309
        %v2322 = vpack.c.b16 %v2313, %v2310
        %v2323 = vpack.c.b16 %v2317, %v2314
        %v2324 = vpack.c.b16 %v2318, %v2315
        %v2325 = vpack.c.b16 %v2319, %v2316
        %v2366 = vunpack.c.l.b16 %v2244
        %v2367 = vunpack.c.h.b16 %v2244
        %v2368 = vunpack.c.l.b16 %v2245
        %v2369 = vunpack.c.h.b16 %v2245
        %v2370 = vunpack.c.l.b16 %v2246
        %v2371 = vunpack.c.h.b16 %v2246
        %v2372 = vunpack.c.l.b16 %v2247
        %v2373 = vunpack.c.h.b16 %v2247
        %v2374 = vunpack.c.l.b16 %v2248
        %v2375 = vunpack.c.h.b16 %v2248
        %v2376 = vunpack.c.l.b16 %v2249
        %v2377 = vunpack.c.h.b16 %v2249
        %v2378 = vunpack.c.l.b16 %v2250
        %v2379 = vunpack.c.h.b16 %v2250
        %v2380 = vunpack.c.l.b16 %v2251
        %v2381 = vunpack.c.h.b16 %v2251
        %v2382 = vunpack.c.l.b16 %v2252
        %v2383 = vunpack.c.h.b16 %v2252
        %v2384 = vunpack.c.l.b16 %v2253
        %v2385 = vunpack.c.h.b16 %v2253
        %v2386 = vunpack.c.l.b16 %v2254
        %v2387 = vunpack.c.h.b16 %v2254
        %v2388 = vunpack.c.l.b16 %v2255
        %v2389 = vunpack.c.h.b16 %v2255
        %v2390 = vunpack.c.l.b16 %v2256
        %v2391 = vunpack.c.h.b16 %v2256
        %v2392 = vunpack.c.l.b16 %v2257
        %v2393 = vunpack.c.h.b16 %v2257
        %v2394 = vunpack.c.l.b16 %v2258
        %v2395 = vunpack.c.h.b16 %v2258
        %v2396 = vunpack.c.l.b16 %v2259
        %v2397 = vunpack.c.h.b16 %v2259
        %v2398 = vunpack.c.l.b16 %v2260
        %v2399 = vunpack.c.h.b16 %v2260
        %v2400 = vunpack.c.l.b16 %v2261
        %v2401 = vunpack.c.h.b16 %v2261
        %v2402 = vunpack.c.l.b16 %v2262
        %v2403 = vunpack.c.h.b16 %v2262
        %v2404 = vunpack.c.l.b16 %v2263
        %v2405 = vunpack.c.h.b16 %v2263
        %v2406 = vunpack.c.l.b16 %v2264
        %v2407 = vunpack.c.h.b16 %v2264
        %v2408 = vunpack.c.l.b16 %v2265
        %v2409 = vunpack.c.h.b16 %v2265
        %v2410 = vunpack.c.l.b16 %v2266
        %v2411 = vunpack.c.h.b16 %v2266
        %v2412 = vunpack.c.l.b16 %v2267
        %v2413 = vunpack.c.h.b16 %v2267
        %v2414 = vunpack.c.l.b16 %v2268
        %v2415 = vunpack.c.h.b16 %v2268
        %v2416 = vunpack.c.l.b16 %v2269
        %v2417 = vunpack.c.h.b16 %v2269
        %v2418 = vunpack.c.l.b16 %v2270
        %v2419 = vunpack.c.h.b16 %v2270
        %v2420 = vunpack.c.l.b16 %v2271
        %v2421 = vunpack.c.h.b16 %v2271
        %v2422 = vunpack.c.l.b16 %v2272
        %v2423 = vunpack.c.h.b16 %v2272
        %v2424 = vunpack.c.l.b16 %v2273
        %v2425 = vunpack.c.h.b16 %v2273
        %v2426 = vunpack.c.l.b16 %v2274
        %v2427 = vunpack.c.h.b16 %v2274
        %v2428 = vunpack.c.l.b16 %v2275
        %v2429 = vunpack.c.h.b16 %v2275
        %v2430 = vunpack.c.l.b16 %v2276
        %v2431 = vunpack.c.h.b16 %v2276
        %v2432 = vunpack.c.l.b16 %v2277
        %v2433 = vunpack.c.h.b16 %v2277
        %v2434 = vunpack.c.l.b16 %v2278
        %v2435 = vunpack.c.h.b16 %v2278
        %v2436 = vunpack.c.l.b16 %v2279
        %v2437 = vunpack.c.h.b16 %v2279
        %v2438 = vpack.c.b16 %v2368, %v2366
        %v2439 = vpack.c.b16 %v2369, %v2367
        %v2440 = vpack.c.b16 %v2372, %v2370
        %v2441 = vpack.c.b16 %v2373, %v2371
        %v2442 = vpack.c.b16 %v2376, %v2374
        %v2443 = vpack.c.b16 %v2377, %v2375
        %v2444 = vpack.c.b16 %v2380, %v2378
        %v2445 = vpack.c.b16 %v2381, %v2379
        %v2446 = vpack.c.b16 %v2384, %v2382
        %v2447 = vpack.c.b16 %v2385, %v2383
        %v2448 = vpack.c.b16 %v2388, %v2386
        %v2449 = vpack.c.b16 %v2389, %v2387
        %v2450 = vpack.c.b16 %v2392, %v2390
        %v2451 = vpack.c.b16 %v2393, %v2391
        %v2452 = vpack.c.b16 %v2396, %v2394
        %v2453 = vpack.c.b16 %v2397, %v2395
        %v2454 = vpack.c.b16 %v2400, %v2398
        %v2455 = vpack.c.b16 %v2401, %v2399
        %v2456 = vpack.c.b16 %v2404, %v2402
        %v2457 = vpack.c.b16 %v2405, %v2403
        %v2458 = vpack.c.b16 %v2408, %v2406
        %v2459 = vpack.c.b16 %v2409, %v2407
        %v2460 = vpack.c.b16 %v2412, %v2410
        %v2461 = vpack.c.b16 %v2413, %v2411
        %v2462 = vpack.c.b16 %v2416, %v2414
        %v2463 = vpack.c.b16 %v2417, %v2415
        %v2464 = vpack.c.b16 %v2420, %v2418
        %v2465 = vpack.c.b16 %v2421, %v2419
        %v2466 = vpack.c.b16 %v2424, %v2422
        %v2467 = vpack.c.b16 %v2425, %v2423
        %v2468 = vpack.c.b16 %v2428, %v2426
        %v2469 = vpack.c.b16 %v2429, %v2427
        %v2470 = vpack.c.b16 %v2432, %v2430
        %v2471 = vpack.c.b16 %v2433, %v2431
        %v2472 = vpack.c.b16 %v2436, %v2434
        %v2473 = vpack.c.b16 %v2437, %v2435
        %v2511 = vsel %vm1602, %v2322, 0
        %v2514 = vsel %vm1602, %v2325, 0
        %2516 = vmatprep.subr.bf16.mxu0 %v2453
        %2517 = vmatpush1.bf16.msra.mxu0 %v2452
        %2518 = vmatprep.subr.bf16.mxu0 %v2451
        %2519 = vmatpush1.bf16.msra.mxu0 %v2450
        %2520 = vmatprep.subr.bf16.mxu0 %v2449
        %2521 = vmatpush1.bf16.msra.mxu0 %v2448
        %2522 = vmatprep.subr.bf16.mxu0 %v2447
        %2523 = vmatpush1.bf16.msra.mxu0 %v2446
        %2524 = vmatprep.subr.bf16.mxu0 %v2445
        %2525 = vmatpush1.bf16.msra.mxu0 %v2444
        %2526 = vmatprep.subr.bf16.mxu0 %v2443
        %2527 = vmatpush1.bf16.msra.mxu0 %v2442
        %2528 = vmatprep.subr.bf16.mxu0 %v2441
        %2529 = vmatpush1.bf16.msra.mxu0 %v2440
        %2530 = vmatprep.subr.bf16.mxu0 %v2439
        %2531 = vmatpush1.bf16.msra.mxu0 %v2438
        %2532 = vmatprep.subr.bf16.mxu0 %v2469
        %2533 = vmatpush2.bf16.msra.mxu0 %v2468
        %2534 = vmatprep.subr.bf16.mxu0 %v2467
        %2535 = vmatpush2.bf16.msra.mxu0 %v2466
        %2536 = vmatprep.subr.bf16.mxu0 %v2465
        %2537 = vmatpush2.bf16.msra.mxu0 %v2464
        %2538 = vmatprep.subr.bf16.mxu0 %v2463
        %2539 = vmatpush2.bf16.msra.mxu0 %v2462
        %2540 = vmatprep.subr.bf16.mxu0 %v2461
        %2541 = vmatpush2.bf16.msra.mxu0 %v2460
        %2542 = vmatprep.subr.bf16.mxu0 %v2459
        %2543 = vmatpush2.bf16.msra.mxu0 %v2458
        %2544 = vmatprep.subr.bf16.mxu0 %v2457
        %2545 = vmatpush2.bf16.msra.mxu0 %v2456
        %2546 = vmatprep.subr.bf16.mxu0 %v2455
        %2547 = vmatpush2.bf16.msra.mxu0 %v2454
        %2548 = vmatprep.mubr.bf16.mxu0 %v2321
        %2549 = vmatmul.mubr.bf16.gmra.mxu0 %v2320
        %v2550 = vpop.f32.mrf.mxu0
        %v2551 = vadd.f32 %v2283, %v2550
        %v2552 = vpop.f32.mrf.mxu0
        %v2553 = vadd.f32 %v2283, %v2552
        %v2554 = vpop.f32.mrf.mxu0
        %v2555 = vadd.f32 %v2288, %v2554
        %v2556 = vpop.f32.mrf.mxu0
        %v2557 = vadd.f32 %v2288, %v2556
        %2558 = vmatprep.mubr.bf16.mxu0 %v2324
        %2559 = vmatmul.mubr.bf16.gmra.mxu0 %v2323
        %v2560 = vpop.f32.mrf.mxu0
        %v2561 = vadd.f32 %v2293, %v2560
        %v2562 = vpop.f32.mrf.mxu0
        %v2563 = vadd.f32 %v2293, %v2562
        %v2564 = vpop.f32.mrf.mxu0
        %v2565 = vadd.f32 %v2298, %v2564
        %v2566 = vpop.f32.mrf.mxu0
        %v2567 = vadd.f32 %v2298, %v2566
        %2568 = vdwg.mxu0
        %2569 = vmatprep.subr.bf16.mxu0 0
        %2570 = vmatpush1.bf16.msra.mxu0 0
        %2571 = vmatprep.subr.bf16.mxu0 0
        %2572 = vmatpush1.bf16.msra.mxu0 0
        %2573 = vmatprep.subr.bf16.mxu0 0
        %2574 = vmatpush1.bf16.msra.mxu0 0
        %2575 = vmatprep.subr.bf16.mxu0 0
        %2576 = vmatpush1.bf16.msra.mxu0 0
        %2577 = vmatprep.subr.bf16.mxu0 0
        %2578 = vmatpush1.bf16.msra.mxu0 0
        %2579 = vmatprep.subr.bf16.mxu0 0
        %2580 = vmatpush1.bf16.msra.mxu0 0
        %2581 = vmatprep.subr.bf16.mxu0 %v2473
        %2582 = vmatpush1.bf16.msra.mxu0 %v2472
        %2583 = vmatprep.subr.bf16.mxu0 %v2471
        %2584 = vmatpush1.bf16.msra.mxu0 %v2470
        %2585 = vmatprep.subr.bf16.mxu0 0
        %2586 = vmatpush2.bf16.msra.mxu0 0
        %2587 = vmatprep.subr.bf16.mxu0 0
        %2588 = vmatpush2.bf16.msra.mxu0 0
        %2589 = vmatprep.subr.bf16.mxu0 0
        %2590 = vmatpush2.bf16.msra.mxu0 0
        %2591 = vmatprep.subr.bf16.mxu0 0
        %2592 = vmatpush2.bf16.msra.mxu0 0
        %2593 = vmatprep.subr.bf16.mxu0 0
        %2594 = vmatpush2.bf16.msra.mxu0 0
        %2595 = vmatprep.subr.bf16.mxu0 0
        %2596 = vmatpush2.bf16.msra.mxu0 0
        %2597 = vmatprep.subr.bf16.mxu0 0
        %2598 = vmatpush2.bf16.msra.mxu0 0
        %2599 = vmatprep.subr.bf16.mxu0 0
        %2600 = vmatpush2.bf16.msra.mxu0 0
        %2601 = vmatprep.mubr.bf16.mxu0 0
        %2602 = vmatmul.mubr.bf16.gmra.mxu0 %v2511
        %v2603 = vpop.f32.mrf.mxu0
        %v2604 = vadd.f32 %v2551, %v2603
        %v2605 = vpop.f32.mrf.mxu0
        %v2606 = vadd.f32 %v2553, %v2605
        %v2607 = vpop.f32.mrf.mxu0
        %v2608 = vadd.f32 %v2555, %v2607
        %v2609 = vpop.f32.mrf.mxu0
        %v2610 = vadd.f32 %v2557, %v2609
        %2611 = vmatprep.mubr.bf16.mxu0 0
        %2612 = vmatmul.mubr.bf16.gmra.mxu0 %v2514
        %v2613 = vpop.f32.mrf.mxu0
        %v2614 = vadd.f32 %v2561, %v2613
        %v2615 = vpop.f32.mrf.mxu0
        %v2616 = vadd.f32 %v2563, %v2615
        %v2617 = vpop.f32.mrf.mxu0
        %v2618 = vadd.f32 %v2565, %v2617
        %v2619 = vpop.f32.mrf.mxu0
        %v2620 = vadd.f32 %v2567, %v2619
        %2621 = vdwg.mxu0
        %v2622 = vmax.f32 %v2604, 0.0
        %v2623 = vmax.f32 %v2606, 0.0
        %v2624 = vmax.f32 %v2608, 0.0
        %v2625 = vmax.f32 %v2610, 0.0
        %v2626 = vmax.f32 %v2614, 0.0
        %v2627 = vmax.f32 %v2616, 0.0
        %v2628 = vmax.f32 %v2618, 0.0
        %v2629 = vmax.f32 %v2620, 0.0
        %s2630 = scalar_lea.vmem %s2, 96
        %v2631 = vld [vmem:[%s2630] sm:$0xff]
        %v2632 = vld [vmem:[%s2630 + $0x8] sm:$0xf]
        %v2633 = vld [vmem:[%s2630 + $0xc] sm:$0xff]
        %v2634 = vld [vmem:[%s2630 + $0x14] sm:$0xf]
        %v2635 = vld [vmem:[%s2630 + $0x18] sm:$0xff]
        %v2636 = vld [vmem:[%s2630 + $0x20] sm:$0xf]
        %v2637 = vld [vmem:[%s2630 + $0x24] sm:$0xff]
        %v2638 = vld [vmem:[%s2630 + $0x2c] sm:$0xf]
        %v2639 = vld [vmem:[%s3] sm:$0xff]
        %v2640 = vld [vmem:[%s3 + $0x8] sm:$0xff]
        %v2641 = vld [vmem:[%s3 + $0x10] sm:$0xff]
        %v2642 = vld [vmem:[%s3 + $0x18] sm:$0xff]
        %2643 = vrot.lane.b32.xlu0 %v2622, 17
        %v2644 = vpop.permute.xlu0 %2643
        %2645 = vrot.lane.b32.xlu0 %v2624, 17
        %v2646 = vpop.permute.xlu0 %2645
        %2647 = vrot.lane.b32.xlu0 %v2626, 17
        %v2648 = vpop.permute.xlu0 %2647
        %2649 = vrot.lane.b32.xlu0 %v2628, 17
        %v2650 = vpop.permute.xlu0 %2649
        %2651 = vrot.lane.b32.xlu0 %v2623, 17
        %v2652 = vpop.permute.xlu0 %2651
        %2653 = vrot.lane.b32.xlu0 %v2625, 17
        %v2654 = vpop.permute.xlu0 %2653
        %2655 = vrot.lane.b32.xlu0 %v2627, 17
        %v2656 = vpop.permute.xlu0 %2655
        %2657 = vrot.lane.b32.xlu0 %v2629, 17
        %v2658 = vpop.permute.xlu0 %2657
        %v2659 = vsel %vm356, %v2644, %v2652
        %v2660 = vsel %vm356, %v2646, %v2654
        %v2661 = vsel %vm356, %v2648, %v2656
        %v2662 = vsel %vm356, %v2650, %v2658
        %v2663 = vsel %vm356, %v2652, %v2644
        %v2664 = vsel %vm356, %v2654, %v2646
        %v2665 = vsel %vm356, %v2656, %v2648
        %v2666 = vsel %vm356, %v2658, %v2650
        %v2667 = vmul.f32 %v2663, %v296
        %v2668 = vmul.f32 %v2659, %v297
        %v2669 = vmul.f32 %v2664, %v296
        %v2670 = vmul.f32 %v2660, %v297
        %v2671 = vmul.f32 %v2665, %v296
        %v2672 = vmul.f32 %v2661, %v297
        %v2673 = vmul.f32 %v2666, %v296
        %v2674 = vmul.f32 %v2662, %v297
        %v2675 = vpack.c.bf16 %v2669, %v2667
        %v2676 = vpack.c.bf16 %v2670, %v2668
        %v2677 = vpack.c.bf16 %v2673, %v2671
        %v2678 = vpack.c.bf16 %v2674, %v2672
        %v2683 = vunpack.c.l.b16 %v2675
        %v2684 = vunpack.c.l.b16 %v2676
        %v2685 = vunpack.c.h.b16 %v2675
        %v2686 = vunpack.c.h.b16 %v2676
        %v2687 = vunpack.c.l.b16 %v2677
        %v2688 = vunpack.c.l.b16 %v2678
        %v2689 = vunpack.c.h.b16 %v2677
        %v2690 = vunpack.c.h.b16 %v2678
        %v2691 = vpack.c.b16 %v2684, %v2683
        %v2692 = vpack.c.b16 %v2686, %v2685
        %v2693 = vpack.c.b16 %v2688, %v2687
        %v2694 = vpack.c.b16 %v2690, %v2689
        %2699 = vst [vmem:[#allocation2] sm:$0xff] %v2691
        %2700 = vst [vmem:[#allocation2 + $0x8] sm:$0xff] %v2692
        %2701 = vst [vmem:[#allocation2 + $0x10] sm:$0xff] %v2693
        %2702 = vst [vmem:[#allocation2 + $0x18] sm:$0xff] %v2694
        %2703 = vrot.lane.b32.xlu0 %v2622, 16
        %v2704 = vpop.permute.xlu0 %2703
        %2705 = vrot.lane.b32.xlu0 %v2624, 16
        %v2706 = vpop.permute.xlu0 %2705
        %2707 = vrot.lane.b32.xlu0 %v2626, 16
        %v2708 = vpop.permute.xlu0 %2707
        %2709 = vrot.lane.b32.xlu0 %v2628, 16
        %v2710 = vpop.permute.xlu0 %2709
        %2711 = vrot.lane.b32.xlu0 %v2623, 16
        %v2712 = vpop.permute.xlu0 %2711
        %2713 = vrot.lane.b32.xlu0 %v2625, 16
        %v2714 = vpop.permute.xlu0 %2713
        %2715 = vrot.lane.b32.xlu0 %v2627, 16
        %v2716 = vpop.permute.xlu0 %2715
        %2717 = vrot.lane.b32.xlu0 %v2629, 16
        %v2718 = vpop.permute.xlu0 %2717
        %v2719 = vsel %vm387, %v2704, %v2712
        %v2720 = vsel %vm387, %v2706, %v2714
        %v2721 = vsel %vm387, %v2708, %v2716
        %v2722 = vsel %vm387, %v2710, %v2718
        %v2723 = vsel %vm387, %v2712, %v2704
        %v2724 = vsel %vm387, %v2714, %v2706
        %v2725 = vsel %vm387, %v2716, %v2708
        %v2726 = vsel %vm387, %v2718, %v2710
        %v2727 = vmul.f32 %v2723, %v300
        %v2728 = vmul.f32 %v2719, %v301
        %v2729 = vmul.f32 %v2724, %v300
        %v2730 = vmul.f32 %v2720, %v301
        %v2731 = vmul.f32 %v2725, %v300
        %v2732 = vmul.f32 %v2721, %v301
        %v2733 = vmul.f32 %v2726, %v300
        %v2734 = vmul.f32 %v2722, %v301
        %v2735 = vpack.c.bf16 %v2729, %v2727
        %v2736 = vpack.c.bf16 %v2730, %v2728
        %v2737 = vpack.c.bf16 %v2733, %v2731
        %v2738 = vpack.c.bf16 %v2734, %v2732
        %v2743 = vunpack.c.l.b16 %v2735
        %v2744 = vunpack.c.l.b16 %v2736
        %v2745 = vunpack.c.h.b16 %v2735
        %v2746 = vunpack.c.h.b16 %v2736
        %v2747 = vunpack.c.l.b16 %v2737
        %v2748 = vunpack.c.l.b16 %v2738
        %v2749 = vunpack.c.h.b16 %v2737
        %v2750 = vunpack.c.h.b16 %v2738
        %v2751 = vpack.c.b16 %v2744, %v2743
        %v2752 = vpack.c.b16 %v2746, %v2745
        %v2753 = vpack.c.b16 %v2748, %v2747
        %v2754 = vpack.c.b16 %v2750, %v2749
        %2759 = vst [vmem:[#allocation2 + $0x20] sm:$0xff] %v2751
        %2760 = vst [vmem:[#allocation2 + $0x28] sm:$0xff] %v2752
        %2761 = vst [vmem:[#allocation2 + $0x30] sm:$0xff] %v2753
        %2762 = vst [vmem:[#allocation2 + $0x38] sm:$0xff] %v2754
        %2763 = vrot.lane.b32.xlu0 %v2622, 15
        %v2764 = vpop.permute.xlu0 %2763
        %2765 = vrot.lane.b32.xlu0 %v2624, 15
        %v2766 = vpop.permute.xlu0 %2765
        %2767 = vrot.lane.b32.xlu0 %v2626, 15
        %v2768 = vpop.permute.xlu0 %2767
        %2769 = vrot.lane.b32.xlu0 %v2628, 15
        %v2770 = vpop.permute.xlu0 %2769
        %2771 = vrot.lane.b32.xlu0 %v2623, 15
        %v2772 = vpop.permute.xlu0 %2771
        %2773 = vrot.lane.b32.xlu0 %v2625, 15
        %v2774 = vpop.permute.xlu0 %2773
        %2775 = vrot.lane.b32.xlu0 %v2627, 15
        %v2776 = vpop.permute.xlu0 %2775
        %2777 = vrot.lane.b32.xlu0 %v2629, 15
        %v2778 = vpop.permute.xlu0 %2777
        %v2779 = vsel %vm418, %v2764, %v2772
        %v2780 = vsel %vm418, %v2766, %v2774
        %v2781 = vsel %vm418, %v2768, %v2776
        %v2782 = vsel %vm418, %v2770, %v2778
        %v2783 = vsel %vm418, %v2772, %v2764
        %v2784 = vsel %vm418, %v2774, %v2766
        %v2785 = vsel %vm418, %v2776, %v2768
        %v2786 = vsel %vm418, %v2778, %v2770
        %v2787 = vmul.f32 %v2783, %v308
        %v2788 = vmul.f32 %v2779, %v309
        %v2789 = vmul.f32 %v2784, %v308
        %v2790 = vmul.f32 %v2780, %v309
        %v2791 = vmul.f32 %v2785, %v308
        %v2792 = vmul.f32 %v2781, %v309
        %v2793 = vmul.f32 %v2786, %v308
        %v2794 = vmul.f32 %v2782, %v309
        %v2795 = vpack.c.bf16 %v2789, %v2787
        %v2796 = vpack.c.bf16 %v2790, %v2788
        %v2797 = vpack.c.bf16 %v2793, %v2791
        %v2798 = vpack.c.bf16 %v2794, %v2792
        %v2803 = vunpack.c.l.b16 %v2795
        %v2804 = vunpack.c.l.b16 %v2796
        %v2805 = vunpack.c.h.b16 %v2795
        %v2806 = vunpack.c.h.b16 %v2796
        %v2807 = vunpack.c.l.b16 %v2797
        %v2808 = vunpack.c.l.b16 %v2798
        %v2809 = vunpack.c.h.b16 %v2797
        %v2810 = vunpack.c.h.b16 %v2798
        %v2811 = vpack.c.b16 %v2804, %v2803
        %v2812 = vpack.c.b16 %v2806, %v2805
        %v2813 = vpack.c.b16 %v2808, %v2807
        %v2814 = vpack.c.b16 %v2810, %v2809
        %2819 = vst [vmem:[#allocation2 + $0x40] sm:$0xff] %v2811
        %2820 = vst [vmem:[#allocation2 + $0x48] sm:$0xff] %v2812
        %2821 = vst [vmem:[#allocation2 + $0x50] sm:$0xff] %v2813
        %2822 = vst [vmem:[#allocation2 + $0x58] sm:$0xff] %v2814
        %2823 = vrot.lane.b32.xlu0 %v2622, 1
        %v2824 = vpop.permute.xlu0 %2823
        %2825 = vrot.lane.b32.xlu0 %v2624, 1
        %v2826 = vpop.permute.xlu0 %2825
        %2827 = vrot.lane.b32.xlu0 %v2626, 1
        %v2828 = vpop.permute.xlu0 %2827
        %2829 = vrot.lane.b32.xlu0 %v2628, 1
        %v2830 = vpop.permute.xlu0 %2829
        %2831 = vrot.lane.b32.xlu0 %v2623, 1
        %v2832 = vpop.permute.xlu0 %2831
        %2833 = vrot.lane.b32.xlu0 %v2625, 1
        %v2834 = vpop.permute.xlu0 %2833
        %2835 = vrot.lane.b32.xlu0 %v2627, 1
        %v2836 = vpop.permute.xlu0 %2835
        %2837 = vrot.lane.b32.xlu0 %v2629, 1
        %v2838 = vpop.permute.xlu0 %2837
        %v2839 = vsel %vm449, %v2824, %v2832
        %v2840 = vsel %vm449, %v2826, %v2834
        %v2841 = vsel %vm449, %v2828, %v2836
        %v2842 = vsel %vm449, %v2830, %v2838
        %v2843 = vsel %vm449, %v2832, %v2824
        %v2844 = vsel %vm449, %v2834, %v2826
        %v2845 = vsel %vm449, %v2836, %v2828
        %v2846 = vsel %vm449, %v2838, %v2830
        %v2847 = vmul.f32 %v2843, %v312
        %v2848 = vmul.f32 %v2839, %v313
        %v2849 = vmul.f32 %v2844, %v312
        %v2850 = vmul.f32 %v2840, %v313
        %v2851 = vmul.f32 %v2845, %v312
        %v2852 = vmul.f32 %v2841, %v313
        %v2853 = vmul.f32 %v2846, %v312
        %v2854 = vmul.f32 %v2842, %v313
        %v2855 = vpack.c.bf16 %v2849, %v2847
        %v2856 = vpack.c.bf16 %v2850, %v2848
        %v2857 = vpack.c.bf16 %v2853, %v2851
        %v2858 = vpack.c.bf16 %v2854, %v2852
        %v2863 = vunpack.c.l.b16 %v2855
        %v2864 = vunpack.c.l.b16 %v2856
        %v2865 = vunpack.c.h.b16 %v2855
        %v2866 = vunpack.c.h.b16 %v2856
        %v2867 = vunpack.c.l.b16 %v2857
        %v2868 = vunpack.c.l.b16 %v2858
        %v2869 = vunpack.c.h.b16 %v2857
        %v2870 = vunpack.c.h.b16 %v2858
        %v2871 = vpack.c.b16 %v2864, %v2863
        %v2872 = vpack.c.b16 %v2866, %v2865
        %v2873 = vpack.c.b16 %v2868, %v2867
        %v2874 = vpack.c.b16 %v2870, %v2869
        %2879 = vst [vmem:[#allocation2 + $0x60] sm:$0xff] %v2871
        %2880 = vst [vmem:[#allocation2 + $0x68] sm:$0xff] %v2872
        %2881 = vst [vmem:[#allocation2 + $0x70] sm:$0xff] %v2873
        %2882 = vst [vmem:[#allocation2 + $0x78] sm:$0xff] %v2874
        %v2883 = vpack.c.bf16 %v2624, %v2622
        %v2884 = vpack.c.bf16 %v2625, %v2623
        %v2885 = vpack.c.bf16 %v2628, %v2626
        %v2886 = vpack.c.bf16 %v2629, %v2627
        %v2891 = vunpack.c.l.b16 %v2883
        %v2892 = vunpack.c.l.b16 %v2884
        %v2893 = vunpack.c.h.b16 %v2883
        %v2894 = vunpack.c.h.b16 %v2884
        %v2895 = vunpack.c.l.b16 %v2885
        %v2896 = vunpack.c.l.b16 %v2886
        %v2897 = vunpack.c.h.b16 %v2885
        %v2898 = vunpack.c.h.b16 %v2886
        %v2899 = vpack.c.b16 %v2892, %v2891
        %v2900 = vpack.c.b16 %v2894, %v2893
        %v2901 = vpack.c.b16 %v2896, %v2895
        %v2902 = vpack.c.b16 %v2898, %v2897
        %2907 = vst [vmem:[#allocation2 + $0x80] sm:$0xff] %v2899
        %2908 = vst [vmem:[#allocation2 + $0x88] sm:$0xff] %v2900
        %2909 = vst [vmem:[#allocation2 + $0x90] sm:$0xff] %v2901
        %2910 = vst [vmem:[#allocation2 + $0x98] sm:$0xff] %v2902
        %2911 = vrot.lane.b32.xlu0 %v2622, 127
        %v2912 = vpop.permute.xlu0 %2911
        %2913 = vrot.lane.b32.xlu0 %v2624, 127
        %v2914 = vpop.permute.xlu0 %2913
        %2915 = vrot.lane.b32.xlu0 %v2626, 127
        %v2916 = vpop.permute.xlu0 %2915
        %2917 = vrot.lane.b32.xlu0 %v2628, 127
        %v2918 = vpop.permute.xlu0 %2917
        %2919 = vrot.lane.b32.xlu0 %v2623, 127
        %v2920 = vpop.permute.xlu0 %2919
        %2921 = vrot.lane.b32.xlu0 %v2625, 127
        %v2922 = vpop.permute.xlu0 %2921
        %2923 = vrot.lane.b32.xlu0 %v2627, 127
        %v2924 = vpop.permute.xlu0 %2923
        %2925 = vrot.lane.b32.xlu0 %v2629, 127
        %v2926 = vpop.permute.xlu0 %2925
        %v2927 = vsel %vm494, %v2912, %v2920
        %v2928 = vsel %vm494, %v2914, %v2922
        %v2929 = vsel %vm494, %v2916, %v2924
        %v2930 = vsel %vm494, %v2918, %v2926
        %v2931 = vsel %vm494, %v2920, %v2912
        %v2932 = vsel %vm494, %v2922, %v2914
        %v2933 = vsel %vm494, %v2924, %v2916
        %v2934 = vsel %vm494, %v2926, %v2918
        %v2935 = vmul.f32 %v2927, %v316
        %v2936 = vmul.f32 %v2931, %v317
        %v2937 = vmul.f32 %v2928, %v316
        %v2938 = vmul.f32 %v2932, %v317
        %v2939 = vmul.f32 %v2929, %v316
        %v2940 = vmul.f32 %v2933, %v317
        %v2941 = vmul.f32 %v2930, %v316
        %v2942 = vmul.f32 %v2934, %v317
        %v2943 = vpack.c.bf16 %v2937, %v2935
        %v2944 = vpack.c.bf16 %v2938, %v2936
        %v2945 = vpack.c.bf16 %v2941, %v2939
        %v2946 = vpack.c.bf16 %v2942, %v2940
        %v2951 = vunpack.c.l.b16 %v2943
        %v2952 = vunpack.c.l.b16 %v2944
        %v2953 = vunpack.c.h.b16 %v2943
        %v2954 = vunpack.c.h.b16 %v2944
        %v2955 = vunpack.c.l.b16 %v2945
        %v2956 = vunpack.c.l.b16 %v2946
        %v2957 = vunpack.c.h.b16 %v2945
        %v2958 = vunpack.c.h.b16 %v2946
        %v2959 = vpack.c.b16 %v2952, %v2951
        %v2960 = vpack.c.b16 %v2954, %v2953
        %v2961 = vpack.c.b16 %v2956, %v2955
        %v2962 = vpack.c.b16 %v2958, %v2957
        %2967 = vst [vmem:[#allocation2 + $0xa0] sm:$0xff] %v2959
        %2968 = vst [vmem:[#allocation2 + $0xa8] sm:$0xff] %v2960
        %2969 = vst [vmem:[#allocation2 + $0xb0] sm:$0xff] %v2961
        %2970 = vst [vmem:[#allocation2 + $0xb8] sm:$0xff] %v2962
        %2971 = vrot.lane.b32.xlu0 %v2622, 113
        %v2972 = vpop.permute.xlu0 %2971
        %2973 = vrot.lane.b32.xlu0 %v2624, 113
        %v2974 = vpop.permute.xlu0 %2973
        %2975 = vrot.lane.b32.xlu0 %v2626, 113
        %v2976 = vpop.permute.xlu0 %2975
        %2977 = vrot.lane.b32.xlu0 %v2628, 113
        %v2978 = vpop.permute.xlu0 %2977
        %2979 = vrot.lane.b32.xlu0 %v2623, 113
        %v2980 = vpop.permute.xlu0 %2979
        %2981 = vrot.lane.b32.xlu0 %v2625, 113
        %v2982 = vpop.permute.xlu0 %2981
        %2983 = vrot.lane.b32.xlu0 %v2627, 113
        %v2984 = vpop.permute.xlu0 %2983
        %2985 = vrot.lane.b32.xlu0 %v2629, 113
        %v2986 = vpop.permute.xlu0 %2985
        %v2987 = vsel %vm525, %v2972, %v2980
        %v2988 = vsel %vm525, %v2974, %v2982
        %v2989 = vsel %vm525, %v2976, %v2984
        %v2990 = vsel %vm525, %v2978, %v2986
        %v2991 = vsel %vm525, %v2980, %v2972
        %v2992 = vsel %vm525, %v2982, %v2974
        %v2993 = vsel %vm525, %v2984, %v2976
        %v2994 = vsel %vm525, %v2986, %v2978
        %v2995 = vmul.f32 %v2987, %v324
        %v2996 = vmul.f32 %v2991, %v325
        %v2997 = vmul.f32 %v2988, %v324
        %v2998 = vmul.f32 %v2992, %v325
        %v2999 = vmul.f32 %v2989, %v324
        %v3000 = vmul.f32 %v2993, %v325
        %v3001 = vmul.f32 %v2990, %v324
        %v3002 = vmul.f32 %v2994, %v325
        %v3003 = vpack.c.bf16 %v2997, %v2995
        %v3004 = vpack.c.bf16 %v2998, %v2996
        %v3005 = vpack.c.bf16 %v3001, %v2999
        %v3006 = vpack.c.bf16 %v3002, %v3000
        %v3011 = vunpack.c.l.b16 %v3003
        %v3012 = vunpack.c.l.b16 %v3004
        %v3013 = vunpack.c.h.b16 %v3003
        %v3014 = vunpack.c.h.b16 %v3004
        %v3015 = vunpack.c.l.b16 %v3005
        %v3016 = vunpack.c.l.b16 %v3006
        %v3017 = vunpack.c.h.b16 %v3005
        %v3018 = vunpack.c.h.b16 %v3006
        %v3019 = vpack.c.b16 %v3012, %v3011
        %v3020 = vpack.c.b16 %v3014, %v3013
        %v3021 = vpack.c.b16 %v3016, %v3015
        %v3022 = vpack.c.b16 %v3018, %v3017
        %3027 = vst [vmem:[#allocation2 + $0xc0] sm:$0xff] %v3019
        %3028 = vst [vmem:[#allocation2 + $0xc8] sm:$0xff] %v3020
        %3029 = vst [vmem:[#allocation2 + $0xd0] sm:$0xff] %v3021
        %3030 = vst [vmem:[#allocation2 + $0xd8] sm:$0xff] %v3022
        %3031 = vrot.lane.b32.xlu0 %v2622, 112
        %v3032 = vpop.permute.xlu0 %3031
        %3033 = vrot.lane.b32.xlu0 %v2624, 112
        %v3034 = vpop.permute.xlu0 %3033
        %3035 = vrot.lane.b32.xlu0 %v2626, 112
        %v3036 = vpop.permute.xlu0 %3035
        %3037 = vrot.lane.b32.xlu0 %v2628, 112
        %v3038 = vpop.permute.xlu0 %3037
        %3039 = vrot.lane.b32.xlu0 %v2623, 112
        %v3040 = vpop.permute.xlu0 %3039
        %3041 = vrot.lane.b32.xlu0 %v2625, 112
        %v3042 = vpop.permute.xlu0 %3041
        %3043 = vrot.lane.b32.xlu0 %v2627, 112
        %v3044 = vpop.permute.xlu0 %3043
        %3045 = vrot.lane.b32.xlu0 %v2629, 112
        %v3046 = vpop.permute.xlu0 %3045
        %v3047 = vsel %vm556, %v3032, %v3040
        %v3048 = vsel %vm556, %v3034, %v3042
        %v3049 = vsel %vm556, %v3036, %v3044
        %v3050 = vsel %vm556, %v3038, %v3046
        %v3051 = vsel %vm556, %v3040, %v3032
        %v3052 = vsel %vm556, %v3042, %v3034
        %v3053 = vsel %vm556, %v3044, %v3036
        %v3054 = vsel %vm556, %v3046, %v3038
        %v3055 = vmul.f32 %v3047, %v328
        %v3056 = vmul.f32 %v3051, %v329
        %v3057 = vmul.f32 %v3048, %v328
        %v3058 = vmul.f32 %v3052, %v329
        %v3059 = vmul.f32 %v3049, %v328
        %v3060 = vmul.f32 %v3053, %v329
        %v3061 = vmul.f32 %v3050, %v328
        %v3062 = vmul.f32 %v3054, %v329
        %v3063 = vpack.c.bf16 %v3057, %v3055
        %v3064 = vpack.c.bf16 %v3058, %v3056
        %v3065 = vpack.c.bf16 %v3061, %v3059
        %v3066 = vpack.c.bf16 %v3062, %v3060
        %v3071 = vunpack.c.l.b16 %v3063
        %v3072 = vunpack.c.l.b16 %v3064
        %v3073 = vunpack.c.h.b16 %v3063
        %v3074 = vunpack.c.h.b16 %v3064
        %v3075 = vunpack.c.l.b16 %v3065
        %v3076 = vunpack.c.l.b16 %v3066
        %v3077 = vunpack.c.h.b16 %v3065
        %v3078 = vunpack.c.h.b16 %v3066
        %v3079 = vpack.c.b16 %v3072, %v3071
        %v3080 = vpack.c.b16 %v3074, %v3073
        %v3081 = vpack.c.b16 %v3076, %v3075
        %v3082 = vpack.c.b16 %v3078, %v3077
        %3087 = vst [vmem:[#allocation2 + $0xe0] sm:$0xff] %v3079
        %3088 = vst [vmem:[#allocation2 + $0xe8] sm:$0xff] %v3080
        %3089 = vst [vmem:[#allocation2 + $0xf0] sm:$0xff] %v3081
        %3090 = vst [vmem:[#allocation2 + $0xf8] sm:$0xff] %v3082
        %3091 = vrot.lane.b32.xlu0 %v2622, 111
        %v3092 = vpop.permute.xlu0 %3091
        %3093 = vrot.lane.b32.xlu0 %v2624, 111
        %v3094 = vpop.permute.xlu0 %3093
        %3095 = vrot.lane.b32.xlu0 %v2626, 111
        %v3096 = vpop.permute.xlu0 %3095
        %3097 = vrot.lane.b32.xlu0 %v2628, 111
        %v3098 = vpop.permute.xlu0 %3097
        %3099 = vrot.lane.b32.xlu0 %v2623, 111
        %v3100 = vpop.permute.xlu0 %3099
        %3101 = vrot.lane.b32.xlu0 %v2625, 111
        %v3102 = vpop.permute.xlu0 %3101
        %3103 = vrot.lane.b32.xlu0 %v2627, 111
        %v3104 = vpop.permute.xlu0 %3103
        %3105 = vrot.lane.b32.xlu0 %v2629, 111
        %v3106 = vpop.permute.xlu0 %3105
        %v3107 = vsel %vm587, %v3092, %v3100
        %v3108 = vsel %vm587, %v3094, %v3102
        %v3109 = vsel %vm587, %v3096, %v3104
        %v3110 = vsel %vm587, %v3098, %v3106
        %v3111 = vsel %vm587, %v3100, %v3092
        %v3112 = vsel %vm587, %v3102, %v3094
        %v3113 = vsel %vm587, %v3104, %v3096
        %v3114 = vsel %vm587, %v3106, %v3098
        %v3115 = vmul.f32 %v3107, %v334
        %v3116 = vmul.f32 %v3111, %v335
        %v3117 = vmul.f32 %v3108, %v334
        %v3118 = vmul.f32 %v3112, %v335
        %v3119 = vmul.f32 %v3109, %v334
        %v3120 = vmul.f32 %v3113, %v335
        %v3121 = vmul.f32 %v3110, %v334
        %v3122 = vmul.f32 %v3114, %v335
        %v3123 = vpack.c.bf16 %v3117, %v3115
        %v3124 = vpack.c.bf16 %v3118, %v3116
        %v3125 = vpack.c.bf16 %v3121, %v3119
        %v3126 = vpack.c.bf16 %v3122, %v3120
        %v3131 = vunpack.c.l.b16 %v3123
        %v3132 = vunpack.c.l.b16 %v3124
        %v3133 = vunpack.c.h.b16 %v3123
        %v3134 = vunpack.c.h.b16 %v3124
        %v3135 = vunpack.c.l.b16 %v3125
        %v3136 = vunpack.c.l.b16 %v3126
        %v3137 = vunpack.c.h.b16 %v3125
        %v3138 = vunpack.c.h.b16 %v3126
        %v3139 = vpack.c.b16 %v3132, %v3131
        %v3140 = vpack.c.b16 %v3134, %v3133
        %v3141 = vpack.c.b16 %v3136, %v3135
        %v3142 = vpack.c.b16 %v3138, %v3137
        %3147 = vst [vmem:[#allocation2 + $0x100] sm:$0xff] %v3139
        %3148 = vst [vmem:[#allocation2 + $0x108] sm:$0xff] %v3140
        %3149 = vst [vmem:[#allocation2 + $0x110] sm:$0xff] %v3141
        %3150 = vst [vmem:[#allocation2 + $0x118] sm:$0xff] %v3142
        %v3151 = vld [vmem:[#allocation2] sm:$0xff]
        %v3152 = vld [vmem:[#allocation2 + $0x8] sm:$0xff]
        %v3153 = vld [vmem:[#allocation2 + $0x10] sm:$0xff]
        %v3154 = vld [vmem:[#allocation2 + $0x18] sm:$0xff]
        %v3155 = vld [vmem:[#allocation2 + $0x20] sm:$0xff]
        %v3156 = vld [vmem:[#allocation2 + $0x28] sm:$0xff]
        %v3157 = vld [vmem:[#allocation2 + $0x30] sm:$0xff]
        %v3158 = vld [vmem:[#allocation2 + $0x38] sm:$0xff]
        %v3159 = vld [vmem:[#allocation2 + $0x40] sm:$0xff]
        %v3160 = vld [vmem:[#allocation2 + $0x48] sm:$0xff]
        %v3161 = vld [vmem:[#allocation2 + $0x50] sm:$0xff]
        %v3162 = vld [vmem:[#allocation2 + $0x58] sm:$0xff]
        %v3163 = vld [vmem:[#allocation2 + $0x60] sm:$0xff]
        %v3164 = vld [vmem:[#allocation2 + $0x68] sm:$0xff]
        %v3165 = vld [vmem:[#allocation2 + $0x70] sm:$0xff]
        %v3166 = vld [vmem:[#allocation2 + $0x78] sm:$0xff]
        %v3167 = vld [vmem:[#allocation2 + $0x80] sm:$0xff]
        %v3168 = vld [vmem:[#allocation2 + $0x88] sm:$0xff]
        %v3169 = vld [vmem:[#allocation2 + $0x90] sm:$0xff]
        %v3170 = vld [vmem:[#allocation2 + $0x98] sm:$0xff]
        %v3171 = vld [vmem:[#allocation2 + $0xa0] sm:$0xff]
        %v3172 = vld [vmem:[#allocation2 + $0xa8] sm:$0xff]
        %v3173 = vld [vmem:[#allocation2 + $0xb0] sm:$0xff]
        %v3174 = vld [vmem:[#allocation2 + $0xb8] sm:$0xff]
        %v3175 = vld [vmem:[#allocation2 + $0xc0] sm:$0xff]
        %v3176 = vld [vmem:[#allocation2 + $0xc8] sm:$0xff]
        %v3177 = vld [vmem:[#allocation2 + $0xd0] sm:$0xff]
        %v3178 = vld [vmem:[#allocation2 + $0xd8] sm:$0xff]
        %v3179 = vld [vmem:[#allocation2 + $0xe0] sm:$0xff]
        %v3180 = vld [vmem:[#allocation2 + $0xe8] sm:$0xff]
        %v3181 = vld [vmem:[#allocation2 + $0xf0] sm:$0xff]
        %v3182 = vld [vmem:[#allocation2 + $0xf8] sm:$0xff]
        %v3183 = vld [vmem:[#allocation2 + $0x100] sm:$0xff]
        %v3184 = vld [vmem:[#allocation2 + $0x108] sm:$0xff]
        %v3185 = vld [vmem:[#allocation2 + $0x110] sm:$0xff]
        %v3186 = vld [vmem:[#allocation2 + $0x118] sm:$0xff]
        %3188 = vset.pattern.permute.xlu0 3
        %3189 = vperm.xlu0 %3188, %v2639
        %v3190 = vpop.permute.xlu0 %3189
        %3193 = vset.pattern.permute.xlu0 3
        %3194 = vperm.xlu0 %3193, %v2640
        %v3195 = vpop.permute.xlu0 %3194
        %3198 = vset.pattern.permute.xlu0 3
        %3199 = vperm.xlu0 %3198, %v2641
        %v3200 = vpop.permute.xlu0 %3199
        %3203 = vset.pattern.permute.xlu0 3
        %3204 = vperm.xlu0 %3203, %v2642
        %v3205 = vpop.permute.xlu0 %3204
        %v3215 = vunpack.c.l.b16 %v2631
        %v3216 = vunpack.c.h.b16 %v2631
        %v3217 = vunpack.c.l.b16 %v2632
        %v3218 = vunpack.c.l.b16 %v2633
        %v3219 = vunpack.c.h.b16 %v2633
        %v3220 = vunpack.c.l.b16 %v2634
        %v3221 = vunpack.c.l.b16 %v2635
        %v3222 = vunpack.c.h.b16 %v2635
        %v3223 = vunpack.c.l.b16 %v2636
        %v3224 = vunpack.c.l.b16 %v2637
        %v3225 = vunpack.c.h.b16 %v2637
        %v3226 = vunpack.c.l.b16 %v2638
        %v3227 = vpack.c.b16 %v3218, %v3215
        %v3228 = vpack.c.b16 %v3219, %v3216
        %v3229 = vpack.c.b16 %v3220, %v3217
        %v3230 = vpack.c.b16 %v3224, %v3221
        %v3231 = vpack.c.b16 %v3225, %v3222
        %v3232 = vpack.c.b16 %v3226, %v3223
        %v3273 = vunpack.c.l.b16 %v3151
        %v3274 = vunpack.c.h.b16 %v3151
        %v3275 = vunpack.c.l.b16 %v3152
        %v3276 = vunpack.c.h.b16 %v3152
        %v3277 = vunpack.c.l.b16 %v3153
        %v3278 = vunpack.c.h.b16 %v3153
        %v3279 = vunpack.c.l.b16 %v3154
        %v3280 = vunpack.c.h.b16 %v3154
        %v3281 = vunpack.c.l.b16 %v3155
        %v3282 = vunpack.c.h.b16 %v3155
        %v3283 = vunpack.c.l.b16 %v3156
        %v3284 = vunpack.c.h.b16 %v3156
        %v3285 = vunpack.c.l.b16 %v3157
        %v3286 = vunpack.c.h.b16 %v3157
        %v3287 = vunpack.c.l.b16 %v3158
        %v3288 = vunpack.c.h.b16 %v3158
        %v3289 = vunpack.c.l.b16 %v3159
        %v3290 = vunpack.c.h.b16 %v3159
        %v3291 = vunpack.c.l.b16 %v3160
        %v3292 = vunpack.c.h.b16 %v3160
        %v3293 = vunpack.c.l.b16 %v3161
        %v3294 = vunpack.c.h.b16 %v3161
        %v3295 = vunpack.c.l.b16 %v3162
        %v3296 = vunpack.c.h.b16 %v3162
        %v3297 = vunpack.c.l.b16 %v3163
        %v3298 = vunpack.c.h.b16 %v3163
        %v3299 = vunpack.c.l.b16 %v3164
        %v3300 = vunpack.c.h.b16 %v3164
        %v3301 = vunpack.c.l.b16 %v3165
        %v3302 = vunpack.c.h.b16 %v3165
        %v3303 = vunpack.c.l.b16 %v3166
        %v3304 = vunpack.c.h.b16 %v3166
        %v3305 = vunpack.c.l.b16 %v3167
        %v3306 = vunpack.c.h.b16 %v3167
        %v3307 = vunpack.c.l.b16 %v3168
        %v3308 = vunpack.c.h.b16 %v3168
        %v3309 = vunpack.c.l.b16 %v3169
        %v3310 = vunpack.c.h.b16 %v3169
        %v3311 = vunpack.c.l.b16 %v3170
        %v3312 = vunpack.c.h.b16 %v3170
        %v3313 = vunpack.c.l.b16 %v3171
        %v3314 = vunpack.c.h.b16 %v3171
        %v3315 = vunpack.c.l.b16 %v3172
        %v3316 = vunpack.c.h.b16 %v3172
        %v3317 = vunpack.c.l.b16 %v3173
        %v3318 = vunpack.c.h.b16 %v3173
        %v3319 = vunpack.c.l.b16 %v3174
        %v3320 = vunpack.c.h.b16 %v3174
        %v3321 = vunpack.c.l.b16 %v3175
        %v3322 = vunpack.c.h.b16 %v3175
        %v3323 = vunpack.c.l.b16 %v3176
        %v3324 = vunpack.c.h.b16 %v3176
        %v3325 = vunpack.c.l.b16 %v3177
        %v3326 = vunpack.c.h.b16 %v3177
        %v3327 = vunpack.c.l.b16 %v3178
        %v3328 = vunpack.c.h.b16 %v3178
        %v3329 = vunpack.c.l.b16 %v3179
        %v3330 = vunpack.c.h.b16 %v3179
        %v3331 = vunpack.c.l.b16 %v3180
        %v3332 = vunpack.c.h.b16 %v3180
        %v3333 = vunpack.c.l.b16 %v3181
        %v3334 = vunpack.c.h.b16 %v3181
        %v3335 = vunpack.c.l.b16 %v3182
        %v3336 = vunpack.c.h.b16 %v3182
        %v3337 = vunpack.c.l.b16 %v3183
        %v3338 = vunpack.c.h.b16 %v3183
        %v3339 = vunpack.c.l.b16 %v3184
        %v3340 = vunpack.c.h.b16 %v3184
        %v3341 = vunpack.c.l.b16 %v3185
        %v3342 = vunpack.c.h.b16 %v3185
        %v3343 = vunpack.c.l.b16 %v3186
        %v3344 = vunpack.c.h.b16 %v3186
        %v3345 = vpack.c.b16 %v3275, %v3273
        %v3346 = vpack.c.b16 %v3276, %v3274
        %v3347 = vpack.c.b16 %v3279, %v3277
        %v3348 = vpack.c.b16 %v3280, %v3278
        %v3349 = vpack.c.b16 %v3283, %v3281
        %v3350 = vpack.c.b16 %v3284, %v3282
        %v3351 = vpack.c.b16 %v3287, %v3285
        %v3352 = vpack.c.b16 %v3288, %v3286
        %v3353 = vpack.c.b16 %v3291, %v3289
        %v3354 = vpack.c.b16 %v3292, %v3290
        %v3355 = vpack.c.b16 %v3295, %v3293
        %v3356 = vpack.c.b16 %v3296, %v3294
        %v3357 = vpack.c.b16 %v3299, %v3297
        %v3358 = vpack.c.b16 %v3300, %v3298
        %v3359 = vpack.c.b16 %v3303, %v3301
        %v3360 = vpack.c.b16 %v3304, %v3302
        %v3361 = vpack.c.b16 %v3307, %v3305
        %v3362 = vpack.c.b16 %v3308, %v3306
        %v3363 = vpack.c.b16 %v3311, %v3309
        %v3364 = vpack.c.b16 %v3312, %v3310
        %v3365 = vpack.c.b16 %v3315, %v3313
        %v3366 = vpack.c.b16 %v3316, %v3314
        %v3367 = vpack.c.b16 %v3319, %v3317
        %v3368 = vpack.c.b16 %v3320, %v3318
        %v3369 = vpack.c.b16 %v3323, %v3321
        %v3370 = vpack.c.b16 %v3324, %v3322
        %v3371 = vpack.c.b16 %v3327, %v3325
        %v3372 = vpack.c.b16 %v3328, %v3326
        %v3373 = vpack.c.b16 %v3331, %v3329
        %v3374 = vpack.c.b16 %v3332, %v3330
        %v3375 = vpack.c.b16 %v3335, %v3333
        %v3376 = vpack.c.b16 %v3336, %v3334
        %v3377 = vpack.c.b16 %v3339, %v3337
        %v3378 = vpack.c.b16 %v3340, %v3338
        %v3379 = vpack.c.b16 %v3343, %v3341
        %v3380 = vpack.c.b16 %v3344, %v3342
        %v3418 = vsel %vm1602, %v3229, 0
        %v3421 = vsel %vm1602, %v3232, 0
        %3423 = vmatprep.subr.bf16.mxu0 %v3360
        %3424 = vmatpush1.bf16.msra.mxu0 %v3359
        %3425 = vmatprep.subr.bf16.mxu0 %v3358
        %3426 = vmatpush1.bf16.msra.mxu0 %v3357
        %3427 = vmatprep.subr.bf16.mxu0 %v3356
        %3428 = vmatpush1.bf16.msra.mxu0 %v3355
        %3429 = vmatprep.subr.bf16.mxu0 %v3354
        %3430 = vmatpush1.bf16.msra.mxu0 %v3353
        %3431 = vmatprep.subr.bf16.mxu0 %v3352
        %3432 = vmatpush1.bf16.msra.mxu0 %v3351
        %3433 = vmatprep.subr.bf16.mxu0 %v3350
        %3434 = vmatpush1.bf16.msra.mxu0 %v3349
        %3435 = vmatprep.subr.bf16.mxu0 %v3348
        %3436 = vmatpush1.bf16.msra.mxu0 %v3347
        %3437 = vmatprep.subr.bf16.mxu0 %v3346
        %3438 = vmatpush1.bf16.msra.mxu0 %v3345
        %3439 = vmatprep.subr.bf16.mxu0 %v3376
        %3440 = vmatpush2.bf16.msra.mxu0 %v3375
        %3441 = vmatprep.subr.bf16.mxu0 %v3374
        %3442 = vmatpush2.bf16.msra.mxu0 %v3373
        %3443 = vmatprep.subr.bf16.mxu0 %v3372
        %3444 = vmatpush2.bf16.msra.mxu0 %v3371
        %3445 = vmatprep.subr.bf16.mxu0 %v3370
        %3446 = vmatpush2.bf16.msra.mxu0 %v3369
        %3447 = vmatprep.subr.bf16.mxu0 %v3368
        %3448 = vmatpush2.bf16.msra.mxu0 %v3367
        %3449 = vmatprep.subr.bf16.mxu0 %v3366
        %3450 = vmatpush2.bf16.msra.mxu0 %v3365
        %3451 = vmatprep.subr.bf16.mxu0 %v3364
        %3452 = vmatpush2.bf16.msra.mxu0 %v3363
        %3453 = vmatprep.subr.bf16.mxu0 %v3362
        %3454 = vmatpush2.bf16.msra.mxu0 %v3361
        %3455 = vmatprep.mubr.bf16.mxu0 %v3228
        %3456 = vmatmul.mubr.bf16.gmra.mxu0 %v3227
        %v3457 = vpop.f32.mrf.mxu0
        %v3458 = vadd.f32 %v3190, %v3457
        %v3459 = vpop.f32.mrf.mxu0
        %v3460 = vadd.f32 %v3190, %v3459
        %v3461 = vpop.f32.mrf.mxu0
        %v3462 = vadd.f32 %v3195, %v3461
        %v3463 = vpop.f32.mrf.mxu0
        %v3464 = vadd.f32 %v3195, %v3463
        %3465 = vmatprep.mubr.bf16.mxu0 %v3231
        %3466 = vmatmul.mubr.bf16.gmra.mxu0 %v3230
        %v3467 = vpop.f32.mrf.mxu0
        %v3468 = vadd.f32 %v3200, %v3467
        %v3469 = vpop.f32.mrf.mxu0
        %v3470 = vadd.f32 %v3200, %v3469
        %v3471 = vpop.f32.mrf.mxu0
        %v3472 = vadd.f32 %v3205, %v3471
        %v3473 = vpop.f32.mrf.mxu0
        %v3474 = vadd.f32 %v3205, %v3473
        %3475 = vdwg.mxu0
        %3476 = vmatprep.subr.bf16.mxu0 0
        %3477 = vmatpush1.bf16.msra.mxu0 0
        %3478 = vmatprep.subr.bf16.mxu0 0
        %3479 = vmatpush1.bf16.msra.mxu0 0
        %3480 = vmatprep.subr.bf16.mxu0 0
        %3481 = vmatpush1.bf16.msra.mxu0 0
        %3482 = vmatprep.subr.bf16.mxu0 0
        %3483 = vmatpush1.bf16.msra.mxu0 0
        %3484 = vmatprep.subr.bf16.mxu0 0
        %3485 = vmatpush1.bf16.msra.mxu0 0
        %3486 = vmatprep.subr.bf16.mxu0 0
        %3487 = vmatpush1.bf16.msra.mxu0 0
        %3488 = vmatprep.subr.bf16.mxu0 %v3380
        %3489 = vmatpush1.bf16.msra.mxu0 %v3379
        %3490 = vmatprep.subr.bf16.mxu0 %v3378
        %3491 = vmatpush1.bf16.msra.mxu0 %v3377
        %3492 = vmatprep.subr.bf16.mxu0 0
        %3493 = vmatpush2.bf16.msra.mxu0 0
        %3494 = vmatprep.subr.bf16.mxu0 0
        %3495 = vmatpush2.bf16.msra.mxu0 0
        %3496 = vmatprep.subr.bf16.mxu0 0
        %3497 = vmatpush2.bf16.msra.mxu0 0
        %3498 = vmatprep.subr.bf16.mxu0 0
        %3499 = vmatpush2.bf16.msra.mxu0 0
        %3500 = vmatprep.subr.bf16.mxu0 0
        %3501 = vmatpush2.bf16.msra.mxu0 0
        %3502 = vmatprep.subr.bf16.mxu0 0
        %3503 = vmatpush2.bf16.msra.mxu0 0
        %3504 = vmatprep.subr.bf16.mxu0 0
        %3505 = vmatpush2.bf16.msra.mxu0 0
        %3506 = vmatprep.subr.bf16.mxu0 0
        %3507 = vmatpush2.bf16.msra.mxu0 0
        %3508 = vmatprep.mubr.bf16.mxu0 0
        %3509 = vmatmul.mubr.bf16.gmra.mxu0 %v3418
        %v3510 = vpop.f32.mrf.mxu0
        %v3511 = vadd.f32 %v3458, %v3510
        %v3512 = vpop.f32.mrf.mxu0
        %v3513 = vadd.f32 %v3460, %v3512
        %v3514 = vpop.f32.mrf.mxu0
        %v3515 = vadd.f32 %v3462, %v3514
        %v3516 = vpop.f32.mrf.mxu0
        %v3517 = vadd.f32 %v3464, %v3516
        %3518 = vmatprep.mubr.bf16.mxu0 0
        %3519 = vmatmul.mubr.bf16.gmra.mxu0 %v3421
        %v3520 = vpop.f32.mrf.mxu0
        %v3521 = vadd.f32 %v3468, %v3520
        %v3522 = vpop.f32.mrf.mxu0
        %v3523 = vadd.f32 %v3470, %v3522
        %v3524 = vpop.f32.mrf.mxu0
        %v3525 = vadd.f32 %v3472, %v3524
        %v3526 = vpop.f32.mrf.mxu0
        %v3527 = vadd.f32 %v3474, %v3526
        %3528 = vdwg.mxu0
        %v3529 = vmax.f32 %v3511, 0.0
        %v3530 = vmax.f32 %v3513, 0.0
        %v3531 = vmax.f32 %v3515, 0.0
        %v3532 = vmax.f32 %v3517, 0.0
        %v3533 = vmax.f32 %v3521, 0.0
        %v3534 = vmax.f32 %v3523, 0.0
        %v3535 = vmax.f32 %v3525, 0.0
        %v3536 = vmax.f32 %v3527, 0.0
        %s3537 = scalar_lea.vmem %s2, 144
        %v3538 = vld [vmem:[%s3537] sm:$0xff]
        %v3539 = vld [vmem:[%s3537 + $0x8] sm:$0xf]
        %v3540 = vld [vmem:[%s3537 + $0xc] sm:$0xff]
        %v3541 = vld [vmem:[%s3537 + $0x14] sm:$0xf]
        %v3542 = vld [vmem:[%s3537 + $0x18] sm:$0xff]
        %v3543 = vld [vmem:[%s3537 + $0x20] sm:$0xf]
        %v3544 = vld [vmem:[%s3537 + $0x24] sm:$0xff]
        %v3545 = vld [vmem:[%s3537 + $0x2c] sm:$0xf]
        %v3546 = vld [vmem:[%s3] sm:$0xff]
        %v3547 = vld [vmem:[%s3 + $0x8] sm:$0xff]
        %v3548 = vld [vmem:[%s3 + $0x10] sm:$0xff]
        %v3549 = vld [vmem:[%s3 + $0x18] sm:$0xff]
        %3550 = vrot.lane.b32.xlu0 %v3529, 17
        %v3551 = vpop.permute.xlu0 %3550
        %3552 = vrot.lane.b32.xlu0 %v3531, 17
        %v3553 = vpop.permute.xlu0 %3552
        %3554 = vrot.lane.b32.xlu0 %v3533, 17
        %v3555 = vpop.permute.xlu0 %3554
        %3556 = vrot.lane.b32.xlu0 %v3535, 17
        %v3557 = vpop.permute.xlu0 %3556
        %3558 = vrot.lane.b32.xlu0 %v3530, 17
        %v3559 = vpop.permute.xlu0 %3558
        %3560 = vrot.lane.b32.xlu0 %v3532, 17
        %v3561 = vpop.permute.xlu0 %3560
        %3562 = vrot.lane.b32.xlu0 %v3534, 17
        %v3563 = vpop.permute.xlu0 %3562
        %3564 = vrot.lane.b32.xlu0 %v3536, 17
        %v3565 = vpop.permute.xlu0 %3564
        %v3566 = vsel %vm356, %v3551, %v3559
        %v3567 = vsel %vm356, %v3553, %v3561
        %v3568 = vsel %vm356, %v3555, %v3563
        %v3569 = vsel %vm356, %v3557, %v3565
        %v3570 = vsel %vm356, %v3559, %v3551
        %v3571 = vsel %vm356, %v3561, %v3553
        %v3572 = vsel %vm356, %v3563, %v3555
        %v3573 = vsel %vm356, %v3565, %v3557
        %v3574 = vmul.f32 %v3570, %v296
        %v3575 = vmul.f32 %v3566, %v297
        %v3576 = vmul.f32 %v3571, %v296
        %v3577 = vmul.f32 %v3567, %v297
        %v3578 = vmul.f32 %v3572, %v296
        %v3579 = vmul.f32 %v3568, %v297
        %v3580 = vmul.f32 %v3573, %v296
        %v3581 = vmul.f32 %v3569, %v297
        %v3582 = vpack.c.bf16 %v3576, %v3574
        %v3583 = vpack.c.bf16 %v3577, %v3575
        %v3584 = vpack.c.bf16 %v3580, %v3578
        %v3585 = vpack.c.bf16 %v3581, %v3579
        %v3590 = vunpack.c.l.b16 %v3582
        %v3591 = vunpack.c.l.b16 %v3583
        %v3592 = vunpack.c.h.b16 %v3582
        %v3593 = vunpack.c.h.b16 %v3583
        %v3594 = vunpack.c.l.b16 %v3584
        %v3595 = vunpack.c.l.b16 %v3585
        %v3596 = vunpack.c.h.b16 %v3584
        %v3597 = vunpack.c.h.b16 %v3585
        %v3598 = vpack.c.b16 %v3591, %v3590
        %v3599 = vpack.c.b16 %v3593, %v3592
        %v3600 = vpack.c.b16 %v3595, %v3594
        %v3601 = vpack.c.b16 %v3597, %v3596
        %3606 = vst [vmem:[#allocation2] sm:$0xff] %v3598
        %3607 = vst [vmem:[#allocation2 + $0x8] sm:$0xff] %v3599
        %3608 = vst [vmem:[#allocation2 + $0x10] sm:$0xff] %v3600
        %3609 = vst [vmem:[#allocation2 + $0x18] sm:$0xff] %v3601
        %3610 = vrot.lane.b32.xlu0 %v3529, 16
        %v3611 = vpop.permute.xlu0 %3610
        %3612 = vrot.lane.b32.xlu0 %v3531, 16
        %v3613 = vpop.permute.xlu0 %3612
        %3614 = vrot.lane.b32.xlu0 %v3533, 16
        %v3615 = vpop.permute.xlu0 %3614
        %3616 = vrot.lane.b32.xlu0 %v3535, 16
        %v3617 = vpop.permute.xlu0 %3616
        %3618 = vrot.lane.b32.xlu0 %v3530, 16
        %v3619 = vpop.permute.xlu0 %3618
        %3620 = vrot.lane.b32.xlu0 %v3532, 16
        %v3621 = vpop.permute.xlu0 %3620
        %3622 = vrot.lane.b32.xlu0 %v3534, 16
        %v3623 = vpop.permute.xlu0 %3622
        %3624 = vrot.lane.b32.xlu0 %v3536, 16
        %v3625 = vpop.permute.xlu0 %3624
        %v3626 = vsel %vm387, %v3611, %v3619
        %v3627 = vsel %vm387, %v3613, %v3621
        %v3628 = vsel %vm387, %v3615, %v3623
        %v3629 = vsel %vm387, %v3617, %v3625
        %v3630 = vsel %vm387, %v3619, %v3611
        %v3631 = vsel %vm387, %v3621, %v3613
        %v3632 = vsel %vm387, %v3623, %v3615
        %v3633 = vsel %vm387, %v3625, %v3617
        %v3634 = vmul.f32 %v3630, %v300
        %v3635 = vmul.f32 %v3626, %v301
        %v3636 = vmul.f32 %v3631, %v300
        %v3637 = vmul.f32 %v3627, %v301
        %v3638 = vmul.f32 %v3632, %v300
        %v3639 = vmul.f32 %v3628, %v301
        %v3640 = vmul.f32 %v3633, %v300
        %v3641 = vmul.f32 %v3629, %v301
        %v3642 = vpack.c.bf16 %v3636, %v3634
        %v3643 = vpack.c.bf16 %v3637, %v3635
        %v3644 = vpack.c.bf16 %v3640, %v3638
        %v3645 = vpack.c.bf16 %v3641, %v3639
        %v3650 = vunpack.c.l.b16 %v3642
        %v3651 = vunpack.c.l.b16 %v3643
        %v3652 = vunpack.c.h.b16 %v3642
        %v3653 = vunpack.c.h.b16 %v3643
        %v3654 = vunpack.c.l.b16 %v3644
        %v3655 = vunpack.c.l.b16 %v3645
        %v3656 = vunpack.c.h.b16 %v3644
        %v3657 = vunpack.c.h.b16 %v3645
        %v3658 = vpack.c.b16 %v3651, %v3650
        %v3659 = vpack.c.b16 %v3653, %v3652
        %v3660 = vpack.c.b16 %v3655, %v3654
        %v3661 = vpack.c.b16 %v3657, %v3656
        %3666 = vst [vmem:[#allocation2 + $0x20] sm:$0xff] %v3658
        %3667 = vst [vmem:[#allocation2 + $0x28] sm:$0xff] %v3659
        %3668 = vst [vmem:[#allocation2 + $0x30] sm:$0xff] %v3660
        %3669 = vst [vmem:[#allocation2 + $0x38] sm:$0xff] %v3661
        %3670 = vrot.lane.b32.xlu0 %v3529, 15
        %v3671 = vpop.permute.xlu0 %3670
        %3672 = vrot.lane.b32.xlu0 %v3531, 15
        %v3673 = vpop.permute.xlu0 %3672
        %3674 = vrot.lane.b32.xlu0 %v3533, 15
        %v3675 = vpop.permute.xlu0 %3674
        %3676 = vrot.lane.b32.xlu0 %v3535, 15
        %v3677 = vpop.permute.xlu0 %3676
        %3678 = vrot.lane.b32.xlu0 %v3530, 15
        %v3679 = vpop.permute.xlu0 %3678
        %3680 = vrot.lane.b32.xlu0 %v3532, 15
        %v3681 = vpop.permute.xlu0 %3680
        %3682 = vrot.lane.b32.xlu0 %v3534, 15
        %v3683 = vpop.permute.xlu0 %3682
        %3684 = vrot.lane.b32.xlu0 %v3536, 15
        %v3685 = vpop.permute.xlu0 %3684
        %v3686 = vsel %vm418, %v3671, %v3679
        %v3687 = vsel %vm418, %v3673, %v3681
        %v3688 = vsel %vm418, %v3675, %v3683
        %v3689 = vsel %vm418, %v3677, %v3685
        %v3690 = vsel %vm418, %v3679, %v3671
        %v3691 = vsel %vm418, %v3681, %v3673
        %v3692 = vsel %vm418, %v3683, %v3675
        %v3693 = vsel %vm418, %v3685, %v3677
        %v3694 = vmul.f32 %v3690, %v308
        %v3695 = vmul.f32 %v3686, %v309
        %v3696 = vmul.f32 %v3691, %v308
        %v3697 = vmul.f32 %v3687, %v309
        %v3698 = vmul.f32 %v3692, %v308
        %v3699 = vmul.f32 %v3688, %v309
        %v3700 = vmul.f32 %v3693, %v308
        %v3701 = vmul.f32 %v3689, %v309
        %v3702 = vpack.c.bf16 %v3696, %v3694
        %v3703 = vpack.c.bf16 %v3697, %v3695
        %v3704 = vpack.c.bf16 %v3700, %v3698
        %v3705 = vpack.c.bf16 %v3701, %v3699
        %v3710 = vunpack.c.l.b16 %v3702
        %v3711 = vunpack.c.l.b16 %v3703
        %v3712 = vunpack.c.h.b16 %v3702
        %v3713 = vunpack.c.h.b16 %v3703
        %v3714 = vunpack.c.l.b16 %v3704
        %v3715 = vunpack.c.l.b16 %v3705
        %v3716 = vunpack.c.h.b16 %v3704
        %v3717 = vunpack.c.h.b16 %v3705
        %v3718 = vpack.c.b16 %v3711, %v3710
        %v3719 = vpack.c.b16 %v3713, %v3712
        %v3720 = vpack.c.b16 %v3715, %v3714
        %v3721 = vpack.c.b16 %v3717, %v3716
        %3726 = vst [vmem:[#allocation2 + $0x40] sm:$0xff] %v3718
        %3727 = vst [vmem:[#allocation2 + $0x48] sm:$0xff] %v3719
        %3728 = vst [vmem:[#allocation2 + $0x50] sm:$0xff] %v3720
        %3729 = vst [vmem:[#allocation2 + $0x58] sm:$0xff] %v3721
        %3730 = vrot.lane.b32.xlu0 %v3529, 1
        %v3731 = vpop.permute.xlu0 %3730
        %3732 = vrot.lane.b32.xlu0 %v3531, 1
        %v3733 = vpop.permute.xlu0 %3732
        %3734 = vrot.lane.b32.xlu0 %v3533, 1
        %v3735 = vpop.permute.xlu0 %3734
        %3736 = vrot.lane.b32.xlu0 %v3535, 1
        %v3737 = vpop.permute.xlu0 %3736
        %3738 = vrot.lane.b32.xlu0 %v3530, 1
        %v3739 = vpop.permute.xlu0 %3738
        %3740 = vrot.lane.b32.xlu0 %v3532, 1
        %v3741 = vpop.permute.xlu0 %3740
        %3742 = vrot.lane.b32.xlu0 %v3534, 1
        %v3743 = vpop.permute.xlu0 %3742
        %3744 = vrot.lane.b32.xlu0 %v3536, 1
        %v3745 = vpop.permute.xlu0 %3744
        %v3746 = vsel %vm449, %v3731, %v3739
        %v3747 = vsel %vm449, %v3733, %v3741
        %v3748 = vsel %vm449, %v3735, %v3743
        %v3749 = vsel %vm449, %v3737, %v3745
        %v3750 = vsel %vm449, %v3739, %v3731
        %v3751 = vsel %vm449, %v3741, %v3733
        %v3752 = vsel %vm449, %v3743, %v3735
        %v3753 = vsel %vm449, %v3745, %v3737
        %v3754 = vmul.f32 %v3750, %v312
        %v3755 = vmul.f32 %v3746, %v313
        %v3756 = vmul.f32 %v3751, %v312
        %v3757 = vmul.f32 %v3747, %v313
        %v3758 = vmul.f32 %v3752, %v312
        %v3759 = vmul.f32 %v3748, %v313
        %v3760 = vmul.f32 %v3753, %v312
        %v3761 = vmul.f32 %v3749, %v313
        %v3762 = vpack.c.bf16 %v3756, %v3754
        %v3763 = vpack.c.bf16 %v3757, %v3755
        %v3764 = vpack.c.bf16 %v3760, %v3758
        %v3765 = vpack.c.bf16 %v3761, %v3759
        %v3770 = vunpack.c.l.b16 %v3762
        %v3771 = vunpack.c.l.b16 %v3763
        %v3772 = vunpack.c.h.b16 %v3762
        %v3773 = vunpack.c.h.b16 %v3763
        %v3774 = vunpack.c.l.b16 %v3764
        %v3775 = vunpack.c.l.b16 %v3765
        %v3776 = vunpack.c.h.b16 %v3764
        %v3777 = vunpack.c.h.b16 %v3765
        %v3778 = vpack.c.b16 %v3771, %v3770
        %v3779 = vpack.c.b16 %v3773, %v3772
        %v3780 = vpack.c.b16 %v3775, %v3774
        %v3781 = vpack.c.b16 %v3777, %v3776
        %3786 = vst [vmem:[#allocation2 + $0x60] sm:$0xff] %v3778
        %3787 = vst [vmem:[#allocation2 + $0x68] sm:$0xff] %v3779
        %3788 = vst [vmem:[#allocation2 + $0x70] sm:$0xff] %v3780
        %3789 = vst [vmem:[#allocation2 + $0x78] sm:$0xff] %v3781
        %v3790 = vpack.c.bf16 %v3531, %v3529
        %v3791 = vpack.c.bf16 %v3532, %v3530
        %v3792 = vpack.c.bf16 %v3535, %v3533
        %v3793 = vpack.c.bf16 %v3536, %v3534
        %v3798 = vunpack.c.l.b16 %v3790
        %v3799 = vunpack.c.l.b16 %v3791
        %v3800 = vunpack.c.h.b16 %v3790
        %v3801 = vunpack.c.h.b16 %v3791
        %v3802 = vunpack.c.l.b16 %v3792
        %v3803 = vunpack.c.l.b16 %v3793
        %v3804 = vunpack.c.h.b16 %v3792
        %v3805 = vunpack.c.h.b16 %v3793
        %v3806 = vpack.c.b16 %v3799, %v3798
        %v3807 = vpack.c.b16 %v3801, %v3800
        %v3808 = vpack.c.b16 %v3803, %v3802
        %v3809 = vpack.c.b16 %v3805, %v3804
        %3814 = vst [vmem:[#allocation2 + $0x80] sm:$0xff] %v3806
        %3815 = vst [vmem:[#allocation2 + $0x88] sm:$0xff] %v3807
        %3816 = vst [vmem:[#allocation2 + $0x90] sm:$0xff] %v3808
        %3817 = vst [vmem:[#allocation2 + $0x98] sm:$0xff] %v3809
        %3818 = vrot.lane.b32.xlu0 %v3529, 127
        %v3819 = vpop.permute.xlu0 %3818
        %3820 = vrot.lane.b32.xlu0 %v3531, 127
        %v3821 = vpop.permute.xlu0 %3820
        %3822 = vrot.lane.b32.xlu0 %v3533, 127
        %v3823 = vpop.permute.xlu0 %3822
        %3824 = vrot.lane.b32.xlu0 %v3535, 127
        %v3825 = vpop.permute.xlu0 %3824
        %3826 = vrot.lane.b32.xlu0 %v3530, 127
        %v3827 = vpop.permute.xlu0 %3826
        %3828 = vrot.lane.b32.xlu0 %v3532, 127
        %v3829 = vpop.permute.xlu0 %3828
        %3830 = vrot.lane.b32.xlu0 %v3534, 127
        %v3831 = vpop.permute.xlu0 %3830
        %3832 = vrot.lane.b32.xlu0 %v3536, 127
        %v3833 = vpop.permute.xlu0 %3832
        %v3834 = vsel %vm494, %v3819, %v3827
        %v3835 = vsel %vm494, %v3821, %v3829
        %v3836 = vsel %vm494, %v3823, %v3831
        %v3837 = vsel %vm494, %v3825, %v3833
        %v3838 = vsel %vm494, %v3827, %v3819
        %v3839 = vsel %vm494, %v3829, %v3821
        %v3840 = vsel %vm494, %v3831, %v3823
        %v3841 = vsel %vm494, %v3833, %v3825
        %v3842 = vmul.f32 %v3834, %v316
        %v3843 = vmul.f32 %v3838, %v317
        %v3844 = vmul.f32 %v3835, %v316
        %v3845 = vmul.f32 %v3839, %v317
        %v3846 = vmul.f32 %v3836, %v316
        %v3847 = vmul.f32 %v3840, %v317
        %v3848 = vmul.f32 %v3837, %v316
        %v3849 = vmul.f32 %v3841, %v317
        %v3850 = vpack.c.bf16 %v3844, %v3842
        %v3851 = vpack.c.bf16 %v3845, %v3843
        %v3852 = vpack.c.bf16 %v3848, %v3846
        %v3853 = vpack.c.bf16 %v3849, %v3847
        %v3858 = vunpack.c.l.b16 %v3850
        %v3859 = vunpack.c.l.b16 %v3851
        %v3860 = vunpack.c.h.b16 %v3850
        %v3861 = vunpack.c.h.b16 %v3851
        %v3862 = vunpack.c.l.b16 %v3852
        %v3863 = vunpack.c.l.b16 %v3853
        %v3864 = vunpack.c.h.b16 %v3852
        %v3865 = vunpack.c.h.b16 %v3853
        %v3866 = vpack.c.b16 %v3859, %v3858
        %v3867 = vpack.c.b16 %v3861, %v3860
        %v3868 = vpack.c.b16 %v3863, %v3862
        %v3869 = vpack.c.b16 %v3865, %v3864
        %3874 = vst [vmem:[#allocation2 + $0xa0] sm:$0xff] %v3866
        %3875 = vst [vmem:[#allocation2 + $0xa8] sm:$0xff] %v3867
        %3876 = vst [vmem:[#allocation2 + $0xb0] sm:$0xff] %v3868
        %3877 = vst [vmem:[#allocation2 + $0xb8] sm:$0xff] %v3869
        %3878 = vrot.lane.b32.xlu0 %v3529, 113
        %v3879 = vpop.permute.xlu0 %3878
        %3880 = vrot.lane.b32.xlu0 %v3531, 113
        %v3881 = vpop.permute.xlu0 %3880
        %3882 = vrot.lane.b32.xlu0 %v3533, 113
        %v3883 = vpop.permute.xlu0 %3882
        %3884 = vrot.lane.b32.xlu0 %v3535, 113
        %v3885 = vpop.permute.xlu0 %3884
        %3886 = vrot.lane.b32.xlu0 %v3530, 113
        %v3887 = vpop.permute.xlu0 %3886
        %3888 = vrot.lane.b32.xlu0 %v3532, 113
        %v3889 = vpop.permute.xlu0 %3888
        %3890 = vrot.lane.b32.xlu0 %v3534, 113
        %v3891 = vpop.permute.xlu0 %3890
        %3892 = vrot.lane.b32.xlu0 %v3536, 113
        %v3893 = vpop.permute.xlu0 %3892
        %v3894 = vsel %vm525, %v3879, %v3887
        %v3895 = vsel %vm525, %v3881, %v3889
        %v3896 = vsel %vm525, %v3883, %v3891
        %v3897 = vsel %vm525, %v3885, %v3893
        %v3898 = vsel %vm525, %v3887, %v3879
        %v3899 = vsel %vm525, %v3889, %v3881
        %v3900 = vsel %vm525, %v3891, %v3883
        %v3901 = vsel %vm525, %v3893, %v3885
        %v3902 = vmul.f32 %v3894, %v324
        %v3903 = vmul.f32 %v3898, %v325
        %v3904 = vmul.f32 %v3895, %v324
        %v3905 = vmul.f32 %v3899, %v325
        %v3906 = vmul.f32 %v3896, %v324
        %v3907 = vmul.f32 %v3900, %v325
        %v3908 = vmul.f32 %v3897, %v324
        %v3909 = vmul.f32 %v3901, %v325
        %v3910 = vpack.c.bf16 %v3904, %v3902
        %v3911 = vpack.c.bf16 %v3905, %v3903
        %v3912 = vpack.c.bf16 %v3908, %v3906
        %v3913 = vpack.c.bf16 %v3909, %v3907
        %v3918 = vunpack.c.l.b16 %v3910
        %v3919 = vunpack.c.l.b16 %v3911
        %v3920 = vunpack.c.h.b16 %v3910
        %v3921 = vunpack.c.h.b16 %v3911
        %v3922 = vunpack.c.l.b16 %v3912
        %v3923 = vunpack.c.l.b16 %v3913
        %v3924 = vunpack.c.h.b16 %v3912
        %v3925 = vunpack.c.h.b16 %v3913
        %v3926 = vpack.c.b16 %v3919, %v3918
        %v3927 = vpack.c.b16 %v3921, %v3920
        %v3928 = vpack.c.b16 %v3923, %v3922
        %v3929 = vpack.c.b16 %v3925, %v3924
        %3934 = vst [vmem:[#allocation2 + $0xc0] sm:$0xff] %v3926
        %3935 = vst [vmem:[#allocation2 + $0xc8] sm:$0xff] %v3927
        %3936 = vst [vmem:[#allocation2 + $0xd0] sm:$0xff] %v3928
        %3937 = vst [vmem:[#allocation2 + $0xd8] sm:$0xff] %v3929
        %3938 = vrot.lane.b32.xlu0 %v3529, 112
        %v3939 = vpop.permute.xlu0 %3938
        %3940 = vrot.lane.b32.xlu0 %v3531, 112
        %v3941 = vpop.permute.xlu0 %3940
        %3942 = vrot.lane.b32.xlu0 %v3533, 112
        %v3943 = vpop.permute.xlu0 %3942
        %3944 = vrot.lane.b32.xlu0 %v3535, 112
        %v3945 = vpop.permute.xlu0 %3944
        %3946 = vrot.lane.b32.xlu0 %v3530, 112
        %v3947 = vpop.permute.xlu0 %3946
        %3948 = vrot.lane.b32.xlu0 %v3532, 112
        %v3949 = vpop.permute.xlu0 %3948
        %3950 = vrot.lane.b32.xlu0 %v3534, 112
        %v3951 = vpop.permute.xlu0 %3950
        %3952 = vrot.lane.b32.xlu0 %v3536, 112
        %v3953 = vpop.permute.xlu0 %3952
        %v3954 = vsel %vm556, %v3939, %v3947
        %v3955 = vsel %vm556, %v3941, %v3949
        %v3956 = vsel %vm556, %v3943, %v3951
        %v3957 = vsel %vm556, %v3945, %v3953
        %v3958 = vsel %vm556, %v3947, %v3939
        %v3959 = vsel %vm556, %v3949, %v3941
        %v3960 = vsel %vm556, %v3951, %v3943
        %v3961 = vsel %vm556, %v3953, %v3945
        %v3962 = vmul.f32 %v3954, %v328
        %v3963 = vmul.f32 %v3958, %v329
        %v3964 = vmul.f32 %v3955, %v328
        %v3965 = vmul.f32 %v3959, %v329
        %v3966 = vmul.f32 %v3956, %v328
        %v3967 = vmul.f32 %v3960, %v329
        %v3968 = vmul.f32 %v3957, %v328
        %v3969 = vmul.f32 %v3961, %v329
        %v3970 = vpack.c.bf16 %v3964, %v3962
        %v3971 = vpack.c.bf16 %v3965, %v3963
        %v3972 = vpack.c.bf16 %v3968, %v3966
        %v3973 = vpack.c.bf16 %v3969, %v3967
        %v3978 = vunpack.c.l.b16 %v3970
        %v3979 = vunpack.c.l.b16 %v3971
        %v3980 = vunpack.c.h.b16 %v3970
        %v3981 = vunpack.c.h.b16 %v3971
        %v3982 = vunpack.c.l.b16 %v3972
        %v3983 = vunpack.c.l.b16 %v3973
        %v3984 = vunpack.c.h.b16 %v3972
        %v3985 = vunpack.c.h.b16 %v3973
        %v3986 = vpack.c.b16 %v3979, %v3978
        %v3987 = vpack.c.b16 %v3981, %v3980
        %v3988 = vpack.c.b16 %v3983, %v3982
        %v3989 = vpack.c.b16 %v3985, %v3984
        %3994 = vst [vmem:[#allocation2 + $0xe0] sm:$0xff] %v3986
        %3995 = vst [vmem:[#allocation2 + $0xe8] sm:$0xff] %v3987
        %3996 = vst [vmem:[#allocation2 + $0xf0] sm:$0xff] %v3988
        %3997 = vst [vmem:[#allocation2 + $0xf8] sm:$0xff] %v3989
        %3998 = vrot.lane.b32.xlu0 %v3529, 111
        %v3999 = vpop.permute.xlu0 %3998
        %4000 = vrot.lane.b32.xlu0 %v3531, 111
        %v4001 = vpop.permute.xlu0 %4000
        %4002 = vrot.lane.b32.xlu0 %v3533, 111
        %v4003 = vpop.permute.xlu0 %4002
        %4004 = vrot.lane.b32.xlu0 %v3535, 111
        %v4005 = vpop.permute.xlu0 %4004
        %4006 = vrot.lane.b32.xlu0 %v3530, 111
        %v4007 = vpop.permute.xlu0 %4006
        %4008 = vrot.lane.b32.xlu0 %v3532, 111
        %v4009 = vpop.permute.xlu0 %4008
        %4010 = vrot.lane.b32.xlu0 %v3534, 111
        %v4011 = vpop.permute.xlu0 %4010
        %4012 = vrot.lane.b32.xlu0 %v3536, 111
        %v4013 = vpop.permute.xlu0 %4012
        %v4014 = vsel %vm587, %v3999, %v4007
        %v4015 = vsel %vm587, %v4001, %v4009
        %v4016 = vsel %vm587, %v4003, %v4011
        %v4017 = vsel %vm587, %v4005, %v4013
        %v4018 = vsel %vm587, %v4007, %v3999
        %v4019 = vsel %vm587, %v4009, %v4001
        %v4020 = vsel %vm587, %v4011, %v4003
        %v4021 = vsel %vm587, %v4013, %v4005
        %v4022 = vmul.f32 %v4014, %v334
        %v4023 = vmul.f32 %v4018, %v335
        %v4024 = vmul.f32 %v4015, %v334
        %v4025 = vmul.f32 %v4019, %v335
        %v4026 = vmul.f32 %v4016, %v334
        %v4027 = vmul.f32 %v4020, %v335
        %v4028 = vmul.f32 %v4017, %v334
        %v4029 = vmul.f32 %v4021, %v335
        %v4030 = vpack.c.bf16 %v4024, %v4022
        %v4031 = vpack.c.bf16 %v4025, %v4023
        %v4032 = vpack.c.bf16 %v4028, %v4026
        %v4033 = vpack.c.bf16 %v4029, %v4027
        %v4038 = vunpack.c.l.b16 %v4030
        %v4039 = vunpack.c.l.b16 %v4031
        %v4040 = vunpack.c.h.b16 %v4030
        %v4041 = vunpack.c.h.b16 %v4031
        %v4042 = vunpack.c.l.b16 %v4032
        %v4043 = vunpack.c.l.b16 %v4033
        %v4044 = vunpack.c.h.b16 %v4032
        %v4045 = vunpack.c.h.b16 %v4033
        %v4046 = vpack.c.b16 %v4039, %v4038
        %v4047 = vpack.c.b16 %v4041, %v4040
        %v4048 = vpack.c.b16 %v4043, %v4042
        %v4049 = vpack.c.b16 %v4045, %v4044
        %4054 = vst [vmem:[#allocation2 + $0x100] sm:$0xff] %v4046
        %4055 = vst [vmem:[#allocation2 + $0x108] sm:$0xff] %v4047
        %4056 = vst [vmem:[#allocation2 + $0x110] sm:$0xff] %v4048
        %4057 = vst [vmem:[#allocation2 + $0x118] sm:$0xff] %v4049
        %v4058 = vld [vmem:[#allocation2] sm:$0xff]
        %v4059 = vld [vmem:[#allocation2 + $0x8] sm:$0xff]
        %v4060 = vld [vmem:[#allocation2 + $0x10] sm:$0xff]
        %v4061 = vld [vmem:[#allocation2 + $0x18] sm:$0xff]
        %v4062 = vld [vmem:[#allocation2 + $0x20] sm:$0xff]
        %v4063 = vld [vmem:[#allocation2 + $0x28] sm:$0xff]
        %v4064 = vld [vmem:[#allocation2 + $0x30] sm:$0xff]
        %v4065 = vld [vmem:[#allocation2 + $0x38] sm:$0xff]
        %v4066 = vld [vmem:[#allocation2 + $0x40] sm:$0xff]
        %v4067 = vld [vmem:[#allocation2 + $0x48] sm:$0xff]
        %v4068 = vld [vmem:[#allocation2 + $0x50] sm:$0xff]
        %v4069 = vld [vmem:[#allocation2 + $0x58] sm:$0xff]
        %v4070 = vld [vmem:[#allocation2 + $0x60] sm:$0xff]
        %v4071 = vld [vmem:[#allocation2 + $0x68] sm:$0xff]
        %v4072 = vld [vmem:[#allocation2 + $0x70] sm:$0xff]
        %v4073 = vld [vmem:[#allocation2 + $0x78] sm:$0xff]
        %v4074 = vld [vmem:[#allocation2 + $0x80] sm:$0xff]
        %v4075 = vld [vmem:[#allocation2 + $0x88] sm:$0xff]
        %v4076 = vld [vmem:[#allocation2 + $0x90] sm:$0xff]
        %v4077 = vld [vmem:[#allocation2 + $0x98] sm:$0xff]
        %v4078 = vld [vmem:[#allocation2 + $0xa0] sm:$0xff]
        %v4079 = vld [vmem:[#allocation2 + $0xa8] sm:$0xff]
        %v4080 = vld [vmem:[#allocation2 + $0xb0] sm:$0xff]
        %v4081 = vld [vmem:[#allocation2 + $0xb8] sm:$0xff]
        %v4082 = vld [vmem:[#allocation2 + $0xc0] sm:$0xff]
        %v4083 = vld [vmem:[#allocation2 + $0xc8] sm:$0xff]
        %v4084 = vld [vmem:[#allocation2 + $0xd0] sm:$0xff]
        %v4085 = vld [vmem:[#allocation2 + $0xd8] sm:$0xff]
        %v4086 = vld [vmem:[#allocation2 + $0xe0] sm:$0xff]
        %v4087 = vld [vmem:[#allocation2 + $0xe8] sm:$0xff]
        %v4088 = vld [vmem:[#allocation2 + $0xf0] sm:$0xff]
        %v4089 = vld [vmem:[#allocation2 + $0xf8] sm:$0xff]
        %v4090 = vld [vmem:[#allocation2 + $0x100] sm:$0xff]
        %v4091 = vld [vmem:[#allocation2 + $0x108] sm:$0xff]
        %v4092 = vld [vmem:[#allocation2 + $0x110] sm:$0xff]
        %v4093 = vld [vmem:[#allocation2 + $0x118] sm:$0xff]
        %4095 = vset.pattern.permute.xlu0 4
        %4096 = vperm.xlu0 %4095, %v3546
        %v4097 = vpop.permute.xlu0 %4096
        %4100 = vset.pattern.permute.xlu0 4
        %4101 = vperm.xlu0 %4100, %v3547
        %v4102 = vpop.permute.xlu0 %4101
        %4105 = vset.pattern.permute.xlu0 4
        %4106 = vperm.xlu0 %4105, %v3548
        %v4107 = vpop.permute.xlu0 %4106
        %4110 = vset.pattern.permute.xlu0 4
        %4111 = vperm.xlu0 %4110, %v3549
        %v4112 = vpop.permute.xlu0 %4111
        %v4122 = vunpack.c.l.b16 %v3538
        %v4123 = vunpack.c.h.b16 %v3538
        %v4124 = vunpack.c.l.b16 %v3539
        %v4125 = vunpack.c.l.b16 %v3540
        %v4126 = vunpack.c.h.b16 %v3540
        %v4127 = vunpack.c.l.b16 %v3541
        %v4128 = vunpack.c.l.b16 %v3542
        %v4129 = vunpack.c.h.b16 %v3542
        %v4130 = vunpack.c.l.b16 %v3543
        %v4131 = vunpack.c.l.b16 %v3544
        %v4132 = vunpack.c.h.b16 %v3544
        %v4133 = vunpack.c.l.b16 %v3545
        %v4134 = vpack.c.b16 %v4125, %v4122
        %v4135 = vpack.c.b16 %v4126, %v4123
        %v4136 = vpack.c.b16 %v4127, %v4124
        %v4137 = vpack.c.b16 %v4131, %v4128
        %v4138 = vpack.c.b16 %v4132, %v4129
        %v4139 = vpack.c.b16 %v4133, %v4130
        %v4180 = vunpack.c.l.b16 %v4058
        %v4181 = vunpack.c.h.b16 %v4058
        %v4182 = vunpack.c.l.b16 %v4059
        %v4183 = vunpack.c.h.b16 %v4059
        %v4184 = vunpack.c.l.b16 %v4060
        %v4185 = vunpack.c.h.b16 %v4060
        %v4186 = vunpack.c.l.b16 %v4061
        %v4187 = vunpack.c.h.b16 %v4061
        %v4188 = vunpack.c.l.b16 %v4062
        %v4189 = vunpack.c.h.b16 %v4062
        %v4190 = vunpack.c.l.b16 %v4063
        %v4191 = vunpack.c.h.b16 %v4063
        %v4192 = vunpack.c.l.b16 %v4064
        %v4193 = vunpack.c.h.b16 %v4064
        %v4194 = vunpack.c.l.b16 %v4065
        %v4195 = vunpack.c.h.b16 %v4065
        %v4196 = vunpack.c.l.b16 %v4066
        %v4197 = vunpack.c.h.b16 %v4066
        %v4198 = vunpack.c.l.b16 %v4067
        %v4199 = vunpack.c.h.b16 %v4067
        %v4200 = vunpack.c.l.b16 %v4068
        %v4201 = vunpack.c.h.b16 %v4068
        %v4202 = vunpack.c.l.b16 %v4069
        %v4203 = vunpack.c.h.b16 %v4069
        %v4204 = vunpack.c.l.b16 %v4070
        %v4205 = vunpack.c.h.b16 %v4070
        %v4206 = vunpack.c.l.b16 %v4071
        %v4207 = vunpack.c.h.b16 %v4071
        %v4208 = vunpack.c.l.b16 %v4072
        %v4209 = vunpack.c.h.b16 %v4072
        %v4210 = vunpack.c.l.b16 %v4073
        %v4211 = vunpack.c.h.b16 %v4073
        %v4212 = vunpack.c.l.b16 %v4074
        %v4213 = vunpack.c.h.b16 %v4074
        %v4214 = vunpack.c.l.b16 %v4075
        %v4215 = vunpack.c.h.b16 %v4075
        %v4216 = vunpack.c.l.b16 %v4076
        %v4217 = vunpack.c.h.b16 %v4076
        %v4218 = vunpack.c.l.b16 %v4077
        %v4219 = vunpack.c.h.b16 %v4077
        %v4220 = vunpack.c.l.b16 %v4078
        %v4221 = vunpack.c.h.b16 %v4078
        %v4222 = vunpack.c.l.b16 %v4079
        %v4223 = vunpack.c.h.b16 %v4079
        %v4224 = vunpack.c.l.b16 %v4080
        %v4225 = vunpack.c.h.b16 %v4080
        %v4226 = vunpack.c.l.b16 %v4081
        %v4227 = vunpack.c.h.b16 %v4081
        %v4228 = vunpack.c.l.b16 %v4082
        %v4229 = vunpack.c.h.b16 %v4082
        %v4230 = vunpack.c.l.b16 %v4083
        %v4231 = vunpack.c.h.b16 %v4083
        %v4232 = vunpack.c.l.b16 %v4084
        %v4233 = vunpack.c.h.b16 %v4084
        %v4234 = vunpack.c.l.b16 %v4085
        %v4235 = vunpack.c.h.b16 %v4085
        %v4236 = vunpack.c.l.b16 %v4086
        %v4237 = vunpack.c.h.b16 %v4086
        %v4238 = vunpack.c.l.b16 %v4087
        %v4239 = vunpack.c.h.b16 %v4087
        %v4240 = vunpack.c.l.b16 %v4088
        %v4241 = vunpack.c.h.b16 %v4088
        %v4242 = vunpack.c.l.b16 %v4089
        %v4243 = vunpack.c.h.b16 %v4089
        %v4244 = vunpack.c.l.b16 %v4090
        %v4245 = vunpack.c.h.b16 %v4090
        %v4246 = vunpack.c.l.b16 %v4091
        %v4247 = vunpack.c.h.b16 %v4091
        %v4248 = vunpack.c.l.b16 %v4092
        %v4249 = vunpack.c.h.b16 %v4092
        %v4250 = vunpack.c.l.b16 %v4093
        %v4251 = vunpack.c.h.b16 %v4093
        %v4252 = vpack.c.b16 %v4182, %v4180
        %v4253 = vpack.c.b16 %v4183, %v4181
        %v4254 = vpack.c.b16 %v4186, %v4184
        %v4255 = vpack.c.b16 %v4187, %v4185
        %v4256 = vpack.c.b16 %v4190, %v4188
        %v4257 = vpack.c.b16 %v4191, %v4189
        %v4258 = vpack.c.b16 %v4194, %v4192
        %v4259 = vpack.c.b16 %v4195, %v4193
        %v4260 = vpack.c.b16 %v4198, %v4196
        %v4261 = vpack.c.b16 %v4199, %v4197
        %v4262 = vpack.c.b16 %v4202, %v4200
        %v4263 = vpack.c.b16 %v4203, %v4201
        %v4264 = vpack.c.b16 %v4206, %v4204
        %v4265 = vpack.c.b16 %v4207, %v4205
        %v4266 = vpack.c.b16 %v4210, %v4208
        %v4267 = vpack.c.b16 %v4211, %v4209
        %v4268 = vpack.c.b16 %v4214, %v4212
        %v4269 = vpack.c.b16 %v4215, %v4213
        %v4270 = vpack.c.b16 %v4218, %v4216
        %v4271 = vpack.c.b16 %v4219, %v4217
        %v4272 = vpack.c.b16 %v4222, %v4220
        %v4273 = vpack.c.b16 %v4223, %v4221
        %v4274 = vpack.c.b16 %v4226, %v4224
        %v4275 = vpack.c.b16 %v4227, %v4225
        %v4276 = vpack.c.b16 %v4230, %v4228
        %v4277 = vpack.c.b16 %v4231, %v4229
        %v4278 = vpack.c.b16 %v4234, %v4232
        %v4279 = vpack.c.b16 %v4235, %v4233
        %v4280 = vpack.c.b16 %v4238, %v4236
        %v4281 = vpack.c.b16 %v4239, %v4237
        %v4282 = vpack.c.b16 %v4242, %v4240
        %v4283 = vpack.c.b16 %v4243, %v4241
        %v4284 = vpack.c.b16 %v4246, %v4244
        %v4285 = vpack.c.b16 %v4247, %v4245
        %v4286 = vpack.c.b16 %v4250, %v4248
        %v4287 = vpack.c.b16 %v4251, %v4249
        %v4325 = vsel %vm1602, %v4136, 0
        %v4328 = vsel %vm1602, %v4139, 0
        %4330 = vmatprep.subr.bf16.mxu0 %v4267
        %4331 = vmatpush1.bf16.msra.mxu0 %v4266
        %4332 = vmatprep.subr.bf16.mxu0 %v4265
        %4333 = vmatpush1.bf16.msra.mxu0 %v4264
        %4334 = vmatprep.subr.bf16.mxu0 %v4263
        %4335 = vmatpush1.bf16.msra.mxu0 %v4262
        %4336 = vmatprep.subr.bf16.mxu0 %v4261
        %4337 = vmatpush1.bf16.msra.mxu0 %v4260
        %4338 = vmatprep.subr.bf16.mxu0 %v4259
        %4339 = vmatpush1.bf16.msra.mxu0 %v4258
        %4340 = vmatprep.subr.bf16.mxu0 %v4257
        %4341 = vmatpush1.bf16.msra.mxu0 %v4256
        %4342 = vmatprep.subr.bf16.mxu0 %v4255
        %4343 = vmatpush1.bf16.msra.mxu0 %v4254
        %4344 = vmatprep.subr.bf16.mxu0 %v4253
        %4345 = vmatpush1.bf16.msra.mxu0 %v4252
        %4346 = vmatprep.subr.bf16.mxu0 %v4283
        %4347 = vmatpush2.bf16.msra.mxu0 %v4282
        %4348 = vmatprep.subr.bf16.mxu0 %v4281
        %4349 = vmatpush2.bf16.msra.mxu0 %v4280
        %4350 = vmatprep.subr.bf16.mxu0 %v4279
        %4351 = vmatpush2.bf16.msra.mxu0 %v4278
        %4352 = vmatprep.subr.bf16.mxu0 %v4277
        %4353 = vmatpush2.bf16.msra.mxu0 %v4276
        %4354 = vmatprep.subr.bf16.mxu0 %v4275
        %4355 = vmatpush2.bf16.msra.mxu0 %v4274
        %4356 = vmatprep.subr.bf16.mxu0 %v4273
        %4357 = vmatpush2.bf16.msra.mxu0 %v4272
        %4358 = vmatprep.subr.bf16.mxu0 %v4271
        %4359 = vmatpush2.bf16.msra.mxu0 %v4270
        %4360 = vmatprep.subr.bf16.mxu0 %v4269
        %4361 = vmatpush2.bf16.msra.mxu0 %v4268
        %4362 = vmatprep.mubr.bf16.mxu0 %v4135
        %4363 = vmatmul.mubr.bf16.gmra.mxu0 %v4134
        %v4364 = vpop.f32.mrf.mxu0
        %v4365 = vadd.f32 %v4097, %v4364
        %v4366 = vpop.f32.mrf.mxu0
        %v4367 = vadd.f32 %v4097, %v4366
        %v4368 = vpop.f32.mrf.mxu0
        %v4369 = vadd.f32 %v4102, %v4368
        %v4370 = vpop.f32.mrf.mxu0
        %v4371 = vadd.f32 %v4102, %v4370
        %4372 = vmatprep.mubr.bf16.mxu0 %v4138
        %4373 = vmatmul.mubr.bf16.gmra.mxu0 %v4137
        %v4374 = vpop.f32.mrf.mxu0
        %v4375 = vadd.f32 %v4107, %v4374
        %v4376 = vpop.f32.mrf.mxu0
        %v4377 = vadd.f32 %v4107, %v4376
        %v4378 = vpop.f32.mrf.mxu0
        %v4379 = vadd.f32 %v4112, %v4378
        %v4380 = vpop.f32.mrf.mxu0
        %v4381 = vadd.f32 %v4112, %v4380
        %4382 = vdwg.mxu0
        %4383 = vmatprep.subr.bf16.mxu0 0
        %4384 = vmatpush1.bf16.msra.mxu0 0
        %4385 = vmatprep.subr.bf16.mxu0 0
        %4386 = vmatpush1.bf16.msra.mxu0 0
        %4387 = vmatprep.subr.bf16.mxu0 0
        %4388 = vmatpush1.bf16.msra.mxu0 0
        %4389 = vmatprep.subr.bf16.mxu0 0
        %4390 = vmatpush1.bf16.msra.mxu0 0
        %4391 = vmatprep.subr.bf16.mxu0 0
        %4392 = vmatpush1.bf16.msra.mxu0 0
        %4393 = vmatprep.subr.bf16.mxu0 0
        %4394 = vmatpush1.bf16.msra.mxu0 0
        %4395 = vmatprep.subr.bf16.mxu0 %v4287
        %4396 = vmatpush1.bf16.msra.mxu0 %v4286
        %4397 = vmatprep.subr.bf16.mxu0 %v4285
        %4398 = vmatpush1.bf16.msra.mxu0 %v4284
        %4399 = vmatprep.subr.bf16.mxu0 0
        %4400 = vmatpush2.bf16.msra.mxu0 0
        %4401 = vmatprep.subr.bf16.mxu0 0
        %4402 = vmatpush2.bf16.msra.mxu0 0
        %4403 = vmatprep.subr.bf16.mxu0 0
        %4404 = vmatpush2.bf16.msra.mxu0 0
        %4405 = vmatprep.subr.bf16.mxu0 0
        %4406 = vmatpush2.bf16.msra.mxu0 0
        %4407 = vmatprep.subr.bf16.mxu0 0
        %4408 = vmatpush2.bf16.msra.mxu0 0
        %4409 = vmatprep.subr.bf16.mxu0 0
        %4410 = vmatpush2.bf16.msra.mxu0 0
        %4411 = vmatprep.subr.bf16.mxu0 0
        %4412 = vmatpush2.bf16.msra.mxu0 0
        %4413 = vmatprep.subr.bf16.mxu0 0
        %4414 = vmatpush2.bf16.msra.mxu0 0
        %4415 = vmatprep.mubr.bf16.mxu0 0
        %4416 = vmatmul.mubr.bf16.gmra.mxu0 %v4325
        %v4417 = vpop.f32.mrf.mxu0
        %v4418 = vadd.f32 %v4365, %v4417
        %v4419 = vpop.f32.mrf.mxu0
        %v4420 = vadd.f32 %v4367, %v4419
        %v4421 = vpop.f32.mrf.mxu0
        %v4422 = vadd.f32 %v4369, %v4421
        %v4423 = vpop.f32.mrf.mxu0
        %v4424 = vadd.f32 %v4371, %v4423
        %4425 = vmatprep.mubr.bf16.mxu0 0
        %4426 = vmatmul.mubr.bf16.gmra.mxu0 %v4328
        %v4427 = vpop.f32.mrf.mxu0
        %v4428 = vadd.f32 %v4375, %v4427
        %v4429 = vpop.f32.mrf.mxu0
        %v4430 = vadd.f32 %v4377, %v4429
        %v4431 = vpop.f32.mrf.mxu0
        %v4432 = vadd.f32 %v4379, %v4431
        %v4433 = vpop.f32.mrf.mxu0
        %v4434 = vadd.f32 %v4381, %v4433
        %4435 = vdwg.mxu0
        %v4436 = vmax.f32 %v4418, 0.0
        %v4437 = vmax.f32 %v4420, 0.0
        %v4438 = vmax.f32 %v4422, 0.0
        %v4439 = vmax.f32 %v4424, 0.0
        %v4440 = vmax.f32 %v4428, 0.0
        %v4441 = vmax.f32 %v4430, 0.0
        %v4442 = vmax.f32 %v4432, 0.0
        %v4443 = vmax.f32 %v4434, 0.0
        %s4444 = scalar_lea.vmem %s2, 192
        %v4445 = vld [vmem:[%s4444] sm:$0xff]
        %v4446 = vld [vmem:[%s4444 + $0x8] sm:$0xf]
        %v4447 = vld [vmem:[%s4444 + $0xc] sm:$0xff]
        %v4448 = vld [vmem:[%s4444 + $0x14] sm:$0xf]
        %v4449 = vld [vmem:[%s4444 + $0x18] sm:$0xff]
        %v4450 = vld [vmem:[%s4444 + $0x20] sm:$0xf]
        %v4451 = vld [vmem:[%s4444 + $0x24] sm:$0xff]
        %v4452 = vld [vmem:[%s4444 + $0x2c] sm:$0xf]
        %v4453 = vld [vmem:[%s3] sm:$0xff]
        %v4454 = vld [vmem:[%s3 + $0x8] sm:$0xff]
        %v4455 = vld [vmem:[%s3 + $0x10] sm:$0xff]
        %v4456 = vld [vmem:[%s3 + $0x18] sm:$0xff]
        %4457 = vrot.lane.b32.xlu0 %v4436, 17
        %v4458 = vpop.permute.xlu0 %4457
        %4459 = vrot.lane.b32.xlu0 %v4438, 17
        %v4460 = vpop.permute.xlu0 %4459
        %4461 = vrot.lane.b32.xlu0 %v4440, 17
        %v4462 = vpop.permute.xlu0 %4461
        %4463 = vrot.lane.b32.xlu0 %v4442, 17
        %v4464 = vpop.permute.xlu0 %4463
        %4465 = vrot.lane.b32.xlu0 %v4437, 17
        %v4466 = vpop.permute.xlu0 %4465
        %4467 = vrot.lane.b32.xlu0 %v4439, 17
        %v4468 = vpop.permute.xlu0 %4467
        %4469 = vrot.lane.b32.xlu0 %v4441, 17
        %v4470 = vpop.permute.xlu0 %4469
        %4471 = vrot.lane.b32.xlu0 %v4443, 17
        %v4472 = vpop.permute.xlu0 %4471
        %v4473 = vsel %vm356, %v4458, %v4466
        %v4474 = vsel %vm356, %v4460, %v4468
        %v4475 = vsel %vm356, %v4462, %v4470
        %v4476 = vsel %vm356, %v4464, %v4472
        %v4477 = vsel %vm356, %v4466, %v4458
        %v4478 = vsel %vm356, %v4468, %v4460
        %v4479 = vsel %vm356, %v4470, %v4462
        %v4480 = vsel %vm356, %v4472, %v4464
        %v4481 = vmul.f32 %v4477, %v296
        %v4482 = vmul.f32 %v4473, %v297
        %v4483 = vmul.f32 %v4478, %v296
        %v4484 = vmul.f32 %v4474, %v297
        %v4485 = vmul.f32 %v4479, %v296
        %v4486 = vmul.f32 %v4475, %v297
        %v4487 = vmul.f32 %v4480, %v296
        %v4488 = vmul.f32 %v4476, %v297
        %v4489 = vpack.c.bf16 %v4483, %v4481
        %v4490 = vpack.c.bf16 %v4484, %v4482
        %v4491 = vpack.c.bf16 %v4487, %v4485
        %v4492 = vpack.c.bf16 %v4488, %v4486
        %v4497 = vunpack.c.l.b16 %v4489
        %v4498 = vunpack.c.l.b16 %v4490
        %v4499 = vunpack.c.h.b16 %v4489
        %v4500 = vunpack.c.h.b16 %v4490
        %v4501 = vunpack.c.l.b16 %v4491
        %v4502 = vunpack.c.l.b16 %v4492
        %v4503 = vunpack.c.h.b16 %v4491
        %v4504 = vunpack.c.h.b16 %v4492
        %v4505 = vpack.c.b16 %v4498, %v4497
        %v4506 = vpack.c.b16 %v4500, %v4499
        %v4507 = vpack.c.b16 %v4502, %v4501
        %v4508 = vpack.c.b16 %v4504, %v4503
        %4513 = vst [vmem:[#allocation2] sm:$0xff] %v4505
        %4514 = vst [vmem:[#allocation2 + $0x8] sm:$0xff] %v4506
        %4515 = vst [vmem:[#allocation2 + $0x10] sm:$0xff] %v4507
        %4516 = vst [vmem:[#allocation2 + $0x18] sm:$0xff] %v4508
        %4517 = vrot.lane.b32.xlu0 %v4436, 16
        %v4518 = vpop.permute.xlu0 %4517
        %4519 = vrot.lane.b32.xlu0 %v4438, 16
        %v4520 = vpop.permute.xlu0 %4519
        %4521 = vrot.lane.b32.xlu0 %v4440, 16
        %v4522 = vpop.permute.xlu0 %4521
        %4523 = vrot.lane.b32.xlu0 %v4442, 16
        %v4524 = vpop.permute.xlu0 %4523
        %4525 = vrot.lane.b32.xlu0 %v4437, 16
        %v4526 = vpop.permute.xlu0 %4525
        %4527 = vrot.lane.b32.xlu0 %v4439, 16
        %v4528 = vpop.permute.xlu0 %4527
        %4529 = vrot.lane.b32.xlu0 %v4441, 16
        %v4530 = vpop.permute.xlu0 %4529
        %4531 = vrot.lane.b32.xlu0 %v4443, 16
        %v4532 = vpop.permute.xlu0 %4531
        %v4533 = vsel %vm387, %v4518, %v4526
        %v4534 = vsel %vm387, %v4520, %v4528
        %v4535 = vsel %vm387, %v4522, %v4530
        %v4536 = vsel %vm387, %v4524, %v4532
        %v4537 = vsel %vm387, %v4526, %v4518
        %v4538 = vsel %vm387, %v4528, %v4520
        %v4539 = vsel %vm387, %v4530, %v4522
        %v4540 = vsel %vm387, %v4532, %v4524
        %v4541 = vmul.f32 %v4537, %v300
        %v4542 = vmul.f32 %v4533, %v301
        %v4543 = vmul.f32 %v4538, %v300
        %v4544 = vmul.f32 %v4534, %v301
        %v4545 = vmul.f32 %v4539, %v300
        %v4546 = vmul.f32 %v4535, %v301
        %v4547 = vmul.f32 %v4540, %v300
        %v4548 = vmul.f32 %v4536, %v301
        %v4549 = vpack.c.bf16 %v4543, %v4541
        %v4550 = vpack.c.bf16 %v4544, %v4542
        %v4551 = vpack.c.bf16 %v4547, %v4545
        %v4552 = vpack.c.bf16 %v4548, %v4546
        %v4557 = vunpack.c.l.b16 %v4549
        %v4558 = vunpack.c.l.b16 %v4550
        %v4559 = vunpack.c.h.b16 %v4549
        %v4560 = vunpack.c.h.b16 %v4550
        %v4561 = vunpack.c.l.b16 %v4551
        %v4562 = vunpack.c.l.b16 %v4552
        %v4563 = vunpack.c.h.b16 %v4551
        %v4564 = vunpack.c.h.b16 %v4552
        %v4565 = vpack.c.b16 %v4558, %v4557
        %v4566 = vpack.c.b16 %v4560, %v4559
        %v4567 = vpack.c.b16 %v4562, %v4561
        %v4568 = vpack.c.b16 %v4564, %v4563
        %4573 = vst [vmem:[#allocation2 + $0x20] sm:$0xff] %v4565
        %4574 = vst [vmem:[#allocation2 + $0x28] sm:$0xff] %v4566
        %4575 = vst [vmem:[#allocation2 + $0x30] sm:$0xff] %v4567
        %4576 = vst [vmem:[#allocation2 + $0x38] sm:$0xff] %v4568
        %4577 = vrot.lane.b32.xlu0 %v4436, 15
        %v4578 = vpop.permute.xlu0 %4577
        %4579 = vrot.lane.b32.xlu0 %v4438, 15
        %v4580 = vpop.permute.xlu0 %4579
        %4581 = vrot.lane.b32.xlu0 %v4440, 15
        %v4582 = vpop.permute.xlu0 %4581
        %4583 = vrot.lane.b32.xlu0 %v4442, 15
        %v4584 = vpop.permute.xlu0 %4583
        %4585 = vrot.lane.b32.xlu0 %v4437, 15
        %v4586 = vpop.permute.xlu0 %4585
        %4587 = vrot.lane.b32.xlu0 %v4439, 15
        %v4588 = vpop.permute.xlu0 %4587
        %4589 = vrot.lane.b32.xlu0 %v4441, 15
        %v4590 = vpop.permute.xlu0 %4589
        %4591 = vrot.lane.b32.xlu0 %v4443, 15
        %v4592 = vpop.permute.xlu0 %4591
        %v4593 = vsel %vm418, %v4578, %v4586
        %v4594 = vsel %vm418, %v4580, %v4588
        %v4595 = vsel %vm418, %v4582, %v4590
        %v4596 = vsel %vm418, %v4584, %v4592
        %v4597 = vsel %vm418, %v4586, %v4578
        %v4598 = vsel %vm418, %v4588, %v4580
        %v4599 = vsel %vm418, %v4590, %v4582
        %v4600 = vsel %vm418, %v4592, %v4584
        %v4601 = vmul.f32 %v4597, %v308
        %v4602 = vmul.f32 %v4593, %v309
        %v4603 = vmul.f32 %v4598, %v308
        %v4604 = vmul.f32 %v4594, %v309
        %v4605 = vmul.f32 %v4599, %v308
        %v4606 = vmul.f32 %v4595, %v309
        %v4607 = vmul.f32 %v4600, %v308
        %v4608 = vmul.f32 %v4596, %v309
        %v4609 = vpack.c.bf16 %v4603, %v4601
        %v4610 = vpack.c.bf16 %v4604, %v4602
        %v4611 = vpack.c.bf16 %v4607, %v4605
        %v4612 = vpack.c.bf16 %v4608, %v4606
        %v4617 = vunpack.c.l.b16 %v4609
        %v4618 = vunpack.c.l.b16 %v4610
        %v4619 = vunpack.c.h.b16 %v4609
        %v4620 = vunpack.c.h.b16 %v4610
        %v4621 = vunpack.c.l.b16 %v4611
        %v4622 = vunpack.c.l.b16 %v4612
        %v4623 = vunpack.c.h.b16 %v4611
        %v4624 = vunpack.c.h.b16 %v4612
        %v4625 = vpack.c.b16 %v4618, %v4617
        %v4626 = vpack.c.b16 %v4620, %v4619
        %v4627 = vpack.c.b16 %v4622, %v4621
        %v4628 = vpack.c.b16 %v4624, %v4623
        %4633 = vst [vmem:[#allocation2 + $0x40] sm:$0xff] %v4625
        %4634 = vst [vmem:[#allocation2 + $0x48] sm:$0xff] %v4626
        %4635 = vst [vmem:[#allocation2 + $0x50] sm:$0xff] %v4627
        %4636 = vst [vmem:[#allocation2 + $0x58] sm:$0xff] %v4628
        %4637 = vrot.lane.b32.xlu0 %v4436, 1
        %v4638 = vpop.permute.xlu0 %4637
        %4639 = vrot.lane.b32.xlu0 %v4438, 1
        %v4640 = vpop.permute.xlu0 %4639
        %4641 = vrot.lane.b32.xlu0 %v4440, 1
        %v4642 = vpop.permute.xlu0 %4641
        %4643 = vrot.lane.b32.xlu0 %v4442, 1
        %v4644 = vpop.permute.xlu0 %4643
        %4645 = vrot.lane.b32.xlu0 %v4437, 1
        %v4646 = vpop.permute.xlu0 %4645
        %4647 = vrot.lane.b32.xlu0 %v4439, 1
        %v4648 = vpop.permute.xlu0 %4647
        %4649 = vrot.lane.b32.xlu0 %v4441, 1
        %v4650 = vpop.permute.xlu0 %4649
        %4651 = vrot.lane.b32.xlu0 %v4443, 1
        %v4652 = vpop.permute.xlu0 %4651
        %v4653 = vsel %vm449, %v4638, %v4646
        %v4654 = vsel %vm449, %v4640, %v4648
        %v4655 = vsel %vm449, %v4642, %v4650
        %v4656 = vsel %vm449, %v4644, %v4652
        %v4657 = vsel %vm449, %v4646, %v4638
        %v4658 = vsel %vm449, %v4648, %v4640
        %v4659 = vsel %vm449, %v4650, %v4642
        %v4660 = vsel %vm449, %v4652, %v4644
        %v4661 = vmul.f32 %v4657, %v312
        %v4662 = vmul.f32 %v4653, %v313
        %v4663 = vmul.f32 %v4658, %v312
        %v4664 = vmul.f32 %v4654, %v313
        %v4665 = vmul.f32 %v4659, %v312
        %v4666 = vmul.f32 %v4655, %v313
        %v4667 = vmul.f32 %v4660, %v312
        %v4668 = vmul.f32 %v4656, %v313
        %v4669 = vpack.c.bf16 %v4663, %v4661
        %v4670 = vpack.c.bf16 %v4664, %v4662
        %v4671 = vpack.c.bf16 %v4667, %v4665
        %v4672 = vpack.c.bf16 %v4668, %v4666
        %v4677 = vunpack.c.l.b16 %v4669
        %v4678 = vunpack.c.l.b16 %v4670
        %v4679 = vunpack.c.h.b16 %v4669
        %v4680 = vunpack.c.h.b16 %v4670
        %v4681 = vunpack.c.l.b16 %v4671
        %v4682 = vunpack.c.l.b16 %v4672
        %v4683 = vunpack.c.h.b16 %v4671
        %v4684 = vunpack.c.h.b16 %v4672
        %v4685 = vpack.c.b16 %v4678, %v4677
        %v4686 = vpack.c.b16 %v4680, %v4679
        %v4687 = vpack.c.b16 %v4682, %v4681
        %v4688 = vpack.c.b16 %v4684, %v4683
        %4693 = vst [vmem:[#allocation2 + $0x60] sm:$0xff] %v4685
        %4694 = vst [vmem:[#allocation2 + $0x68] sm:$0xff] %v4686
        %4695 = vst [vmem:[#allocation2 + $0x70] sm:$0xff] %v4687
        %4696 = vst [vmem:[#allocation2 + $0x78] sm:$0xff] %v4688
        %v4697 = vpack.c.bf16 %v4438, %v4436
        %v4698 = vpack.c.bf16 %v4439, %v4437
        %v4699 = vpack.c.bf16 %v4442, %v4440
        %v4700 = vpack.c.bf16 %v4443, %v4441
        %v4705 = vunpack.c.l.b16 %v4697
        %v4706 = vunpack.c.l.b16 %v4698
        %v4707 = vunpack.c.h.b16 %v4697
        %v4708 = vunpack.c.h.b16 %v4698
        %v4709 = vunpack.c.l.b16 %v4699
        %v4710 = vunpack.c.l.b16 %v4700
        %v4711 = vunpack.c.h.b16 %v4699
        %v4712 = vunpack.c.h.b16 %v4700
        %v4713 = vpack.c.b16 %v4706, %v4705
        %v4714 = vpack.c.b16 %v4708, %v4707
        %v4715 = vpack.c.b16 %v4710, %v4709
        %v4716 = vpack.c.b16 %v4712, %v4711
        %4721 = vst [vmem:[#allocation2 + $0x80] sm:$0xff] %v4713
        %4722 = vst [vmem:[#allocation2 + $0x88] sm:$0xff] %v4714
        %4723 = vst [vmem:[#allocation2 + $0x90] sm:$0xff] %v4715
        %4724 = vst [vmem:[#allocation2 + $0x98] sm:$0xff] %v4716
        %4725 = vrot.lane.b32.xlu0 %v4436, 127
        %v4726 = vpop.permute.xlu0 %4725
        %4727 = vrot.lane.b32.xlu0 %v4438, 127
        %v4728 = vpop.permute.xlu0 %4727
        %4729 = vrot.lane.b32.xlu0 %v4440, 127
        %v4730 = vpop.permute.xlu0 %4729
        %4731 = vrot.lane.b32.xlu0 %v4442, 127
        %v4732 = vpop.permute.xlu0 %4731
        %4733 = vrot.lane.b32.xlu0 %v4437, 127
        %v4734 = vpop.permute.xlu0 %4733
        %4735 = vrot.lane.b32.xlu0 %v4439, 127
        %v4736 = vpop.permute.xlu0 %4735
        %4737 = vrot.lane.b32.xlu0 %v4441, 127
        %v4738 = vpop.permute.xlu0 %4737
        %4739 = vrot.lane.b32.xlu0 %v4443, 127
        %v4740 = vpop.permute.xlu0 %4739
        %v4741 = vsel %vm494, %v4726, %v4734
        %v4742 = vsel %vm494, %v4728, %v4736
        %v4743 = vsel %vm494, %v4730, %v4738
        %v4744 = vsel %vm494, %v4732, %v4740
        %v4745 = vsel %vm494, %v4734, %v4726
        %v4746 = vsel %vm494, %v4736, %v4728
        %v4747 = vsel %vm494, %v4738, %v4730
        %v4748 = vsel %vm494, %v4740, %v4732
        %v4749 = vmul.f32 %v4741, %v316
        %v4750 = vmul.f32 %v4745, %v317
        %v4751 = vmul.f32 %v4742, %v316
        %v4752 = vmul.f32 %v4746, %v317
        %v4753 = vmul.f32 %v4743, %v316
        %v4754 = vmul.f32 %v4747, %v317
        %v4755 = vmul.f32 %v4744, %v316
        %v4756 = vmul.f32 %v4748, %v317
        %v4757 = vpack.c.bf16 %v4751, %v4749
        %v4758 = vpack.c.bf16 %v4752, %v4750
        %v4759 = vpack.c.bf16 %v4755, %v4753
        %v4760 = vpack.c.bf16 %v4756, %v4754
        %v4765 = vunpack.c.l.b16 %v4757
        %v4766 = vunpack.c.l.b16 %v4758
        %v4767 = vunpack.c.h.b16 %v4757
        %v4768 = vunpack.c.h.b16 %v4758
        %v4769 = vunpack.c.l.b16 %v4759
        %v4770 = vunpack.c.l.b16 %v4760
        %v4771 = vunpack.c.h.b16 %v4759
        %v4772 = vunpack.c.h.b16 %v4760
        %v4773 = vpack.c.b16 %v4766, %v4765
        %v4774 = vpack.c.b16 %v4768, %v4767
        %v4775 = vpack.c.b16 %v4770, %v4769
        %v4776 = vpack.c.b16 %v4772, %v4771
        %4781 = vst [vmem:[#allocation2 + $0xa0] sm:$0xff] %v4773
        %4782 = vst [vmem:[#allocation2 + $0xa8] sm:$0xff] %v4774
        %4783 = vst [vmem:[#allocation2 + $0xb0] sm:$0xff] %v4775
        %4784 = vst [vmem:[#allocation2 + $0xb8] sm:$0xff] %v4776
        %4785 = vrot.lane.b32.xlu0 %v4436, 113
        %v4786 = vpop.permute.xlu0 %4785
        %4787 = vrot.lane.b32.xlu0 %v4438, 113
        %v4788 = vpop.permute.xlu0 %4787
        %4789 = vrot.lane.b32.xlu0 %v4440, 113
        %v4790 = vpop.permute.xlu0 %4789
        %4791 = vrot.lane.b32.xlu0 %v4442, 113
        %v4792 = vpop.permute.xlu0 %4791
        %4793 = vrot.lane.b32.xlu0 %v4437, 113
        %v4794 = vpop.permute.xlu0 %4793
        %4795 = vrot.lane.b32.xlu0 %v4439, 113
        %v4796 = vpop.permute.xlu0 %4795
        %4797 = vrot.lane.b32.xlu0 %v4441, 113
        %v4798 = vpop.permute.xlu0 %4797
        %4799 = vrot.lane.b32.xlu0 %v4443, 113
        %v4800 = vpop.permute.xlu0 %4799
        %v4801 = vsel %vm525, %v4786, %v4794
        %v4802 = vsel %vm525, %v4788, %v4796
        %v4803 = vsel %vm525, %v4790, %v4798
        %v4804 = vsel %vm525, %v4792, %v4800
        %v4805 = vsel %vm525, %v4794, %v4786
        %v4806 = vsel %vm525, %v4796, %v4788
        %v4807 = vsel %vm525, %v4798, %v4790
        %v4808 = vsel %vm525, %v4800, %v4792
        %v4809 = vmul.f32 %v4801, %v324
        %v4810 = vmul.f32 %v4805, %v325
        %v4811 = vmul.f32 %v4802, %v324
        %v4812 = vmul.f32 %v4806, %v325
        %v4813 = vmul.f32 %v4803, %v324
        %v4814 = vmul.f32 %v4807, %v325
        %v4815 = vmul.f32 %v4804, %v324
        %v4816 = vmul.f32 %v4808, %v325
        %v4817 = vpack.c.bf16 %v4811, %v4809
        %v4818 = vpack.c.bf16 %v4812, %v4810
        %v4819 = vpack.c.bf16 %v4815, %v4813
        %v4820 = vpack.c.bf16 %v4816, %v4814
        %v4825 = vunpack.c.l.b16 %v4817
        %v4826 = vunpack.c.l.b16 %v4818
        %v4827 = vunpack.c.h.b16 %v4817
        %v4828 = vunpack.c.h.b16 %v4818
        %v4829 = vunpack.c.l.b16 %v4819
        %v4830 = vunpack.c.l.b16 %v4820
        %v4831 = vunpack.c.h.b16 %v4819
        %v4832 = vunpack.c.h.b16 %v4820
        %v4833 = vpack.c.b16 %v4826, %v4825
        %v4834 = vpack.c.b16 %v4828, %v4827
        %v4835 = vpack.c.b16 %v4830, %v4829
        %v4836 = vpack.c.b16 %v4832, %v4831
        %4841 = vst [vmem:[#allocation2 + $0xc0] sm:$0xff] %v4833
        %4842 = vst [vmem:[#allocation2 + $0xc8] sm:$0xff] %v4834
        %4843 = vst [vmem:[#allocation2 + $0xd0] sm:$0xff] %v4835
        %4844 = vst [vmem:[#allocation2 + $0xd8] sm:$0xff] %v4836
        %4845 = vrot.lane.b32.xlu0 %v4436, 112
        %v4846 = vpop.permute.xlu0 %4845
        %4847 = vrot.lane.b32.xlu0 %v4438, 112
        %v4848 = vpop.permute.xlu0 %4847
        %4849 = vrot.lane.b32.xlu0 %v4440, 112
        %v4850 = vpop.permute.xlu0 %4849
        %4851 = vrot.lane.b32.xlu0 %v4442, 112
        %v4852 = vpop.permute.xlu0 %4851
        %4853 = vrot.lane.b32.xlu0 %v4437, 112
        %v4854 = vpop.permute.xlu0 %4853
        %4855 = vrot.lane.b32.xlu0 %v4439, 112
        %v4856 = vpop.permute.xlu0 %4855
        %4857 = vrot.lane.b32.xlu0 %v4441, 112
        %v4858 = vpop.permute.xlu0 %4857
        %4859 = vrot.lane.b32.xlu0 %v4443, 112
        %v4860 = vpop.permute.xlu0 %4859
        %v4861 = vsel %vm556, %v4846, %v4854
        %v4862 = vsel %vm556, %v4848, %v4856
        %v4863 = vsel %vm556, %v4850, %v4858
        %v4864 = vsel %vm556, %v4852, %v4860
        %v4865 = vsel %vm556, %v4854, %v4846
        %v4866 = vsel %vm556, %v4856, %v4848
        %v4867 = vsel %vm556, %v4858, %v4850
        %v4868 = vsel %vm556, %v4860, %v4852
        %v4869 = vmul.f32 %v4861, %v328
        %v4870 = vmul.f32 %v4865, %v329
        %v4871 = vmul.f32 %v4862, %v328
        %v4872 = vmul.f32 %v4866, %v329
        %v4873 = vmul.f32 %v4863, %v328
        %v4874 = vmul.f32 %v4867, %v329
        %v4875 = vmul.f32 %v4864, %v328
        %v4876 = vmul.f32 %v4868, %v329
        %v4877 = vpack.c.bf16 %v4871, %v4869
        %v4878 = vpack.c.bf16 %v4872, %v4870
        %v4879 = vpack.c.bf16 %v4875, %v4873
        %v4880 = vpack.c.bf16 %v4876, %v4874
        %v4885 = vunpack.c.l.b16 %v4877
        %v4886 = vunpack.c.l.b16 %v4878
        %v4887 = vunpack.c.h.b16 %v4877
        %v4888 = vunpack.c.h.b16 %v4878
        %v4889 = vunpack.c.l.b16 %v4879
        %v4890 = vunpack.c.l.b16 %v4880
        %v4891 = vunpack.c.h.b16 %v4879
        %v4892 = vunpack.c.h.b16 %v4880
        %v4893 = vpack.c.b16 %v4886, %v4885
        %v4894 = vpack.c.b16 %v4888, %v4887
        %v4895 = vpack.c.b16 %v4890, %v4889
        %v4896 = vpack.c.b16 %v4892, %v4891
        %4901 = vst [vmem:[#allocation2 + $0xe0] sm:$0xff] %v4893
        %4902 = vst [vmem:[#allocation2 + $0xe8] sm:$0xff] %v4894
        %4903 = vst [vmem:[#allocation2 + $0xf0] sm:$0xff] %v4895
        %4904 = vst [vmem:[#allocation2 + $0xf8] sm:$0xff] %v4896
        %4905 = vrot.lane.b32.xlu0 %v4436, 111
        %v4906 = vpop.permute.xlu0 %4905
        %4907 = vrot.lane.b32.xlu0 %v4438, 111
        %v4908 = vpop.permute.xlu0 %4907
        %4909 = vrot.lane.b32.xlu0 %v4440, 111
        %v4910 = vpop.permute.xlu0 %4909
        %4911 = vrot.lane.b32.xlu0 %v4442, 111
        %v4912 = vpop.permute.xlu0 %4911
        %4913 = vrot.lane.b32.xlu0 %v4437, 111
        %v4914 = vpop.permute.xlu0 %4913
        %4915 = vrot.lane.b32.xlu0 %v4439, 111
        %v4916 = vpop.permute.xlu0 %4915
        %4917 = vrot.lane.b32.xlu0 %v4441, 111
        %v4918 = vpop.permute.xlu0 %4917
        %4919 = vrot.lane.b32.xlu0 %v4443, 111
        %v4920 = vpop.permute.xlu0 %4919
        %v4921 = vsel %vm587, %v4906, %v4914
        %v4922 = vsel %vm587, %v4908, %v4916
        %v4923 = vsel %vm587, %v4910, %v4918
        %v4924 = vsel %vm587, %v4912, %v4920
        %v4925 = vsel %vm587, %v4914, %v4906
        %v4926 = vsel %vm587, %v4916, %v4908
        %v4927 = vsel %vm587, %v4918, %v4910
        %v4928 = vsel %vm587, %v4920, %v4912
        %v4929 = vmul.f32 %v4921, %v334
        %v4930 = vmul.f32 %v4925, %v335
        %v4931 = vmul.f32 %v4922, %v334
        %v4932 = vmul.f32 %v4926, %v335
        %v4933 = vmul.f32 %v4923, %v334
        %v4934 = vmul.f32 %v4927, %v335
        %v4935 = vmul.f32 %v4924, %v334
        %v4936 = vmul.f32 %v4928, %v335
        %v4937 = vpack.c.bf16 %v4931, %v4929
        %v4938 = vpack.c.bf16 %v4932, %v4930
        %v4939 = vpack.c.bf16 %v4935, %v4933
        %v4940 = vpack.c.bf16 %v4936, %v4934
        %v4945 = vunpack.c.l.b16 %v4937
        %v4946 = vunpack.c.l.b16 %v4938
        %v4947 = vunpack.c.h.b16 %v4937
        %v4948 = vunpack.c.h.b16 %v4938
        %v4949 = vunpack.c.l.b16 %v4939
        %v4950 = vunpack.c.l.b16 %v4940
        %v4951 = vunpack.c.h.b16 %v4939
        %v4952 = vunpack.c.h.b16 %v4940
        %v4953 = vpack.c.b16 %v4946, %v4945
        %v4954 = vpack.c.b16 %v4948, %v4947
        %v4955 = vpack.c.b16 %v4950, %v4949
        %v4956 = vpack.c.b16 %v4952, %v4951
        %4961 = vst [vmem:[#allocation2 + $0x100] sm:$0xff] %v4953
        %4962 = vst [vmem:[#allocation2 + $0x108] sm:$0xff] %v4954
        %4963 = vst [vmem:[#allocation2 + $0x110] sm:$0xff] %v4955
        %4964 = vst [vmem:[#allocation2 + $0x118] sm:$0xff] %v4956
        %v4965 = vld [vmem:[#allocation2] sm:$0xff]
        %v4966 = vld [vmem:[#allocation2 + $0x8] sm:$0xff]
        %v4967 = vld [vmem:[#allocation2 + $0x10] sm:$0xff]
        %v4968 = vld [vmem:[#allocation2 + $0x18] sm:$0xff]
        %v4969 = vld [vmem:[#allocation2 + $0x20] sm:$0xff]
        %v4970 = vld [vmem:[#allocation2 + $0x28] sm:$0xff]
        %v4971 = vld [vmem:[#allocation2 + $0x30] sm:$0xff]
        %v4972 = vld [vmem:[#allocation2 + $0x38] sm:$0xff]
        %v4973 = vld [vmem:[#allocation2 + $0x40] sm:$0xff]
        %v4974 = vld [vmem:[#allocation2 + $0x48] sm:$0xff]
        %v4975 = vld [vmem:[#allocation2 + $0x50] sm:$0xff]
        %v4976 = vld [vmem:[#allocation2 + $0x58] sm:$0xff]
        %v4977 = vld [vmem:[#allocation2 + $0x60] sm:$0xff]
        %v4978 = vld [vmem:[#allocation2 + $0x68] sm:$0xff]
        %v4979 = vld [vmem:[#allocation2 + $0x70] sm:$0xff]
        %v4980 = vld [vmem:[#allocation2 + $0x78] sm:$0xff]
        %v4981 = vld [vmem:[#allocation2 + $0x80] sm:$0xff]
        %v4982 = vld [vmem:[#allocation2 + $0x88] sm:$0xff]
        %v4983 = vld [vmem:[#allocation2 + $0x90] sm:$0xff]
        %v4984 = vld [vmem:[#allocation2 + $0x98] sm:$0xff]
        %v4985 = vld [vmem:[#allocation2 + $0xa0] sm:$0xff]
        %v4986 = vld [vmem:[#allocation2 + $0xa8] sm:$0xff]
        %v4987 = vld [vmem:[#allocation2 + $0xb0] sm:$0xff]
        %v4988 = vld [vmem:[#allocation2 + $0xb8] sm:$0xff]
        %v4989 = vld [vmem:[#allocation2 + $0xc0] sm:$0xff]
        %v4990 = vld [vmem:[#allocation2 + $0xc8] sm:$0xff]
        %v4991 = vld [vmem:[#allocation2 + $0xd0] sm:$0xff]
        %v4992 = vld [vmem:[#allocation2 + $0xd8] sm:$0xff]
        %v4993 = vld [vmem:[#allocation2 + $0xe0] sm:$0xff]
        %v4994 = vld [vmem:[#allocation2 + $0xe8] sm:$0xff]
        %v4995 = vld [vmem:[#allocation2 + $0xf0] sm:$0xff]
        %v4996 = vld [vmem:[#allocation2 + $0xf8] sm:$0xff]
        %v4997 = vld [vmem:[#allocation2 + $0x100] sm:$0xff]
        %v4998 = vld [vmem:[#allocation2 + $0x108] sm:$0xff]
        %v4999 = vld [vmem:[#allocation2 + $0x110] sm:$0xff]
        %v5000 = vld [vmem:[#allocation2 + $0x118] sm:$0xff]
        %5002 = vset.pattern.permute.xlu0 5
        %5003 = vperm.xlu0 %5002, %v4453
        %v5004 = vpop.permute.xlu0 %5003
        %5007 = vset.pattern.permute.xlu0 5
        %5008 = vperm.xlu0 %5007, %v4454
        %v5009 = vpop.permute.xlu0 %5008
        %5012 = vset.pattern.permute.xlu0 5
        %5013 = vperm.xlu0 %5012, %v4455
        %v5014 = vpop.permute.xlu0 %5013
        %5017 = vset.pattern.permute.xlu0 5
        %5018 = vperm.xlu0 %5017, %v4456
        %v5019 = vpop.permute.xlu0 %5018
        %v5029 = vunpack.c.l.b16 %v4445
        %v5030 = vunpack.c.h.b16 %v4445
        %v5031 = vunpack.c.l.b16 %v4446
        %v5032 = vunpack.c.l.b16 %v4447
        %v5033 = vunpack.c.h.b16 %v4447
        %v5034 = vunpack.c.l.b16 %v4448
        %v5035 = vunpack.c.l.b16 %v4449
        %v5036 = vunpack.c.h.b16 %v4449
        %v5037 = vunpack.c.l.b16 %v4450
        %v5038 = vunpack.c.l.b16 %v4451
        %v5039 = vunpack.c.h.b16 %v4451
        %v5040 = vunpack.c.l.b16 %v4452
        %v5041 = vpack.c.b16 %v5032, %v5029
        %v5042 = vpack.c.b16 %v5033, %v5030
        %v5043 = vpack.c.b16 %v5034, %v5031
        %v5044 = vpack.c.b16 %v5038, %v5035
        %v5045 = vpack.c.b16 %v5039, %v5036
        %v5046 = vpack.c.b16 %v5040, %v5037
        %v5087 = vunpack.c.l.b16 %v4965
        %v5088 = vunpack.c.h.b16 %v4965
        %v5089 = vunpack.c.l.b16 %v4966
        %v5090 = vunpack.c.h.b16 %v4966
        %v5091 = vunpack.c.l.b16 %v4967
        %v5092 = vunpack.c.h.b16 %v4967
        %v5093 = vunpack.c.l.b16 %v4968
        %v5094 = vunpack.c.h.b16 %v4968
        %v5095 = vunpack.c.l.b16 %v4969
        %v5096 = vunpack.c.h.b16 %v4969
        %v5097 = vunpack.c.l.b16 %v4970
        %v5098 = vunpack.c.h.b16 %v4970
        %v5099 = vunpack.c.l.b16 %v4971
        %v5100 = vunpack.c.h.b16 %v4971
        %v5101 = vunpack.c.l.b16 %v4972
        %v5102 = vunpack.c.h.b16 %v4972
        %v5103 = vunpack.c.l.b16 %v4973
        %v5104 = vunpack.c.h.b16 %v4973
        %v5105 = vunpack.c.l.b16 %v4974
        %v5106 = vunpack.c.h.b16 %v4974
        %v5107 = vunpack.c.l.b16 %v4975
        %v5108 = vunpack.c.h.b16 %v4975
        %v5109 = vunpack.c.l.b16 %v4976
        %v5110 = vunpack.c.h.b16 %v4976
        %v5111 = vunpack.c.l.b16 %v4977
        %v5112 = vunpack.c.h.b16 %v4977
        %v5113 = vunpack.c.l.b16 %v4978
        %v5114 = vunpack.c.h.b16 %v4978
        %v5115 = vunpack.c.l.b16 %v4979
        %v5116 = vunpack.c.h.b16 %v4979
        %v5117 = vunpack.c.l.b16 %v4980
        %v5118 = vunpack.c.h.b16 %v4980
        %v5119 = vunpack.c.l.b16 %v4981
        %v5120 = vunpack.c.h.b16 %v4981
        %v5121 = vunpack.c.l.b16 %v4982
        %v5122 = vunpack.c.h.b16 %v4982
        %v5123 = vunpack.c.l.b16 %v4983
        %v5124 = vunpack.c.h.b16 %v4983
        %v5125 = vunpack.c.l.b16 %v4984
        %v5126 = vunpack.c.h.b16 %v4984
        %v5127 = vunpack.c.l.b16 %v4985
        %v5128 = vunpack.c.h.b16 %v4985
        %v5129 = vunpack.c.l.b16 %v4986
        %v5130 = vunpack.c.h.b16 %v4986
        %v5131 = vunpack.c.l.b16 %v4987
        %v5132 = vunpack.c.h.b16 %v4987
        %v5133 = vunpack.c.l.b16 %v4988
        %v5134 = vunpack.c.h.b16 %v4988
        %v5135 = vunpack.c.l.b16 %v4989
        %v5136 = vunpack.c.h.b16 %v4989
        %v5137 = vunpack.c.l.b16 %v4990
        %v5138 = vunpack.c.h.b16 %v4990
        %v5139 = vunpack.c.l.b16 %v4991
        %v5140 = vunpack.c.h.b16 %v4991
        %v5141 = vunpack.c.l.b16 %v4992
        %v5142 = vunpack.c.h.b16 %v4992
        %v5143 = vunpack.c.l.b16 %v4993
        %v5144 = vunpack.c.h.b16 %v4993
        %v5145 = vunpack.c.l.b16 %v4994
        %v5146 = vunpack.c.h.b16 %v4994
        %v5147 = vunpack.c.l.b16 %v4995
        %v5148 = vunpack.c.h.b16 %v4995
        %v5149 = vunpack.c.l.b16 %v4996
        %v5150 = vunpack.c.h.b16 %v4996
        %v5151 = vunpack.c.l.b16 %v4997
        %v5152 = vunpack.c.h.b16 %v4997
        %v5153 = vunpack.c.l.b16 %v4998
        %v5154 = vunpack.c.h.b16 %v4998
        %v5155 = vunpack.c.l.b16 %v4999
        %v5156 = vunpack.c.h.b16 %v4999
        %v5157 = vunpack.c.l.b16 %v5000
        %v5158 = vunpack.c.h.b16 %v5000
        %v5159 = vpack.c.b16 %v5089, %v5087
        %v5160 = vpack.c.b16 %v5090, %v5088
        %v5161 = vpack.c.b16 %v5093, %v5091
        %v5162 = vpack.c.b16 %v5094, %v5092
        %v5163 = vpack.c.b16 %v5097, %v5095
        %v5164 = vpack.c.b16 %v5098, %v5096
        %v5165 = vpack.c.b16 %v5101, %v5099
        %v5166 = vpack.c.b16 %v5102, %v5100
        %v5167 = vpack.c.b16 %v5105, %v5103
        %v5168 = vpack.c.b16 %v5106, %v5104
        %v5169 = vpack.c.b16 %v5109, %v5107
        %v5170 = vpack.c.b16 %v5110, %v5108
        %v5171 = vpack.c.b16 %v5113, %v5111
        %v5172 = vpack.c.b16 %v5114, %v5112
        %v5173 = vpack.c.b16 %v5117, %v5115
        %v5174 = vpack.c.b16 %v5118, %v5116
        %v5175 = vpack.c.b16 %v5121, %v5119
        %v5176 = vpack.c.b16 %v5122, %v5120
        %v5177 = vpack.c.b16 %v5125, %v5123
        %v5178 = vpack.c.b16 %v5126, %v5124
        %v5179 = vpack.c.b16 %v5129, %v5127
        %v5180 = vpack.c.b16 %v5130, %v5128
        %v5181 = vpack.c.b16 %v5133, %v5131
        %v5182 = vpack.c.b16 %v5134, %v5132
        %v5183 = vpack.c.b16 %v5137, %v5135
        %v5184 = vpack.c.b16 %v5138, %v5136
        %v5185 = vpack.c.b16 %v5141, %v5139
        %v5186 = vpack.c.b16 %v5142, %v5140
        %v5187 = vpack.c.b16 %v5145, %v5143
        %v5188 = vpack.c.b16 %v5146, %v5144
        %v5189 = vpack.c.b16 %v5149, %v5147
        %v5190 = vpack.c.b16 %v5150, %v5148
        %v5191 = vpack.c.b16 %v5153, %v5151
        %v5192 = vpack.c.b16 %v5154, %v5152
        %v5193 = vpack.c.b16 %v5157, %v5155
        %v5194 = vpack.c.b16 %v5158, %v5156
        %v5232 = vsel %vm1602, %v5043, 0
        %v5235 = vsel %vm1602, %v5046, 0
        %5237 = vmatprep.subr.bf16.mxu0 %v5174
        %5238 = vmatpush1.bf16.msra.mxu0 %v5173
        %5239 = vmatprep.subr.bf16.mxu0 %v5172
        %5240 = vmatpush1.bf16.msra.mxu0 %v5171
        %5241 = vmatprep.subr.bf16.mxu0 %v5170
        %5242 = vmatpush1.bf16.msra.mxu0 %v5169
        %5243 = vmatprep.subr.bf16.mxu0 %v5168
        %5244 = vmatpush1.bf16.msra.mxu0 %v5167
        %5245 = vmatprep.subr.bf16.mxu0 %v5166
        %5246 = vmatpush1.bf16.msra.mxu0 %v5165
        %5247 = vmatprep.subr.bf16.mxu0 %v5164
        %5248 = vmatpush1.bf16.msra.mxu0 %v5163
        %5249 = vmatprep.subr.bf16.mxu0 %v5162
        %5250 = vmatpush1.bf16.msra.mxu0 %v5161
        %5251 = vmatprep.subr.bf16.mxu0 %v5160
        %5252 = vmatpush1.bf16.msra.mxu0 %v5159
        %5253 = vmatprep.subr.bf16.mxu0 %v5190
        %5254 = vmatpush2.bf16.msra.mxu0 %v5189
        %5255 = vmatprep.subr.bf16.mxu0 %v5188
        %5256 = vmatpush2.bf16.msra.mxu0 %v5187
        %5257 = vmatprep.subr.bf16.mxu0 %v5186
        %5258 = vmatpush2.bf16.msra.mxu0 %v5185
        %5259 = vmatprep.subr.bf16.mxu0 %v5184
        %5260 = vmatpush2.bf16.msra.mxu0 %v5183
        %5261 = vmatprep.subr.bf16.mxu0 %v5182
        %5262 = vmatpush2.bf16.msra.mxu0 %v5181
        %5263 = vmatprep.subr.bf16.mxu0 %v5180
        %5264 = vmatpush2.bf16.msra.mxu0 %v5179
        %5265 = vmatprep.subr.bf16.mxu0 %v5178
        %5266 = vmatpush2.bf16.msra.mxu0 %v5177
        %5267 = vmatprep.subr.bf16.mxu0 %v5176
        %5268 = vmatpush2.bf16.msra.mxu0 %v5175
        %5269 = vmatprep.mubr.bf16.mxu0 %v5042
        %5270 = vmatmul.mubr.bf16.gmra.mxu0 %v5041
        %v5271 = vpop.f32.mrf.mxu0
        %v5272 = vadd.f32 %v5004, %v5271
        %v5273 = vpop.f32.mrf.mxu0
        %v5274 = vadd.f32 %v5004, %v5273
        %v5275 = vpop.f32.mrf.mxu0
        %v5276 = vadd.f32 %v5009, %v5275
        %v5277 = vpop.f32.mrf.mxu0
        %v5278 = vadd.f32 %v5009, %v5277
        %5279 = vmatprep.mubr.bf16.mxu0 %v5045
        %5280 = vmatmul.mubr.bf16.gmra.mxu0 %v5044
        %v5281 = vpop.f32.mrf.mxu0
        %v5282 = vadd.f32 %v5014, %v5281
        %v5283 = vpop.f32.mrf.mxu0
        %v5284 = vadd.f32 %v5014, %v5283
        %v5285 = vpop.f32.mrf.mxu0
        %v5286 = vadd.f32 %v5019, %v5285
        %v5287 = vpop.f32.mrf.mxu0
        %v5288 = vadd.f32 %v5019, %v5287
        %5289 = vdwg.mxu0
        %5290 = vmatprep.subr.bf16.mxu0 0
        %5291 = vmatpush1.bf16.msra.mxu0 0
        %5292 = vmatprep.subr.bf16.mxu0 0
        %5293 = vmatpush1.bf16.msra.mxu0 0
        %5294 = vmatprep.subr.bf16.mxu0 0
        %5295 = vmatpush1.bf16.msra.mxu0 0
        %5296 = vmatprep.subr.bf16.mxu0 0
        %5297 = vmatpush1.bf16.msra.mxu0 0
        %5298 = vmatprep.subr.bf16.mxu0 0
        %5299 = vmatpush1.bf16.msra.mxu0 0
        %5300 = vmatprep.subr.bf16.mxu0 0
        %5301 = vmatpush1.bf16.msra.mxu0 0
        %5302 = vmatprep.subr.bf16.mxu0 %v5194
        %5303 = vmatpush1.bf16.msra.mxu0 %v5193
        %5304 = vmatprep.subr.bf16.mxu0 %v5192
        %5305 = vmatpush1.bf16.msra.mxu0 %v5191
        %5306 = vmatprep.subr.bf16.mxu0 0
        %5307 = vmatpush2.bf16.msra.mxu0 0
        %5308 = vmatprep.subr.bf16.mxu0 0
        %5309 = vmatpush2.bf16.msra.mxu0 0
        %5310 = vmatprep.subr.bf16.mxu0 0
        %5311 = vmatpush2.bf16.msra.mxu0 0
        %5312 = vmatprep.subr.bf16.mxu0 0
        %5313 = vmatpush2.bf16.msra.mxu0 0
        %5314 = vmatprep.subr.bf16.mxu0 0
        %5315 = vmatpush2.bf16.msra.mxu0 0
        %5316 = vmatprep.subr.bf16.mxu0 0
        %5317 = vmatpush2.bf16.msra.mxu0 0
        %5318 = vmatprep.subr.bf16.mxu0 0
        %5319 = vmatpush2.bf16.msra.mxu0 0
        %5320 = vmatprep.subr.bf16.mxu0 0
        %5321 = vmatpush2.bf16.msra.mxu0 0
        %5322 = vmatprep.mubr.bf16.mxu0 0
        %5323 = vmatmul.mubr.bf16.gmra.mxu0 %v5232
        %v5324 = vpop.f32.mrf.mxu0
        %v5325 = vadd.f32 %v5272, %v5324
        %v5326 = vpop.f32.mrf.mxu0
        %v5327 = vadd.f32 %v5274, %v5326
        %v5328 = vpop.f32.mrf.mxu0
        %v5329 = vadd.f32 %v5276, %v5328
        %v5330 = vpop.f32.mrf.mxu0
        %v5331 = vadd.f32 %v5278, %v5330
        %5332 = vmatprep.mubr.bf16.mxu0 0
        %5333 = vmatmul.mubr.bf16.gmra.mxu0 %v5235
        %v5334 = vpop.f32.mrf.mxu0
        %v5335 = vadd.f32 %v5282, %v5334
        %v5336 = vpop.f32.mrf.mxu0
        %v5337 = vadd.f32 %v5284, %v5336
        %v5338 = vpop.f32.mrf.mxu0
        %v5339 = vadd.f32 %v5286, %v5338
        %v5340 = vpop.f32.mrf.mxu0
        %v5341 = vadd.f32 %v5288, %v5340
        %5342 = vdwg.mxu0
        %v5343 = vmax.f32 %v5325, 0.0
        %v5344 = vmax.f32 %v5327, 0.0
        %v5345 = vmax.f32 %v5329, 0.0
        %v5346 = vmax.f32 %v5331, 0.0
        %v5347 = vmax.f32 %v5335, 0.0
        %v5348 = vmax.f32 %v5337, 0.0
        %v5349 = vmax.f32 %v5339, 0.0
        %v5350 = vmax.f32 %v5341, 0.0
        %s5351 = scalar_lea.vmem %s2, 240
        %v5352 = vld [vmem:[%s5351] sm:$0xff]
        %v5353 = vld [vmem:[%s5351 + $0x8] sm:$0xf]
        %v5354 = vld [vmem:[%s5351 + $0xc] sm:$0xff]
        %v5355 = vld [vmem:[%s5351 + $0x14] sm:$0xf]
        %v5356 = vld [vmem:[%s5351 + $0x18] sm:$0xff]
        %v5357 = vld [vmem:[%s5351 + $0x20] sm:$0xf]
        %v5358 = vld [vmem:[%s5351 + $0x24] sm:$0xff]
        %v5359 = vld [vmem:[%s5351 + $0x2c] sm:$0xf]
        %v5360 = vld [vmem:[%s3] sm:$0xff]
        %v5361 = vld [vmem:[%s3 + $0x8] sm:$0xff]
        %v5362 = vld [vmem:[%s3 + $0x10] sm:$0xff]
        %v5363 = vld [vmem:[%s3 + $0x18] sm:$0xff]
        %5364 = vrot.lane.b32.xlu0 %v5343, 17
        %v5365 = vpop.permute.xlu0 %5364
        %5366 = vrot.lane.b32.xlu0 %v5345, 17
        %v5367 = vpop.permute.xlu0 %5366
        %5368 = vrot.lane.b32.xlu0 %v5347, 17
        %v5369 = vpop.permute.xlu0 %5368
        %5370 = vrot.lane.b32.xlu0 %v5349, 17
        %v5371 = vpop.permute.xlu0 %5370
        %5372 = vrot.lane.b32.xlu0 %v5344, 17
        %v5373 = vpop.permute.xlu0 %5372
        %5374 = vrot.lane.b32.xlu0 %v5346, 17
        %v5375 = vpop.permute.xlu0 %5374
        %5376 = vrot.lane.b32.xlu0 %v5348, 17
        %v5377 = vpop.permute.xlu0 %5376
        %5378 = vrot.lane.b32.xlu0 %v5350, 17
        %v5379 = vpop.permute.xlu0 %5378
        %v5380 = vsel %vm356, %v5365, %v5373
        %v5381 = vsel %vm356, %v5367, %v5375
        %v5382 = vsel %vm356, %v5369, %v5377
        %v5383 = vsel %vm356, %v5371, %v5379
        %v5384 = vsel %vm356, %v5373, %v5365
        %v5385 = vsel %vm356, %v5375, %v5367
        %v5386 = vsel %vm356, %v5377, %v5369
        %v5387 = vsel %vm356, %v5379, %v5371
        %v5388 = vmul.f32 %v5384, %v296
        %v5389 = vmul.f32 %v5380, %v297
        %v5390 = vmul.f32 %v5385, %v296
        %v5391 = vmul.f32 %v5381, %v297
        %v5392 = vmul.f32 %v5386, %v296
        %v5393 = vmul.f32 %v5382, %v297
        %v5394 = vmul.f32 %v5387, %v296
        %v5395 = vmul.f32 %v5383, %v297
        %v5396 = vpack.c.bf16 %v5390, %v5388
        %v5397 = vpack.c.bf16 %v5391, %v5389
        %v5398 = vpack.c.bf16 %v5394, %v5392
        %v5399 = vpack.c.bf16 %v5395, %v5393
        %v5404 = vunpack.c.l.b16 %v5396
        %v5405 = vunpack.c.l.b16 %v5397
        %v5406 = vunpack.c.h.b16 %v5396
        %v5407 = vunpack.c.h.b16 %v5397
        %v5408 = vunpack.c.l.b16 %v5398
        %v5409 = vunpack.c.l.b16 %v5399
        %v5410 = vunpack.c.h.b16 %v5398
        %v5411 = vunpack.c.h.b16 %v5399
        %v5412 = vpack.c.b16 %v5405, %v5404
        %v5413 = vpack.c.b16 %v5407, %v5406
        %v5414 = vpack.c.b16 %v5409, %v5408
        %v5415 = vpack.c.b16 %v5411, %v5410
        %5420 = vst [vmem:[#allocation2] sm:$0xff] %v5412
        %5421 = vst [vmem:[#allocation2 + $0x8] sm:$0xff] %v5413
        %5422 = vst [vmem:[#allocation2 + $0x10] sm:$0xff] %v5414
        %5423 = vst [vmem:[#allocation2 + $0x18] sm:$0xff] %v5415
        %5424 = vrot.lane.b32.xlu0 %v5343, 16
        %v5425 = vpop.permute.xlu0 %5424
        %5426 = vrot.lane.b32.xlu0 %v5345, 16
        %v5427 = vpop.permute.xlu0 %5426
        %5428 = vrot.lane.b32.xlu0 %v5347, 16
        %v5429 = vpop.permute.xlu0 %5428
        %5430 = vrot.lane.b32.xlu0 %v5349, 16
        %v5431 = vpop.permute.xlu0 %5430
        %5432 = vrot.lane.b32.xlu0 %v5344, 16
        %v5433 = vpop.permute.xlu0 %5432
        %5434 = vrot.lane.b32.xlu0 %v5346, 16
        %v5435 = vpop.permute.xlu0 %5434
        %5436 = vrot.lane.b32.xlu0 %v5348, 16
        %v5437 = vpop.permute.xlu0 %5436
        %5438 = vrot.lane.b32.xlu0 %v5350, 16
        %v5439 = vpop.permute.xlu0 %5438
        %v5440 = vsel %vm387, %v5425, %v5433
        %v5441 = vsel %vm387, %v5427, %v5435
        %v5442 = vsel %vm387, %v5429, %v5437
        %v5443 = vsel %vm387, %v5431, %v5439
        %v5444 = vsel %vm387, %v5433, %v5425
        %v5445 = vsel %vm387, %v5435, %v5427
        %v5446 = vsel %vm387, %v5437, %v5429
        %v5447 = vsel %vm387, %v5439, %v5431
        %v5448 = vmul.f32 %v5444, %v300
        %v5449 = vmul.f32 %v5440, %v301
        %v5450 = vmul.f32 %v5445, %v300
        %v5451 = vmul.f32 %v5441, %v301
        %v5452 = vmul.f32 %v5446, %v300
        %v5453 = vmul.f32 %v5442, %v301
        %v5454 = vmul.f32 %v5447, %v300
        %v5455 = vmul.f32 %v5443, %v301
        %v5456 = vpack.c.bf16 %v5450, %v5448
        %v5457 = vpack.c.bf16 %v5451, %v5449
        %v5458 = vpack.c.bf16 %v5454, %v5452
        %v5459 = vpack.c.bf16 %v5455, %v5453
        %v5464 = vunpack.c.l.b16 %v5456
        %v5465 = vunpack.c.l.b16 %v5457
        %v5466 = vunpack.c.h.b16 %v5456
        %v5467 = vunpack.c.h.b16 %v5457
        %v5468 = vunpack.c.l.b16 %v5458
        %v5469 = vunpack.c.l.b16 %v5459
        %v5470 = vunpack.c.h.b16 %v5458
        %v5471 = vunpack.c.h.b16 %v5459
        %v5472 = vpack.c.b16 %v5465, %v5464
        %v5473 = vpack.c.b16 %v5467, %v5466
        %v5474 = vpack.c.b16 %v5469, %v5468
        %v5475 = vpack.c.b16 %v5471, %v5470
        %5480 = vst [vmem:[#allocation2 + $0x20] sm:$0xff] %v5472
        %5481 = vst [vmem:[#allocation2 + $0x28] sm:$0xff] %v5473
        %5482 = vst [vmem:[#allocation2 + $0x30] sm:$0xff] %v5474
        %5483 = vst [vmem:[#allocation2 + $0x38] sm:$0xff] %v5475
        %5484 = vrot.lane.b32.xlu0 %v5343, 15
        %v5485 = vpop.permute.xlu0 %5484
        %5486 = vrot.lane.b32.xlu0 %v5345, 15
        %v5487 = vpop.permute.xlu0 %5486
        %5488 = vrot.lane.b32.xlu0 %v5347, 15
        %v5489 = vpop.permute.xlu0 %5488
        %5490 = vrot.lane.b32.xlu0 %v5349, 15
        %v5491 = vpop.permute.xlu0 %5490
        %5492 = vrot.lane.b32.xlu0 %v5344, 15
        %v5493 = vpop.permute.xlu0 %5492
        %5494 = vrot.lane.b32.xlu0 %v5346, 15
        %v5495 = vpop.permute.xlu0 %5494
        %5496 = vrot.lane.b32.xlu0 %v5348, 15
        %v5497 = vpop.permute.xlu0 %5496
        %5498 = vrot.lane.b32.xlu0 %v5350, 15
        %v5499 = vpop.permute.xlu0 %5498
        %v5500 = vsel %vm418, %v5485, %v5493
        %v5501 = vsel %vm418, %v5487, %v5495
        %v5502 = vsel %vm418, %v5489, %v5497
        %v5503 = vsel %vm418, %v5491, %v5499
        %v5504 = vsel %vm418, %v5493, %v5485
        %v5505 = vsel %vm418, %v5495, %v5487
        %v5506 = vsel %vm418, %v5497, %v5489
        %v5507 = vsel %vm418, %v5499, %v5491
        %v5508 = vmul.f32 %v5504, %v308
        %v5509 = vmul.f32 %v5500, %v309
        %v5510 = vmul.f32 %v5505, %v308
        %v5511 = vmul.f32 %v5501, %v309
        %v5512 = vmul.f32 %v5506, %v308
        %v5513 = vmul.f32 %v5502, %v309
        %v5514 = vmul.f32 %v5507, %v308
        %v5515 = vmul.f32 %v5503, %v309
        %v5516 = vpack.c.bf16 %v5510, %v5508
        %v5517 = vpack.c.bf16 %v5511, %v5509
        %v5518 = vpack.c.bf16 %v5514, %v5512
        %v5519 = vpack.c.bf16 %v5515, %v5513
        %v5524 = vunpack.c.l.b16 %v5516
        %v5525 = vunpack.c.l.b16 %v5517
        %v5526 = vunpack.c.h.b16 %v5516
        %v5527 = vunpack.c.h.b16 %v5517
        %v5528 = vunpack.c.l.b16 %v5518
        %v5529 = vunpack.c.l.b16 %v5519
        %v5530 = vunpack.c.h.b16 %v5518
        %v5531 = vunpack.c.h.b16 %v5519
        %v5532 = vpack.c.b16 %v5525, %v5524
        %v5533 = vpack.c.b16 %v5527, %v5526
        %v5534 = vpack.c.b16 %v5529, %v5528
        %v5535 = vpack.c.b16 %v5531, %v5530
        %5540 = vst [vmem:[#allocation2 + $0x40] sm:$0xff] %v5532
        %5541 = vst [vmem:[#allocation2 + $0x48] sm:$0xff] %v5533
        %5542 = vst [vmem:[#allocation2 + $0x50] sm:$0xff] %v5534
        %5543 = vst [vmem:[#allocation2 + $0x58] sm:$0xff] %v5535
        %5544 = vrot.lane.b32.xlu0 %v5343, 1
        %v5545 = vpop.permute.xlu0 %5544
        %5546 = vrot.lane.b32.xlu0 %v5345, 1
        %v5547 = vpop.permute.xlu0 %5546
        %5548 = vrot.lane.b32.xlu0 %v5347, 1
        %v5549 = vpop.permute.xlu0 %5548
        %5550 = vrot.lane.b32.xlu0 %v5349, 1
        %v5551 = vpop.permute.xlu0 %5550
        %5552 = vrot.lane.b32.xlu0 %v5344, 1
        %v5553 = vpop.permute.xlu0 %5552
        %5554 = vrot.lane.b32.xlu0 %v5346, 1
        %v5555 = vpop.permute.xlu0 %5554
        %5556 = vrot.lane.b32.xlu0 %v5348, 1
        %v5557 = vpop.permute.xlu0 %5556
        %5558 = vrot.lane.b32.xlu0 %v5350, 1
        %v5559 = vpop.permute.xlu0 %5558
        %v5560 = vsel %vm449, %v5545, %v5553
        %v5561 = vsel %vm449, %v5547, %v5555
        %v5562 = vsel %vm449, %v5549, %v5557
        %v5563 = vsel %vm449, %v5551, %v5559
        %v5564 = vsel %vm449, %v5553, %v5545
        %v5565 = vsel %vm449, %v5555, %v5547
        %v5566 = vsel %vm449, %v5557, %v5549
        %v5567 = vsel %vm449, %v5559, %v5551
        %v5568 = vmul.f32 %v5564, %v312
        %v5569 = vmul.f32 %v5560, %v313
        %v5570 = vmul.f32 %v5565, %v312
        %v5571 = vmul.f32 %v5561, %v313
        %v5572 = vmul.f32 %v5566, %v312
        %v5573 = vmul.f32 %v5562, %v313
        %v5574 = vmul.f32 %v5567, %v312
        %v5575 = vmul.f32 %v5563, %v313
        %v5576 = vpack.c.bf16 %v5570, %v5568
        %v5577 = vpack.c.bf16 %v5571, %v5569
        %v5578 = vpack.c.bf16 %v5574, %v5572
        %v5579 = vpack.c.bf16 %v5575, %v5573
        %v5584 = vunpack.c.l.b16 %v5576
        %v5585 = vunpack.c.l.b16 %v5577
        %v5586 = vunpack.c.h.b16 %v5576
        %v5587 = vunpack.c.h.b16 %v5577
        %v5588 = vunpack.c.l.b16 %v5578
        %v5589 = vunpack.c.l.b16 %v5579
        %v5590 = vunpack.c.h.b16 %v5578
        %v5591 = vunpack.c.h.b16 %v5579
        %v5592 = vpack.c.b16 %v5585, %v5584
        %v5593 = vpack.c.b16 %v5587, %v5586
        %v5594 = vpack.c.b16 %v5589, %v5588
        %v5595 = vpack.c.b16 %v5591, %v5590
        %5600 = vst [vmem:[#allocation2 + $0x60] sm:$0xff] %v5592
        %5601 = vst [vmem:[#allocation2 + $0x68] sm:$0xff] %v5593
        %5602 = vst [vmem:[#allocation2 + $0x70] sm:$0xff] %v5594
        %5603 = vst [vmem:[#allocation2 + $0x78] sm:$0xff] %v5595
        %v5604 = vpack.c.bf16 %v5345, %v5343
        %v5605 = vpack.c.bf16 %v5346, %v5344
        %v5606 = vpack.c.bf16 %v5349, %v5347
        %v5607 = vpack.c.bf16 %v5350, %v5348
        %v5612 = vunpack.c.l.b16 %v5604
        %v5613 = vunpack.c.l.b16 %v5605
        %v5614 = vunpack.c.h.b16 %v5604
        %v5615 = vunpack.c.h.b16 %v5605
        %v5616 = vunpack.c.l.b16 %v5606
        %v5617 = vunpack.c.l.b16 %v5607
        %v5618 = vunpack.c.h.b16 %v5606
        %v5619 = vunpack.c.h.b16 %v5607
        %v5620 = vpack.c.b16 %v5613, %v5612
        %v5621 = vpack.c.b16 %v5615, %v5614
        %v5622 = vpack.c.b16 %v5617, %v5616
        %v5623 = vpack.c.b16 %v5619, %v5618
        %5628 = vst [vmem:[#allocation2 + $0x80] sm:$0xff] %v5620
        %5629 = vst [vmem:[#allocation2 + $0x88] sm:$0xff] %v5621
        %5630 = vst [vmem:[#allocation2 + $0x90] sm:$0xff] %v5622
        %5631 = vst [vmem:[#allocation2 + $0x98] sm:$0xff] %v5623
        %5632 = vrot.lane.b32.xlu0 %v5343, 127
        %v5633 = vpop.permute.xlu0 %5632
        %5634 = vrot.lane.b32.xlu0 %v5345, 127
        %v5635 = vpop.permute.xlu0 %5634
        %5636 = vrot.lane.b32.xlu0 %v5347, 127
        %v5637 = vpop.permute.xlu0 %5636
        %5638 = vrot.lane.b32.xlu0 %v5349, 127
        %v5639 = vpop.permute.xlu0 %5638
        %5640 = vrot.lane.b32.xlu0 %v5344, 127
        %v5641 = vpop.permute.xlu0 %5640
        %5642 = vrot.lane.b32.xlu0 %v5346, 127
        %v5643 = vpop.permute.xlu0 %5642
        %5644 = vrot.lane.b32.xlu0 %v5348, 127
        %v5645 = vpop.permute.xlu0 %5644
        %5646 = vrot.lane.b32.xlu0 %v5350, 127
        %v5647 = vpop.permute.xlu0 %5646
        %v5648 = vsel %vm494, %v5633, %v5641
        %v5649 = vsel %vm494, %v5635, %v5643
        %v5650 = vsel %vm494, %v5637, %v5645
        %v5651 = vsel %vm494, %v5639, %v5647
        %v5652 = vsel %vm494, %v5641, %v5633
        %v5653 = vsel %vm494, %v5643, %v5635
        %v5654 = vsel %vm494, %v5645, %v5637
        %v5655 = vsel %vm494, %v5647, %v5639
        %v5656 = vmul.f32 %v5648, %v316
        %v5657 = vmul.f32 %v5652, %v317
        %v5658 = vmul.f32 %v5649, %v316
        %v5659 = vmul.f32 %v5653, %v317
        %v5660 = vmul.f32 %v5650, %v316
        %v5661 = vmul.f32 %v5654, %v317
        %v5662 = vmul.f32 %v5651, %v316
        %v5663 = vmul.f32 %v5655, %v317
        %v5664 = vpack.c.bf16 %v5658, %v5656
        %v5665 = vpack.c.bf16 %v5659, %v5657
        %v5666 = vpack.c.bf16 %v5662, %v5660
        %v5667 = vpack.c.bf16 %v5663, %v5661
        %v5672 = vunpack.c.l.b16 %v5664
        %v5673 = vunpack.c.l.b16 %v5665
        %v5674 = vunpack.c.h.b16 %v5664
        %v5675 = vunpack.c.h.b16 %v5665
        %v5676 = vunpack.c.l.b16 %v5666
        %v5677 = vunpack.c.l.b16 %v5667
        %v5678 = vunpack.c.h.b16 %v5666
        %v5679 = vunpack.c.h.b16 %v5667
        %v5680 = vpack.c.b16 %v5673, %v5672
        %v5681 = vpack.c.b16 %v5675, %v5674
        %v5682 = vpack.c.b16 %v5677, %v5676
        %v5683 = vpack.c.b16 %v5679, %v5678
        %5688 = vst [vmem:[#allocation2 + $0xa0] sm:$0xff] %v5680
        %5689 = vst [vmem:[#allocation2 + $0xa8] sm:$0xff] %v5681
        %5690 = vst [vmem:[#allocation2 + $0xb0] sm:$0xff] %v5682
        %5691 = vst [vmem:[#allocation2 + $0xb8] sm:$0xff] %v5683
        %5692 = vrot.lane.b32.xlu0 %v5343, 113
        %v5693 = vpop.permute.xlu0 %5692
        %5694 = vrot.lane.b32.xlu0 %v5345, 113
        %v5695 = vpop.permute.xlu0 %5694
        %5696 = vrot.lane.b32.xlu0 %v5347, 113
        %v5697 = vpop.permute.xlu0 %5696
        %5698 = vrot.lane.b32.xlu0 %v5349, 113
        %v5699 = vpop.permute.xlu0 %5698
        %5700 = vrot.lane.b32.xlu0 %v5344, 113
        %v5701 = vpop.permute.xlu0 %5700
        %5702 = vrot.lane.b32.xlu0 %v5346, 113
        %v5703 = vpop.permute.xlu0 %5702
        %5704 = vrot.lane.b32.xlu0 %v5348, 113
        %v5705 = vpop.permute.xlu0 %5704
        %5706 = vrot.lane.b32.xlu0 %v5350, 113
        %v5707 = vpop.permute.xlu0 %5706
        %v5708 = vsel %vm525, %v5693, %v5701
        %v5709 = vsel %vm525, %v5695, %v5703
        %v5710 = vsel %vm525, %v5697, %v5705
        %v5711 = vsel %vm525, %v5699, %v5707
        %v5712 = vsel %vm525, %v5701, %v5693
        %v5713 = vsel %vm525, %v5703, %v5695
        %v5714 = vsel %vm525, %v5705, %v5697
        %v5715 = vsel %vm525, %v5707, %v5699
        %v5716 = vmul.f32 %v5708, %v324
        %v5717 = vmul.f32 %v5712, %v325
        %v5718 = vmul.f32 %v5709, %v324
        %v5719 = vmul.f32 %v5713, %v325
        %v5720 = vmul.f32 %v5710, %v324
        %v5721 = vmul.f32 %v5714, %v325
        %v5722 = vmul.f32 %v5711, %v324
        %v5723 = vmul.f32 %v5715, %v325
        %v5724 = vpack.c.bf16 %v5718, %v5716
        %v5725 = vpack.c.bf16 %v5719, %v5717
        %v5726 = vpack.c.bf16 %v5722, %v5720
        %v5727 = vpack.c.bf16 %v5723, %v5721
        %v5732 = vunpack.c.l.b16 %v5724
        %v5733 = vunpack.c.l.b16 %v5725
        %v5734 = vunpack.c.h.b16 %v5724
        %v5735 = vunpack.c.h.b16 %v5725
        %v5736 = vunpack.c.l.b16 %v5726
        %v5737 = vunpack.c.l.b16 %v5727
        %v5738 = vunpack.c.h.b16 %v5726
        %v5739 = vunpack.c.h.b16 %v5727
        %v5740 = vpack.c.b16 %v5733, %v5732
        %v5741 = vpack.c.b16 %v5735, %v5734
        %v5742 = vpack.c.b16 %v5737, %v5736
        %v5743 = vpack.c.b16 %v5739, %v5738
        %5748 = vst [vmem:[#allocation2 + $0xc0] sm:$0xff] %v5740
        %5749 = vst [vmem:[#allocation2 + $0xc8] sm:$0xff] %v5741
        %5750 = vst [vmem:[#allocation2 + $0xd0] sm:$0xff] %v5742
        %5751 = vst [vmem:[#allocation2 + $0xd8] sm:$0xff] %v5743
        %5752 = vrot.lane.b32.xlu0 %v5343, 112
        %v5753 = vpop.permute.xlu0 %5752
        %5754 = vrot.lane.b32.xlu0 %v5345, 112
        %v5755 = vpop.permute.xlu0 %5754
        %5756 = vrot.lane.b32.xlu0 %v5347, 112
        %v5757 = vpop.permute.xlu0 %5756
        %5758 = vrot.lane.b32.xlu0 %v5349, 112
        %v5759 = vpop.permute.xlu0 %5758
        %5760 = vrot.lane.b32.xlu0 %v5344, 112
        %v5761 = vpop.permute.xlu0 %5760
        %5762 = vrot.lane.b32.xlu0 %v5346, 112
        %v5763 = vpop.permute.xlu0 %5762
        %5764 = vrot.lane.b32.xlu0 %v5348, 112
        %v5765 = vpop.permute.xlu0 %5764
        %5766 = vrot.lane.b32.xlu0 %v5350, 112
        %v5767 = vpop.permute.xlu0 %5766
        %v5768 = vsel %vm556, %v5753, %v5761
        %v5769 = vsel %vm556, %v5755, %v5763
        %v5770 = vsel %vm556, %v5757, %v5765
        %v5771 = vsel %vm556, %v5759, %v5767
        %v5772 = vsel %vm556, %v5761, %v5753
        %v5773 = vsel %vm556, %v5763, %v5755
        %v5774 = vsel %vm556, %v5765, %v5757
        %v5775 = vsel %vm556, %v5767, %v5759
        %v5776 = vmul.f32 %v5768, %v328
        %v5777 = vmul.f32 %v5772, %v329
        %v5778 = vmul.f32 %v5769, %v328
        %v5779 = vmul.f32 %v5773, %v329
        %v5780 = vmul.f32 %v5770, %v328
        %v5781 = vmul.f32 %v5774, %v329
        %v5782 = vmul.f32 %v5771, %v328
        %v5783 = vmul.f32 %v5775, %v329
        %v5784 = vpack.c.bf16 %v5778, %v5776
        %v5785 = vpack.c.bf16 %v5779, %v5777
        %v5786 = vpack.c.bf16 %v5782, %v5780
        %v5787 = vpack.c.bf16 %v5783, %v5781
        %v5792 = vunpack.c.l.b16 %v5784
        %v5793 = vunpack.c.l.b16 %v5785
        %v5794 = vunpack.c.h.b16 %v5784
        %v5795 = vunpack.c.h.b16 %v5785
        %v5796 = vunpack.c.l.b16 %v5786
        %v5797 = vunpack.c.l.b16 %v5787
        %v5798 = vunpack.c.h.b16 %v5786
        %v5799 = vunpack.c.h.b16 %v5787
        %v5800 = vpack.c.b16 %v5793, %v5792
        %v5801 = vpack.c.b16 %v5795, %v5794
        %v5802 = vpack.c.b16 %v5797, %v5796
        %v5803 = vpack.c.b16 %v5799, %v5798
        %5808 = vst [vmem:[#allocation2 + $0xe0] sm:$0xff] %v5800
        %5809 = vst [vmem:[#allocation2 + $0xe8] sm:$0xff] %v5801
        %5810 = vst [vmem:[#allocation2 + $0xf0] sm:$0xff] %v5802
        %5811 = vst [vmem:[#allocation2 + $0xf8] sm:$0xff] %v5803
        %5812 = vrot.lane.b32.xlu0 %v5343, 111
        %v5813 = vpop.permute.xlu0 %5812
        %5814 = vrot.lane.b32.xlu0 %v5345, 111
        %v5815 = vpop.permute.xlu0 %5814
        %5816 = vrot.lane.b32.xlu0 %v5347, 111
        %v5817 = vpop.permute.xlu0 %5816
        %5818 = vrot.lane.b32.xlu0 %v5349, 111
        %v5819 = vpop.permute.xlu0 %5818
        %5820 = vrot.lane.b32.xlu0 %v5344, 111
        %v5821 = vpop.permute.xlu0 %5820
        %5822 = vrot.lane.b32.xlu0 %v5346, 111
        %v5823 = vpop.permute.xlu0 %5822
        %5824 = vrot.lane.b32.xlu0 %v5348, 111
        %v5825 = vpop.permute.xlu0 %5824
        %5826 = vrot.lane.b32.xlu0 %v5350, 111
        %v5827 = vpop.permute.xlu0 %5826
        %v5828 = vsel %vm587, %v5813, %v5821
        %v5829 = vsel %vm587, %v5815, %v5823
        %v5830 = vsel %vm587, %v5817, %v5825
        %v5831 = vsel %vm587, %v5819, %v5827
        %v5832 = vsel %vm587, %v5821, %v5813
        %v5833 = vsel %vm587, %v5823, %v5815
        %v5834 = vsel %vm587, %v5825, %v5817
        %v5835 = vsel %vm587, %v5827, %v5819
        %v5836 = vmul.f32 %v5828, %v334
        %v5837 = vmul.f32 %v5832, %v335
        %v5838 = vmul.f32 %v5829, %v334
        %v5839 = vmul.f32 %v5833, %v335
        %v5840 = vmul.f32 %v5830, %v334
        %v5841 = vmul.f32 %v5834, %v335
        %v5842 = vmul.f32 %v5831, %v334
        %v5843 = vmul.f32 %v5835, %v335
        %v5844 = vpack.c.bf16 %v5838, %v5836
        %v5845 = vpack.c.bf16 %v5839, %v5837
        %v5846 = vpack.c.bf16 %v5842, %v5840
        %v5847 = vpack.c.bf16 %v5843, %v5841
        %v5852 = vunpack.c.l.b16 %v5844
        %v5853 = vunpack.c.l.b16 %v5845
        %v5854 = vunpack.c.h.b16 %v5844
        %v5855 = vunpack.c.h.b16 %v5845
        %v5856 = vunpack.c.l.b16 %v5846
        %v5857 = vunpack.c.l.b16 %v5847
        %v5858 = vunpack.c.h.b16 %v5846
        %v5859 = vunpack.c.h.b16 %v5847
        %v5860 = vpack.c.b16 %v5853, %v5852
        %v5861 = vpack.c.b16 %v5855, %v5854
        %v5862 = vpack.c.b16 %v5857, %v5856
        %v5863 = vpack.c.b16 %v5859, %v5858
        %5868 = vst [vmem:[#allocation2 + $0x100] sm:$0xff] %v5860
        %5869 = vst [vmem:[#allocation2 + $0x108] sm:$0xff] %v5861
        %5870 = vst [vmem:[#allocation2 + $0x110] sm:$0xff] %v5862
        %5871 = vst [vmem:[#allocation2 + $0x118] sm:$0xff] %v5863
        %v5872 = vld [vmem:[#allocation2] sm:$0xff]
        %v5873 = vld [vmem:[#allocation2 + $0x8] sm:$0xff]
        %v5874 = vld [vmem:[#allocation2 + $0x10] sm:$0xff]
        %v5875 = vld [vmem:[#allocation2 + $0x18] sm:$0xff]
        %v5876 = vld [vmem:[#allocation2 + $0x20] sm:$0xff]
        %v5877 = vld [vmem:[#allocation2 + $0x28] sm:$0xff]
        %v5878 = vld [vmem:[#allocation2 + $0x30] sm:$0xff]
        %v5879 = vld [vmem:[#allocation2 + $0x38] sm:$0xff]
        %v5880 = vld [vmem:[#allocation2 + $0x40] sm:$0xff]
        %v5881 = vld [vmem:[#allocation2 + $0x48] sm:$0xff]
        %v5882 = vld [vmem:[#allocation2 + $0x50] sm:$0xff]
        %v5883 = vld [vmem:[#allocation2 + $0x58] sm:$0xff]
        %v5884 = vld [vmem:[#allocation2 + $0x60] sm:$0xff]
        %v5885 = vld [vmem:[#allocation2 + $0x68] sm:$0xff]
        %v5886 = vld [vmem:[#allocation2 + $0x70] sm:$0xff]
        %v5887 = vld [vmem:[#allocation2 + $0x78] sm:$0xff]
        %v5888 = vld [vmem:[#allocation2 + $0x80] sm:$0xff]
        %v5889 = vld [vmem:[#allocation2 + $0x88] sm:$0xff]
        %v5890 = vld [vmem:[#allocation2 + $0x90] sm:$0xff]
        %v5891 = vld [vmem:[#allocation2 + $0x98] sm:$0xff]
        %v5892 = vld [vmem:[#allocation2 + $0xa0] sm:$0xff]
        %v5893 = vld [vmem:[#allocation2 + $0xa8] sm:$0xff]
        %v5894 = vld [vmem:[#allocation2 + $0xb0] sm:$0xff]
        %v5895 = vld [vmem:[#allocation2 + $0xb8] sm:$0xff]
        %v5896 = vld [vmem:[#allocation2 + $0xc0] sm:$0xff]
        %v5897 = vld [vmem:[#allocation2 + $0xc8] sm:$0xff]
        %v5898 = vld [vmem:[#allocation2 + $0xd0] sm:$0xff]
        %v5899 = vld [vmem:[#allocation2 + $0xd8] sm:$0xff]
        %v5900 = vld [vmem:[#allocation2 + $0xe0] sm:$0xff]
        %v5901 = vld [vmem:[#allocation2 + $0xe8] sm:$0xff]
        %v5902 = vld [vmem:[#allocation2 + $0xf0] sm:$0xff]
        %v5903 = vld [vmem:[#allocation2 + $0xf8] sm:$0xff]
        %v5904 = vld [vmem:[#allocation2 + $0x100] sm:$0xff]
        %v5905 = vld [vmem:[#allocation2 + $0x108] sm:$0xff]
        %v5906 = vld [vmem:[#allocation2 + $0x110] sm:$0xff]
        %v5907 = vld [vmem:[#allocation2 + $0x118] sm:$0xff]
        %5909 = vset.pattern.permute.xlu0 6
        %5910 = vperm.xlu0 %5909, %v5360
        %v5911 = vpop.permute.xlu0 %5910
        %5914 = vset.pattern.permute.xlu0 6
        %5915 = vperm.xlu0 %5914, %v5361
        %v5916 = vpop.permute.xlu0 %5915
        %5919 = vset.pattern.permute.xlu0 6
        %5920 = vperm.xlu0 %5919, %v5362
        %v5921 = vpop.permute.xlu0 %5920
        %5924 = vset.pattern.permute.xlu0 6
        %5925 = vperm.xlu0 %5924, %v5363
        %v5926 = vpop.permute.xlu0 %5925
        %v5936 = vunpack.c.l.b16 %v5352
        %v5937 = vunpack.c.h.b16 %v5352
        %v5938 = vunpack.c.l.b16 %v5353
        %v5939 = vunpack.c.l.b16 %v5354
        %v5940 = vunpack.c.h.b16 %v5354
        %v5941 = vunpack.c.l.b16 %v5355
        %v5942 = vunpack.c.l.b16 %v5356
        %v5943 = vunpack.c.h.b16 %v5356
        %v5944 = vunpack.c.l.b16 %v5357
        %v5945 = vunpack.c.l.b16 %v5358
        %v5946 = vunpack.c.h.b16 %v5358
        %v5947 = vunpack.c.l.b16 %v5359
        %v5948 = vpack.c.b16 %v5939, %v5936
        %v5949 = vpack.c.b16 %v5940, %v5937
        %v5950 = vpack.c.b16 %v5941, %v5938
        %v5951 = vpack.c.b16 %v5945, %v5942
        %v5952 = vpack.c.b16 %v5946, %v5943
        %v5953 = vpack.c.b16 %v5947, %v5944
        %v5994 = vunpack.c.l.b16 %v5872
        %v5995 = vunpack.c.h.b16 %v5872
        %v5996 = vunpack.c.l.b16 %v5873
        %v5997 = vunpack.c.h.b16 %v5873
        %v5998 = vunpack.c.l.b16 %v5874
        %v5999 = vunpack.c.h.b16 %v5874
        %v6000 = vunpack.c.l.b16 %v5875
        %v6001 = vunpack.c.h.b16 %v5875
        %v6002 = vunpack.c.l.b16 %v5876
        %v6003 = vunpack.c.h.b16 %v5876
        %v6004 = vunpack.c.l.b16 %v5877
        %v6005 = vunpack.c.h.b16 %v5877
        %v6006 = vunpack.c.l.b16 %v5878
        %v6007 = vunpack.c.h.b16 %v5878
        %v6008 = vunpack.c.l.b16 %v5879
        %v6009 = vunpack.c.h.b16 %v5879
        %v6010 = vunpack.c.l.b16 %v5880
        %v6011 = vunpack.c.h.b16 %v5880
        %v6012 = vunpack.c.l.b16 %v5881
        %v6013 = vunpack.c.h.b16 %v5881
        %v6014 = vunpack.c.l.b16 %v5882
        %v6015 = vunpack.c.h.b16 %v5882
        %v6016 = vunpack.c.l.b16 %v5883
        %v6017 = vunpack.c.h.b16 %v5883
        %v6018 = vunpack.c.l.b16 %v5884
        %v6019 = vunpack.c.h.b16 %v5884
        %v6020 = vunpack.c.l.b16 %v5885
        %v6021 = vunpack.c.h.b16 %v5885
        %v6022 = vunpack.c.l.b16 %v5886
        %v6023 = vunpack.c.h.b16 %v5886
        %v6024 = vunpack.c.l.b16 %v5887
        %v6025 = vunpack.c.h.b16 %v5887
        %v6026 = vunpack.c.l.b16 %v5888
        %v6027 = vunpack.c.h.b16 %v5888
        %v6028 = vunpack.c.l.b16 %v5889
        %v6029 = vunpack.c.h.b16 %v5889
        %v6030 = vunpack.c.l.b16 %v5890
        %v6031 = vunpack.c.h.b16 %v5890
        %v6032 = vunpack.c.l.b16 %v5891
        %v6033 = vunpack.c.h.b16 %v5891
        %v6034 = vunpack.c.l.b16 %v5892
        %v6035 = vunpack.c.h.b16 %v5892
        %v6036 = vunpack.c.l.b16 %v5893
        %v6037 = vunpack.c.h.b16 %v5893
        %v6038 = vunpack.c.l.b16 %v5894
        %v6039 = vunpack.c.h.b16 %v5894
        %v6040 = vunpack.c.l.b16 %v5895
        %v6041 = vunpack.c.h.b16 %v5895
        %v6042 = vunpack.c.l.b16 %v5896
        %v6043 = vunpack.c.h.b16 %v5896
        %v6044 = vunpack.c.l.b16 %v5897
        %v6045 = vunpack.c.h.b16 %v5897
        %v6046 = vunpack.c.l.b16 %v5898
        %v6047 = vunpack.c.h.b16 %v5898
        %v6048 = vunpack.c.l.b16 %v5899
        %v6049 = vunpack.c.h.b16 %v5899
        %v6050 = vunpack.c.l.b16 %v5900
        %v6051 = vunpack.c.h.b16 %v5900
        %v6052 = vunpack.c.l.b16 %v5901
        %v6053 = vunpack.c.h.b16 %v5901
        %v6054 = vunpack.c.l.b16 %v5902
        %v6055 = vunpack.c.h.b16 %v5902
        %v6056 = vunpack.c.l.b16 %v5903
        %v6057 = vunpack.c.h.b16 %v5903
        %v6058 = vunpack.c.l.b16 %v5904
        %v6059 = vunpack.c.h.b16 %v5904
        %v6060 = vunpack.c.l.b16 %v5905
        %v6061 = vunpack.c.h.b16 %v5905
        %v6062 = vunpack.c.l.b16 %v5906
        %v6063 = vunpack.c.h.b16 %v5906
        %v6064 = vunpack.c.l.b16 %v5907
        %v6065 = vunpack.c.h.b16 %v5907
        %v6066 = vpack.c.b16 %v5996, %v5994
        %v6067 = vpack.c.b16 %v5997, %v5995
        %v6068 = vpack.c.b16 %v6000, %v5998
        %v6069 = vpack.c.b16 %v6001, %v5999
        %v6070 = vpack.c.b16 %v6004, %v6002
        %v6071 = vpack.c.b16 %v6005, %v6003
        %v6072 = vpack.c.b16 %v6008, %v6006
        %v6073 = vpack.c.b16 %v6009, %v6007
        %v6074 = vpack.c.b16 %v6012, %v6010
        %v6075 = vpack.c.b16 %v6013, %v6011
        %v6076 = vpack.c.b16 %v6016, %v6014
        %v6077 = vpack.c.b16 %v6017, %v6015
        %v6078 = vpack.c.b16 %v6020, %v6018
        %v6079 = vpack.c.b16 %v6021, %v6019
        %v6080 = vpack.c.b16 %v6024, %v6022
        %v6081 = vpack.c.b16 %v6025, %v6023
        %v6082 = vpack.c.b16 %v6028, %v6026
        %v6083 = vpack.c.b16 %v6029, %v6027
        %v6084 = vpack.c.b16 %v6032, %v6030
        %v6085 = vpack.c.b16 %v6033, %v6031
        %v6086 = vpack.c.b16 %v6036, %v6034
        %v6087 = vpack.c.b16 %v6037, %v6035
        %v6088 = vpack.c.b16 %v6040, %v6038
        %v6089 = vpack.c.b16 %v6041, %v6039
        %v6090 = vpack.c.b16 %v6044, %v6042
        %v6091 = vpack.c.b16 %v6045, %v6043
        %v6092 = vpack.c.b16 %v6048, %v6046
        %v6093 = vpack.c.b16 %v6049, %v6047
        %v6094 = vpack.c.b16 %v6052, %v6050
        %v6095 = vpack.c.b16 %v6053, %v6051
        %v6096 = vpack.c.b16 %v6056, %v6054
        %v6097 = vpack.c.b16 %v6057, %v6055
        %v6098 = vpack.c.b16 %v6060, %v6058
        %v6099 = vpack.c.b16 %v6061, %v6059
        %v6100 = vpack.c.b16 %v6064, %v6062
        %v6101 = vpack.c.b16 %v6065, %v6063
        %v6139 = vsel %vm1602, %v5950, 0
        %v6142 = vsel %vm1602, %v5953, 0
        %6144 = vmatprep.subr.bf16.mxu0 %v6081
        %6145 = vmatpush1.bf16.msra.mxu0 %v6080
        %6146 = vmatprep.subr.bf16.mxu0 %v6079
        %6147 = vmatpush1.bf16.msra.mxu0 %v6078
        %6148 = vmatprep.subr.bf16.mxu0 %v6077
        %6149 = vmatpush1.bf16.msra.mxu0 %v6076
        %6150 = vmatprep.subr.bf16.mxu0 %v6075
        %6151 = vmatpush1.bf16.msra.mxu0 %v6074
        %6152 = vmatprep.subr.bf16.mxu0 %v6073
        %6153 = vmatpush1.bf16.msra.mxu0 %v6072
        %6154 = vmatprep.subr.bf16.mxu0 %v6071
        %6155 = vmatpush1.bf16.msra.mxu0 %v6070
        %6156 = vmatprep.subr.bf16.mxu0 %v6069
        %6157 = vmatpush1.bf16.msra.mxu0 %v6068
        %6158 = vmatprep.subr.bf16.mxu0 %v6067
        %6159 = vmatpush1.bf16.msra.mxu0 %v6066
        %6160 = vmatprep.subr.bf16.mxu0 %v6097
        %6161 = vmatpush2.bf16.msra.mxu0 %v6096
        %6162 = vmatprep.subr.bf16.mxu0 %v6095
        %6163 = vmatpush2.bf16.msra.mxu0 %v6094
        %6164 = vmatprep.subr.bf16.mxu0 %v6093
        %6165 = vmatpush2.bf16.msra.mxu0 %v6092
        %6166 = vmatprep.subr.bf16.mxu0 %v6091
        %6167 = vmatpush2.bf16.msra.mxu0 %v6090
        %6168 = vmatprep.subr.bf16.mxu0 %v6089
        %6169 = vmatpush2.bf16.msra.mxu0 %v6088
        %6170 = vmatprep.subr.bf16.mxu0 %v6087
        %6171 = vmatpush2.bf16.msra.mxu0 %v6086
        %6172 = vmatprep.subr.bf16.mxu0 %v6085
        %6173 = vmatpush2.bf16.msra.mxu0 %v6084
        %6174 = vmatprep.subr.bf16.mxu0 %v6083
        %6175 = vmatpush2.bf16.msra.mxu0 %v6082
        %6176 = vmatprep.mubr.bf16.mxu0 %v5949
        %6177 = vmatmul.mubr.bf16.gmra.mxu0 %v5948
        %v6178 = vpop.f32.mrf.mxu0
        %v6179 = vadd.f32 %v5911, %v6178
        %v6180 = vpop.f32.mrf.mxu0
        %v6181 = vadd.f32 %v5911, %v6180
        %v6182 = vpop.f32.mrf.mxu0
        %v6183 = vadd.f32 %v5916, %v6182
        %v6184 = vpop.f32.mrf.mxu0
        %v6185 = vadd.f32 %v5916, %v6184
        %6186 = vmatprep.mubr.bf16.mxu0 %v5952
        %6187 = vmatmul.mubr.bf16.gmra.mxu0 %v5951
        %v6188 = vpop.f32.mrf.mxu0
        %v6189 = vadd.f32 %v5921, %v6188
        %v6190 = vpop.f32.mrf.mxu0
        %v6191 = vadd.f32 %v5921, %v6190
        %v6192 = vpop.f32.mrf.mxu0
        %v6193 = vadd.f32 %v5926, %v6192
        %v6194 = vpop.f32.mrf.mxu0
        %v6195 = vadd.f32 %v5926, %v6194
        %6196 = vdwg.mxu0
        %6197 = vmatprep.subr.bf16.mxu0 0
        %6198 = vmatpush1.bf16.msra.mxu0 0
        %6199 = vmatprep.subr.bf16.mxu0 0
        %6200 = vmatpush1.bf16.msra.mxu0 0
        %6201 = vmatprep.subr.bf16.mxu0 0
        %6202 = vmatpush1.bf16.msra.mxu0 0
        %6203 = vmatprep.subr.bf16.mxu0 0
        %6204 = vmatpush1.bf16.msra.mxu0 0
        %6205 = vmatprep.subr.bf16.mxu0 0
        %6206 = vmatpush1.bf16.msra.mxu0 0
        %6207 = vmatprep.subr.bf16.mxu0 0
        %6208 = vmatpush1.bf16.msra.mxu0 0
        %6209 = vmatprep.subr.bf16.mxu0 %v6101
        %6210 = vmatpush1.bf16.msra.mxu0 %v6100
        %6211 = vmatprep.subr.bf16.mxu0 %v6099
        %6212 = vmatpush1.bf16.msra.mxu0 %v6098
        %6213 = vmatprep.subr.bf16.mxu0 0
        %6214 = vmatpush2.bf16.msra.mxu0 0
        %6215 = vmatprep.subr.bf16.mxu0 0
        %6216 = vmatpush2.bf16.msra.mxu0 0
        %6217 = vmatprep.subr.bf16.mxu0 0
        %6218 = vmatpush2.bf16.msra.mxu0 0
        %6219 = vmatprep.subr.bf16.mxu0 0
        %6220 = vmatpush2.bf16.msra.mxu0 0
        %6221 = vmatprep.subr.bf16.mxu0 0
        %6222 = vmatpush2.bf16.msra.mxu0 0
        %6223 = vmatprep.subr.bf16.mxu0 0
        %6224 = vmatpush2.bf16.msra.mxu0 0
        %6225 = vmatprep.subr.bf16.mxu0 0
        %6226 = vmatpush2.bf16.msra.mxu0 0
        %6227 = vmatprep.subr.bf16.mxu0 0
        %6228 = vmatpush2.bf16.msra.mxu0 0
        %6229 = vmatprep.mubr.bf16.mxu0 0
        %6230 = vmatmul.mubr.bf16.gmra.mxu0 %v6139
        %v6231 = vpop.f32.mrf.mxu0
        %v6232 = vadd.f32 %v6179, %v6231
        %v6233 = vpop.f32.mrf.mxu0
        %v6234 = vadd.f32 %v6181, %v6233
        %v6235 = vpop.f32.mrf.mxu0
        %v6236 = vadd.f32 %v6183, %v6235
        %v6237 = vpop.f32.mrf.mxu0
        %v6238 = vadd.f32 %v6185, %v6237
        %6239 = vmatprep.mubr.bf16.mxu0 0
        %6240 = vmatmul.mubr.bf16.gmra.mxu0 %v6142
        %v6241 = vpop.f32.mrf.mxu0
        %v6242 = vadd.f32 %v6189, %v6241
        %v6243 = vpop.f32.mrf.mxu0
        %v6244 = vadd.f32 %v6191, %v6243
        %v6245 = vpop.f32.mrf.mxu0
        %v6246 = vadd.f32 %v6193, %v6245
        %v6247 = vpop.f32.mrf.mxu0
        %v6248 = vadd.f32 %v6195, %v6247
        %6249 = vdwg.mxu0
        %v6250 = vmax.f32 %v6232, 0.0
        %v6251 = vmax.f32 %v6234, 0.0
        %v6252 = vmax.f32 %v6236, 0.0
        %v6253 = vmax.f32 %v6238, 0.0
        %v6254 = vmax.f32 %v6242, 0.0
        %v6255 = vmax.f32 %v6244, 0.0
        %v6256 = vmax.f32 %v6246, 0.0
        %v6257 = vmax.f32 %v6248, 0.0
        %v6258 = vld [vmem:[%s4] sm:$0xff]
        %v6259 = vld [vmem:[%s4 + $0x8] sm:$0xf]
        %v6260 = vld [vmem:[%s5] sm:$0xff]
        %6261 = vrot.lane.b32.xlu0 %v6250, 17
        %v6262 = vpop.permute.xlu0 %6261
        %6263 = vrot.lane.b32.xlu0 %v6252, 17
        %v6264 = vpop.permute.xlu0 %6263
        %6265 = vrot.lane.b32.xlu0 %v6254, 17
        %v6266 = vpop.permute.xlu0 %6265
        %6267 = vrot.lane.b32.xlu0 %v6256, 17
        %v6268 = vpop.permute.xlu0 %6267
        %6269 = vrot.lane.b32.xlu0 %v6251, 17
        %v6270 = vpop.permute.xlu0 %6269
        %6271 = vrot.lane.b32.xlu0 %v6253, 17
        %v6272 = vpop.permute.xlu0 %6271
        %6273 = vrot.lane.b32.xlu0 %v6255, 17
        %v6274 = vpop.permute.xlu0 %6273
        %6275 = vrot.lane.b32.xlu0 %v6257, 17
        %v6276 = vpop.permute.xlu0 %6275
        %v6277 = vsel %vm356, %v6262, %v6270
        %v6278 = vsel %vm356, %v6264, %v6272
        %v6279 = vsel %vm356, %v6266, %v6274
        %v6280 = vsel %vm356, %v6268, %v6276
        %v6281 = vsel %vm356, %v6270, %v6262
        %v6282 = vsel %vm356, %v6272, %v6264
        %v6283 = vsel %vm356, %v6274, %v6266
        %v6284 = vsel %vm356, %v6276, %v6268
        %v6285 = vmul.f32 %v6281, %v296
        %v6286 = vmul.f32 %v6277, %v297
        %v6287 = vmul.f32 %v6282, %v296
        %v6288 = vmul.f32 %v6278, %v297
        %v6289 = vmul.f32 %v6283, %v296
        %v6290 = vmul.f32 %v6279, %v297
        %v6291 = vmul.f32 %v6284, %v296
        %v6292 = vmul.f32 %v6280, %v297
        %v6293 = vpack.c.bf16 %v6287, %v6285
        %v6294 = vpack.c.bf16 %v6288, %v6286
        %v6295 = vpack.c.bf16 %v6291, %v6289
        %v6296 = vpack.c.bf16 %v6292, %v6290
        %v6301 = vunpack.c.l.b16 %v6293
        %v6302 = vunpack.c.l.b16 %v6294
        %v6303 = vunpack.c.h.b16 %v6293
        %v6304 = vunpack.c.h.b16 %v6294
        %v6305 = vunpack.c.l.b16 %v6295
        %v6306 = vunpack.c.l.b16 %v6296
        %v6307 = vunpack.c.h.b16 %v6295
        %v6308 = vunpack.c.h.b16 %v6296
        %v6309 = vpack.c.b16 %v6302, %v6301
        %v6310 = vpack.c.b16 %v6304, %v6303
        %v6311 = vpack.c.b16 %v6306, %v6305
        %v6312 = vpack.c.b16 %v6308, %v6307
        %6317 = vst [vmem:[#allocation2] sm:$0xff] %v6309
        %6318 = vst [vmem:[#allocation2 + $0x8] sm:$0xff] %v6310
        %6319 = vst [vmem:[#allocation2 + $0x10] sm:$0xff] %v6311
        %6320 = vst [vmem:[#allocation2 + $0x18] sm:$0xff] %v6312
        %6321 = vrot.lane.b32.xlu0 %v6250, 16
        %v6322 = vpop.permute.xlu0 %6321
        %6323 = vrot.lane.b32.xlu0 %v6252, 16
        %v6324 = vpop.permute.xlu0 %6323
        %6325 = vrot.lane.b32.xlu0 %v6254, 16
        %v6326 = vpop.permute.xlu0 %6325
        %6327 = vrot.lane.b32.xlu0 %v6256, 16
        %v6328 = vpop.permute.xlu0 %6327
        %6329 = vrot.lane.b32.xlu0 %v6251, 16
        %v6330 = vpop.permute.xlu0 %6329
        %6331 = vrot.lane.b32.xlu0 %v6253, 16
        %v6332 = vpop.permute.xlu0 %6331
        %6333 = vrot.lane.b32.xlu0 %v6255, 16
        %v6334 = vpop.permute.xlu0 %6333
        %6335 = vrot.lane.b32.xlu0 %v6257, 16
        %v6336 = vpop.permute.xlu0 %6335
        %v6337 = vsel %vm387, %v6322, %v6330
        %v6338 = vsel %vm387, %v6324, %v6332
        %v6339 = vsel %vm387, %v6326, %v6334
        %v6340 = vsel %vm387, %v6328, %v6336
        %v6341 = vsel %vm387, %v6330, %v6322
        %v6342 = vsel %vm387, %v6332, %v6324
        %v6343 = vsel %vm387, %v6334, %v6326
        %v6344 = vsel %vm387, %v6336, %v6328
        %v6345 = vmul.f32 %v6341, %v300
        %v6346 = vmul.f32 %v6337, %v301
        %v6347 = vmul.f32 %v6342, %v300
        %v6348 = vmul.f32 %v6338, %v301
        %v6349 = vmul.f32 %v6343, %v300
        %v6350 = vmul.f32 %v6339, %v301
        %v6351 = vmul.f32 %v6344, %v300
        %v6352 = vmul.f32 %v6340, %v301
        %v6353 = vpack.c.bf16 %v6347, %v6345
        %v6354 = vpack.c.bf16 %v6348, %v6346
        %v6355 = vpack.c.bf16 %v6351, %v6349
        %v6356 = vpack.c.bf16 %v6352, %v6350
        %v6361 = vunpack.c.l.b16 %v6353
        %v6362 = vunpack.c.l.b16 %v6354
        %v6363 = vunpack.c.h.b16 %v6353
        %v6364 = vunpack.c.h.b16 %v6354
        %v6365 = vunpack.c.l.b16 %v6355
        %v6366 = vunpack.c.l.b16 %v6356
        %v6367 = vunpack.c.h.b16 %v6355
        %v6368 = vunpack.c.h.b16 %v6356
        %v6369 = vpack.c.b16 %v6362, %v6361
        %v6370 = vpack.c.b16 %v6364, %v6363
        %v6371 = vpack.c.b16 %v6366, %v6365
        %v6372 = vpack.c.b16 %v6368, %v6367
        %6377 = vst [vmem:[#allocation2 + $0x20] sm:$0xff] %v6369
        %6378 = vst [vmem:[#allocation2 + $0x28] sm:$0xff] %v6370
        %6379 = vst [vmem:[#allocation2 + $0x30] sm:$0xff] %v6371
        %6380 = vst [vmem:[#allocation2 + $0x38] sm:$0xff] %v6372
        %6381 = vrot.lane.b32.xlu0 %v6250, 15
        %v6382 = vpop.permute.xlu0 %6381
        %6383 = vrot.lane.b32.xlu0 %v6252, 15
        %v6384 = vpop.permute.xlu0 %6383
        %6385 = vrot.lane.b32.xlu0 %v6254, 15
        %v6386 = vpop.permute.xlu0 %6385
        %6387 = vrot.lane.b32.xlu0 %v6256, 15
        %v6388 = vpop.permute.xlu0 %6387
        %6389 = vrot.lane.b32.xlu0 %v6251, 15
        %v6390 = vpop.permute.xlu0 %6389
        %6391 = vrot.lane.b32.xlu0 %v6253, 15
        %v6392 = vpop.permute.xlu0 %6391
        %6393 = vrot.lane.b32.xlu0 %v6255, 15
        %v6394 = vpop.permute.xlu0 %6393
        %6395 = vrot.lane.b32.xlu0 %v6257, 15
        %v6396 = vpop.permute.xlu0 %6395
        %v6397 = vsel %vm418, %v6382, %v6390
        %v6398 = vsel %vm418, %v6384, %v6392
        %v6399 = vsel %vm418, %v6386, %v6394
        %v6400 = vsel %vm418, %v6388, %v6396
        %v6401 = vsel %vm418, %v6390, %v6382
        %v6402 = vsel %vm418, %v6392, %v6384
        %v6403 = vsel %vm418, %v6394, %v6386
        %v6404 = vsel %vm418, %v6396, %v6388
        %v6405 = vmul.f32 %v6401, %v308
        %v6406 = vmul.f32 %v6397, %v309
        %v6407 = vmul.f32 %v6402, %v308
        %v6408 = vmul.f32 %v6398, %v309
        %v6409 = vmul.f32 %v6403, %v308
        %v6410 = vmul.f32 %v6399, %v309
        %v6411 = vmul.f32 %v6404, %v308
        %v6412 = vmul.f32 %v6400, %v309
        %v6413 = vpack.c.bf16 %v6407, %v6405
        %v6414 = vpack.c.bf16 %v6408, %v6406
        %v6415 = vpack.c.bf16 %v6411, %v6409
        %v6416 = vpack.c.bf16 %v6412, %v6410
        %v6421 = vunpack.c.l.b16 %v6413
        %v6422 = vunpack.c.l.b16 %v6414
        %v6423 = vunpack.c.h.b16 %v6413
        %v6424 = vunpack.c.h.b16 %v6414
        %v6425 = vunpack.c.l.b16 %v6415
        %v6426 = vunpack.c.l.b16 %v6416
        %v6427 = vunpack.c.h.b16 %v6415
        %v6428 = vunpack.c.h.b16 %v6416
        %v6429 = vpack.c.b16 %v6422, %v6421
        %v6430 = vpack.c.b16 %v6424, %v6423
        %v6431 = vpack.c.b16 %v6426, %v6425
        %v6432 = vpack.c.b16 %v6428, %v6427
        %6437 = vst [vmem:[#allocation2 + $0x40] sm:$0xff] %v6429
        %6438 = vst [vmem:[#allocation2 + $0x48] sm:$0xff] %v6430
        %6439 = vst [vmem:[#allocation2 + $0x50] sm:$0xff] %v6431
        %6440 = vst [vmem:[#allocation2 + $0x58] sm:$0xff] %v6432
        %6441 = vrot.lane.b32.xlu0 %v6250, 1
        %v6442 = vpop.permute.xlu0 %6441
        %6443 = vrot.lane.b32.xlu0 %v6252, 1
        %v6444 = vpop.permute.xlu0 %6443
        %6445 = vrot.lane.b32.xlu0 %v6254, 1
        %v6446 = vpop.permute.xlu0 %6445
        %6447 = vrot.lane.b32.xlu0 %v6256, 1
        %v6448 = vpop.permute.xlu0 %6447
        %6449 = vrot.lane.b32.xlu0 %v6251, 1
        %v6450 = vpop.permute.xlu0 %6449
        %6451 = vrot.lane.b32.xlu0 %v6253, 1
        %v6452 = vpop.permute.xlu0 %6451
        %6453 = vrot.lane.b32.xlu0 %v6255, 1
        %v6454 = vpop.permute.xlu0 %6453
        %6455 = vrot.lane.b32.xlu0 %v6257, 1
        %v6456 = vpop.permute.xlu0 %6455
        %v6457 = vsel %vm449, %v6442, %v6450
        %v6458 = vsel %vm449, %v6444, %v6452
        %v6459 = vsel %vm449, %v6446, %v6454
        %v6460 = vsel %vm449, %v6448, %v6456
        %v6461 = vsel %vm449, %v6450, %v6442
        %v6462 = vsel %vm449, %v6452, %v6444
        %v6463 = vsel %vm449, %v6454, %v6446
        %v6464 = vsel %vm449, %v6456, %v6448
        %v6465 = vmul.f32 %v6461, %v312
        %v6466 = vmul.f32 %v6457, %v313
        %v6467 = vmul.f32 %v6462, %v312
        %v6468 = vmul.f32 %v6458, %v313
        %v6469 = vmul.f32 %v6463, %v312
        %v6470 = vmul.f32 %v6459, %v313
        %v6471 = vmul.f32 %v6464, %v312
        %v6472 = vmul.f32 %v6460, %v313
        %v6473 = vpack.c.bf16 %v6467, %v6465
        %v6474 = vpack.c.bf16 %v6468, %v6466
        %v6475 = vpack.c.bf16 %v6471, %v6469
        %v6476 = vpack.c.bf16 %v6472, %v6470
        %v6481 = vunpack.c.l.b16 %v6473
        %v6482 = vunpack.c.l.b16 %v6474
        %v6483 = vunpack.c.h.b16 %v6473
        %v6484 = vunpack.c.h.b16 %v6474
        %v6485 = vunpack.c.l.b16 %v6475
        %v6486 = vunpack.c.l.b16 %v6476
        %v6487 = vunpack.c.h.b16 %v6475
        %v6488 = vunpack.c.h.b16 %v6476
        %v6489 = vpack.c.b16 %v6482, %v6481
        %v6490 = vpack.c.b16 %v6484, %v6483
        %v6491 = vpack.c.b16 %v6486, %v6485
        %v6492 = vpack.c.b16 %v6488, %v6487
        %6497 = vst [vmem:[#allocation2 + $0x60] sm:$0xff] %v6489
        %6498 = vst [vmem:[#allocation2 + $0x68] sm:$0xff] %v6490
        %6499 = vst [vmem:[#allocation2 + $0x70] sm:$0xff] %v6491
        %6500 = vst [vmem:[#allocation2 + $0x78] sm:$0xff] %v6492
        %v6501 = vpack.c.bf16 %v6252, %v6250
        %v6502 = vpack.c.bf16 %v6253, %v6251
        %v6503 = vpack.c.bf16 %v6256, %v6254
        %v6504 = vpack.c.bf16 %v6257, %v6255
        %v6509 = vunpack.c.l.b16 %v6501
        %v6510 = vunpack.c.l.b16 %v6502
        %v6511 = vunpack.c.h.b16 %v6501
        %v6512 = vunpack.c.h.b16 %v6502
        %v6513 = vunpack.c.l.b16 %v6503
        %v6514 = vunpack.c.l.b16 %v6504
        %v6515 = vunpack.c.h.b16 %v6503
        %v6516 = vunpack.c.h.b16 %v6504
        %v6517 = vpack.c.b16 %v6510, %v6509
        %v6518 = vpack.c.b16 %v6512, %v6511
        %v6519 = vpack.c.b16 %v6514, %v6513
        %v6520 = vpack.c.b16 %v6516, %v6515
        %6525 = vst [vmem:[#allocation2 + $0x80] sm:$0xff] %v6517
        %6526 = vst [vmem:[#allocation2 + $0x88] sm:$0xff] %v6518
        %6527 = vst [vmem:[#allocation2 + $0x90] sm:$0xff] %v6519
        %6528 = vst [vmem:[#allocation2 + $0x98] sm:$0xff] %v6520
        %6529 = vrot.lane.b32.xlu0 %v6250, 127
        %v6530 = vpop.permute.xlu0 %6529
        %6531 = vrot.lane.b32.xlu0 %v6252, 127
        %v6532 = vpop.permute.xlu0 %6531
        %6533 = vrot.lane.b32.xlu0 %v6254, 127
        %v6534 = vpop.permute.xlu0 %6533
        %6535 = vrot.lane.b32.xlu0 %v6256, 127
        %v6536 = vpop.permute.xlu0 %6535
        %6537 = vrot.lane.b32.xlu0 %v6251, 127
        %v6538 = vpop.permute.xlu0 %6537
        %6539 = vrot.lane.b32.xlu0 %v6253, 127
        %v6540 = vpop.permute.xlu0 %6539
        %6541 = vrot.lane.b32.xlu0 %v6255, 127
        %v6542 = vpop.permute.xlu0 %6541
        %6543 = vrot.lane.b32.xlu0 %v6257, 127
        %v6544 = vpop.permute.xlu0 %6543
        %v6545 = vsel %vm494, %v6530, %v6538
        %v6546 = vsel %vm494, %v6532, %v6540
        %v6547 = vsel %vm494, %v6534, %v6542
        %v6548 = vsel %vm494, %v6536, %v6544
        %v6549 = vsel %vm494, %v6538, %v6530
        %v6550 = vsel %vm494, %v6540, %v6532
        %v6551 = vsel %vm494, %v6542, %v6534
        %v6552 = vsel %vm494, %v6544, %v6536
        %v6553 = vmul.f32 %v6545, %v316
        %v6554 = vmul.f32 %v6549, %v317
        %v6555 = vmul.f32 %v6546, %v316
        %v6556 = vmul.f32 %v6550, %v317
        %v6557 = vmul.f32 %v6547, %v316
        %v6558 = vmul.f32 %v6551, %v317
        %v6559 = vmul.f32 %v6548, %v316
        %v6560 = vmul.f32 %v6552, %v317
        %v6561 = vpack.c.bf16 %v6555, %v6553
        %v6562 = vpack.c.bf16 %v6556, %v6554
        %v6563 = vpack.c.bf16 %v6559, %v6557
        %v6564 = vpack.c.bf16 %v6560, %v6558
        %v6569 = vunpack.c.l.b16 %v6561
        %v6570 = vunpack.c.l.b16 %v6562
        %v6571 = vunpack.c.h.b16 %v6561
        %v6572 = vunpack.c.h.b16 %v6562
        %v6573 = vunpack.c.l.b16 %v6563
        %v6574 = vunpack.c.l.b16 %v6564
        %v6575 = vunpack.c.h.b16 %v6563
        %v6576 = vunpack.c.h.b16 %v6564
        %v6577 = vpack.c.b16 %v6570, %v6569
        %v6578 = vpack.c.b16 %v6572, %v6571
        %v6579 = vpack.c.b16 %v6574, %v6573
        %v6580 = vpack.c.b16 %v6576, %v6575
        %6585 = vst [vmem:[#allocation2 + $0xa0] sm:$0xff] %v6577
        %6586 = vst [vmem:[#allocation2 + $0xa8] sm:$0xff] %v6578
        %6587 = vst [vmem:[#allocation2 + $0xb0] sm:$0xff] %v6579
        %6588 = vst [vmem:[#allocation2 + $0xb8] sm:$0xff] %v6580
        %6589 = vrot.lane.b32.xlu0 %v6250, 113
        %v6590 = vpop.permute.xlu0 %6589
        %6591 = vrot.lane.b32.xlu0 %v6252, 113
        %v6592 = vpop.permute.xlu0 %6591
        %6593 = vrot.lane.b32.xlu0 %v6254, 113
        %v6594 = vpop.permute.xlu0 %6593
        %6595 = vrot.lane.b32.xlu0 %v6256, 113
        %v6596 = vpop.permute.xlu0 %6595
        %6597 = vrot.lane.b32.xlu0 %v6251, 113
        %v6598 = vpop.permute.xlu0 %6597
        %6599 = vrot.lane.b32.xlu0 %v6253, 113
        %v6600 = vpop.permute.xlu0 %6599
        %6601 = vrot.lane.b32.xlu0 %v6255, 113
        %v6602 = vpop.permute.xlu0 %6601
        %6603 = vrot.lane.b32.xlu0 %v6257, 113
        %v6604 = vpop.permute.xlu0 %6603
        %v6605 = vsel %vm525, %v6590, %v6598
        %v6606 = vsel %vm525, %v6592, %v6600
        %v6607 = vsel %vm525, %v6594, %v6602
        %v6608 = vsel %vm525, %v6596, %v6604
        %v6609 = vsel %vm525, %v6598, %v6590
        %v6610 = vsel %vm525, %v6600, %v6592
        %v6611 = vsel %vm525, %v6602, %v6594
        %v6612 = vsel %vm525, %v6604, %v6596
        %v6613 = vmul.f32 %v6605, %v324
        %v6614 = vmul.f32 %v6609, %v325
        %v6615 = vmul.f32 %v6606, %v324
        %v6616 = vmul.f32 %v6610, %v325
        %v6617 = vmul.f32 %v6607, %v324
        %v6618 = vmul.f32 %v6611, %v325
        %v6619 = vmul.f32 %v6608, %v324
        %v6620 = vmul.f32 %v6612, %v325
        %v6621 = vpack.c.bf16 %v6615, %v6613
        %v6622 = vpack.c.bf16 %v6616, %v6614
        %v6623 = vpack.c.bf16 %v6619, %v6617
        %v6624 = vpack.c.bf16 %v6620, %v6618
        %v6629 = vunpack.c.l.b16 %v6621
        %v6630 = vunpack.c.l.b16 %v6622
        %v6631 = vunpack.c.h.b16 %v6621
        %v6632 = vunpack.c.h.b16 %v6622
        %v6633 = vunpack.c.l.b16 %v6623
        %v6634 = vunpack.c.l.b16 %v6624
        %v6635 = vunpack.c.h.b16 %v6623
        %v6636 = vunpack.c.h.b16 %v6624
        %v6637 = vpack.c.b16 %v6630, %v6629
        %v6638 = vpack.c.b16 %v6632, %v6631
        %v6639 = vpack.c.b16 %v6634, %v6633
        %v6640 = vpack.c.b16 %v6636, %v6635
        %6645 = vst [vmem:[#allocation2 + $0xc0] sm:$0xff] %v6637
        %6646 = vst [vmem:[#allocation2 + $0xc8] sm:$0xff] %v6638
        %6647 = vst [vmem:[#allocation2 + $0xd0] sm:$0xff] %v6639
        %6648 = vst [vmem:[#allocation2 + $0xd8] sm:$0xff] %v6640
        %6649 = vrot.lane.b32.xlu0 %v6250, 112
        %v6650 = vpop.permute.xlu0 %6649
        %6651 = vrot.lane.b32.xlu0 %v6252, 112
        %v6652 = vpop.permute.xlu0 %6651
        %6653 = vrot.lane.b32.xlu0 %v6254, 112
        %v6654 = vpop.permute.xlu0 %6653
        %6655 = vrot.lane.b32.xlu0 %v6256, 112
        %v6656 = vpop.permute.xlu0 %6655
        %6657 = vrot.lane.b32.xlu0 %v6251, 112
        %v6658 = vpop.permute.xlu0 %6657
        %6659 = vrot.lane.b32.xlu0 %v6253, 112
        %v6660 = vpop.permute.xlu0 %6659
        %6661 = vrot.lane.b32.xlu0 %v6255, 112
        %v6662 = vpop.permute.xlu0 %6661
        %6663 = vrot.lane.b32.xlu0 %v6257, 112
        %v6664 = vpop.permute.xlu0 %6663
        %v6665 = vsel %vm556, %v6650, %v6658
        %v6666 = vsel %vm556, %v6652, %v6660
        %v6667 = vsel %vm556, %v6654, %v6662
        %v6668 = vsel %vm556, %v6656, %v6664
        %v6669 = vsel %vm556, %v6658, %v6650
        %v6670 = vsel %vm556, %v6660, %v6652
        %v6671 = vsel %vm556, %v6662, %v6654
        %v6672 = vsel %vm556, %v6664, %v6656
        %v6673 = vmul.f32 %v6665, %v328
        %v6674 = vmul.f32 %v6669, %v329
        %v6675 = vmul.f32 %v6666, %v328
        %v6676 = vmul.f32 %v6670, %v329
        %v6677 = vmul.f32 %v6667, %v328
        %v6678 = vmul.f32 %v6671, %v329
        %v6679 = vmul.f32 %v6668, %v328
        %v6680 = vmul.f32 %v6672, %v329
        %v6681 = vpack.c.bf16 %v6675, %v6673
        %v6682 = vpack.c.bf16 %v6676, %v6674
        %v6683 = vpack.c.bf16 %v6679, %v6677
        %v6684 = vpack.c.bf16 %v6680, %v6678
        %v6689 = vunpack.c.l.b16 %v6681
        %v6690 = vunpack.c.l.b16 %v6682
        %v6691 = vunpack.c.h.b16 %v6681
        %v6692 = vunpack.c.h.b16 %v6682
        %v6693 = vunpack.c.l.b16 %v6683
        %v6694 = vunpack.c.l.b16 %v6684
        %v6695 = vunpack.c.h.b16 %v6683
        %v6696 = vunpack.c.h.b16 %v6684
        %v6697 = vpack.c.b16 %v6690, %v6689
        %v6698 = vpack.c.b16 %v6692, %v6691
        %v6699 = vpack.c.b16 %v6694, %v6693
        %v6700 = vpack.c.b16 %v6696, %v6695
        %6705 = vst [vmem:[#allocation2 + $0xe0] sm:$0xff] %v6697
        %6706 = vst [vmem:[#allocation2 + $0xe8] sm:$0xff] %v6698
        %6707 = vst [vmem:[#allocation2 + $0xf0] sm:$0xff] %v6699
        %6708 = vst [vmem:[#allocation2 + $0xf8] sm:$0xff] %v6700
        %6709 = vrot.lane.b32.xlu0 %v6250, 111
        %v6710 = vpop.permute.xlu0 %6709
        %6711 = vrot.lane.b32.xlu0 %v6252, 111
        %v6712 = vpop.permute.xlu0 %6711
        %6713 = vrot.lane.b32.xlu0 %v6254, 111
        %v6714 = vpop.permute.xlu0 %6713
        %6715 = vrot.lane.b32.xlu0 %v6256, 111
        %v6716 = vpop.permute.xlu0 %6715
        %6717 = vrot.lane.b32.xlu0 %v6251, 111
        %v6718 = vpop.permute.xlu0 %6717
        %6719 = vrot.lane.b32.xlu0 %v6253, 111
        %v6720 = vpop.permute.xlu0 %6719
        %6721 = vrot.lane.b32.xlu0 %v6255, 111
        %v6722 = vpop.permute.xlu0 %6721
        %6723 = vrot.lane.b32.xlu0 %v6257, 111
        %v6724 = vpop.permute.xlu0 %6723
        %v6725 = vsel %vm587, %v6710, %v6718
        %v6726 = vsel %vm587, %v6712, %v6720
        %v6727 = vsel %vm587, %v6714, %v6722
        %v6728 = vsel %vm587, %v6716, %v6724
        %v6729 = vsel %vm587, %v6718, %v6710
        %v6730 = vsel %vm587, %v6720, %v6712
        %v6731 = vsel %vm587, %v6722, %v6714
        %v6732 = vsel %vm587, %v6724, %v6716
        %v6733 = vmul.f32 %v6725, %v334
        %v6734 = vmul.f32 %v6729, %v335
        %v6735 = vmul.f32 %v6726, %v334
        %v6736 = vmul.f32 %v6730, %v335
        %v6737 = vmul.f32 %v6727, %v334
        %v6738 = vmul.f32 %v6731, %v335
        %v6739 = vmul.f32 %v6728, %v334
        %v6740 = vmul.f32 %v6732, %v335
        %v6741 = vpack.c.bf16 %v6735, %v6733
        %v6742 = vpack.c.bf16 %v6736, %v6734
        %v6743 = vpack.c.bf16 %v6739, %v6737
        %v6744 = vpack.c.bf16 %v6740, %v6738
        %v6749 = vunpack.c.l.b16 %v6741
        %v6750 = vunpack.c.l.b16 %v6742
        %v6751 = vunpack.c.h.b16 %v6741
        %v6752 = vunpack.c.h.b16 %v6742
        %v6753 = vunpack.c.l.b16 %v6743
        %v6754 = vunpack.c.l.b16 %v6744
        %v6755 = vunpack.c.h.b16 %v6743
        %v6756 = vunpack.c.h.b16 %v6744
        %v6757 = vpack.c.b16 %v6750, %v6749
        %v6758 = vpack.c.b16 %v6752, %v6751
        %v6759 = vpack.c.b16 %v6754, %v6753
        %v6760 = vpack.c.b16 %v6756, %v6755
        %6765 = vst [vmem:[#allocation2 + $0x100] sm:$0xff] %v6757
        %6766 = vst [vmem:[#allocation2 + $0x108] sm:$0xff] %v6758
        %6767 = vst [vmem:[#allocation2 + $0x110] sm:$0xff] %v6759
        %6768 = vst [vmem:[#allocation2 + $0x118] sm:$0xff] %v6760
        %v6769 = vld [vmem:[#allocation2] sm:$0xff]
        %v6770 = vld [vmem:[#allocation2 + $0x8] sm:$0xff]
        %v6771 = vld [vmem:[#allocation2 + $0x10] sm:$0xff]
        %v6772 = vld [vmem:[#allocation2 + $0x18] sm:$0xff]
        %v6773 = vld [vmem:[#allocation2 + $0x20] sm:$0xff]
        %v6774 = vld [vmem:[#allocation2 + $0x28] sm:$0xff]
        %v6775 = vld [vmem:[#allocation2 + $0x30] sm:$0xff]
        %v6776 = vld [vmem:[#allocation2 + $0x38] sm:$0xff]
        %v6777 = vld [vmem:[#allocation2 + $0x40] sm:$0xff]
        %v6778 = vld [vmem:[#allocation2 + $0x48] sm:$0xff]
        %v6779 = vld [vmem:[#allocation2 + $0x50] sm:$0xff]
        %v6780 = vld [vmem:[#allocation2 + $0x58] sm:$0xff]
        %v6781 = vld [vmem:[#allocation2 + $0x60] sm:$0xff]
        %v6782 = vld [vmem:[#allocation2 + $0x68] sm:$0xff]
        %v6783 = vld [vmem:[#allocation2 + $0x70] sm:$0xff]
        %v6784 = vld [vmem:[#allocation2 + $0x78] sm:$0xff]
        %v6785 = vld [vmem:[#allocation2 + $0x80] sm:$0xff]
        %v6786 = vld [vmem:[#allocation2 + $0x88] sm:$0xff]
        %v6787 = vld [vmem:[#allocation2 + $0x90] sm:$0xff]
        %v6788 = vld [vmem:[#allocation2 + $0x98] sm:$0xff]
        %v6789 = vld [vmem:[#allocation2 + $0xa0] sm:$0xff]
        %v6790 = vld [vmem:[#allocation2 + $0xa8] sm:$0xff]
        %v6791 = vld [vmem:[#allocation2 + $0xb0] sm:$0xff]
        %v6792 = vld [vmem:[#allocation2 + $0xb8] sm:$0xff]
        %v6793 = vld [vmem:[#allocation2 + $0xc0] sm:$0xff]
        %v6794 = vld [vmem:[#allocation2 + $0xc8] sm:$0xff]
        %v6795 = vld [vmem:[#allocation2 + $0xd0] sm:$0xff]
        %v6796 = vld [vmem:[#allocation2 + $0xd8] sm:$0xff]
        %v6797 = vld [vmem:[#allocation2 + $0xe0] sm:$0xff]
        %v6798 = vld [vmem:[#allocation2 + $0xe8] sm:$0xff]
        %v6799 = vld [vmem:[#allocation2 + $0xf0] sm:$0xff]
        %v6800 = vld [vmem:[#allocation2 + $0xf8] sm:$0xff]
        %v6801 = vld [vmem:[#allocation2 + $0x100] sm:$0xff]
        %v6802 = vld [vmem:[#allocation2 + $0x108] sm:$0xff]
        %v6803 = vld [vmem:[#allocation2 + $0x110] sm:$0xff]
        %v6804 = vld [vmem:[#allocation2 + $0x118] sm:$0xff]
        %6806 = vset.pattern.permute.xlu0 0
        %6807 = vperm.xlu0 %6806, %v6260
        %v6808 = vpop.permute.xlu0 %6807
        %v6812 = vunpack.c.l.b16 %v6258
        %v6813 = vunpack.c.h.b16 %v6258
        %v6814 = vunpack.c.l.b16 %v6259
        %v6815 = vpack.c.b16 %v6812, %v6812
        %v6816 = vpack.c.b16 %v6813, %v6813
        %v6817 = vpack.c.b16 %v6814, %v6814
        %v6856 = vunpack.c.l.b16 %v6769
        %v6857 = vunpack.c.h.b16 %v6769
        %v6858 = vunpack.c.l.b16 %v6770
        %v6859 = vunpack.c.h.b16 %v6770
        %v6860 = vunpack.c.l.b16 %v6771
        %v6861 = vunpack.c.h.b16 %v6771
        %v6862 = vunpack.c.l.b16 %v6772
        %v6863 = vunpack.c.h.b16 %v6772
        %v6864 = vunpack.c.l.b16 %v6773
        %v6865 = vunpack.c.h.b16 %v6773
        %v6866 = vunpack.c.l.b16 %v6774
        %v6867 = vunpack.c.h.b16 %v6774
        %v6868 = vunpack.c.l.b16 %v6775
        %v6869 = vunpack.c.h.b16 %v6775
        %v6870 = vunpack.c.l.b16 %v6776
        %v6871 = vunpack.c.h.b16 %v6776
        %v6872 = vunpack.c.l.b16 %v6777
        %v6873 = vunpack.c.h.b16 %v6777
        %v6874 = vunpack.c.l.b16 %v6778
        %v6875 = vunpack.c.h.b16 %v6778
        %v6876 = vunpack.c.l.b16 %v6779
        %v6877 = vunpack.c.h.b16 %v6779
        %v6878 = vunpack.c.l.b16 %v6780
        %v6879 = vunpack.c.h.b16 %v6780
        %v6880 = vunpack.c.l.b16 %v6781
        %v6881 = vunpack.c.h.b16 %v6781
        %v6882 = vunpack.c.l.b16 %v6782
        %v6883 = vunpack.c.h.b16 %v6782
        %v6884 = vunpack.c.l.b16 %v6783
        %v6885 = vunpack.c.h.b16 %v6783
        %v6886 = vunpack.c.l.b16 %v6784
        %v6887 = vunpack.c.h.b16 %v6784
        %v6888 = vunpack.c.l.b16 %v6785
        %v6889 = vunpack.c.h.b16 %v6785
        %v6890 = vunpack.c.l.b16 %v6786
        %v6891 = vunpack.c.h.b16 %v6786
        %v6892 = vunpack.c.l.b16 %v6787
        %v6893 = vunpack.c.h.b16 %v6787
        %v6894 = vunpack.c.l.b16 %v6788
        %v6895 = vunpack.c.h.b16 %v6788
        %v6896 = vunpack.c.l.b16 %v6789
        %v6897 = vunpack.c.h.b16 %v6789
        %v6898 = vunpack.c.l.b16 %v6790
        %v6899 = vunpack.c.h.b16 %v6790
        %v6900 = vunpack.c.l.b16 %v6791
        %v6901 = vunpack.c.h.b16 %v6791
        %v6902 = vunpack.c.l.b16 %v6792
        %v6903 = vunpack.c.h.b16 %v6792
        %v6904 = vunpack.c.l.b16 %v6793
        %v6905 = vunpack.c.h.b16 %v6793
        %v6906 = vunpack.c.l.b16 %v6794
        %v6907 = vunpack.c.h.b16 %v6794
        %v6908 = vunpack.c.l.b16 %v6795
        %v6909 = vunpack.c.h.b16 %v6795
        %v6910 = vunpack.c.l.b16 %v6796
        %v6911 = vunpack.c.h.b16 %v6796
        %v6912 = vunpack.c.l.b16 %v6797
        %v6913 = vunpack.c.h.b16 %v6797
        %v6914 = vunpack.c.l.b16 %v6798
        %v6915 = vunpack.c.h.b16 %v6798
        %v6916 = vunpack.c.l.b16 %v6799
        %v6917 = vunpack.c.h.b16 %v6799
        %v6918 = vunpack.c.l.b16 %v6800
        %v6919 = vunpack.c.h.b16 %v6800
        %v6920 = vunpack.c.l.b16 %v6801
        %v6921 = vunpack.c.h.b16 %v6801
        %v6922 = vunpack.c.l.b16 %v6802
        %v6923 = vunpack.c.h.b16 %v6802
        %v6924 = vunpack.c.l.b16 %v6803
        %v6925 = vunpack.c.h.b16 %v6803
        %v6926 = vunpack.c.l.b16 %v6804
        %v6927 = vunpack.c.h.b16 %v6804
        %v6928 = vpack.c.b16 %v6858, %v6856
        %v6929 = vpack.c.b16 %v6859, %v6857
        %v6930 = vpack.c.b16 %v6862, %v6860
        %v6931 = vpack.c.b16 %v6863, %v6861
        %v6932 = vpack.c.b16 %v6866, %v6864
        %v6933 = vpack.c.b16 %v6867, %v6865
        %v6934 = vpack.c.b16 %v6870, %v6868
        %v6935 = vpack.c.b16 %v6871, %v6869
        %v6936 = vpack.c.b16 %v6874, %v6872
        %v6937 = vpack.c.b16 %v6875, %v6873
        %v6938 = vpack.c.b16 %v6878, %v6876
        %v6939 = vpack.c.b16 %v6879, %v6877
        %v6940 = vpack.c.b16 %v6882, %v6880
        %v6941 = vpack.c.b16 %v6883, %v6881
        %v6942 = vpack.c.b16 %v6886, %v6884
        %v6943 = vpack.c.b16 %v6887, %v6885
        %v6944 = vpack.c.b16 %v6890, %v6888
        %v6945 = vpack.c.b16 %v6891, %v6889
        %v6946 = vpack.c.b16 %v6894, %v6892
        %v6947 = vpack.c.b16 %v6895, %v6893
        %v6948 = vpack.c.b16 %v6898, %v6896
        %v6949 = vpack.c.b16 %v6899, %v6897
        %v6950 = vpack.c.b16 %v6902, %v6900
        %v6951 = vpack.c.b16 %v6903, %v6901
        %v6952 = vpack.c.b16 %v6906, %v6904
        %v6953 = vpack.c.b16 %v6907, %v6905
        %v6954 = vpack.c.b16 %v6910, %v6908
        %v6955 = vpack.c.b16 %v6911, %v6909
        %v6956 = vpack.c.b16 %v6914, %v6912
        %v6957 = vpack.c.b16 %v6915, %v6913
        %v6958 = vpack.c.b16 %v6918, %v6916
        %v6959 = vpack.c.b16 %v6919, %v6917
        %v6960 = vpack.c.b16 %v6922, %v6920
        %v6961 = vpack.c.b16 %v6923, %v6921
        %v6962 = vpack.c.b16 %v6926, %v6924
        %v6963 = vpack.c.b16 %v6927, %v6925
        %v7001 = vsel %vm1602, %v6817, 0
        %7003 = vmatprep.subr.bf16.mxu0 %v6943
        %7004 = vmatpush1.bf16.msra.mxu0 %v6942
        %7005 = vmatprep.subr.bf16.mxu0 %v6941
        %7006 = vmatpush1.bf16.msra.mxu0 %v6940
        %7007 = vmatprep.subr.bf16.mxu0 %v6939
        %7008 = vmatpush1.bf16.msra.mxu0 %v6938
        %7009 = vmatprep.subr.bf16.mxu0 %v6937
        %7010 = vmatpush1.bf16.msra.mxu0 %v6936
        %7011 = vmatprep.subr.bf16.mxu0 %v6935
        %7012 = vmatpush1.bf16.msra.mxu0 %v6934
        %7013 = vmatprep.subr.bf16.mxu0 %v6933
        %7014 = vmatpush1.bf16.msra.mxu0 %v6932
        %7015 = vmatprep.subr.bf16.mxu0 %v6931
        %7016 = vmatpush1.bf16.msra.mxu0 %v6930
        %7017 = vmatprep.subr.bf16.mxu0 %v6929
        %7018 = vmatpush1.bf16.msra.mxu0 %v6928
        %7019 = vmatprep.subr.bf16.mxu0 %v6959
        %7020 = vmatpush2.bf16.msra.mxu0 %v6958
        %7021 = vmatprep.subr.bf16.mxu0 %v6957
        %7022 = vmatpush2.bf16.msra.mxu0 %v6956
        %7023 = vmatprep.subr.bf16.mxu0 %v6955
        %7024 = vmatpush2.bf16.msra.mxu0 %v6954
        %7025 = vmatprep.subr.bf16.mxu0 %v6953
        %7026 = vmatpush2.bf16.msra.mxu0 %v6952
        %7027 = vmatprep.subr.bf16.mxu0 %v6951
        %7028 = vmatpush2.bf16.msra.mxu0 %v6950
        %7029 = vmatprep.subr.bf16.mxu0 %v6949
        %7030 = vmatpush2.bf16.msra.mxu0 %v6948
        %7031 = vmatprep.subr.bf16.mxu0 %v6947
        %7032 = vmatpush2.bf16.msra.mxu0 %v6946
        %7033 = vmatprep.subr.bf16.mxu0 %v6945
        %7034 = vmatpush2.bf16.msra.mxu0 %v6944
        %7035 = vmatprep.mubr.bf16.mxu0 %v6816
        %7036 = vmatmul.mubr.bf16.gmra.mxu0 %v6815
        %v7037 = vpop.f32.mrf.mxu0
        %v7038 = vadd.f32 %v6808, %v7037
        %v7039 = vpop.f32.mrf.mxu0
        %v7040 = vadd.f32 %v6808, %v7039
        %v7041 = vpop.f32.mrf.mxu0
        %v7042 = vpop.f32.mrf.mxu0
        %7043 = vdwg.mxu0
        %7044 = vmatprep.subr.bf16.mxu0 0
        %7045 = vmatpush1.bf16.msra.mxu0 0
        %7046 = vmatprep.subr.bf16.mxu0 0
        %7047 = vmatpush1.bf16.msra.mxu0 0
        %7048 = vmatprep.subr.bf16.mxu0 0
        %7049 = vmatpush1.bf16.msra.mxu0 0
        %7050 = vmatprep.subr.bf16.mxu0 0
        %7051 = vmatpush1.bf16.msra.mxu0 0
        %7052 = vmatprep.subr.bf16.mxu0 0
        %7053 = vmatpush1.bf16.msra.mxu0 0
        %7054 = vmatprep.subr.bf16.mxu0 0
        %7055 = vmatpush1.bf16.msra.mxu0 0
        %7056 = vmatprep.subr.bf16.mxu0 %v6963
        %7057 = vmatpush1.bf16.msra.mxu0 %v6962
        %7058 = vmatprep.subr.bf16.mxu0 %v6961
        %7059 = vmatpush1.bf16.msra.mxu0 %v6960
        %7060 = vmatprep.subr.bf16.mxu0 0
        %7061 = vmatpush2.bf16.msra.mxu0 0
        %7062 = vmatprep.subr.bf16.mxu0 0
        %7063 = vmatpush2.bf16.msra.mxu0 0
        %7064 = vmatprep.subr.bf16.mxu0 0
        %7065 = vmatpush2.bf16.msra.mxu0 0
        %7066 = vmatprep.subr.bf16.mxu0 0
        %7067 = vmatpush2.bf16.msra.mxu0 0
        %7068 = vmatprep.subr.bf16.mxu0 0
        %7069 = vmatpush2.bf16.msra.mxu0 0
        %7070 = vmatprep.subr.bf16.mxu0 0
        %7071 = vmatpush2.bf16.msra.mxu0 0
        %7072 = vmatprep.subr.bf16.mxu0 0
        %7073 = vmatpush2.bf16.msra.mxu0 0
        %7074 = vmatprep.subr.bf16.mxu0 0
        %7075 = vmatpush2.bf16.msra.mxu0 0
        %7076 = vmatprep.mubr.bf16.mxu0 0
        %7077 = vmatmul.mubr.bf16.gmra.mxu0 %v7001
        %v7078 = vpop.f32.mrf.mxu0
        %v7079 = vadd.f32 %v7038, %v7078
        %v7080 = vpop.f32.mrf.mxu0
        %v7081 = vadd.f32 %v7040, %v7080
        %v7082 = vpop.f32.mrf.mxu0
        %v7083 = vpop.f32.mrf.mxu0
        %7084 = vdwg.mxu0
        %7085 = vst [vmem:[%s278] sm:$0xff] %v7079
        %7086 = vst [vmem:[%s278 + $0x8] sm:$0xff] %v7081
        %s7087 = smul.u32 2, %s17
        %p7088 = scmp.lt.s32.totalorder %s7087, 3
        %s7089 = scalar_select %p7088, %s7087, 3
        %s7090 = smul.addr %s7089, 8
        %s7091 = scalar_lea.vmem %s6, %s7090
        // Predicated region
        $region68: #{fully_conv_net_forward.1} parent=62 // pred_check
          %p7092 = pneg %p166
        $region69: #{fully_conv_net_forward.1} parent=62 // pred_check_branch
          %7094 = sbr.rel (%p7092) target = $region71
        $region70: #{fully_conv_net_forward.1} parent=62 // pred_region
          %s7095 = smul.u32 2, %s17
        $region71: #{fully_conv_net_forward.1} parent=62 // pred_fallthru
          _
      $region63: #{fully_conv_net_forward.1} parent=5 // pred_fallthru
        _
      %p7096 = scmp.le.s32.totalorder 2, %s12
      // Predicated region
      $region72: #{fully_conv_net_forward.1} parent=5 // pred_check
        %p7097 = pneg %p7096
      $region73: #{fully_conv_net_forward.1} parent=5 // pred_check_branch
        %7099 = sbr.rel (%p7097) target = $region75
      $region74: #{fully_conv_net_forward.1} parent=5 // pred_region
        %s7100 = ssub.s32 %s12, 2
        // Predicated region
        $region76: #{fully_conv_net_forward.1} parent=74 // pred_check
          %p7101 = pneg %p172
        $region77: #{fully_conv_net_forward.1} parent=74 // pred_check_branch
          %7103 = sbr.rel (%p7101) target = $region79
        $region78: #{fully_conv_net_forward.1} parent=74 // pred_region
          %s7104 = smul.u32 2, %s18
          %p7105 = scmp.lt.s32.totalorder %s7104, 3
          %s7106 = scalar_select %p7105, %s7104, 3
          %s7107 = smul.addr %s7106, 8
          %s7108 = scalar_lea.vmem %s6, %s7107
        $region79: #{fully_conv_net_forward.1} parent=74 // pred_fallthru
          _
      $region75: #{fully_conv_net_forward.1} parent=5 // pred_fallthru
        _
    $region6: #{fully_conv_net_forward.1} parent=1 // loop_footer
      %s16 = sadd.s32 1, %s12
    $region7: #{fully_conv_net_forward.1} parent=1 // loop_footer_branch
      %11 = sbr.rel target = $region3
    $region8: #{fully_conv_net_forward.1} parent=1 // loop_exit
      _

</llo_original>
